<compile_context>
chip_gen: v6e
topology: v6e:2x2x1
jax: 0.10.0
libtpu: 0.0.40
codegen_flags: <defaults>
</compile_context>

<pallas_src>
import functools

import jax
import jax.numpy as jnp
from jax.experimental import pallas as pl
from jax.experimental.pallas import tpu as pltpu


def _srcnn_fused_kernel(x1_ref, w1_ref, b1_ref, w2_ref, b2_ref, w3_ref, b3_ref,
                        o_ref,
                        f1_ref, f2_ref,
                        *, H, W):
    """Fused SRCNN forward for one image.

    x1_ref : (1, H*W, 81)    conv1 patch matrix, row = h*W + w, col = kh*9 + kw
    w1_ref : (81, 64)        conv1 weights
    b1_ref : (1, 64)
    w2_ref : (9, 64, 32)     conv2 weights, [kh*3 + kw, cin, cout]
    b2_ref : (1, 32)
    w3_ref : (25, 32)        conv3 weights, row = kh*5 + kw
    b3_ref : (1, 1)
    o_ref  : (1, H, W)       output
    f1_ref : (H+2, W+2, 64)  zero-bordered feat1 (conv2 halo)  [VMEM scratch]
    f2_ref : (H+4, W+4, 32)  zero-bordered feat2 (conv3 halo)  [VMEM scratch]
    """
    f32 = jnp.float32

    # ---------------- Conv1: 9x9, 1->64  (one MXU matmul, K=81) ------------
    y1 = jnp.dot(x1_ref[0], w1_ref[...], preferred_element_type=f32)  # (H*W, 64)
    y1 = jnp.maximum(y1 + b1_ref[...], 0.0)

    # feat1 stays in VMEM.  Zero only the 1-px halo border; the interior is
    # fully overwritten every step.  (H, W, 64) reshape is leading-dim only
    # (channel stays minor), so it is layout-preserving for W % 8 == 0.
    zrow1 = jnp.zeros((1, W + 2, 64), f32)
    zcol1 = jnp.zeros((H + 2, 1, 64), f32)
    f1_ref[0:1, :, :] = zrow1
    f1_ref[H + 1:H + 2, :, :] = zrow1
    f1_ref[:, 0:1, :] = zcol1
    f1_ref[:, W + 1:W + 2, :] = zcol1
    f1_ref[1:1 + H, 1:1 + W, :] = y1.reshape(H, W, 64)

    # ---------------- Conv2: 3x3, 64->32  (9 accumulated MXU matmuls) ------
    # No im2col scratch: each tap is a shifted view of f1, contracted over the
    # 64 input channels on the MXU; partial sums accumulate in registers.
    y2 = None
    for t in range(9):
        kh, kw = divmod(t, 3)
        tap = f1_ref[kh:kh + H, kw:kw + W, :].reshape(H * W, 64)
        part = jnp.dot(tap, w2_ref[t], preferred_element_type=f32)   # (H*W, 32)
        y2 = part if y2 is None else y2 + part
    y2 = jnp.maximum(y2 + b2_ref[...], 0.0)

    # feat2 stays in VMEM; zero only the 2-px halo border.
    zrow2 = jnp.zeros((2, W + 4, 32), f32)
    zcol2 = jnp.zeros((H + 4, 2, 32), f32)
    f2_ref[0:2, :, :] = zrow2
    f2_ref[H + 2:H + 4, :, :] = zrow2
    f2_ref[:, 0:2, :] = zcol2
    f2_ref[:, W + 2:W + 4, :] = zcol2
    f2_ref[2:2 + H, 2:2 + W, :] = y2.reshape(H, W, 32)

    # ---------------- Conv3: 5x5, 32->1  (VPU, value accumulation) ---------
    # Cout == 1: MXU would produce a 1-lane output column, so stay on the VPU,
    # accumulate the 25 taps in registers and reduce channels once at the end.
    acc = None
    for t in range(25):
        kh, kw = divmod(t, 5)
        term = f2_ref[kh:kh + H, kw:kw + W, :] * w3_ref[t:t + 1, :]  # (H, W, 32)
        acc = term if acc is None else acc + term
    out = jnp.sum(acc, axis=-1) + b3_ref[...]                        # (H, W)
    o_ref[...] = out[None].astype(o_ref.dtype)


def srcnn_forward(x_nchw, params):
    """Reproduces SRCCNN.forward: relu(conv1) -> relu(conv2) -> conv3.
    Input/output are NCHW to match the PyTorch module."""
    (w1, b1), (w2, b2), (w3, b3) = params
    N, C, H, W = x_nchw.shape
    assert C == 1, "SRCNN takes single-channel images"
    assert H % 8 == 0 and W % 8 == 0, "layout-preserving reshapes need W,H % 8 == 0"

    # conv1 zero padding (pad=4) and the 81-tap patch extraction are pure
    # layout glue -> plain JAX in the wrapper.  The kernel then only handles
    # lane-dense operands (no size-1 minor dims, no per-tap lane broadcasts).
    x_pad = jnp.pad(x_nchw[:, 0], ((0, 0), (4, 4), (4, 4)))          # (N, H+8, W+8)
    taps = [x_pad[:, kh:kh + H, kw:kw + W]
            for kh in range(9) for kw in range(9)]                   # 81 x (N, H, W)
    x_im = jnp.stack(taps, axis=-1).reshape(N, H * W, 81)            # (N, H*W, 81)

    # Flatten weights to the layouts the kernel expects (HWIO row-major).
    w1f = w1.reshape(9 * 9, 64)             # (81, 64)
    b1f = b1.reshape(1, 64)
    w2r = w2.reshape(9, 64, 32)             # (9, 64, 32): [kh*3+kw, cin, cout]
    b2f = b2.reshape(1, 32)
    w3f = w3.reshape(5 * 5, 32)             # (25, 32)
    b3f = b3.reshape(1, 1)

    kernel = functools.partial(_srcnn_fused_kernel, H=H, W=W)

    out = pl.pallas_call(
        kernel,
        out_shape=jax.ShapeDtypeStruct((N, H, W), jnp.float32),
        grid_spec=pltpu.PrefetchScalarGridSpec(
            num_scalar_prefetch=0,
            grid=(N,),
            in_specs=[
                pl.BlockSpec((1, H * W, 81), lambda n: (n, 0, 0)),
                pl.BlockSpec((81, 64), lambda n: (0, 0)),
                pl.BlockSpec((1, 64), lambda n: (0, 0)),
                pl.BlockSpec((9, 64, 32), lambda n: (0, 0, 0)),
                pl.BlockSpec((1, 32), lambda n: (0, 0)),
                pl.BlockSpec((25, 32), lambda n: (0, 0)),
                pl.BlockSpec((1, 1), lambda n: (0, 0)),
            ],
            out_specs=pl.BlockSpec((1, H, W), lambda n: (n, 0, 0)),
            scratch_shapes=[
                pltpu.VMEM((H + 2, W + 2, 64), jnp.float32),   # feat1 (padded)
                pltpu.VMEM((H + 4, W + 4, 32), jnp.float32),   # feat2 (padded)
            ],
        ),
        compiler_params=pltpu.CompilerParams(
            dimension_semantics=("parallel",),
            # Explicit scoped-VMEM budget; re-derive per H tile on v7x (64 MiB
            # physical) once the H-tiling TODO lands.
            vmem_limit_bytes=48 * 1024 * 1024),
    )(x_im, w1f, b1f, w2r, b2f, w3f, b3f)

    return out[:, None]                     # (N, H, W) -> NCHW (N, 1, H, W)


def init_params(key):
    """Deterministic parameter init matching nn.Conv2d fan-in bounds; weights
    stored as (KH, KW, Cin, Cout)."""
    ks = jax.random.split(key, 6)

    def conv_init(kw_key, kb_key, kh, kw, cin, cout):
        fan_in = cin * kh * kw
        bound = 1.0 / jnp.sqrt(fan_in)
        w = jax.random.uniform(kw_key, (kh, kw, cin, cout),
                               minval=-bound, maxval=bound, dtype=jnp.float32)
        b = jax.random.uniform(kb_key, (cout,),
                               minval=-bound, maxval=bound, dtype=jnp.float32)
        return w, b

    w1, b1 = conv_init(ks[0], ks[1], 9, 9, 1, 64)
    w2, b2 = conv_init(ks[2], ks[3], 3, 3, 64, 32)
    w3, b3 = conv_init(ks[4], ks[5], 5, 5, 32, 1)
    return (w1, b1), (w2, b2), (w3, b3)


def srcnn_reference(x_nchw, params):
    """Pure-JAX reference (lax conv, full f32 precision) for validation."""
    (w1, b1), (w2, b2), (w3, b3) = params

    def conv(x, w, b, pad, relu):
        y = jax.lax.conv_general_dilated(
            x, w, window_strides=(1, 1), padding=[(pad, pad), (pad, pad)],
            dimension_numbers=("NCHW", "HWIO", "NCHW"),
            precision=jax.lax.Precision.HIGHEST)
        y = y + b.reshape(1, -1, 1, 1)
        return jnp.maximum(y, 0.0) if relu else y

    out = conv(x_nchw, w1, b1, 4, True)
    out = conv(out, w2, b2, 1, True)
    out = conv(out, w3, b3, 2, False)
    return out


if __name__ == "__main__":
    key = jax.random.PRNGKey(0)
    k_x, k_p = jax.random.split(key)

    # SRCNN takes single-channel images: (batch=2, channels=1, 16, 16)
    x = jax.random.uniform(k_x, (2, 1, 16, 16), dtype=jnp.float32)
    params = init_params(k_p)

    out = jax.block_until_ready(srcnn_forward(x, params))
    ref = jax.block_until_ready(srcnn_reference(x, params))

    assert out.shape == (2, 1, 16, 16), out.shape
    # Tolerance leaves headroom for MXU pass-precision differences between the
    # in-kernel matmuls (conv1/conv2) and the HIGHEST-precision XLA reference.
    assert jnp.allclose(out, ref, rtol=2e-3, atol=2e-3), (
        float(jnp.max(jnp.abs(out - ref))))

    print("KERNEL_OK")
</pallas_src>

<mosaic_0001>
module attributes {stable_mosaic.version = 11 : i64} {
  func.func @_srcnn_fused_kernel(%arg0: i32, %arg1: memref<1x256x81xf32, #tpu.memory_space<vmem>>, %arg2: memref<81x64xf32, #tpu.memory_space<vmem>>, %arg3: memref<1x64xf32, #tpu.memory_space<vmem>>, %arg4: memref<9x64x32xf32, #tpu.memory_space<vmem>>, %arg5: memref<1x32xf32, #tpu.memory_space<vmem>>, %arg6: memref<25x32xf32, #tpu.memory_space<vmem>>, %arg7: memref<1x1xf32, #tpu.memory_space<vmem>>, %arg8: memref<1x16x16xf32, #tpu.memory_space<vmem>>, %arg9: memref<18x18x64xf32, #tpu.memory_space<vmem>>, %arg10: memref<20x20x32xf32, #tpu.memory_space<vmem>>) attributes {dimension_semantics = [#tpu.dimension_semantics<parallel>], iteration_bounds = array<i64: 2>, scalar_prefetch = 0 : i64, scratch_operands = 2 : i64, tpu.core_type = #tpu.core_type<tc>, window_params = [{transform_indices = @transform_0, window_bounds = array<i64: 1, 256, 81>}, {pipeline_mode = #tpu.pipeline_mode<synchronous>, transform_indices = @transform_1, window_bounds = array<i64: 81, 64>}, {pipeline_mode = #tpu.pipeline_mode<synchronous>, transform_indices = @transform_2, window_bounds = array<i64: 1, 64>}, {pipeline_mode = #tpu.pipeline_mode<synchronous>, transform_indices = @transform_3, window_bounds = array<i64: 9, 64, 32>}, {pipeline_mode = #tpu.pipeline_mode<synchronous>, transform_indices = @transform_4, window_bounds = array<i64: 1, 32>}, {pipeline_mode = #tpu.pipeline_mode<synchronous>, transform_indices = @transform_5, window_bounds = array<i64: 25, 32>}, {pipeline_mode = #tpu.pipeline_mode<synchronous>, transform_indices = @transform_6, window_bounds = array<i64: 1, 1>}, {transform_indices = @transform_7, window_bounds = array<i64: 1, 16, 16>}]} {
    %c0 = arith.constant 0 : index
    %c0_0 = arith.constant 0 : index
    %c0_1 = arith.constant 0 : index
    %0 = vector.load %arg1[%c0, %c0_0, %c0_1] : memref<1x256x81xf32, #tpu.memory_space<vmem>>, vector<1x256x81xf32>
    %1 = vector.shape_cast %0 : vector<1x256x81xf32> to vector<256x81xf32>
    %c0_2 = arith.constant 0 : index
    %c0_3 = arith.constant 0 : index
    %2 = vector.load %arg2[%c0_2, %c0_3] : memref<81x64xf32, #tpu.memory_space<vmem>>, vector<81x64xf32>
    %cst = arith.constant dense<0.000000e+00> : vector<256x64xf32>
    %3 = tpu.matmul %1, %2, %cst {dimension_numbers = #tpu.dot_dimension_numbers<[1], [0], [0], [1], [0, 0, 1, 1], [], []>} : vector<256x81xf32>, vector<81x64xf32>, vector<256x64xf32> -> vector<256x64xf32>
    %c0_4 = arith.constant 0 : index
    %c0_5 = arith.constant 0 : index
    %4 = vector.load %arg3[%c0_4, %c0_5] : memref<1x64xf32, #tpu.memory_space<vmem>>, vector<1x64xf32>
    %5 = vector.broadcast %4 : vector<1x64xf32> to vector<256x64xf32>
    %6 = arith.addf %3, %5 : vector<256x64xf32>
    %cst_6 = arith.constant 0.000000e+00 : f32
    %7 = vector.broadcast %cst_6 : f32 to vector<256x64xf32>
    %8 = arith.maximumf %6, %7 : vector<256x64xf32>
    %cst_7 = arith.constant 0.000000e+00 : f32
    %9 = vector.broadcast %cst_7 : f32 to vector<1x18x64xf32>
    %cst_8 = arith.constant 0.000000e+00 : f32
    %10 = vector.broadcast %cst_8 : f32 to vector<18x1x64xf32>
    %c0_9 = arith.constant 0 : index
    %c0_10 = arith.constant 0 : index
    %c0_11 = arith.constant 0 : index
    %11 = vector.load %arg9[%c0_9, %c0_10, %c0_11] : memref<18x18x64xf32, #tpu.memory_space<vmem>>, vector<1x18x64xf32>
    tpu.vector_store %arg9[%c0_9, %c0_10, %c0_11], %9 {strides = array<i32>} : memref<18x18x64xf32, #tpu.memory_space<vmem>>, vector<1x18x64xf32>,
    %c17 = arith.constant 17 : index
    %c0_12 = arith.constant 0 : index
    %c0_13 = arith.constant 0 : index
    %12 = vector.load %arg9[%c17, %c0_12, %c0_13] : memref<18x18x64xf32, #tpu.memory_space<vmem>>, vector<1x18x64xf32>
    tpu.vector_store %arg9[%c17, %c0_12, %c0_13], %9 {strides = array<i32>} : memref<18x18x64xf32, #tpu.memory_space<vmem>>, vector<1x18x64xf32>,
    %c0_14 = arith.constant 0 : index
    %c0_15 = arith.constant 0 : index
    %c0_16 = arith.constant 0 : index
    %13 = vector.load %arg9[%c0_14, %c0_15, %c0_16] : memref<18x18x64xf32, #tpu.memory_space<vmem>>, vector<18x1x64xf32>
    tpu.vector_store %arg9[%c0_14, %c0_15, %c0_16], %10 {strides = array<i32>} : memref<18x18x64xf32, #tpu.memory_space<vmem>>, vector<18x1x64xf32>,
    %c0_17 = arith.constant 0 : index
    %c17_18 = arith.constant 17 : index
    %c0_19 = arith.constant 0 : index
    %14 = vector.load %arg9[%c0_17, %c17_18, %c0_19] : memref<18x18x64xf32, #tpu.memory_space<vmem>>, vector<18x1x64xf32>
    tpu.vector_store %arg9[%c0_17, %c17_18, %c0_19], %10 {strides = array<i32>} : memref<18x18x64xf32, #tpu.memory_space<vmem>>, vector<18x1x64xf32>,
    %15 = vector.shape_cast %8 : vector<256x64xf32> to vector<16x16x64xf32>
    %c1 = arith.constant 1 : index
    %c1_20 = arith.constant 1 : index
    %c0_21 = arith.constant 0 : index
    %16 = vector.load %arg9[%c1, %c1_20, %c0_21] : memref<18x18x64xf32, #tpu.memory_space<vmem>>, vector<16x16x64xf32>
    tpu.vector_store %arg9[%c1, %c1_20, %c0_21], %15 {strides = array<i32>} : memref<18x18x64xf32, #tpu.memory_space<vmem>>, vector<16x16x64xf32>,
    %c0_22 = arith.constant 0 : index
    %c0_23 = arith.constant 0 : index
    %c0_24 = arith.constant 0 : index
    %17 = vector.load %arg9[%c0_22, %c0_23, %c0_24] : memref<18x18x64xf32, #tpu.memory_space<vmem>>, vector<16x16x64xf32>
    %18 = vector.shape_cast %17 : vector<16x16x64xf32> to vector<256x64xf32>
    %c0_25 = arith.constant 0 : index
    %c0_26 = arith.constant 0 : index
    %c0_27 = arith.constant 0 : index
    %19 = vector.load %arg4[%c0_25, %c0_26, %c0_27] : memref<9x64x32xf32, #tpu.memory_space<vmem>>, vector<1x64x32xf32>
    %20 = vector.shape_cast %19 : vector<1x64x32xf32> to vector<64x32xf32>
    %cst_28 = arith.constant dense<0.000000e+00> : vector<256x32xf32>
    %21 = tpu.matmul %18, %20, %cst_28 {dimension_numbers = #tpu.dot_dimension_numbers<[1], [0], [0], [1], [0, 0, 1, 1], [], []>} : vector<256x64xf32>, vector<64x32xf32>, vector<256x32xf32> -> vector<256x32xf32>
    %c0_29 = arith.constant 0 : index
    %c1_30 = arith.constant 1 : index
    %c0_31 = arith.constant 0 : index
    %22 = vector.load %arg9[%c0_29, %c1_30, %c0_31] : memref<18x18x64xf32, #tpu.memory_space<vmem>>, vector<16x16x64xf32>
    %23 = vector.shape_cast %22 : vector<16x16x64xf32> to vector<256x64xf32>
    %c1_32 = arith.constant 1 : index
    %c0_33 = arith.constant 0 : index
    %c0_34 = arith.constant 0 : index
    %24 = vector.load %arg4[%c1_32, %c0_33, %c0_34] : memref<9x64x32xf32, #tpu.memory_space<vmem>>, vector<1x64x32xf32>
    %25 = vector.shape_cast %24 : vector<1x64x32xf32> to vector<64x32xf32>
    %cst_35 = arith.constant dense<0.000000e+00> : vector<256x32xf32>
    %26 = tpu.matmul %23, %25, %cst_35 {dimension_numbers = #tpu.dot_dimension_numbers<[1], [0], [0], [1], [0, 0, 1, 1], [], []>} : vector<256x64xf32>, vector<64x32xf32>, vector<256x32xf32> -> vector<256x32xf32>
    %27 = arith.addf %21, %26 : vector<256x32xf32>
    %c0_36 = arith.constant 0 : index
    %c2 = arith.constant 2 : index
    %c0_37 = arith.constant 0 : index
    %28 = vector.load %arg9[%c0_36, %c2, %c0_37] : memref<18x18x64xf32, #tpu.memory_space<vmem>>, vector<16x16x64xf32>
    %29 = vector.shape_cast %28 : vector<16x16x64xf32> to vector<256x64xf32>
    %c2_38 = arith.constant 2 : index
    %c0_39 = arith.constant 0 : index
    %c0_40 = arith.constant 0 : index
    %30 = vector.load %arg4[%c2_38, %c0_39, %c0_40] : memref<9x64x32xf32, #tpu.memory_space<vmem>>, vector<1x64x32xf32>
    %31 = vector.shape_cast %30 : vector<1x64x32xf32> to vector<64x32xf32>
    %cst_41 = arith.constant dense<0.000000e+00> : vector<256x32xf32>
    %32 = tpu.matmul %29, %31, %cst_41 {dimension_numbers = #tpu.dot_dimension_numbers<[1], [0], [0], [1], [0, 0, 1, 1], [], []>} : vector<256x64xf32>, vector<64x32xf32>, vector<256x32xf32> -> vector<256x32xf32>
    %33 = arith.addf %27, %32 : vector<256x32xf32>
    %c1_42 = arith.constant 1 : index
    %c0_43 = arith.constant 0 : index
    %c0_44 = arith.constant 0 : index
    %34 = vector.load %arg9[%c1_42, %c0_43, %c0_44] : memref<18x18x64xf32, #tpu.memory_space<vmem>>, vector<16x16x64xf32>
    %35 = vector.shape_cast %34 : vector<16x16x64xf32> to vector<256x64xf32>
    %c3 = arith.constant 3 : index
    %c0_45 = arith.constant 0 : index
    %c0_46 = arith.constant 0 : index
    %36 = vector.load %arg4[%c3, %c0_45, %c0_46] : memref<9x64x32xf32, #tpu.memory_space<vmem>>, vector<1x64x32xf32>
    %37 = vector.shape_cast %36 : vector<1x64x32xf32> to vector<64x32xf32>
    %cst_47 = arith.constant dense<0.000000e+00> : vector<256x32xf32>
    %38 = tpu.matmul %35, %37, %cst_47 {dimension_numbers = #tpu.dot_dimension_numbers<[1], [0], [0], [1], [0, 0, 1, 1], [], []>} : vector<256x64xf32>, vector<64x32xf32>, vector<256x32xf32> -> vector<256x32xf32>
    %39 = arith.addf %33, %38 : vector<256x32xf32>
    %c1_48 = arith.constant 1 : index
    %c1_49 = arith.constant 1 : index
    %c0_50 = arith.constant 0 : index
    %40 = vector.load %arg9[%c1_48, %c1_49, %c0_50] : memref<18x18x64xf32, #tpu.memory_space<vmem>>, vector<16x16x64xf32>
    %41 = vector.shape_cast %40 : vector<16x16x64xf32> to vector<256x64xf32>
    %c4 = arith.constant 4 : index
    %c0_51 = arith.constant 0 : index
    %c0_52 = arith.constant 0 : index
    %42 = vector.load %arg4[%c4, %c0_51, %c0_52] : memref<9x64x32xf32, #tpu.memory_space<vmem>>, vector<1x64x32xf32>
    %43 = vector.shape_cast %42 : vector<1x64x32xf32> to vector<64x32xf32>
    %cst_53 = arith.constant dense<0.000000e+00> : vector<256x32xf32>
    %44 = tpu.matmul %41, %43, %cst_53 {dimension_numbers = #tpu.dot_dimension_numbers<[1], [0], [0], [1], [0, 0, 1, 1], [], []>} : vector<256x64xf32>, vector<64x32xf32>, vector<256x32xf32> -> vector<256x32xf32>
    %45 = arith.addf %39, %44 : vector<256x32xf32>
    %c1_54 = arith.constant 1 : index
    %c2_55 = arith.constant 2 : index
    %c0_56 = arith.constant 0 : index
    %46 = vector.load %arg9[%c1_54, %c2_55, %c0_56] : memref<18x18x64xf32, #tpu.memory_space<vmem>>, vector<16x16x64xf32>
    %47 = vector.shape_cast %46 : vector<16x16x64xf32> to vector<256x64xf32>
    %c5 = arith.constant 5 : index
    %c0_57 = arith.constant 0 : index
    %c0_58 = arith.constant 0 : index
    %48 = vector.load %arg4[%c5, %c0_57, %c0_58] : memref<9x64x32xf32, #tpu.memory_space<vmem>>, vector<1x64x32xf32>
    %49 = vector.shape_cast %48 : vector<1x64x32xf32> to vector<64x32xf32>
    %cst_59 = arith.constant dense<0.000000e+00> : vector<256x32xf32>
    %50 = tpu.matmul %47, %49, %cst_59 {dimension_numbers = #tpu.dot_dimension_numbers<[1], [0], [0], [1], [0, 0, 1, 1], [], []>} : vector<256x64xf32>, vector<64x32xf32>, vector<256x32xf32> -> vector<256x32xf32>
    %51 = arith.addf %45, %50 : vector<256x32xf32>
    %c2_60 = arith.constant 2 : index
    %c0_61 = arith.constant 0 : index
    %c0_62 = arith.constant 0 : index
    %52 = vector.load %arg9[%c2_60, %c0_61, %c0_62] : memref<18x18x64xf32, #tpu.memory_space<vmem>>, vector<16x16x64xf32>
    %53 = vector.shape_cast %52 : vector<16x16x64xf32> to vector<256x64xf32>
    %c6 = arith.constant 6 : index
    %c0_63 = arith.constant 0 : index
    %c0_64 = arith.constant 0 : index
    %54 = vector.load %arg4[%c6, %c0_63, %c0_64] : memref<9x64x32xf32, #tpu.memory_space<vmem>>, vector<1x64x32xf32>
    %55 = vector.shape_cast %54 : vector<1x64x32xf32> to vector<64x32xf32>
    %cst_65 = arith.constant dense<0.000000e+00> : vector<256x32xf32>
    %56 = tpu.matmul %53, %55, %cst_65 {dimension_numbers = #tpu.dot_dimension_numbers<[1], [0], [0], [1], [0, 0, 1, 1], [], []>} : vector<256x64xf32>, vector<64x32xf32>, vector<256x32xf32> -> vector<256x32xf32>
    %57 = arith.addf %51, %56 : vector<256x32xf32>
    %c2_66 = arith.constant 2 : index
    %c1_67 = arith.constant 1 : index
    %c0_68 = arith.constant 0 : index
    %58 = vector.load %arg9[%c2_66, %c1_67, %c0_68] : memref<18x18x64xf32, #tpu.memory_space<vmem>>, vector<16x16x64xf32>
    %59 = vector.shape_cast %58 : vector<16x16x64xf32> to vector<256x64xf32>
    %c7 = arith.constant 7 : index
    %c0_69 = arith.constant 0 : index
    %c0_70 = arith.constant 0 : index
    %60 = vector.load %arg4[%c7, %c0_69, %c0_70] : memref<9x64x32xf32, #tpu.memory_space<vmem>>, vector<1x64x32xf32>
    %61 = vector.shape_cast %60 : vector<1x64x32xf32> to vector<64x32xf32>
    %cst_71 = arith.constant dense<0.000000e+00> : vector<256x32xf32>
    %62 = tpu.matmul %59, %61, %cst_71 {dimension_numbers = #tpu.dot_dimension_numbers<[1], [0], [0], [1], [0, 0, 1, 1], [], []>} : vector<256x64xf32>, vector<64x32xf32>, vector<256x32xf32> -> vector<256x32xf32>
    %63 = arith.addf %57, %62 : vector<256x32xf32>
    %c2_72 = arith.constant 2 : index
    %c2_73 = arith.constant 2 : index
    %c0_74 = arith.constant 0 : index
    %64 = vector.load %arg9[%c2_72, %c2_73, %c0_74] : memref<18x18x64xf32, #tpu.memory_space<vmem>>, vector<16x16x64xf32>
    %65 = vector.shape_cast %64 : vector<16x16x64xf32> to vector<256x64xf32>
    %c8 = arith.constant 8 : index
    %c0_75 = arith.constant 0 : index
    %c0_76 = arith.constant 0 : index
    %66 = vector.load %arg4[%c8, %c0_75, %c0_76] : memref<9x64x32xf32, #tpu.memory_space<vmem>>, vector<1x64x32xf32>
    %67 = vector.shape_cast %66 : vector<1x64x32xf32> to vector<64x32xf32>
    %cst_77 = arith.constant dense<0.000000e+00> : vector<256x32xf32>
    %68 = tpu.matmul %65, %67, %cst_77 {dimension_numbers = #tpu.dot_dimension_numbers<[1], [0], [0], [1], [0, 0, 1, 1], [], []>} : vector<256x64xf32>, vector<64x32xf32>, vector<256x32xf32> -> vector<256x32xf32>
    %69 = arith.addf %63, %68 : vector<256x32xf32>
    %c0_78 = arith.constant 0 : index
    %c0_79 = arith.constant 0 : index
    %70 = vector.load %arg5[%c0_78, %c0_79] : memref<1x32xf32, #tpu.memory_space<vmem>>, vector<1x32xf32>
    %71 = vector.broadcast %70 : vector<1x32xf32> to vector<256x32xf32>
    %72 = arith.addf %69, %71 : vector<256x32xf32>
    %cst_80 = arith.constant 0.000000e+00 : f32
    %73 = vector.broadcast %cst_80 : f32 to vector<256x32xf32>
    %74 = arith.maximumf %72, %73 : vector<256x32xf32>
    %cst_81 = arith.constant 0.000000e+00 : f32
    %75 = vector.broadcast %cst_81 : f32 to vector<2x20x32xf32>
    %cst_82 = arith.constant 0.000000e+00 : f32
    %76 = vector.broadcast %cst_82 : f32 to vector<20x2x32xf32>
    %c0_83 = arith.constant 0 : index
    %c0_84 = arith.constant 0 : index
    %c0_85 = arith.constant 0 : index
    %77 = vector.load %arg10[%c0_83, %c0_84, %c0_85] : memref<20x20x32xf32, #tpu.memory_space<vmem>>, vector<2x20x32xf32>
    tpu.vector_store %arg10[%c0_83, %c0_84, %c0_85], %75 {strides = array<i32>} : memref<20x20x32xf32, #tpu.memory_space<vmem>>, vector<2x20x32xf32>,
    %c18 = arith.constant 18 : index
    %c0_86 = arith.constant 0 : index
    %c0_87 = arith.constant 0 : index
    %78 = vector.load %arg10[%c18, %c0_86, %c0_87] : memref<20x20x32xf32, #tpu.memory_space<vmem>>, vector<2x20x32xf32>
    tpu.vector_store %arg10[%c18, %c0_86, %c0_87], %75 {strides = array<i32>} : memref<20x20x32xf32, #tpu.memory_space<vmem>>, vector<2x20x32xf32>,
    %c0_88 = arith.constant 0 : index
    %c0_89 = arith.constant 0 : index
    %c0_90 = arith.constant 0 : index
    %79 = vector.load %arg10[%c0_88, %c0_89, %c0_90] : memref<20x20x32xf32, #tpu.memory_space<vmem>>, vector<20x2x32xf32>
    tpu.vector_store %arg10[%c0_88, %c0_89, %c0_90], %76 {strides = array<i32>} : memref<20x20x32xf32, #tpu.memory_space<vmem>>, vector<20x2x32xf32>,
    %c0_91 = arith.constant 0 : index
    %c18_92 = arith.constant 18 : index
    %c0_93 = arith.constant 0 : index
    %80 = vector.load %arg10[%c0_91, %c18_92, %c0_93] : memref<20x20x32xf32, #tpu.memory_space<vmem>>, vector<20x2x32xf32>
    tpu.vector_store %arg10[%c0_91, %c18_92, %c0_93], %76 {strides = array<i32>} : memref<20x20x32xf32, #tpu.memory_space<vmem>>, vector<20x2x32xf32>,
    %81 = vector.shape_cast %74 : vector<256x32xf32> to vector<16x16x32xf32>
    %c2_94 = arith.constant 2 : index
    %c2_95 = arith.constant 2 : index
    %c0_96 = arith.constant 0 : index
    %82 = vector.load %arg10[%c2_94, %c2_95, %c0_96] : memref<20x20x32xf32, #tpu.memory_space<vmem>>, vector<16x16x32xf32>
    tpu.vector_store %arg10[%c2_94, %c2_95, %c0_96], %81 {strides = array<i32>} : memref<20x20x32xf32, #tpu.memory_space<vmem>>, vector<16x16x32xf32>,
    %c0_97 = arith.constant 0 : index
    %c0_98 = arith.constant 0 : index
    %c0_99 = arith.constant 0 : index
    %83 = vector.load %arg10[%c0_97, %c0_98, %c0_99] : memref<20x20x32xf32, #tpu.memory_space<vmem>>, vector<16x16x32xf32>
    %c0_100 = arith.constant 0 : index
    %c0_101 = arith.constant 0 : index
    %84 = vector.load %arg6[%c0_100, %c0_101] : memref<25x32xf32, #tpu.memory_space<vmem>>, vector<1x32xf32>
    %85 = vector.shape_cast %84 : vector<1x32xf32> to vector<1x1x32xf32>
    %86 = vector.broadcast %85 : vector<1x1x32xf32> to vector<16x16x32xf32>
    %87 = arith.mulf %83, %86 : vector<16x16x32xf32>
    %c0_102 = arith.constant 0 : index
    %c1_103 = arith.constant 1 : index
    %c0_104 = arith.constant 0 : index
    %88 = vector.load %arg10[%c0_102, %c1_103, %c0_104] : memref<20x20x32xf32, #tpu.memory_space<vmem>>, vector<16x16x32xf32>
    %c1_105 = arith.constant 1 : index
    %c0_106 = arith.constant 0 : index
    %89 = vector.load %arg6[%c1_105, %c0_106] : memref<25x32xf32, #tpu.memory_space<vmem>>, vector<1x32xf32>
    %90 = vector.shape_cast %89 : vector<1x32xf32> to vector<1x1x32xf32>
    %91 = vector.broadcast %90 : vector<1x1x32xf32> to vector<16x16x32xf32>
    %92 = arith.mulf %88, %91 : vector<16x16x32xf32>
    %93 = arith.addf %87, %92 : vector<16x16x32xf32>
    %c0_107 = arith.constant 0 : index
    %c2_108 = arith.constant 2 : index
    %c0_109 = arith.constant 0 : index
    %94 = vector.load %arg10[%c0_107, %c2_108, %c0_109] : memref<20x20x32xf32, #tpu.memory_space<vmem>>, vector<16x16x32xf32>
    %c2_110 = arith.constant 2 : index
    %c0_111 = arith.constant 0 : index
    %95 = vector.load %arg6[%c2_110, %c0_111] : memref<25x32xf32, #tpu.memory_space<vmem>>, vector<1x32xf32>
    %96 = vector.shape_cast %95 : vector<1x32xf32> to vector<1x1x32xf32>
    %97 = vector.broadcast %96 : vector<1x1x32xf32> to vector<16x16x32xf32>
    %98 = arith.mulf %94, %97 : vector<16x16x32xf32>
    %99 = arith.addf %93, %98 : vector<16x16x32xf32>
    %c0_112 = arith.constant 0 : index
    %c3_113 = arith.constant 3 : index
    %c0_114 = arith.constant 0 : index
    %100 = vector.load %arg10[%c0_112, %c3_113, %c0_114] : memref<20x20x32xf32, #tpu.memory_space<vmem>>, vector<16x16x32xf32>
    %c3_115 = arith.constant 3 : index
    %c0_116 = arith.constant 0 : index
    %101 = vector.load %arg6[%c3_115, %c0_116] : memref<25x32xf32, #tpu.memory_space<vmem>>, vector<1x32xf32>
    %102 = vector.shape_cast %101 : vector<1x32xf32> to vector<1x1x32xf32>
    %103 = vector.broadcast %102 : vector<1x1x32xf32> to vector<16x16x32xf32>
    %104 = arith.mulf %100, %103 : vector<16x16x32xf32>
    %105 = arith.addf %99, %104 : vector<16x16x32xf32>
    %c0_117 = arith.constant 0 : index
    %c4_118 = arith.constant 4 : index
    %c0_119 = arith.constant 0 : index
    %106 = vector.load %arg10[%c0_117, %c4_118, %c0_119] : memref<20x20x32xf32, #tpu.memory_space<vmem>>, vector<16x16x32xf32>
    %c4_120 = arith.constant 4 : index
    %c0_121 = arith.constant 0 : index
    %107 = vector.load %arg6[%c4_120, %c0_121] : memref<25x32xf32, #tpu.memory_space<vmem>>, vector<1x32xf32>
    %108 = vector.shape_cast %107 : vector<1x32xf32> to vector<1x1x32xf32>
    %109 = vector.broadcast %108 : vector<1x1x32xf32> to vector<16x16x32xf32>
    %110 = arith.mulf %106, %109 : vector<16x16x32xf32>
    %111 = arith.addf %105, %110 : vector<16x16x32xf32>
    %c1_122 = arith.constant 1 : index
    %c0_123 = arith.constant 0 : index
    %c0_124 = arith.constant 0 : index
    %112 = vector.load %arg10[%c1_122, %c0_123, %c0_124] : memref<20x20x32xf32, #tpu.memory_space<vmem>>, vector<16x16x32xf32>
    %c5_125 = arith.constant 5 : index
    %c0_126 = arith.constant 0 : index
    %113 = vector.load %arg6[%c5_125, %c0_126] : memref<25x32xf32, #tpu.memory_space<vmem>>, vector<1x32xf32>
    %114 = vector.shape_cast %113 : vector<1x32xf32> to vector<1x1x32xf32>
    %115 = vector.broadcast %114 : vector<1x1x32xf32> to vector<16x16x32xf32>
    %116 = arith.mulf %112, %115 : vector<16x16x32xf32>
    %117 = arith.addf %111, %116 : vector<16x16x32xf32>
    %c1_127 = arith.constant 1 : index
    %c1_128 = arith.constant 1 : index
    %c0_129 = arith.constant 0 : index
    %118 = vector.load %arg10[%c1_127, %c1_128, %c0_129] : memref<20x20x32xf32, #tpu.memory_space<vmem>>, vector<16x16x32xf32>
    %c6_130 = arith.constant 6 : index
    %c0_131 = arith.constant 0 : index
    %119 = vector.load %arg6[%c6_130, %c0_131] : memref<25x32xf32, #tpu.memory_space<vmem>>, vector<1x32xf32>
    %120 = vector.shape_cast %119 : vector<1x32xf32> to vector<1x1x32xf32>
    %121 = vector.broadcast %120 : vector<1x1x32xf32> to vector<16x16x32xf32>
    %122 = arith.mulf %118, %121 : vector<16x16x32xf32>
    %123 = arith.addf %117, %122 : vector<16x16x32xf32>
    %c1_132 = arith.constant 1 : index
    %c2_133 = arith.constant 2 : index
    %c0_134 = arith.constant 0 : index
    %124 = vector.load %arg10[%c1_132, %c2_133, %c0_134] : memref<20x20x32xf32, #tpu.memory_space<vmem>>, vector<16x16x32xf32>
    %c7_135 = arith.constant 7 : index
    %c0_136 = arith.constant 0 : index
    %125 = vector.load %arg6[%c7_135, %c0_136] : memref<25x32xf32, #tpu.memory_space<vmem>>, vector<1x32xf32>
    %126 = vector.shape_cast %125 : vector<1x32xf32> to vector<1x1x32xf32>
    %127 = vector.broadcast %126 : vector<1x1x32xf32> to vector<16x16x32xf32>
    %128 = arith.mulf %124, %127 : vector<16x16x32xf32>
    %129 = arith.addf %123, %128 : vector<16x16x32xf32>
    %c1_137 = arith.constant 1 : index
    %c3_138 = arith.constant 3 : index
    %c0_139 = arith.constant 0 : index
    %130 = vector.load %arg10[%c1_137, %c3_138, %c0_139] : memref<20x20x32xf32, #tpu.memory_space<vmem>>, vector<16x16x32xf32>
    %c8_140 = arith.constant 8 : index
    %c0_141 = arith.constant 0 : index
    %131 = vector.load %arg6[%c8_140, %c0_141] : memref<25x32xf32, #tpu.memory_space<vmem>>, vector<1x32xf32>
    %132 = vector.shape_cast %131 : vector<1x32xf32> to vector<1x1x32xf32>
    %133 = vector.broadcast %132 : vector<1x1x32xf32> to vector<16x16x32xf32>
    %134 = arith.mulf %130, %133 : vector<16x16x32xf32>
    %135 = arith.addf %129, %134 : vector<16x16x32xf32>
    %c1_142 = arith.constant 1 : index
    %c4_143 = arith.constant 4 : index
    %c0_144 = arith.constant 0 : index
    %136 = vector.load %arg10[%c1_142, %c4_143, %c0_144] : memref<20x20x32xf32, #tpu.memory_space<vmem>>, vector<16x16x32xf32>
    %c9 = arith.constant 9 : index
    %c0_145 = arith.constant 0 : index
    %137 = vector.load %arg6[%c9, %c0_145] : memref<25x32xf32, #tpu.memory_space<vmem>>, vector<1x32xf32>
    %138 = vector.shape_cast %137 : vector<1x32xf32> to vector<1x1x32xf32>
    %139 = vector.broadcast %138 : vector<1x1x32xf32> to vector<16x16x32xf32>
    %140 = arith.mulf %136, %139 : vector<16x16x32xf32>
    %141 = arith.addf %135, %140 : vector<16x16x32xf32>
    %c2_146 = arith.constant 2 : index
    %c0_147 = arith.constant 0 : index
    %c0_148 = arith.constant 0 : index
    %142 = vector.load %arg10[%c2_146, %c0_147, %c0_148] : memref<20x20x32xf32, #tpu.memory_space<vmem>>, vector<16x16x32xf32>
    %c10 = arith.constant 10 : index
    %c0_149 = arith.constant 0 : index
    %143 = vector.load %arg6[%c10, %c0_149] : memref<25x32xf32, #tpu.memory_space<vmem>>, vector<1x32xf32>
    %144 = vector.shape_cast %143 : vector<1x32xf32> to vector<1x1x32xf32>
    %145 = vector.broadcast %144 : vector<1x1x32xf32> to vector<16x16x32xf32>
    %146 = arith.mulf %142, %145 : vector<16x16x32xf32>
    %147 = arith.addf %141, %146 : vector<16x16x32xf32>
    %c2_150 = arith.constant 2 : index
    %c1_151 = arith.constant 1 : index
    %c0_152 = arith.constant 0 : index
    %148 = vector.load %arg10[%c2_150, %c1_151, %c0_152] : memref<20x20x32xf32, #tpu.memory_space<vmem>>, vector<16x16x32xf32>
    %c11 = arith.constant 11 : index
    %c0_153 = arith.constant 0 : index
    %149 = vector.load %arg6[%c11, %c0_153] : memref<25x32xf32, #tpu.memory_space<vmem>>, vector<1x32xf32>
    %150 = vector.shape_cast %149 : vector<1x32xf32> to vector<1x1x32xf32>
    %151 = vector.broadcast %150 : vector<1x1x32xf32> to vector<16x16x32xf32>
    %152 = arith.mulf %148, %151 : vector<16x16x32xf32>
    %153 = arith.addf %147, %152 : vector<16x16x32xf32>
    %c2_154 = arith.constant 2 : index
    %c2_155 = arith.constant 2 : index
    %c0_156 = arith.constant 0 : index
    %154 = vector.load %arg10[%c2_154, %c2_155, %c0_156] : memref<20x20x32xf32, #tpu.memory_space<vmem>>, vector<16x16x32xf32>
    %c12 = arith.constant 12 : index
    %c0_157 = arith.constant 0 : index
    %155 = vector.load %arg6[%c12, %c0_157] : memref<25x32xf32, #tpu.memory_space<vmem>>, vector<1x32xf32>
    %156 = vector.shape_cast %155 : vector<1x32xf32> to vector<1x1x32xf32>
    %157 = vector.broadcast %156 : vector<1x1x32xf32> to vector<16x16x32xf32>
    %158 = arith.mulf %154, %157 : vector<16x16x32xf32>
    %159 = arith.addf %153, %158 : vector<16x16x32xf32>
    %c2_158 = arith.constant 2 : index
    %c3_159 = arith.constant 3 : index
    %c0_160 = arith.constant 0 : index
    %160 = vector.load %arg10[%c2_158, %c3_159, %c0_160] : memref<20x20x32xf32, #tpu.memory_space<vmem>>, vector<16x16x32xf32>
    %c13 = arith.constant 13 : index
    %c0_161 = arith.constant 0 : index
    %161 = vector.load %arg6[%c13, %c0_161] : memref<25x32xf32, #tpu.memory_space<vmem>>, vector<1x32xf32>
    %162 = vector.shape_cast %161 : vector<1x32xf32> to vector<1x1x32xf32>
    %163 = vector.broadcast %162 : vector<1x1x32xf32> to vector<16x16x32xf32>
    %164 = arith.mulf %160, %163 : vector<16x16x32xf32>
    %165 = arith.addf %159, %164 : vector<16x16x32xf32>
    %c2_162 = arith.constant 2 : index
    %c4_163 = arith.constant 4 : index
    %c0_164 = arith.constant 0 : index
    %166 = vector.load %arg10[%c2_162, %c4_163, %c0_164] : memref<20x20x32xf32, #tpu.memory_space<vmem>>, vector<16x16x32xf32>
    %c14 = arith.constant 14 : index
    %c0_165 = arith.constant 0 : index
    %167 = vector.load %arg6[%c14, %c0_165] : memref<25x32xf32, #tpu.memory_space<vmem>>, vector<1x32xf32>
    %168 = vector.shape_cast %167 : vector<1x32xf32> to vector<1x1x32xf32>
    %169 = vector.broadcast %168 : vector<1x1x32xf32> to vector<16x16x32xf32>
    %170 = arith.mulf %166, %169 : vector<16x16x32xf32>
    %171 = arith.addf %165, %170 : vector<16x16x32xf32>
    %c3_166 = arith.constant 3 : index
    %c0_167 = arith.constant 0 : index
    %c0_168 = arith.constant 0 : index
    %172 = vector.load %arg10[%c3_166, %c0_167, %c0_168] : memref<20x20x32xf32, #tpu.memory_space<vmem>>, vector<16x16x32xf32>
    %c15 = arith.constant 15 : index
    %c0_169 = arith.constant 0 : index
    %173 = vector.load %arg6[%c15, %c0_169] : memref<25x32xf32, #tpu.memory_space<vmem>>, vector<1x32xf32>
    %174 = vector.shape_cast %173 : vector<1x32xf32> to vector<1x1x32xf32>
    %175 = vector.broadcast %174 : vector<1x1x32xf32> to vector<16x16x32xf32>
    %176 = arith.mulf %172, %175 : vector<16x16x32xf32>
    %177 = arith.addf %171, %176 : vector<16x16x32xf32>
    %c3_170 = arith.constant 3 : index
    %c1_171 = arith.constant 1 : index
    %c0_172 = arith.constant 0 : index
    %178 = vector.load %arg10[%c3_170, %c1_171, %c0_172] : memref<20x20x32xf32, #tpu.memory_space<vmem>>, vector<16x16x32xf32>
    %c16 = arith.constant 16 : index
    %c0_173 = arith.constant 0 : index
    %179 = vector.load %arg6[%c16, %c0_173] : memref<25x32xf32, #tpu.memory_space<vmem>>, vector<1x32xf32>
    %180 = vector.shape_cast %179 : vector<1x32xf32> to vector<1x1x32xf32>
    %181 = vector.broadcast %180 : vector<1x1x32xf32> to vector<16x16x32xf32>
    %182 = arith.mulf %178, %181 : vector<16x16x32xf32>
    %183 = arith.addf %177, %182 : vector<16x16x32xf32>
    %c3_174 = arith.constant 3 : index
    %c2_175 = arith.constant 2 : index
    %c0_176 = arith.constant 0 : index
    %184 = vector.load %arg10[%c3_174, %c2_175, %c0_176] : memref<20x20x32xf32, #tpu.memory_space<vmem>>, vector<16x16x32xf32>
    %c17_177 = arith.constant 17 : index
    %c0_178 = arith.constant 0 : index
    %185 = vector.load %arg6[%c17_177, %c0_178] : memref<25x32xf32, #tpu.memory_space<vmem>>, vector<1x32xf32>
    %186 = vector.shape_cast %185 : vector<1x32xf32> to vector<1x1x32xf32>
    %187 = vector.broadcast %186 : vector<1x1x32xf32> to vector<16x16x32xf32>
    %188 = arith.mulf %184, %187 : vector<16x16x32xf32>
    %189 = arith.addf %183, %188 : vector<16x16x32xf32>
    %c3_179 = arith.constant 3 : index
    %c3_180 = arith.constant 3 : index
    %c0_181 = arith.constant 0 : index
    %190 = vector.load %arg10[%c3_179, %c3_180, %c0_181] : memref<20x20x32xf32, #tpu.memory_space<vmem>>, vector<16x16x32xf32>
    %c18_182 = arith.constant 18 : index
    %c0_183 = arith.constant 0 : index
    %191 = vector.load %arg6[%c18_182, %c0_183] : memref<25x32xf32, #tpu.memory_space<vmem>>, vector<1x32xf32>
    %192 = vector.shape_cast %191 : vector<1x32xf32> to vector<1x1x32xf32>
    %193 = vector.broadcast %192 : vector<1x1x32xf32> to vector<16x16x32xf32>
    %194 = arith.mulf %190, %193 : vector<16x16x32xf32>
    %195 = arith.addf %189, %194 : vector<16x16x32xf32>
    %c3_184 = arith.constant 3 : index
    %c4_185 = arith.constant 4 : index
    %c0_186 = arith.constant 0 : index
    %196 = vector.load %arg10[%c3_184, %c4_185, %c0_186] : memref<20x20x32xf32, #tpu.memory_space<vmem>>, vector<16x16x32xf32>
    %c19 = arith.constant 19 : index
    %c0_187 = arith.constant 0 : index
    %197 = vector.load %arg6[%c19, %c0_187] : memref<25x32xf32, #tpu.memory_space<vmem>>, vector<1x32xf32>
    %198 = vector.shape_cast %197 : vector<1x32xf32> to vector<1x1x32xf32>
    %199 = vector.broadcast %198 : vector<1x1x32xf32> to vector<16x16x32xf32>
    %200 = arith.mulf %196, %199 : vector<16x16x32xf32>
    %201 = arith.addf %195, %200 : vector<16x16x32xf32>
    %c4_188 = arith.constant 4 : index
    %c0_189 = arith.constant 0 : index
    %c0_190 = arith.constant 0 : index
    %202 = vector.load %arg10[%c4_188, %c0_189, %c0_190] : memref<20x20x32xf32, #tpu.memory_space<vmem>>, vector<16x16x32xf32>
    %c20 = arith.constant 20 : index
    %c0_191 = arith.constant 0 : index
    %203 = vector.load %arg6[%c20, %c0_191] : memref<25x32xf32, #tpu.memory_space<vmem>>, vector<1x32xf32>
    %204 = vector.shape_cast %203 : vector<1x32xf32> to vector<1x1x32xf32>
    %205 = vector.broadcast %204 : vector<1x1x32xf32> to vector<16x16x32xf32>
    %206 = arith.mulf %202, %205 : vector<16x16x32xf32>
    %207 = arith.addf %201, %206 : vector<16x16x32xf32>
    %c4_192 = arith.constant 4 : index
    %c1_193 = arith.constant 1 : index
    %c0_194 = arith.constant 0 : index
    %208 = vector.load %arg10[%c4_192, %c1_193, %c0_194] : memref<20x20x32xf32, #tpu.memory_space<vmem>>, vector<16x16x32xf32>
    %c21 = arith.constant 21 : index
    %c0_195 = arith.constant 0 : index
    %209 = vector.load %arg6[%c21, %c0_195] : memref<25x32xf32, #tpu.memory_space<vmem>>, vector<1x32xf32>
    %210 = vector.shape_cast %209 : vector<1x32xf32> to vector<1x1x32xf32>
    %211 = vector.broadcast %210 : vector<1x1x32xf32> to vector<16x16x32xf32>
    %212 = arith.mulf %208, %211 : vector<16x16x32xf32>
    %213 = arith.addf %207, %212 : vector<16x16x32xf32>
    %c4_196 = arith.constant 4 : index
    %c2_197 = arith.constant 2 : index
    %c0_198 = arith.constant 0 : index
    %214 = vector.load %arg10[%c4_196, %c2_197, %c0_198] : memref<20x20x32xf32, #tpu.memory_space<vmem>>, vector<16x16x32xf32>
    %c22 = arith.constant 22 : index
    %c0_199 = arith.constant 0 : index
    %215 = vector.load %arg6[%c22, %c0_199] : memref<25x32xf32, #tpu.memory_space<vmem>>, vector<1x32xf32>
    %216 = vector.shape_cast %215 : vector<1x32xf32> to vector<1x1x32xf32>
    %217 = vector.broadcast %216 : vector<1x1x32xf32> to vector<16x16x32xf32>
    %218 = arith.mulf %214, %217 : vector<16x16x32xf32>
    %219 = arith.addf %213, %218 : vector<16x16x32xf32>
    %c4_200 = arith.constant 4 : index
    %c3_201 = arith.constant 3 : index
    %c0_202 = arith.constant 0 : index
    %220 = vector.load %arg10[%c4_200, %c3_201, %c0_202] : memref<20x20x32xf32, #tpu.memory_space<vmem>>, vector<16x16x32xf32>
    %c23 = arith.constant 23 : index
    %c0_203 = arith.constant 0 : index
    %221 = vector.load %arg6[%c23, %c0_203] : memref<25x32xf32, #tpu.memory_space<vmem>>, vector<1x32xf32>
    %222 = vector.shape_cast %221 : vector<1x32xf32> to vector<1x1x32xf32>
    %223 = vector.broadcast %222 : vector<1x1x32xf32> to vector<16x16x32xf32>
    %224 = arith.mulf %220, %223 : vector<16x16x32xf32>
    %225 = arith.addf %219, %224 : vector<16x16x32xf32>
    %c4_204 = arith.constant 4 : index
    %c4_205 = arith.constant 4 : index
    %c0_206 = arith.constant 0 : index
    %226 = vector.load %arg10[%c4_204, %c4_205, %c0_206] : memref<20x20x32xf32, #tpu.memory_space<vmem>>, vector<16x16x32xf32>
    %c24 = arith.constant 24 : index
    %c0_207 = arith.constant 0 : index
    %227 = vector.load %arg6[%c24, %c0_207] : memref<25x32xf32, #tpu.memory_space<vmem>>, vector<1x32xf32>
    %228 = vector.shape_cast %227 : vector<1x32xf32> to vector<1x1x32xf32>
    %229 = vector.broadcast %228 : vector<1x1x32xf32> to vector<16x16x32xf32>
    %230 = arith.mulf %226, %229 : vector<16x16x32xf32>
    %231 = arith.addf %225, %230 : vector<16x16x32xf32>
    %cst_208 = arith.constant dense<0.000000e+00> : vector<16x16xf32>
    %232 = vector.multi_reduction <add>, %231, %cst_208 [2] : vector<16x16x32xf32> to vector<16x16xf32>
    %c0_209 = arith.constant 0 : index
    %c0_210 = arith.constant 0 : index
    %233 = vector.load %arg7[%c0_209, %c0_210] : memref<1x1xf32, #tpu.memory_space<vmem>>, vector<1x1xf32>
    %234 = vector.broadcast %233 : vector<1x1xf32> to vector<16x16xf32>
    %235 = arith.addf %232, %234 : vector<16x16xf32>
    %236 = vector.shape_cast %235 : vector<16x16xf32> to vector<1x16x16xf32>
    %c0_211 = arith.constant 0 : index
    %c0_212 = arith.constant 0 : index
    %c0_213 = arith.constant 0 : index
    %237 = vector.load %arg8[%c0_211, %c0_212, %c0_213] : memref<1x16x16xf32, #tpu.memory_space<vmem>>, vector<1x16x16xf32>
    tpu.vector_store %arg8[%c0_211, %c0_212, %c0_213], %236 {strides = array<i32>} : memref<1x16x16xf32, #tpu.memory_space<vmem>>, vector<1x16x16xf32>,
    return
  }
  func.func @transform_0(%arg0: i32) -> (i32, i32, i32) {
    %c0_i32 = arith.constant 0 : i32
    %c0_i32_0 = arith.constant 0 : i32
    %c0_i32_1 = arith.constant 0 : i32
    return %arg0, %c0_i32, %c0_i32_0 : i32, i32, i32
  }
  func.func @transform_1(%arg0: i32) -> (i32, i32) {
    %c0_i32 = arith.constant 0 : i32
    %c0_i32_0 = arith.constant 0 : i32
    %c0_i32_1 = arith.constant 0 : i32
    return %c0_i32, %c0_i32_0 : i32, i32
  }
  func.func @transform_2(%arg0: i32) -> (i32, i32) {
    %c0_i32 = arith.constant 0 : i32
    %c0_i32_0 = arith.constant 0 : i32
    %c0_i32_1 = arith.constant 0 : i32
    return %c0_i32, %c0_i32_0 : i32, i32
  }
  func.func @transform_3(%arg0: i32) -> (i32, i32, i32) {
    %c0_i32 = arith.constant 0 : i32
    %c0_i32_0 = arith.constant 0 : i32
    %c0_i32_1 = arith.constant 0 : i32
    %c0_i32_2 = arith.constant 0 : i32
    return %c0_i32, %c0_i32_0, %c0_i32_1 : i32, i32, i32
  }
  func.func @transform_4(%arg0: i32) -> (i32, i32) {
    %c0_i32 = arith.constant 0 : i32
    %c0_i32_0 = arith.constant 0 : i32
    %c0_i32_1 = arith.constant 0 : i32
    return %c0_i32, %c0_i32_0 : i32, i32
  }
  func.func @transform_5(%arg0: i32) -> (i32, i32) {
    %c0_i32 = arith.constant 0 : i32
    %c0_i32_0 = arith.constant 0 : i32
    %c0_i32_1 = arith.constant 0 : i32
    return %c0_i32, %c0_i32_0 : i32, i32
  }
  func.func @transform_6(%arg0: i32) -> (i32, i32) {
    %c0_i32 = arith.constant 0 : i32
    %c0_i32_0 = arith.constant 0 : i32
    %c0_i32_1 = arith.constant 0 : i32
    return %c0_i32, %c0_i32_0 : i32, i32
  }
  func.func @transform_7(%arg0: i32) -> (i32, i32, i32) {
    %c0_i32 = arith.constant 0 : i32
    %c0_i32_0 = arith.constant 0 : i32
    %c0_i32_1 = arith.constant 0 : i32
    return %arg0, %c0_i32, %c0_i32_0 : i32, i32, i32
  }
}

</mosaic_0001>

<llo_original>
// kernel: tpu_custom_call.1
$region0: #{tpu_custom_call.1}
  #allocation0 [shape = 'u32[]', space=smem, size = 0x4, offset = 0x4, fixed_abs, tag = 'smem constant byte address 0x4 - core index']
  #allocation1 [shape = 'u32[144,128]{1,0:T(1,128)}', space=vmem, size = 0x12000, scoped, tag = 'internal scratch']
  #allocation2 [shape = 'f32[18,18,64]{2,1,0:T(8,128)}', space=vmem, size = 0x36000, scoped, tag = 'scratch operand']
  #allocation3 [shape = 'f32[20,20,32]{2,1,0:T(8,128)}', space=vmem, size = 0x3c000, scoped, tag = 'scratch operand']
  #allocation4 [shape = 'f32[1,1]{1,0:T(1,128)S(1)}', space=vmem, size = 0x200, scoped, tag = 'scoped memory for tpu_custom_call.1']
  %s0 = inlined_call_operand.vmem [shape: f32[2,256,81], index: 0, kind: input, shape index: {}]
  %s1 = inlined_call_operand.vmem [shape: f32[81,64], index: 1, kind: input, shape index: {}]
  %s2 = inlined_call_operand.vmem [shape: f32[1,64], index: 2, kind: input, shape index: {}]
  %s3 = inlined_call_operand.vmem [shape: f32[9,64,32], index: 3, kind: input, shape index: {}]
  %s4 = inlined_call_operand.vmem [shape: f32[1,32], index: 4, kind: input, shape index: {}]
  %s5 = inlined_call_operand.vmem [shape: f32[25,32], index: 5, kind: input, shape index: {}]
  %s6 = inlined_call_operand.<no memory space> [shape: f32[1,1], index: 6, kind: input, shape index: {}]
  %s7 = inlined_call_operand.hbm [shape: f32[2,16,16], index: 7, kind: output, shape index: {}]
  %s8 = sld [smem:[#allocation0]]
  $region61: #{tpu_custom_call.1} parent=0
    _
  %s10 = ssub.s32 1, %s8
  %s11 = scalar_select 0, %s10, %s8
  %v12 = vstv %s6
  %13 = vst [vmem:[#allocation4] sm:$0x1] %v12
  $region1: #{tpu_custom_call.1} parent=0
    #allocation5 [shape = 'u8[16384]{0}', space=vmem, size = 0x4000, scoped, tag = 'output window, operand 0']
    #allocation6 [shape = 's32[2]{0}', space=sflag, size = 0x8, scoped, tag = 'scoped memory for tpu_custom_call.1']
    %14 = vsyncpa [#allocation6], 0
    %s15 = scalar_lea.sflag [#allocation6], 1
    %16 = vsyncpa %s15, 0
    loop: start=0, step=1, limit=4
    $region2: #{tpu_custom_call.1} parent=1 // loop_pre_header
      _
    $region3: #{tpu_custom_call.1} parent=1 // loop_header
      %s18 = sphi 0, %s22
      %p19 = scmp.ge.s32.totalorder %s18, 4
      %s28 = sphi 0, %s30
      %s31 = sphi 0, %s28
      %s32 = sphi 0, %s31
      %s48 = sphi 0, %s32
      %s52 = sphi 0, %s52
      %s54 = sphi 0, %s52
      %s55 = sphi 0, %s54
      %s69 = sphi 0, %s55
      %s73 = sphi 0, %s73
      %s75 = sphi 0, %s73
      %s76 = sphi 0, %s75
      %s90 = sphi 0, %s76
      %s94 = sphi 0, %s94
      %s96 = sphi 0, %s94
      %s97 = sphi 0, %s96
      %s111 = sphi 0, %s97
      %s115 = sphi 0, %s115
      %s117 = sphi 0, %s115
      %s118 = sphi 0, %s117
      %s132 = sphi 0, %s118
      %s136 = sphi 0, %s136
      %s138 = sphi 0, %s136
      %s139 = sphi 0, %s138
      %s153 = sphi 0, %s139
      %s157 = sphi 0, %s157
      %s159 = sphi 0, %s157
      %s160 = sphi 0, %s159
      %s174 = sphi 0, %s160
      %s180 = sphi 0, %s182
      %s183 = sphi 0, %s180
      %s184 = sphi 0, %s183
      %s200 = sphi 0, %s184
    $region4: #{tpu_custom_call.1} parent=1 // loop_header_branch
      %21 = sbr.rel (%p19) target = $region8
    $region5: #{tpu_custom_call.1} parent=1 // loop_body
      %s23 = ssub.s32 %s18, 1
      %s24 = ssub.s32 %s18, 2
      %s25 = sadd.s32 %s18, 1
      %s26 = ssub.s32 %s18, %s25
      %p27 = scmp.eq.s32.totalorder %s26, 0
      %s29 = sadd.s32 %s28, 1
      %s30 = scalar_select %p27, %s28, %s29
      %p33 = pneg %p27
      %p34 = scmp.eq.s32.totalorder %s18, 1
      %p35 = por %p33, %p34
      %p36 = scmp.ne.s32.totalorder %s28, %s31
      %p37 = scmp.eq.s32.totalorder %s18, 0
      %p38 = por %p36, %p37
      %p39 = scmp.ne.s32.totalorder %s28, %s31
      %p40 = scmp.eq.s32.totalorder %s23, 1
      %p41 = por %p39, %p40
      %p42 = scmp.ne.s32.totalorder %s31, %s32
      %p43 = scmp.eq.s32.totalorder %s23, 0
      %p44 = por %p42, %p43
      %p45 = scmp.ne.s32.totalorder %s31, %s32
      %p46 = scmp.eq.s32.totalorder %s24, 1
      %p47 = por %p45, %p46
      %p49 = scmp.ne.s32.totalorder %s32, %s48
      %p50 = scmp.eq.s32.totalorder %s24, 0
      %p51 = por %p49, %p50
      %s53 = sadd.s32 %s52, 1
      %p56 = scmp.eq.s32.totalorder %s18, 1
      %p57 = scmp.ne.s32.totalorder %s52, %s54
      %p58 = scmp.eq.s32.totalorder %s18, 0
      %p59 = por %p57, %p58
      %p60 = scmp.ne.s32.totalorder %s52, %s54
      %p61 = scmp.eq.s32.totalorder %s23, 1
      %p62 = por %p60, %p61
      %p63 = scmp.ne.s32.totalorder %s54, %s55
      %p64 = scmp.eq.s32.totalorder %s23, 0
      %p65 = por %p63, %p64
      %p66 = scmp.ne.s32.totalorder %s54, %s55
      %p67 = scmp.eq.s32.totalorder %s24, 1
      %p68 = por %p66, %p67
      %p70 = scmp.ne.s32.totalorder %s55, %s69
      %p71 = scmp.eq.s32.totalorder %s24, 0
      %p72 = por %p70, %p71
      %s74 = sadd.s32 %s73, 1
      %p77 = scmp.eq.s32.totalorder %s18, 1
      %p78 = scmp.ne.s32.totalorder %s73, %s75
      %p79 = scmp.eq.s32.totalorder %s18, 0
      %p80 = por %p78, %p79
      %p81 = scmp.ne.s32.totalorder %s73, %s75
      %p82 = scmp.eq.s32.totalorder %s23, 1
      %p83 = por %p81, %p82
      %p84 = scmp.ne.s32.totalorder %s75, %s76
      %p85 = scmp.eq.s32.totalorder %s23, 0
      %p86 = por %p84, %p85
      %p87 = scmp.ne.s32.totalorder %s75, %s76
      %p88 = scmp.eq.s32.totalorder %s24, 1
      %p89 = por %p87, %p88
      %p91 = scmp.ne.s32.totalorder %s76, %s90
      %p92 = scmp.eq.s32.totalorder %s24, 0
      %p93 = por %p91, %p92
      %s95 = sadd.s32 %s94, 1
      %p98 = scmp.eq.s32.totalorder %s18, 1
      %p99 = scmp.ne.s32.totalorder %s94, %s96
      %p100 = scmp.eq.s32.totalorder %s18, 0
      %p101 = por %p99, %p100
      %p102 = scmp.ne.s32.totalorder %s94, %s96
      %p103 = scmp.eq.s32.totalorder %s23, 1
      %p104 = por %p102, %p103
      %p105 = scmp.ne.s32.totalorder %s96, %s97
      %p106 = scmp.eq.s32.totalorder %s23, 0
      %p107 = por %p105, %p106
      %p108 = scmp.ne.s32.totalorder %s96, %s97
      %p109 = scmp.eq.s32.totalorder %s24, 1
      %p110 = por %p108, %p109
      %p112 = scmp.ne.s32.totalorder %s97, %s111
      %p113 = scmp.eq.s32.totalorder %s24, 0
      %p114 = por %p112, %p113
      %s116 = sadd.s32 %s115, 1
      %p119 = scmp.eq.s32.totalorder %s18, 1
      %p120 = scmp.ne.s32.totalorder %s115, %s117
      %p121 = scmp.eq.s32.totalorder %s18, 0
      %p122 = por %p120, %p121
      %p123 = scmp.ne.s32.totalorder %s115, %s117
      %p124 = scmp.eq.s32.totalorder %s23, 1
      %p125 = por %p123, %p124
      %p126 = scmp.ne.s32.totalorder %s117, %s118
      %p127 = scmp.eq.s32.totalorder %s23, 0
      %p128 = por %p126, %p127
      %p129 = scmp.ne.s32.totalorder %s117, %s118
      %p130 = scmp.eq.s32.totalorder %s24, 1
      %p131 = por %p129, %p130
      %p133 = scmp.ne.s32.totalorder %s118, %s132
      %p134 = scmp.eq.s32.totalorder %s24, 0
      %p135 = por %p133, %p134
      %s137 = sadd.s32 %s136, 1
      %p140 = scmp.eq.s32.totalorder %s18, 1
      %p141 = scmp.ne.s32.totalorder %s136, %s138
      %p142 = scmp.eq.s32.totalorder %s18, 0
      %p143 = por %p141, %p142
      %p144 = scmp.ne.s32.totalorder %s136, %s138
      %p145 = scmp.eq.s32.totalorder %s23, 1
      %p146 = por %p144, %p145
      %p147 = scmp.ne.s32.totalorder %s138, %s139
      %p148 = scmp.eq.s32.totalorder %s23, 0
      %p149 = por %p147, %p148
      %p150 = scmp.ne.s32.totalorder %s138, %s139
      %p151 = scmp.eq.s32.totalorder %s24, 1
      %p152 = por %p150, %p151
      %p154 = scmp.ne.s32.totalorder %s139, %s153
      %p155 = scmp.eq.s32.totalorder %s24, 0
      %p156 = por %p154, %p155
      %s158 = sadd.s32 %s157, 1
      %p161 = scmp.eq.s32.totalorder %s18, 1
      %p162 = scmp.ne.s32.totalorder %s157, %s159
      %p163 = scmp.eq.s32.totalorder %s18, 0
      %p164 = por %p162, %p163
      %p165 = scmp.ne.s32.totalorder %s157, %s159
      %p166 = scmp.eq.s32.totalorder %s23, 1
      %p167 = por %p165, %p166
      %p168 = scmp.ne.s32.totalorder %s159, %s160
      %p169 = scmp.eq.s32.totalorder %s23, 0
      %p170 = por %p168, %p169
      %p171 = scmp.ne.s32.totalorder %s159, %s160
      %p172 = scmp.eq.s32.totalorder %s24, 1
      %p173 = por %p171, %p172
      %p175 = scmp.ne.s32.totalorder %s160, %s174
      %p176 = scmp.eq.s32.totalorder %s24, 0
      %p177 = por %p175, %p176
      %s178 = ssub.s32 %s18, %s25
      %p179 = scmp.eq.s32.totalorder %s178, 0
      %s181 = sadd.s32 %s180, 1
      %s182 = scalar_select %p179, %s180, %s181
      %p185 = pneg %p179
      %p186 = scmp.eq.s32.totalorder %s18, 1
      %p187 = por %p185, %p186
      %p188 = scmp.ne.s32.totalorder %s180, %s183
      %p189 = scmp.eq.s32.totalorder %s18, 0
      %p190 = por %p188, %p189
      %p191 = scmp.ne.s32.totalorder %s180, %s183
      %p192 = scmp.eq.s32.totalorder %s23, 1
      %p193 = por %p191, %p192
      %p194 = scmp.ne.s32.totalorder %s183, %s184
      %p195 = scmp.eq.s32.totalorder %s23, 0
      %p196 = por %p194, %p195
      %p197 = scmp.ne.s32.totalorder %s183, %s184
      %p198 = scmp.eq.s32.totalorder %s24, 1
      %p199 = por %p197, %p198
      %p201 = scmp.ne.s32.totalorder %s184, %s200
      %p202 = scmp.eq.s32.totalorder %s24, 0
      %p203 = por %p201, %p202
      %p204 = scmp.le.s32.totalorder 1, %s18
      %p205 = scmp.lt.s32.totalorder %s18, 3
      %p206 = pnand %p204, %p205
      %p207 = pneg %p206
      // Predicated region
      $region9: #{tpu_custom_call.1} parent=5 // pred_check
        _
      $region10: #{tpu_custom_call.1} parent=5 // pred_check_branch
        %209 = sbr.rel (%p206) target = $region12
      $region11: #{tpu_custom_call.1} parent=5 // pred_region
        %s210 = ssub.s32 %s18, 1
        // Predicated region
        $region13: #{tpu_custom_call.1} parent=11 // pred_check
          %p211 = pneg %p65
        $region14: #{tpu_custom_call.1} parent=11 // pred_check_branch
          %213 = sbr.rel (%p211) target = $region16
        $region15: #{tpu_custom_call.1} parent=11 // pred_region
          _
        $region16: #{tpu_custom_call.1} parent=11 // pred_fallthru
          _
        // Predicated region
        $region17: #{tpu_custom_call.1} parent=11 // pred_check
          %p214 = pneg %p86
        $region18: #{tpu_custom_call.1} parent=11 // pred_check_branch
          %216 = sbr.rel (%p214) target = $region20
        $region19: #{tpu_custom_call.1} parent=11 // pred_region
          _
        $region20: #{tpu_custom_call.1} parent=11 // pred_fallthru
          _
        // Predicated region
        $region21: #{tpu_custom_call.1} parent=11 // pred_check
          %p217 = pneg %p107
        $region22: #{tpu_custom_call.1} parent=11 // pred_check_branch
          %219 = sbr.rel (%p217) target = $region24
        $region23: #{tpu_custom_call.1} parent=11 // pred_region
          _
        $region24: #{tpu_custom_call.1} parent=11 // pred_fallthru
          _
        // Predicated region
        $region25: #{tpu_custom_call.1} parent=11 // pred_check
          %p220 = pneg %p128
        $region26: #{tpu_custom_call.1} parent=11 // pred_check_branch
          %222 = sbr.rel (%p220) target = $region28
        $region27: #{tpu_custom_call.1} parent=11 // pred_region
          _
        $region28: #{tpu_custom_call.1} parent=11 // pred_fallthru
          _
        // Predicated region
        $region29: #{tpu_custom_call.1} parent=11 // pred_check
          %p223 = pneg %p149
        $region30: #{tpu_custom_call.1} parent=11 // pred_check_branch
          %225 = sbr.rel (%p223) target = $region32
        $region31: #{tpu_custom_call.1} parent=11 // pred_region
          _
        $region32: #{tpu_custom_call.1} parent=11 // pred_fallthru
          _
        // Predicated region
        $region33: #{tpu_custom_call.1} parent=11 // pred_check
          %p226 = pneg %p170
        $region34: #{tpu_custom_call.1} parent=11 // pred_check_branch
          %228 = sbr.rel (%p226) target = $region36
        $region35: #{tpu_custom_call.1} parent=11 // pred_region
          _
        $region36: #{tpu_custom_call.1} parent=11 // pred_fallthru
          _
      $region12: #{tpu_custom_call.1} parent=5 // pred_fallthru
        _
      %p229 = scmp.lt.s32.totalorder %s18, 2
      // Predicated region
      $region37: #{tpu_custom_call.1} parent=5 // pred_check
        %p230 = pneg %p229
      $region38: #{tpu_custom_call.1} parent=5 // pred_check_branch
        %232 = sbr.rel (%p230) target = $region40
      $region39: #{tpu_custom_call.1} parent=5 // pred_region
        // Predicated region
        $region41: #{tpu_custom_call.1} parent=39 // pred_check
          %p233 = pneg %p38
        $region42: #{tpu_custom_call.1} parent=39 // pred_check_branch
          %235 = sbr.rel (%p233) target = $region44
        $region43: #{tpu_custom_call.1} parent=39 // pred_region
          %p236 = scmp.lt.s32.totalorder %s18, 1
          %s237 = scalar_select %p236, %s18, 1
          %s238 = smul.addr %s237, 32
          %s239 = smul.addr %s238, 8
          %s240 = scalar_lea.vmem %s0, %s239
        $region44: #{tpu_custom_call.1} parent=39 // pred_fallthru
          _
      $region40: #{tpu_custom_call.1} parent=5 // pred_fallthru
        _
      %p241 = scmp.le.s32.totalorder 1, %s18
      %p242 = scmp.lt.s32.totalorder %s18, 3
      %p243 = pnand %p241, %p242
      %p244 = pneg %p243
      // Predicated region
      $region45: #{tpu_custom_call.1} parent=5 // pred_check
        _
      $region46: #{tpu_custom_call.1} parent=5 // pred_check_branch
        %246 = sbr.rel (%p243) target = $region48
      $region47: #{tpu_custom_call.1} parent=5 // pred_region
        %s247 = ssub.s32 %s18, 1
        %p248 = scmp.lt.s32.totalorder %s23, 1
        %s249 = scalar_select %p248, %s23, 1
        %s250 = smul.addr %s249, 32
        %s251 = smul.addr %s250, 8
        %s252 = scalar_lea.vmem %s0, %s251
        %p253 = pneg %p44
        %p254 = pneg %p41
        %p255 = pneg %p65
        %p256 = pneg %p62
        %p257 = pneg %p86
        %p258 = pneg %p83
        %p259 = pneg %p107
        %p260 = pneg %p104
        %p261 = pneg %p128
        %p262 = pneg %p125
        %p263 = pneg %p149
        %p264 = pneg %p146
        %p265 = pneg %p170
        %p266 = pneg %p167
        %p267 = pneg %p196
        %p268 = pneg %p193
        %s269 = sand.u32 %s183, 1
        %s270 = scalar_lea.sflag [#allocation6], %s269
        %s271 = sand.u32 %s183, 1
        %s272 = smul.addr %s271, 16
        %s273 = scalar_lea.vmem [#allocation5], %s272
        %p274 = scmp.lt.s32.totalorder %s23, 1
        %s275 = scalar_select %p274, %s23, 1
        %s276 = smul.addr %s275, 32
        %s277 = smul.addr %s276, 8
        %s278 = scalar_lea.vmem %s0, %s277
        %v279 = vld [vmem:[%s278] sm:$0xff]
        %v280 = vld [vmem:[%s278 + $0x8] sm:$0xff]
        %v281 = vld [vmem:[%s278 + $0x10] sm:$0xff]
        %v282 = vld [vmem:[%s278 + $0x18] sm:$0xff]
        %v283 = vld [vmem:[%s278 + $0x20] sm:$0xff]
        %v284 = vld [vmem:[%s278 + $0x28] sm:$0xff]
        %v285 = vld [vmem:[%s278 + $0x30] sm:$0xff]
        %v286 = vld [vmem:[%s278 + $0x38] sm:$0xff]
        %v287 = vld [vmem:[%s278 + $0x40] sm:$0xff]
        %v288 = vld [vmem:[%s278 + $0x48] sm:$0xff]
        %v289 = vld [vmem:[%s278 + $0x50] sm:$0xff]
        %v290 = vld [vmem:[%s278 + $0x58] sm:$0xff]
        %v291 = vld [vmem:[%s278 + $0x60] sm:$0xff]
        %v292 = vld [vmem:[%s278 + $0x68] sm:$0xff]
        %v293 = vld [vmem:[%s278 + $0x70] sm:$0xff]
        %v294 = vld [vmem:[%s278 + $0x78] sm:$0xff]
        %v295 = vld [vmem:[%s278 + $0x80] sm:$0xff]
        %v296 = vld [vmem:[%s278 + $0x88] sm:$0xff]
        %v297 = vld [vmem:[%s278 + $0x90] sm:$0xff]
        %v298 = vld [vmem:[%s278 + $0x98] sm:$0xff]
        %v299 = vld [vmem:[%s278 + $0xa0] sm:$0xff]
        %v300 = vld [vmem:[%s278 + $0xa8] sm:$0xff]
        %v301 = vld [vmem:[%s278 + $0xb0] sm:$0xff]
        %v302 = vld [vmem:[%s278 + $0xb8] sm:$0xff]
        %v303 = vld [vmem:[%s278 + $0xc0] sm:$0xff]
        %v304 = vld [vmem:[%s278 + $0xc8] sm:$0xff]
        %v305 = vld [vmem:[%s278 + $0xd0] sm:$0xff]
        %v306 = vld [vmem:[%s278 + $0xd8] sm:$0xff]
        %v307 = vld [vmem:[%s278 + $0xe0] sm:$0xff]
        %v308 = vld [vmem:[%s278 + $0xe8] sm:$0xff]
        %v309 = vld [vmem:[%s278 + $0xf0] sm:$0xff]
        %v310 = vld [vmem:[%s278 + $0xf8] sm:$0xff]
        %v311 = vld [vmem:[%s1] sm:$0xff]
        %v312 = vld [vmem:[%s1 + $0x8] sm:$0xff]
        %v313 = vld [vmem:[%s1 + $0x10] sm:$0xff]
        %v314 = vld [vmem:[%s1 + $0x18] sm:$0xff]
        %v315 = vld [vmem:[%s1 + $0x20] sm:$0xff]
        %v316 = vld [vmem:[%s1 + $0x28] sm:$0xff]
        %v317 = vld [vmem:[%s1 + $0x30] sm:$0xff]
        %v318 = vld [vmem:[%s1 + $0x38] sm:$0xff]
        %v319 = vld [vmem:[%s1 + $0x40] sm:$0xff]
        %v320 = vld [vmem:[%s1 + $0x48] sm:$0xff]
        %v321 = vld [vmem:[%s1 + $0x50] sm:$0x1]
        %v322 = vld [vmem:[%s2] sm:$0x1]
        %v324 = vlaneseq
        %v325 = vshrl.u32 %v324, 7
        %v326 = vsub.s32 0, %v325
        %v327 = vrot.slane %v322, %v326
        %vm329 = vcmask 662528
        %v331 = vsel %vm329, %v279, 0
        %v334 = vsel %vm329, %v280, 0
        %v337 = vsel %vm329, %v281, 0
        %v340 = vsel %vm329, %v282, 0
        %v343 = vsel %vm329, %v283, 0
        %v346 = vsel %vm329, %v284, 0
        %v349 = vsel %vm329, %v285, 0
        %v352 = vsel %vm329, %v286, 0
        %v355 = vsel %vm329, %v287, 0
        %v358 = vsel %vm329, %v288, 0
        %v361 = vsel %vm329, %v289, 0
        %v364 = vsel %vm329, %v290, 0
        %v367 = vsel %vm329, %v291, 0
        %v370 = vsel %vm329, %v292, 0
        %v373 = vsel %vm329, %v293, 0
        %v376 = vsel %vm329, %v294, 0
        %v379 = vsel %vm329, %v295, 0
        %v382 = vsel %vm329, %v296, 0
        %v385 = vsel %vm329, %v297, 0
        %v388 = vsel %vm329, %v298, 0
        %v391 = vsel %vm329, %v299, 0
        %v394 = vsel %vm329, %v300, 0
        %v397 = vsel %vm329, %v301, 0
        %v400 = vsel %vm329, %v302, 0
        %v403 = vsel %vm329, %v303, 0
        %v406 = vsel %vm329, %v304, 0
        %v409 = vsel %vm329, %v305, 0
        %v412 = vsel %vm329, %v306, 0
        %v415 = vsel %vm329, %v307, 0
        %v418 = vsel %vm329, %v308, 0
        %v421 = vsel %vm329, %v309, 0
        %v424 = vsel %vm329, %v310, 0
        %vm426 = vcmask 1040384
        %v428 = vsel %vm426, %v321, 0
        %430 = vmatprep.subr.mxu0 0.0
        %431 = vmatpush1.msra.mxu0 0.0
        %432 = vmatprep.subr.mxu0 0.0
        %433 = vmatpush1.msra.mxu0 0.0
        %434 = vmatprep.subr.mxu0 0.0
        %435 = vmatpush1.msra.mxu0 0.0
        %436 = vmatprep.subr.mxu0 0.0
        %437 = vmatpush1.msra.mxu0 0.0
        %438 = vmatprep.subr.mxu0 0.0
        %439 = vmatpush1.msra.mxu0 0.0
        %440 = vmatprep.subr.mxu0 0.0
        %441 = vmatpush1.msra.mxu0 %v428
        %442 = vmatprep.subr.mxu0 0.0
        %443 = vmatpush1.msra.mxu0 %v320
        %444 = vmatprep.subr.mxu0 0.0
        %445 = vmatpush1.msra.mxu0 %v319
        %446 = vmatprep.subr.mxu0 0.0
        %447 = vmatpush1.msra.mxu0 %v318
        %448 = vmatprep.subr.mxu0 0.0
        %449 = vmatpush1.msra.mxu0 %v317
        %450 = vmatprep.subr.mxu0 0.0
        %451 = vmatpush1.msra.mxu0 %v316
        %452 = vmatprep.subr.mxu0 0.0
        %453 = vmatpush1.msra.mxu0 %v315
        %454 = vmatprep.subr.mxu0 0.0
        %455 = vmatpush1.msra.mxu0 %v314
        %456 = vmatprep.subr.mxu0 0.0
        %457 = vmatpush1.msra.mxu0 %v313
        %458 = vmatprep.subr.mxu0 0.0
        %459 = vmatpush1.msra.mxu0 %v312
        %460 = vmatprep.subr.mxu0 0.0
        %461 = vmatpush1.msra.mxu0 %v311
        %462 = vmatprep.subr.mxu0 0.0
        %463 = vmatpush2.msra.mxu0 0.0
        %464 = vmatprep.subr.mxu0 0.0
        %465 = vmatpush2.msra.mxu0 0.0
        %466 = vmatprep.subr.mxu0 0.0
        %467 = vmatpush2.msra.mxu0 0.0
        %468 = vmatprep.subr.mxu0 0.0
        %469 = vmatpush2.msra.mxu0 0.0
        %470 = vmatprep.subr.mxu0 0.0
        %471 = vmatpush2.msra.mxu0 0.0
        %472 = vmatprep.subr.mxu0 0.0
        %473 = vmatpush2.msra.mxu0 0.0
        %474 = vmatprep.subr.mxu0 0.0
        %475 = vmatpush2.msra.mxu0 0.0
        %476 = vmatprep.subr.mxu0 0.0
        %477 = vmatpush2.msra.mxu0 0.0
        %478 = vmatprep.subr.mxu0 0.0
        %479 = vmatpush2.msra.mxu0 0.0
        %480 = vmatprep.subr.mxu0 0.0
        %481 = vmatpush2.msra.mxu0 0.0
        %482 = vmatprep.subr.mxu0 0.0
        %483 = vmatpush2.msra.mxu0 0.0
        %484 = vmatprep.subr.mxu0 0.0
        %485 = vmatpush2.msra.mxu0 0.0
        %486 = vmatprep.subr.mxu0 0.0
        %487 = vmatpush2.msra.mxu0 0.0
        %488 = vmatprep.subr.mxu0 0.0
        %489 = vmatpush2.msra.mxu0 0.0
        %490 = vmatprep.subr.mxu0 0.0
        %491 = vmatpush2.msra.mxu0 0.0
        %492 = vmatprep.subr.mxu0 0.0
        %493 = vmatpush2.msra.mxu0 0.0
        %494 = vmatprep.mubr.f32.mxu0 0.0
        %495 = vmatmul.mubr.f32.gmra.mxu0 %v331
        %v496 = vpop.f32.mrf.mxu0
        %v497 = vadd.f32 %v327, %v496
        %v498 = vpop.f32.mrf.mxu0
        %499 = vmatprep.mubr.f32.mxu0 0.0
        %500 = vmatmul.mubr.f32.gmra.mxu0 %v334
        %v501 = vpop.f32.mrf.mxu0
        %v502 = vadd.f32 %v327, %v501
        %v503 = vpop.f32.mrf.mxu0
        %504 = vmatprep.mubr.f32.mxu0 0.0
        %505 = vmatmul.mubr.f32.gmra.mxu0 %v337
        %v506 = vpop.f32.mrf.mxu0
        %v507 = vadd.f32 %v327, %v506
        %v508 = vpop.f32.mrf.mxu0
        %509 = vmatprep.mubr.f32.mxu0 0.0
        %510 = vmatmul.mubr.f32.gmra.mxu0 %v340
        %v511 = vpop.f32.mrf.mxu0
        %v512 = vadd.f32 %v327, %v511
        %v513 = vpop.f32.mrf.mxu0
        %514 = vmatprep.mubr.f32.mxu0 0.0
        %515 = vmatmul.mubr.f32.gmra.mxu0 %v343
        %v516 = vpop.f32.mrf.mxu0
        %v517 = vadd.f32 %v327, %v516
        %v518 = vpop.f32.mrf.mxu0
        %519 = vmatprep.mubr.f32.mxu0 0.0
        %520 = vmatmul.mubr.f32.gmra.mxu0 %v346
        %v521 = vpop.f32.mrf.mxu0
        %v522 = vadd.f32 %v327, %v521
        %v523 = vpop.f32.mrf.mxu0
        %524 = vmatprep.mubr.f32.mxu0 0.0
        %525 = vmatmul.mubr.f32.gmra.mxu0 %v349
        %v526 = vpop.f32.mrf.mxu0
        %v527 = vadd.f32 %v327, %v526
        %v528 = vpop.f32.mrf.mxu0
        %529 = vmatprep.mubr.f32.mxu0 0.0
        %530 = vmatmul.mubr.f32.gmra.mxu0 %v352
        %v531 = vpop.f32.mrf.mxu0
        %v532 = vadd.f32 %v327, %v531
        %v533 = vpop.f32.mrf.mxu0
        %534 = vmatprep.mubr.f32.mxu0 0.0
        %535 = vmatmul.mubr.f32.gmra.mxu0 %v355
        %v536 = vpop.f32.mrf.mxu0
        %v537 = vadd.f32 %v327, %v536
        %v538 = vpop.f32.mrf.mxu0
        %539 = vmatprep.mubr.f32.mxu0 0.0
        %540 = vmatmul.mubr.f32.gmra.mxu0 %v358
        %v541 = vpop.f32.mrf.mxu0
        %v542 = vadd.f32 %v327, %v541
        %v543 = vpop.f32.mrf.mxu0
        %544 = vmatprep.mubr.f32.mxu0 0.0
        %545 = vmatmul.mubr.f32.gmra.mxu0 %v361
        %v546 = vpop.f32.mrf.mxu0
        %v547 = vadd.f32 %v327, %v546
        %v548 = vpop.f32.mrf.mxu0
        %549 = vmatprep.mubr.f32.mxu0 0.0
        %550 = vmatmul.mubr.f32.gmra.mxu0 %v364
        %v551 = vpop.f32.mrf.mxu0
        %v552 = vadd.f32 %v327, %v551
        %v553 = vpop.f32.mrf.mxu0
        %554 = vmatprep.mubr.f32.mxu0 0.0
        %555 = vmatmul.mubr.f32.gmra.mxu0 %v367
        %v556 = vpop.f32.mrf.mxu0
        %v557 = vadd.f32 %v327, %v556
        %v558 = vpop.f32.mrf.mxu0
        %559 = vmatprep.mubr.f32.mxu0 0.0
        %560 = vmatmul.mubr.f32.gmra.mxu0 %v370
        %v561 = vpop.f32.mrf.mxu0
        %v562 = vadd.f32 %v327, %v561
        %v563 = vpop.f32.mrf.mxu0
        %564 = vmatprep.mubr.f32.mxu0 0.0
        %565 = vmatmul.mubr.f32.gmra.mxu0 %v373
        %v566 = vpop.f32.mrf.mxu0
        %v567 = vadd.f32 %v327, %v566
        %v568 = vpop.f32.mrf.mxu0
        %569 = vmatprep.mubr.f32.mxu0 0.0
        %570 = vmatmul.mubr.f32.gmra.mxu0 %v376
        %v571 = vpop.f32.mrf.mxu0
        %v572 = vadd.f32 %v327, %v571
        %v573 = vpop.f32.mrf.mxu0
        %574 = vmatprep.mubr.f32.mxu0 0.0
        %575 = vmatmul.mubr.f32.gmra.mxu0 %v379
        %v576 = vpop.f32.mrf.mxu0
        %v577 = vadd.f32 %v327, %v576
        %v578 = vpop.f32.mrf.mxu0
        %579 = vmatprep.mubr.f32.mxu0 0.0
        %580 = vmatmul.mubr.f32.gmra.mxu0 %v382
        %v581 = vpop.f32.mrf.mxu0
        %v582 = vadd.f32 %v327, %v581
        %v583 = vpop.f32.mrf.mxu0
        %584 = vmatprep.mubr.f32.mxu0 0.0
        %585 = vmatmul.mubr.f32.gmra.mxu0 %v385
        %v586 = vpop.f32.mrf.mxu0
        %v587 = vadd.f32 %v327, %v586
        %v588 = vpop.f32.mrf.mxu0
        %589 = vmatprep.mubr.f32.mxu0 0.0
        %590 = vmatmul.mubr.f32.gmra.mxu0 %v388
        %v591 = vpop.f32.mrf.mxu0
        %v592 = vadd.f32 %v327, %v591
        %v593 = vpop.f32.mrf.mxu0
        %594 = vmatprep.mubr.f32.mxu0 0.0
        %595 = vmatmul.mubr.f32.gmra.mxu0 %v391
        %v596 = vpop.f32.mrf.mxu0
        %v597 = vadd.f32 %v327, %v596
        %v598 = vpop.f32.mrf.mxu0
        %599 = vmatprep.mubr.f32.mxu0 0.0
        %600 = vmatmul.mubr.f32.gmra.mxu0 %v394
        %v601 = vpop.f32.mrf.mxu0
        %v602 = vadd.f32 %v327, %v601
        %v603 = vpop.f32.mrf.mxu0
        %604 = vmatprep.mubr.f32.mxu0 0.0
        %605 = vmatmul.mubr.f32.gmra.mxu0 %v397
        %v606 = vpop.f32.mrf.mxu0
        %v607 = vadd.f32 %v327, %v606
        %v608 = vpop.f32.mrf.mxu0
        %609 = vmatprep.mubr.f32.mxu0 0.0
        %610 = vmatmul.mubr.f32.gmra.mxu0 %v400
        %v611 = vpop.f32.mrf.mxu0
        %v612 = vadd.f32 %v327, %v611
        %v613 = vpop.f32.mrf.mxu0
        %614 = vmatprep.mubr.f32.mxu0 0.0
        %615 = vmatmul.mubr.f32.gmra.mxu0 %v403
        %v616 = vpop.f32.mrf.mxu0
        %v617 = vadd.f32 %v327, %v616
        %v618 = vpop.f32.mrf.mxu0
        %619 = vmatprep.mubr.f32.mxu0 0.0
        %620 = vmatmul.mubr.f32.gmra.mxu0 %v406
        %v621 = vpop.f32.mrf.mxu0
        %v622 = vadd.f32 %v327, %v621
        %v623 = vpop.f32.mrf.mxu0
        %624 = vmatprep.mubr.f32.mxu0 0.0
        %625 = vmatmul.mubr.f32.gmra.mxu0 %v409
        %v626 = vpop.f32.mrf.mxu0
        %v627 = vadd.f32 %v327, %v626
        %v628 = vpop.f32.mrf.mxu0
        %629 = vmatprep.mubr.f32.mxu0 0.0
        %630 = vmatmul.mubr.f32.gmra.mxu0 %v412
        %v631 = vpop.f32.mrf.mxu0
        %v632 = vadd.f32 %v327, %v631
        %v633 = vpop.f32.mrf.mxu0
        %634 = vmatprep.mubr.f32.mxu0 0.0
        %635 = vmatmul.mubr.f32.gmra.mxu0 %v415
        %v636 = vpop.f32.mrf.mxu0
        %v637 = vadd.f32 %v327, %v636
        %v638 = vpop.f32.mrf.mxu0
        %639 = vmatprep.mubr.f32.mxu0 0.0
        %640 = vmatmul.mubr.f32.gmra.mxu0 %v418
        %v641 = vpop.f32.mrf.mxu0
        %v642 = vadd.f32 %v327, %v641
        %v643 = vpop.f32.mrf.mxu0
        %644 = vmatprep.mubr.f32.mxu0 0.0
        %645 = vmatmul.mubr.f32.gmra.mxu0 %v421
        %v646 = vpop.f32.mrf.mxu0
        %v647 = vadd.f32 %v327, %v646
        %v648 = vpop.f32.mrf.mxu0
        %649 = vmatprep.mubr.f32.mxu0 0.0
        %650 = vmatmul.mubr.f32.gmra.mxu0 %v424
        %v651 = vpop.f32.mrf.mxu0
        %v652 = vadd.f32 %v327, %v651
        %v653 = vpop.f32.mrf.mxu0
        %654 = vdwg.mxu0
        %v655 = vmax.f32 %v497, 0.0
        %v656 = vmax.f32 %v502, 0.0
        %v657 = vmax.f32 %v507, 0.0
        %v658 = vmax.f32 %v512, 0.0
        %v659 = vmax.f32 %v517, 0.0
        %v660 = vmax.f32 %v522, 0.0
        %v661 = vmax.f32 %v527, 0.0
        %v662 = vmax.f32 %v532, 0.0
        %v663 = vmax.f32 %v537, 0.0
        %v664 = vmax.f32 %v542, 0.0
        %v665 = vmax.f32 %v547, 0.0
        %v666 = vmax.f32 %v552, 0.0
        %v667 = vmax.f32 %v557, 0.0
        %v668 = vmax.f32 %v562, 0.0
        %v669 = vmax.f32 %v567, 0.0
        %v670 = vmax.f32 %v572, 0.0
        %v671 = vmax.f32 %v577, 0.0
        %v672 = vmax.f32 %v582, 0.0
        %v673 = vmax.f32 %v587, 0.0
        %v674 = vmax.f32 %v592, 0.0
        %v675 = vmax.f32 %v597, 0.0
        %v676 = vmax.f32 %v602, 0.0
        %v677 = vmax.f32 %v607, 0.0
        %v678 = vmax.f32 %v612, 0.0
        %v679 = vmax.f32 %v617, 0.0
        %v680 = vmax.f32 %v622, 0.0
        %v681 = vmax.f32 %v627, 0.0
        %v682 = vmax.f32 %v632, 0.0
        %v683 = vmax.f32 %v637, 0.0
        %v684 = vmax.f32 %v642, 0.0
        %v685 = vmax.f32 %v647, 0.0
        %v686 = vmax.f32 %v652, 0.0
        %vm687 = vcmask 523264
        %688 = vst.msk [vmem:[#allocation2] sm:$0xff] %vm687, 0.0
        %689 = vst.msk [vmem:[#allocation2 + $0x8] sm:$0xff] %vm687, 0.0
        %vm690 = vcmask 517120
        %691 = vst.msk [vmem:[#allocation2 + $0x10] sm:$0x3] %vm690, 0.0
        %s692 = scalar_lea.vmem [#allocation2], 408
        %693 = vst.msk [vmem:[%s692] sm:$0xff] %vm687, 0.0
        %694 = vst.msk [vmem:[%s692 + $0x8] sm:$0xff] %vm687, 0.0
        %695 = vst.msk [vmem:[%s692 + $0x10] sm:$0x3] %vm690, 0.0
        %vm696 = vcmask 516096
        %697 = vst.msk [vmem:[#allocation2] sm:$0x1] %vm696, 0.0
        %698 = vst.msk [vmem:[#allocation2 + $0x18] sm:$0x1] %vm696, 0.0
        %699 = vst.msk [vmem:[#allocation2 + $0x30] sm:$0x1] %vm696, 0.0
        %700 = vst.msk [vmem:[#allocation2 + $0x48] sm:$0x1] %vm696, 0.0
        %701 = vst.msk [vmem:[#allocation2 + $0x60] sm:$0x1] %vm696, 0.0
        %702 = vst.msk [vmem:[#allocation2 + $0x78] sm:$0x1] %vm696, 0.0
        %703 = vst.msk [vmem:[#allocation2 + $0x90] sm:$0x1] %vm696, 0.0
        %704 = vst.msk [vmem:[#allocation2 + $0xa8] sm:$0x1] %vm696, 0.0
        %705 = vst.msk [vmem:[#allocation2 + $0xc0] sm:$0x1] %vm696, 0.0
        %706 = vst.msk [vmem:[#allocation2 + $0xd8] sm:$0x1] %vm696, 0.0
        %707 = vst.msk [vmem:[#allocation2 + $0xf0] sm:$0x1] %vm696, 0.0
        %708 = vst.msk [vmem:[#allocation2 + $0x108] sm:$0x1] %vm696, 0.0
        %709 = vst.msk [vmem:[#allocation2 + $0x120] sm:$0x1] %vm696, 0.0
        %710 = vst.msk [vmem:[#allocation2 + $0x138] sm:$0x1] %vm696, 0.0
        %711 = vst.msk [vmem:[#allocation2 + $0x150] sm:$0x1] %vm696, 0.0
        %712 = vst.msk [vmem:[#allocation2 + $0x168] sm:$0x1] %vm696, 0.0
        %713 = vst.msk [vmem:[#allocation2 + $0x180] sm:$0x1] %vm696, 0.0
        %714 = vst.msk [vmem:[#allocation2 + $0x198] sm:$0x1] %vm696, 0.0
        %715 = vst.msk [vmem:[#allocation2 + $0x11] sm:$0x1] %vm696, 0.0
        %716 = vst.msk [vmem:[#allocation2 + $0x29] sm:$0x1] %vm696, 0.0
        %717 = vst.msk [vmem:[#allocation2 + $0x41] sm:$0x1] %vm696, 0.0
        %718 = vst.msk [vmem:[#allocation2 + $0x59] sm:$0x1] %vm696, 0.0
        %719 = vst.msk [vmem:[#allocation2 + $0x71] sm:$0x1] %vm696, 0.0
        %720 = vst.msk [vmem:[#allocation2 + $0x89] sm:$0x1] %vm696, 0.0
        %721 = vst.msk [vmem:[#allocation2 + $0xa1] sm:$0x1] %vm696, 0.0
        %722 = vst.msk [vmem:[#allocation2 + $0xb9] sm:$0x1] %vm696, 0.0
        %723 = vst.msk [vmem:[#allocation2 + $0xd1] sm:$0x1] %vm696, 0.0
        %724 = vst.msk [vmem:[#allocation2 + $0xe9] sm:$0x1] %vm696, 0.0
        %725 = vst.msk [vmem:[#allocation2 + $0x101] sm:$0x1] %vm696, 0.0
        %726 = vst.msk [vmem:[#allocation2 + $0x119] sm:$0x1] %vm696, 0.0
        %727 = vst.msk [vmem:[#allocation2 + $0x131] sm:$0x1] %vm696, 0.0
        %728 = vst.msk [vmem:[#allocation2 + $0x149] sm:$0x1] %vm696, 0.0
        %729 = vst.msk [vmem:[#allocation2 + $0x161] sm:$0x1] %vm696, 0.0
        %730 = vst.msk [vmem:[#allocation2 + $0x179] sm:$0x1] %vm696, 0.0
        %731 = vst.msk [vmem:[#allocation2 + $0x191] sm:$0x1] %vm696, 0.0
        %732 = vst.msk [vmem:[#allocation2 + $0x1a9] sm:$0x1] %vm696, 0.0
        %s733 = scalar_lea.vmem [#allocation2], 24
        %734 = vst.msk [vmem:[%s733 + $0x1] sm:$0xff] %vm687, %v655
        %735 = vst.msk [vmem:[%s733 + $0x9] sm:$0xff] %vm687, %v656
        %736 = vst.msk [vmem:[%s733 + $0x19] sm:$0xff] %vm687, %v657
        %737 = vst.msk [vmem:[%s733 + $0x21] sm:$0xff] %vm687, %v658
        %738 = vst.msk [vmem:[%s733 + $0x31] sm:$0xff] %vm687, %v659
        %739 = vst.msk [vmem:[%s733 + $0x39] sm:$0xff] %vm687, %v660
        %740 = vst.msk [vmem:[%s733 + $0x49] sm:$0xff] %vm687, %v661
        %741 = vst.msk [vmem:[%s733 + $0x51] sm:$0xff] %vm687, %v662
        %742 = vst.msk [vmem:[%s733 + $0x61] sm:$0xff] %vm687, %v663
        %743 = vst.msk [vmem:[%s733 + $0x69] sm:$0xff] %vm687, %v664
        %744 = vst.msk [vmem:[%s733 + $0x79] sm:$0xff] %vm687, %v665
        %745 = vst.msk [vmem:[%s733 + $0x81] sm:$0xff] %vm687, %v666
        %746 = vst.msk [vmem:[%s733 + $0x91] sm:$0xff] %vm687, %v667
        %747 = vst.msk [vmem:[%s733 + $0x99] sm:$0xff] %vm687, %v668
        %748 = vst.msk [vmem:[%s733 + $0xa9] sm:$0xff] %vm687, %v669
        %749 = vst.msk [vmem:[%s733 + $0xb1] sm:$0xff] %vm687, %v670
        %750 = vst.msk [vmem:[%s733 + $0xc1] sm:$0xff] %vm687, %v671
        %751 = vst.msk [vmem:[%s733 + $0xc9] sm:$0xff] %vm687, %v672
        %752 = vst.msk [vmem:[%s733 + $0xd9] sm:$0xff] %vm687, %v673
        %753 = vst.msk [vmem:[%s733 + $0xe1] sm:$0xff] %vm687, %v674
        %754 = vst.msk [vmem:[%s733 + $0xf1] sm:$0xff] %vm687, %v675
        %755 = vst.msk [vmem:[%s733 + $0xf9] sm:$0xff] %vm687, %v676
        %756 = vst.msk [vmem:[%s733 + $0x109] sm:$0xff] %vm687, %v677
        %757 = vst.msk [vmem:[%s733 + $0x111] sm:$0xff] %vm687, %v678
        %758 = vst.msk [vmem:[%s733 + $0x121] sm:$0xff] %vm687, %v679
        %759 = vst.msk [vmem:[%s733 + $0x129] sm:$0xff] %vm687, %v680
        %760 = vst.msk [vmem:[%s733 + $0x139] sm:$0xff] %vm687, %v681
        %761 = vst.msk [vmem:[%s733 + $0x141] sm:$0xff] %vm687, %v682
        %762 = vst.msk [vmem:[%s733 + $0x151] sm:$0xff] %vm687, %v683
        %763 = vst.msk [vmem:[%s733 + $0x159] sm:$0xff] %vm687, %v684
        %764 = vst.msk [vmem:[%s733 + $0x169] sm:$0xff] %vm687, %v685
        %765 = vst.msk [vmem:[%s733 + $0x171] sm:$0xff] %vm687, %v686
        %v766 = vld [vmem:[#allocation2] sm:$0xff]
        %v767 = vld [vmem:[#allocation2 + $0x8] sm:$0xff]
        %v768 = vld [vmem:[#allocation2 + $0x18] sm:$0xff]
        %v769 = vld [vmem:[#allocation2 + $0x20] sm:$0xff]
        %v770 = vld [vmem:[#allocation2 + $0x30] sm:$0xff]
        %v771 = vld [vmem:[#allocation2 + $0x38] sm:$0xff]
        %v772 = vld [vmem:[#allocation2 + $0x48] sm:$0xff]
        %v773 = vld [vmem:[#allocation2 + $0x50] sm:$0xff]
        %v774 = vld [vmem:[#allocation2 + $0x60] sm:$0xff]
        %v775 = vld [vmem:[#allocation2 + $0x68] sm:$0xff]
        %v776 = vld [vmem:[#allocation2 + $0x78] sm:$0xff]
        %v777 = vld [vmem:[#allocation2 + $0x80] sm:$0xff]
        %v778 = vld [vmem:[#allocation2 + $0x90] sm:$0xff]
        %v779 = vld [vmem:[#allocation2 + $0x98] sm:$0xff]
        %v780 = vld [vmem:[#allocation2 + $0xa8] sm:$0xff]
        %v781 = vld [vmem:[#allocation2 + $0xb0] sm:$0xff]
        %v782 = vld [vmem:[#allocation2 + $0xc0] sm:$0xff]
        %v783 = vld [vmem:[#allocation2 + $0xc8] sm:$0xff]
        %v784 = vld [vmem:[#allocation2 + $0xd8] sm:$0xff]
        %v785 = vld [vmem:[#allocation2 + $0xe0] sm:$0xff]
        %v786 = vld [vmem:[#allocation2 + $0xf0] sm:$0xff]
        %v787 = vld [vmem:[#allocation2 + $0xf8] sm:$0xff]
        %v788 = vld [vmem:[#allocation2 + $0x108] sm:$0xff]
        %v789 = vld [vmem:[#allocation2 + $0x110] sm:$0xff]
        %v790 = vld [vmem:[#allocation2 + $0x120] sm:$0xff]
        %v791 = vld [vmem:[#allocation2 + $0x128] sm:$0xff]
        %v792 = vld [vmem:[#allocation2 + $0x138] sm:$0xff]
        %v793 = vld [vmem:[#allocation2 + $0x140] sm:$0xff]
        %v794 = vld [vmem:[#allocation2 + $0x150] sm:$0xff]
        %v795 = vld [vmem:[#allocation2 + $0x158] sm:$0xff]
        %v796 = vld [vmem:[#allocation2 + $0x168] sm:$0xff]
        %v797 = vld [vmem:[#allocation2 + $0x170] sm:$0xff]
        %v798 = vld [vmem:[%s3] sm:$0xff]
        %v799 = vld [vmem:[%s3 + $0x8] sm:$0xff]
        %v800 = vld [vmem:[%s3 + $0x10] sm:$0xff]
        %v801 = vld [vmem:[%s3 + $0x18] sm:$0xff]
        %v802 = vld [vmem:[%s3 + $0x20] sm:$0xff]
        %v803 = vld [vmem:[%s3 + $0x28] sm:$0xff]
        %v804 = vld [vmem:[%s3 + $0x30] sm:$0xff]
        %v805 = vld [vmem:[%s3 + $0x38] sm:$0xff]
        %v806 = vld [vmem:[#allocation2 + $0x1] sm:$0xff]
        %v807 = vld [vmem:[#allocation2 + $0x9] sm:$0xff]
        %v808 = vld [vmem:[#allocation2 + $0x19] sm:$0xff]
        %v809 = vld [vmem:[#allocation2 + $0x21] sm:$0xff]
        %v810 = vld [vmem:[#allocation2 + $0x31] sm:$0xff]
        %v811 = vld [vmem:[#allocation2 + $0x39] sm:$0xff]
        %v812 = vld [vmem:[#allocation2 + $0x49] sm:$0xff]
        %v813 = vld [vmem:[#allocation2 + $0x51] sm:$0xff]
        %v814 = vld [vmem:[#allocation2 + $0x61] sm:$0xff]
        %v815 = vld [vmem:[#allocation2 + $0x69] sm:$0xff]
        %v816 = vld [vmem:[#allocation2 + $0x79] sm:$0xff]
        %v817 = vld [vmem:[#allocation2 + $0x81] sm:$0xff]
        %v818 = vld [vmem:[#allocation2 + $0x91] sm:$0xff]
        %v819 = vld [vmem:[#allocation2 + $0x99] sm:$0xff]
        %v820 = vld [vmem:[#allocation2 + $0xa9] sm:$0xff]
        %v821 = vld [vmem:[#allocation2 + $0xb1] sm:$0xff]
        %v822 = vld [vmem:[#allocation2 + $0xc1] sm:$0xff]
        %v823 = vld [vmem:[#allocation2 + $0xc9] sm:$0xff]
        %v824 = vld [vmem:[#allocation2 + $0xd9] sm:$0xff]
        %v825 = vld [vmem:[#allocation2 + $0xe1] sm:$0xff]
        %v826 = vld [vmem:[#allocation2 + $0xf1] sm:$0xff]
        %v827 = vld [vmem:[#allocation2 + $0xf9] sm:$0xff]
        %v828 = vld [vmem:[#allocation2 + $0x109] sm:$0xff]
        %v829 = vld [vmem:[#allocation2 + $0x111] sm:$0xff]
        %v830 = vld [vmem:[#allocation2 + $0x121] sm:$0xff]
        %v831 = vld [vmem:[#allocation2 + $0x129] sm:$0xff]
        %v832 = vld [vmem:[#allocation2 + $0x139] sm:$0xff]
        %v833 = vld [vmem:[#allocation2 + $0x141] sm:$0xff]
        %v834 = vld [vmem:[#allocation2 + $0x151] sm:$0xff]
        %v835 = vld [vmem:[#allocation2 + $0x159] sm:$0xff]
        %v836 = vld [vmem:[#allocation2 + $0x169] sm:$0xff]
        %v837 = vld [vmem:[#allocation2 + $0x171] sm:$0xff]
        %s838 = scalar_lea.vmem %s3, 64
        %v839 = vld [vmem:[%s838] sm:$0xff]
        %v840 = vld [vmem:[%s838 + $0x8] sm:$0xff]
        %v841 = vld [vmem:[%s838 + $0x10] sm:$0xff]
        %v842 = vld [vmem:[%s838 + $0x18] sm:$0xff]
        %v843 = vld [vmem:[%s838 + $0x20] sm:$0xff]
        %v844 = vld [vmem:[%s838 + $0x28] sm:$0xff]
        %v845 = vld [vmem:[%s838 + $0x30] sm:$0xff]
        %v846 = vld [vmem:[%s838 + $0x38] sm:$0xff]
        %v848 = vsel %vm687, %v806, 0
        %v851 = vsel %vm687, %v807, 0
        %v854 = vsel %vm687, %v808, 0
        %v857 = vsel %vm687, %v809, 0
        %v860 = vsel %vm687, %v810, 0
        %v863 = vsel %vm687, %v811, 0
        %v866 = vsel %vm687, %v812, 0
        %v869 = vsel %vm687, %v813, 0
        %v872 = vsel %vm687, %v814, 0
        %v875 = vsel %vm687, %v815, 0
        %v878 = vsel %vm687, %v816, 0
        %v881 = vsel %vm687, %v817, 0
        %v884 = vsel %vm687, %v818, 0
        %v887 = vsel %vm687, %v819, 0
        %v890 = vsel %vm687, %v820, 0
        %v893 = vsel %vm687, %v821, 0
        %v896 = vsel %vm687, %v822, 0
        %v899 = vsel %vm687, %v823, 0
        %v902 = vsel %vm687, %v824, 0
        %v905 = vsel %vm687, %v825, 0
        %v908 = vsel %vm687, %v826, 0
        %v911 = vsel %vm687, %v827, 0
        %v914 = vsel %vm687, %v828, 0
        %v917 = vsel %vm687, %v829, 0
        %v920 = vsel %vm687, %v830, 0
        %v923 = vsel %vm687, %v831, 0
        %v926 = vsel %vm687, %v832, 0
        %v929 = vsel %vm687, %v833, 0
        %v932 = vsel %vm687, %v834, 0
        %v935 = vsel %vm687, %v835, 0
        %v938 = vsel %vm687, %v836, 0
        %v941 = vsel %vm687, %v837, 0
        %943 = vmatprep.subr.mxu0 0.0
        %944 = vmatpush1.msra.mxu0 0.0
        %945 = vmatprep.subr.mxu0 0.0
        %946 = vmatpush1.msra.mxu0 0.0
        %947 = vmatprep.subr.mxu0 0.0
        %948 = vmatpush1.msra.mxu0 0.0
        %949 = vmatprep.subr.mxu0 0.0
        %950 = vmatpush1.msra.mxu0 0.0
        %951 = vmatprep.subr.mxu0 0.0
        %952 = vmatpush1.msra.mxu0 0.0
        %953 = vmatprep.subr.mxu0 0.0
        %954 = vmatpush1.msra.mxu0 0.0
        %955 = vmatprep.subr.mxu0 0.0
        %956 = vmatpush1.msra.mxu0 0.0
        %957 = vmatprep.subr.mxu0 0.0
        %958 = vmatpush1.msra.mxu0 0.0
        %959 = vmatprep.subr.mxu0 0.0
        %960 = vmatpush1.msra.mxu0 %v846
        %961 = vmatprep.subr.mxu0 0.0
        %962 = vmatpush1.msra.mxu0 %v845
        %963 = vmatprep.subr.mxu0 0.0
        %964 = vmatpush1.msra.mxu0 %v844
        %965 = vmatprep.subr.mxu0 0.0
        %966 = vmatpush1.msra.mxu0 %v843
        %967 = vmatprep.subr.mxu0 0.0
        %968 = vmatpush1.msra.mxu0 %v842
        %969 = vmatprep.subr.mxu0 0.0
        %970 = vmatpush1.msra.mxu0 %v841
        %971 = vmatprep.subr.mxu0 0.0
        %972 = vmatpush1.msra.mxu0 %v840
        %973 = vmatprep.subr.mxu0 0.0
        %974 = vmatpush1.msra.mxu0 %v839
        %975 = vmatprep.subr.mxu0 0.0
        %976 = vmatpush2.msra.mxu0 0.0
        %977 = vmatprep.subr.mxu0 0.0
        %978 = vmatpush2.msra.mxu0 0.0
        %979 = vmatprep.subr.mxu0 0.0
        %980 = vmatpush2.msra.mxu0 0.0
        %981 = vmatprep.subr.mxu0 0.0
        %982 = vmatpush2.msra.mxu0 0.0
        %983 = vmatprep.subr.mxu0 0.0
        %984 = vmatpush2.msra.mxu0 0.0
        %985 = vmatprep.subr.mxu0 0.0
        %986 = vmatpush2.msra.mxu0 0.0
        %987 = vmatprep.subr.mxu0 0.0
        %988 = vmatpush2.msra.mxu0 0.0
        %989 = vmatprep.subr.mxu0 0.0
        %990 = vmatpush2.msra.mxu0 0.0
        %991 = vmatprep.subr.mxu0 0.0
        %992 = vmatpush2.msra.mxu0 0.0
        %993 = vmatprep.subr.mxu0 0.0
        %994 = vmatpush2.msra.mxu0 0.0
        %995 = vmatprep.subr.mxu0 0.0
        %996 = vmatpush2.msra.mxu0 0.0
        %997 = vmatprep.subr.mxu0 0.0
        %998 = vmatpush2.msra.mxu0 0.0
        %999 = vmatprep.subr.mxu0 0.0
        %1000 = vmatpush2.msra.mxu0 0.0
        %1001 = vmatprep.subr.mxu0 0.0
        %1002 = vmatpush2.msra.mxu0 0.0
        %1003 = vmatprep.subr.mxu0 0.0
        %1004 = vmatpush2.msra.mxu0 0.0
        %1005 = vmatprep.subr.mxu0 0.0
        %1006 = vmatpush2.msra.mxu0 0.0
        %1007 = vmatprep.mubr.f32.mxu0 0.0
        %1008 = vmatmul.mubr.f32.gmra.mxu0 %v848
        %v1009 = vpop.f32.mrf.mxu0
        %v1010 = vadd.f32 0.0, %v1009
        %v1011 = vpop.f32.mrf.mxu0
        %1012 = vmatprep.mubr.f32.mxu0 0.0
        %1013 = vmatmul.mubr.f32.gmra.mxu0 %v851
        %v1014 = vpop.f32.mrf.mxu0
        %v1015 = vadd.f32 0.0, %v1014
        %v1016 = vpop.f32.mrf.mxu0
        %1017 = vmatprep.mubr.f32.mxu0 0.0
        %1018 = vmatmul.mubr.f32.gmra.mxu0 %v854
        %v1019 = vpop.f32.mrf.mxu0
        %v1020 = vadd.f32 0.0, %v1019
        %v1021 = vpop.f32.mrf.mxu0
        %1022 = vmatprep.mubr.f32.mxu0 0.0
        %1023 = vmatmul.mubr.f32.gmra.mxu0 %v857
        %v1024 = vpop.f32.mrf.mxu0
        %v1025 = vadd.f32 0.0, %v1024
        %v1026 = vpop.f32.mrf.mxu0
        %1027 = vmatprep.mubr.f32.mxu0 0.0
        %1028 = vmatmul.mubr.f32.gmra.mxu0 %v860
        %v1029 = vpop.f32.mrf.mxu0
        %v1030 = vadd.f32 0.0, %v1029
        %v1031 = vpop.f32.mrf.mxu0
        %1032 = vmatprep.mubr.f32.mxu0 0.0
        %1033 = vmatmul.mubr.f32.gmra.mxu0 %v863
        %v1034 = vpop.f32.mrf.mxu0
        %v1035 = vadd.f32 0.0, %v1034
        %v1036 = vpop.f32.mrf.mxu0
        %1037 = vmatprep.mubr.f32.mxu0 0.0
        %1038 = vmatmul.mubr.f32.gmra.mxu0 %v866
        %v1039 = vpop.f32.mrf.mxu0
        %v1040 = vadd.f32 0.0, %v1039
        %v1041 = vpop.f32.mrf.mxu0
        %1042 = vmatprep.mubr.f32.mxu0 0.0
        %1043 = vmatmul.mubr.f32.gmra.mxu0 %v869
        %v1044 = vpop.f32.mrf.mxu0
        %v1045 = vadd.f32 0.0, %v1044
        %v1046 = vpop.f32.mrf.mxu0
        %1047 = vmatprep.mubr.f32.mxu0 0.0
        %1048 = vmatmul.mubr.f32.gmra.mxu0 %v872
        %v1049 = vpop.f32.mrf.mxu0
        %v1050 = vadd.f32 0.0, %v1049
        %v1051 = vpop.f32.mrf.mxu0
        %1052 = vmatprep.mubr.f32.mxu0 0.0
        %1053 = vmatmul.mubr.f32.gmra.mxu0 %v875
        %v1054 = vpop.f32.mrf.mxu0
        %v1055 = vadd.f32 0.0, %v1054
        %v1056 = vpop.f32.mrf.mxu0
        %1057 = vmatprep.mubr.f32.mxu0 0.0
        %1058 = vmatmul.mubr.f32.gmra.mxu0 %v878
        %v1059 = vpop.f32.mrf.mxu0
        %v1060 = vadd.f32 0.0, %v1059
        %v1061 = vpop.f32.mrf.mxu0
        %1062 = vmatprep.mubr.f32.mxu0 0.0
        %1063 = vmatmul.mubr.f32.gmra.mxu0 %v881
        %v1064 = vpop.f32.mrf.mxu0
        %v1065 = vadd.f32 0.0, %v1064
        %v1066 = vpop.f32.mrf.mxu0
        %1067 = vmatprep.mubr.f32.mxu0 0.0
        %1068 = vmatmul.mubr.f32.gmra.mxu0 %v884
        %v1069 = vpop.f32.mrf.mxu0
        %v1070 = vadd.f32 0.0, %v1069
        %v1071 = vpop.f32.mrf.mxu0
        %1072 = vmatprep.mubr.f32.mxu0 0.0
        %1073 = vmatmul.mubr.f32.gmra.mxu0 %v887
        %v1074 = vpop.f32.mrf.mxu0
        %v1075 = vadd.f32 0.0, %v1074
        %v1076 = vpop.f32.mrf.mxu0
        %1077 = vmatprep.mubr.f32.mxu0 0.0
        %1078 = vmatmul.mubr.f32.gmra.mxu0 %v890
        %v1079 = vpop.f32.mrf.mxu0
        %v1080 = vadd.f32 0.0, %v1079
        %v1081 = vpop.f32.mrf.mxu0
        %1082 = vmatprep.mubr.f32.mxu0 0.0
        %1083 = vmatmul.mubr.f32.gmra.mxu0 %v893
        %v1084 = vpop.f32.mrf.mxu0
        %v1085 = vadd.f32 0.0, %v1084
        %v1086 = vpop.f32.mrf.mxu0
        %1087 = vmatprep.mubr.f32.mxu0 0.0
        %1088 = vmatmul.mubr.f32.gmra.mxu0 %v896
        %v1089 = vpop.f32.mrf.mxu0
        %v1090 = vadd.f32 0.0, %v1089
        %v1091 = vpop.f32.mrf.mxu0
        %1092 = vmatprep.mubr.f32.mxu0 0.0
        %1093 = vmatmul.mubr.f32.gmra.mxu0 %v899
        %v1094 = vpop.f32.mrf.mxu0
        %v1095 = vadd.f32 0.0, %v1094
        %v1096 = vpop.f32.mrf.mxu0
        %1097 = vmatprep.mubr.f32.mxu0 0.0
        %1098 = vmatmul.mubr.f32.gmra.mxu0 %v902
        %v1099 = vpop.f32.mrf.mxu0
        %v1100 = vadd.f32 0.0, %v1099
        %v1101 = vpop.f32.mrf.mxu0
        %1102 = vmatprep.mubr.f32.mxu0 0.0
        %1103 = vmatmul.mubr.f32.gmra.mxu0 %v905
        %v1104 = vpop.f32.mrf.mxu0
        %v1105 = vadd.f32 0.0, %v1104
        %v1106 = vpop.f32.mrf.mxu0
        %1107 = vmatprep.mubr.f32.mxu0 0.0
        %1108 = vmatmul.mubr.f32.gmra.mxu0 %v908
        %v1109 = vpop.f32.mrf.mxu0
        %v1110 = vadd.f32 0.0, %v1109
        %v1111 = vpop.f32.mrf.mxu0
        %1112 = vmatprep.mubr.f32.mxu0 0.0
        %1113 = vmatmul.mubr.f32.gmra.mxu0 %v911
        %v1114 = vpop.f32.mrf.mxu0
        %v1115 = vadd.f32 0.0, %v1114
        %v1116 = vpop.f32.mrf.mxu0
        %1117 = vmatprep.mubr.f32.mxu0 0.0
        %1118 = vmatmul.mubr.f32.gmra.mxu0 %v914
        %v1119 = vpop.f32.mrf.mxu0
        %v1120 = vadd.f32 0.0, %v1119
        %v1121 = vpop.f32.mrf.mxu0
        %1122 = vmatprep.mubr.f32.mxu0 0.0
        %1123 = vmatmul.mubr.f32.gmra.mxu0 %v917
        %v1124 = vpop.f32.mrf.mxu0
        %v1125 = vadd.f32 0.0, %v1124
        %v1126 = vpop.f32.mrf.mxu0
        %1127 = vmatprep.mubr.f32.mxu0 0.0
        %1128 = vmatmul.mubr.f32.gmra.mxu0 %v920
        %v1129 = vpop.f32.mrf.mxu0
        %v1130 = vadd.f32 0.0, %v1129
        %v1131 = vpop.f32.mrf.mxu0
        %1132 = vmatprep.mubr.f32.mxu0 0.0
        %1133 = vmatmul.mubr.f32.gmra.mxu0 %v923
        %v1134 = vpop.f32.mrf.mxu0
        %v1135 = vadd.f32 0.0, %v1134
        %v1136 = vpop.f32.mrf.mxu0
        %1137 = vmatprep.mubr.f32.mxu0 0.0
        %1138 = vmatmul.mubr.f32.gmra.mxu0 %v926
        %v1139 = vpop.f32.mrf.mxu0
        %v1140 = vadd.f32 0.0, %v1139
        %v1141 = vpop.f32.mrf.mxu0
        %1142 = vmatprep.mubr.f32.mxu0 0.0
        %1143 = vmatmul.mubr.f32.gmra.mxu0 %v929
        %v1144 = vpop.f32.mrf.mxu0
        %v1145 = vadd.f32 0.0, %v1144
        %v1146 = vpop.f32.mrf.mxu0
        %1147 = vmatprep.mubr.f32.mxu0 0.0
        %1148 = vmatmul.mubr.f32.gmra.mxu0 %v932
        %v1149 = vpop.f32.mrf.mxu0
        %v1150 = vadd.f32 0.0, %v1149
        %v1151 = vpop.f32.mrf.mxu0
        %1152 = vmatprep.mubr.f32.mxu0 0.0
        %1153 = vmatmul.mubr.f32.gmra.mxu0 %v935
        %v1154 = vpop.f32.mrf.mxu0
        %v1155 = vadd.f32 0.0, %v1154
        %v1156 = vpop.f32.mrf.mxu0
        %1157 = vmatprep.mubr.f32.mxu0 0.0
        %1158 = vmatmul.mubr.f32.gmra.mxu0 %v938
        %v1159 = vpop.f32.mrf.mxu0
        %v1160 = vadd.f32 0.0, %v1159
        %v1161 = vpop.f32.mrf.mxu0
        %1162 = vmatprep.mubr.f32.mxu0 0.0
        %1163 = vmatmul.mubr.f32.gmra.mxu0 %v941
        %v1164 = vpop.f32.mrf.mxu0
        %v1165 = vadd.f32 0.0, %v1164
        %v1166 = vpop.f32.mrf.mxu0
        %1167 = vdwg.mxu0
        %v1169 = vsel %vm687, %v766, 0
        %v1172 = vsel %vm687, %v767, 0
        %v1175 = vsel %vm687, %v768, 0
        %v1178 = vsel %vm687, %v769, 0
        %v1181 = vsel %vm687, %v770, 0
        %v1184 = vsel %vm687, %v771, 0
        %v1187 = vsel %vm687, %v772, 0
        %v1190 = vsel %vm687, %v773, 0
        %v1193 = vsel %vm687, %v774, 0
        %v1196 = vsel %vm687, %v775, 0
        %v1199 = vsel %vm687, %v776, 0
        %v1202 = vsel %vm687, %v777, 0
        %v1205 = vsel %vm687, %v778, 0
        %v1208 = vsel %vm687, %v779, 0
        %v1211 = vsel %vm687, %v780, 0
        %v1214 = vsel %vm687, %v781, 0
        %v1217 = vsel %vm687, %v782, 0
        %v1220 = vsel %vm687, %v783, 0
        %v1223 = vsel %vm687, %v784, 0
        %v1226 = vsel %vm687, %v785, 0
        %v1229 = vsel %vm687, %v786, 0
        %v1232 = vsel %vm687, %v787, 0
        %v1235 = vsel %vm687, %v788, 0
        %v1238 = vsel %vm687, %v789, 0
        %v1241 = vsel %vm687, %v790, 0
        %v1244 = vsel %vm687, %v791, 0
        %v1247 = vsel %vm687, %v792, 0
        %v1250 = vsel %vm687, %v793, 0
        %v1253 = vsel %vm687, %v794, 0
        %v1256 = vsel %vm687, %v795, 0
        %v1259 = vsel %vm687, %v796, 0
        %v1262 = vsel %vm687, %v797, 0
        %1264 = vmatprep.subr.mxu0 0.0
        %1265 = vmatpush1.msra.mxu0 0.0
        %1266 = vmatprep.subr.mxu0 0.0
        %1267 = vmatpush1.msra.mxu0 0.0
        %1268 = vmatprep.subr.mxu0 0.0
        %1269 = vmatpush1.msra.mxu0 0.0
        %1270 = vmatprep.subr.mxu0 0.0
        %1271 = vmatpush1.msra.mxu0 0.0
        %1272 = vmatprep.subr.mxu0 0.0
        %1273 = vmatpush1.msra.mxu0 0.0
        %1274 = vmatprep.subr.mxu0 0.0
        %1275 = vmatpush1.msra.mxu0 0.0
        %1276 = vmatprep.subr.mxu0 0.0
        %1277 = vmatpush1.msra.mxu0 0.0
        %1278 = vmatprep.subr.mxu0 0.0
        %1279 = vmatpush1.msra.mxu0 0.0
        %1280 = vmatprep.subr.mxu0 0.0
        %1281 = vmatpush1.msra.mxu0 %v805
        %1282 = vmatprep.subr.mxu0 0.0
        %1283 = vmatpush1.msra.mxu0 %v804
        %1284 = vmatprep.subr.mxu0 0.0
        %1285 = vmatpush1.msra.mxu0 %v803
        %1286 = vmatprep.subr.mxu0 0.0
        %1287 = vmatpush1.msra.mxu0 %v802
        %1288 = vmatprep.subr.mxu0 0.0
        %1289 = vmatpush1.msra.mxu0 %v801
        %1290 = vmatprep.subr.mxu0 0.0
        %1291 = vmatpush1.msra.mxu0 %v800
        %1292 = vmatprep.subr.mxu0 0.0
        %1293 = vmatpush1.msra.mxu0 %v799
        %1294 = vmatprep.subr.mxu0 0.0
        %1295 = vmatpush1.msra.mxu0 %v798
        %1296 = vmatprep.subr.mxu0 0.0
        %1297 = vmatpush2.msra.mxu0 0.0
        %1298 = vmatprep.subr.mxu0 0.0
        %1299 = vmatpush2.msra.mxu0 0.0
        %1300 = vmatprep.subr.mxu0 0.0
        %1301 = vmatpush2.msra.mxu0 0.0
        %1302 = vmatprep.subr.mxu0 0.0
        %1303 = vmatpush2.msra.mxu0 0.0
        %1304 = vmatprep.subr.mxu0 0.0
        %1305 = vmatpush2.msra.mxu0 0.0
        %1306 = vmatprep.subr.mxu0 0.0
        %1307 = vmatpush2.msra.mxu0 0.0
        %1308 = vmatprep.subr.mxu0 0.0
        %1309 = vmatpush2.msra.mxu0 0.0
        %1310 = vmatprep.subr.mxu0 0.0
        %1311 = vmatpush2.msra.mxu0 0.0
        %1312 = vmatprep.subr.mxu0 0.0
        %1313 = vmatpush2.msra.mxu0 0.0
        %1314 = vmatprep.subr.mxu0 0.0
        %1315 = vmatpush2.msra.mxu0 0.0
        %1316 = vmatprep.subr.mxu0 0.0
        %1317 = vmatpush2.msra.mxu0 0.0
        %1318 = vmatprep.subr.mxu0 0.0
        %1319 = vmatpush2.msra.mxu0 0.0
        %1320 = vmatprep.subr.mxu0 0.0
        %1321 = vmatpush2.msra.mxu0 0.0
        %1322 = vmatprep.subr.mxu0 0.0
        %1323 = vmatpush2.msra.mxu0 0.0
        %1324 = vmatprep.subr.mxu0 0.0
        %1325 = vmatpush2.msra.mxu0 0.0
        %1326 = vmatprep.subr.mxu0 0.0
        %1327 = vmatpush2.msra.mxu0 0.0
        %1328 = vmatprep.mubr.f32.mxu0 0.0
        %1329 = vmatmul.mubr.f32.gmra.mxu0 %v1169
        %v1330 = vpop.f32.mrf.mxu0
        %v1331 = vadd.f32 %v1010, %v1330
        %v1332 = vpop.f32.mrf.mxu0
        %1333 = vmatprep.mubr.f32.mxu0 0.0
        %1334 = vmatmul.mubr.f32.gmra.mxu0 %v1172
        %v1335 = vpop.f32.mrf.mxu0
        %v1336 = vadd.f32 %v1015, %v1335
        %v1337 = vpop.f32.mrf.mxu0
        %1338 = vmatprep.mubr.f32.mxu0 0.0
        %1339 = vmatmul.mubr.f32.gmra.mxu0 %v1175
        %v1340 = vpop.f32.mrf.mxu0
        %v1341 = vadd.f32 %v1020, %v1340
        %v1342 = vpop.f32.mrf.mxu0
        %1343 = vmatprep.mubr.f32.mxu0 0.0
        %1344 = vmatmul.mubr.f32.gmra.mxu0 %v1178
        %v1345 = vpop.f32.mrf.mxu0
        %v1346 = vadd.f32 %v1025, %v1345
        %v1347 = vpop.f32.mrf.mxu0
        %1348 = vmatprep.mubr.f32.mxu0 0.0
        %1349 = vmatmul.mubr.f32.gmra.mxu0 %v1181
        %v1350 = vpop.f32.mrf.mxu0
        %v1351 = vadd.f32 %v1030, %v1350
        %v1352 = vpop.f32.mrf.mxu0
        %1353 = vmatprep.mubr.f32.mxu0 0.0
        %1354 = vmatmul.mubr.f32.gmra.mxu0 %v1184
        %v1355 = vpop.f32.mrf.mxu0
        %v1356 = vadd.f32 %v1035, %v1355
        %v1357 = vpop.f32.mrf.mxu0
        %1358 = vmatprep.mubr.f32.mxu0 0.0
        %1359 = vmatmul.mubr.f32.gmra.mxu0 %v1187
        %v1360 = vpop.f32.mrf.mxu0
        %v1361 = vadd.f32 %v1040, %v1360
        %v1362 = vpop.f32.mrf.mxu0
        %1363 = vmatprep.mubr.f32.mxu0 0.0
        %1364 = vmatmul.mubr.f32.gmra.mxu0 %v1190
        %v1365 = vpop.f32.mrf.mxu0
        %v1366 = vadd.f32 %v1045, %v1365
        %v1367 = vpop.f32.mrf.mxu0
        %1368 = vmatprep.mubr.f32.mxu0 0.0
        %1369 = vmatmul.mubr.f32.gmra.mxu0 %v1193
        %v1370 = vpop.f32.mrf.mxu0
        %v1371 = vadd.f32 %v1050, %v1370
        %v1372 = vpop.f32.mrf.mxu0
        %1373 = vmatprep.mubr.f32.mxu0 0.0
        %1374 = vmatmul.mubr.f32.gmra.mxu0 %v1196
        %v1375 = vpop.f32.mrf.mxu0
        %v1376 = vadd.f32 %v1055, %v1375
        %v1377 = vpop.f32.mrf.mxu0
        %1378 = vmatprep.mubr.f32.mxu0 0.0
        %1379 = vmatmul.mubr.f32.gmra.mxu0 %v1199
        %v1380 = vpop.f32.mrf.mxu0
        %v1381 = vadd.f32 %v1060, %v1380
        %v1382 = vpop.f32.mrf.mxu0
        %1383 = vmatprep.mubr.f32.mxu0 0.0
        %1384 = vmatmul.mubr.f32.gmra.mxu0 %v1202
        %v1385 = vpop.f32.mrf.mxu0
        %v1386 = vadd.f32 %v1065, %v1385
        %v1387 = vpop.f32.mrf.mxu0
        %1388 = vmatprep.mubr.f32.mxu0 0.0
        %1389 = vmatmul.mubr.f32.gmra.mxu0 %v1205
        %v1390 = vpop.f32.mrf.mxu0
        %v1391 = vadd.f32 %v1070, %v1390
        %v1392 = vpop.f32.mrf.mxu0
        %1393 = vmatprep.mubr.f32.mxu0 0.0
        %1394 = vmatmul.mubr.f32.gmra.mxu0 %v1208
        %v1395 = vpop.f32.mrf.mxu0
        %v1396 = vadd.f32 %v1075, %v1395
        %v1397 = vpop.f32.mrf.mxu0
        %1398 = vmatprep.mubr.f32.mxu0 0.0
        %1399 = vmatmul.mubr.f32.gmra.mxu0 %v1211
        %v1400 = vpop.f32.mrf.mxu0
        %v1401 = vadd.f32 %v1080, %v1400
        %v1402 = vpop.f32.mrf.mxu0
        %1403 = vmatprep.mubr.f32.mxu0 0.0
        %1404 = vmatmul.mubr.f32.gmra.mxu0 %v1214
        %v1405 = vpop.f32.mrf.mxu0
        %v1406 = vadd.f32 %v1085, %v1405
        %v1407 = vpop.f32.mrf.mxu0
        %1408 = vmatprep.mubr.f32.mxu0 0.0
        %1409 = vmatmul.mubr.f32.gmra.mxu0 %v1217
        %v1410 = vpop.f32.mrf.mxu0
        %v1411 = vadd.f32 %v1090, %v1410
        %v1412 = vpop.f32.mrf.mxu0
        %1413 = vmatprep.mubr.f32.mxu0 0.0
        %1414 = vmatmul.mubr.f32.gmra.mxu0 %v1220
        %v1415 = vpop.f32.mrf.mxu0
        %v1416 = vadd.f32 %v1095, %v1415
        %v1417 = vpop.f32.mrf.mxu0
        %1418 = vmatprep.mubr.f32.mxu0 0.0
        %1419 = vmatmul.mubr.f32.gmra.mxu0 %v1223
        %v1420 = vpop.f32.mrf.mxu0
        %v1421 = vadd.f32 %v1100, %v1420
        %v1422 = vpop.f32.mrf.mxu0
        %1423 = vmatprep.mubr.f32.mxu0 0.0
        %1424 = vmatmul.mubr.f32.gmra.mxu0 %v1226
        %v1425 = vpop.f32.mrf.mxu0
        %v1426 = vadd.f32 %v1105, %v1425
        %v1427 = vpop.f32.mrf.mxu0
        %1428 = vmatprep.mubr.f32.mxu0 0.0
        %1429 = vmatmul.mubr.f32.gmra.mxu0 %v1229
        %v1430 = vpop.f32.mrf.mxu0
        %v1431 = vadd.f32 %v1110, %v1430
        %v1432 = vpop.f32.mrf.mxu0
        %1433 = vmatprep.mubr.f32.mxu0 0.0
        %1434 = vmatmul.mubr.f32.gmra.mxu0 %v1232
        %v1435 = vpop.f32.mrf.mxu0
        %v1436 = vadd.f32 %v1115, %v1435
        %v1437 = vpop.f32.mrf.mxu0
        %1438 = vmatprep.mubr.f32.mxu0 0.0
        %1439 = vmatmul.mubr.f32.gmra.mxu0 %v1235
        %v1440 = vpop.f32.mrf.mxu0
        %v1441 = vadd.f32 %v1120, %v1440
        %v1442 = vpop.f32.mrf.mxu0
        %1443 = vmatprep.mubr.f32.mxu0 0.0
        %1444 = vmatmul.mubr.f32.gmra.mxu0 %v1238
        %v1445 = vpop.f32.mrf.mxu0
        %v1446 = vadd.f32 %v1125, %v1445
        %v1447 = vpop.f32.mrf.mxu0
        %1448 = vmatprep.mubr.f32.mxu0 0.0
        %1449 = vmatmul.mubr.f32.gmra.mxu0 %v1241
        %v1450 = vpop.f32.mrf.mxu0
        %v1451 = vadd.f32 %v1130, %v1450
        %v1452 = vpop.f32.mrf.mxu0
        %1453 = vmatprep.mubr.f32.mxu0 0.0
        %1454 = vmatmul.mubr.f32.gmra.mxu0 %v1244
        %v1455 = vpop.f32.mrf.mxu0
        %v1456 = vadd.f32 %v1135, %v1455
        %v1457 = vpop.f32.mrf.mxu0
        %1458 = vmatprep.mubr.f32.mxu0 0.0
        %1459 = vmatmul.mubr.f32.gmra.mxu0 %v1247
        %v1460 = vpop.f32.mrf.mxu0
        %v1461 = vadd.f32 %v1140, %v1460
        %v1462 = vpop.f32.mrf.mxu0
        %1463 = vmatprep.mubr.f32.mxu0 0.0
        %1464 = vmatmul.mubr.f32.gmra.mxu0 %v1250
        %v1465 = vpop.f32.mrf.mxu0
        %v1466 = vadd.f32 %v1145, %v1465
        %v1467 = vpop.f32.mrf.mxu0
        %1468 = vmatprep.mubr.f32.mxu0 0.0
        %1469 = vmatmul.mubr.f32.gmra.mxu0 %v1253
        %v1470 = vpop.f32.mrf.mxu0
        %v1471 = vadd.f32 %v1150, %v1470
        %v1472 = vpop.f32.mrf.mxu0
        %1473 = vmatprep.mubr.f32.mxu0 0.0
        %1474 = vmatmul.mubr.f32.gmra.mxu0 %v1256
        %v1475 = vpop.f32.mrf.mxu0
        %v1476 = vadd.f32 %v1155, %v1475
        %v1477 = vpop.f32.mrf.mxu0
        %1478 = vmatprep.mubr.f32.mxu0 0.0
        %1479 = vmatmul.mubr.f32.gmra.mxu0 %v1259
        %v1480 = vpop.f32.mrf.mxu0
        %v1481 = vadd.f32 %v1160, %v1480
        %v1482 = vpop.f32.mrf.mxu0
        %1483 = vmatprep.mubr.f32.mxu0 0.0
        %1484 = vmatmul.mubr.f32.gmra.mxu0 %v1262
        %v1485 = vpop.f32.mrf.mxu0
        %v1486 = vadd.f32 %v1165, %v1485
        %v1487 = vpop.f32.mrf.mxu0
        %1488 = vdwg.mxu0
        %v1489 = vld [vmem:[#allocation2 + $0x2] sm:$0xff]
        %v1490 = vld [vmem:[#allocation2 + $0xa] sm:$0xff]
        %v1491 = vld [vmem:[#allocation2 + $0x1a] sm:$0xff]
        %v1492 = vld [vmem:[#allocation2 + $0x22] sm:$0xff]
        %v1493 = vld [vmem:[#allocation2 + $0x32] sm:$0xff]
        %v1494 = vld [vmem:[#allocation2 + $0x3a] sm:$0xff]
        %v1495 = vld [vmem:[#allocation2 + $0x4a] sm:$0xff]
        %v1496 = vld [vmem:[#allocation2 + $0x52] sm:$0xff]
        %v1497 = vld [vmem:[#allocation2 + $0x62] sm:$0xff]
        %v1498 = vld [vmem:[#allocation2 + $0x6a] sm:$0xff]
        %v1499 = vld [vmem:[#allocation2 + $0x7a] sm:$0xff]
        %v1500 = vld [vmem:[#allocation2 + $0x82] sm:$0xff]
        %v1501 = vld [vmem:[#allocation2 + $0x92] sm:$0xff]
        %v1502 = vld [vmem:[#allocation2 + $0x9a] sm:$0xff]
        %v1503 = vld [vmem:[#allocation2 + $0xaa] sm:$0xff]
        %v1504 = vld [vmem:[#allocation2 + $0xb2] sm:$0xff]
        %v1505 = vld [vmem:[#allocation2 + $0xc2] sm:$0xff]
        %v1506 = vld [vmem:[#allocation2 + $0xca] sm:$0xff]
        %v1507 = vld [vmem:[#allocation2 + $0xda] sm:$0xff]
        %v1508 = vld [vmem:[#allocation2 + $0xe2] sm:$0xff]
        %v1509 = vld [vmem:[#allocation2 + $0xf2] sm:$0xff]
        %v1510 = vld [vmem:[#allocation2 + $0xfa] sm:$0xff]
        %v1511 = vld [vmem:[#allocation2 + $0x10a] sm:$0xff]
        %v1512 = vld [vmem:[#allocation2 + $0x112] sm:$0xff]
        %v1513 = vld [vmem:[#allocation2 + $0x122] sm:$0xff]
        %v1514 = vld [vmem:[#allocation2 + $0x12a] sm:$0xff]
        %v1515 = vld [vmem:[#allocation2 + $0x13a] sm:$0xff]
        %v1516 = vld [vmem:[#allocation2 + $0x142] sm:$0xff]
        %v1517 = vld [vmem:[#allocation2 + $0x152] sm:$0xff]
        %v1518 = vld [vmem:[#allocation2 + $0x15a] sm:$0xff]
        %v1519 = vld [vmem:[#allocation2 + $0x16a] sm:$0xff]
        %v1520 = vld [vmem:[#allocation2 + $0x172] sm:$0xff]
        %s1521 = scalar_lea.vmem %s3, 128
        %v1522 = vld [vmem:[%s1521] sm:$0xff]
        %v1523 = vld [vmem:[%s1521 + $0x8] sm:$0xff]
        %v1524 = vld [vmem:[%s1521 + $0x10] sm:$0xff]
        %v1525 = vld [vmem:[%s1521 + $0x18] sm:$0xff]
        %v1526 = vld [vmem:[%s1521 + $0x20] sm:$0xff]
        %v1527 = vld [vmem:[%s1521 + $0x28] sm:$0xff]
        %v1528 = vld [vmem:[%s1521 + $0x30] sm:$0xff]
        %v1529 = vld [vmem:[%s1521 + $0x38] sm:$0xff]
        %v1531 = vsel %vm687, %v1489, 0
        %v1534 = vsel %vm687, %v1490, 0
        %v1537 = vsel %vm687, %v1491, 0
        %v1540 = vsel %vm687, %v1492, 0
        %v1543 = vsel %vm687, %v1493, 0
        %v1546 = vsel %vm687, %v1494, 0
        %v1549 = vsel %vm687, %v1495, 0
        %v1552 = vsel %vm687, %v1496, 0
        %v1555 = vsel %vm687, %v1497, 0
        %v1558 = vsel %vm687, %v1498, 0
        %v1561 = vsel %vm687, %v1499, 0
        %v1564 = vsel %vm687, %v1500, 0
        %v1567 = vsel %vm687, %v1501, 0
        %v1570 = vsel %vm687, %v1502, 0
        %v1573 = vsel %vm687, %v1503, 0
        %v1576 = vsel %vm687, %v1504, 0
        %v1579 = vsel %vm687, %v1505, 0
        %v1582 = vsel %vm687, %v1506, 0
        %v1585 = vsel %vm687, %v1507, 0
        %v1588 = vsel %vm687, %v1508, 0
        %v1591 = vsel %vm687, %v1509, 0
        %v1594 = vsel %vm687, %v1510, 0
        %v1597 = vsel %vm687, %v1511, 0
        %v1600 = vsel %vm687, %v1512, 0
        %v1603 = vsel %vm687, %v1513, 0
        %v1606 = vsel %vm687, %v1514, 0
        %v1609 = vsel %vm687, %v1515, 0
        %v1612 = vsel %vm687, %v1516, 0
        %v1615 = vsel %vm687, %v1517, 0
        %v1618 = vsel %vm687, %v1518, 0
        %v1621 = vsel %vm687, %v1519, 0
        %v1624 = vsel %vm687, %v1520, 0
        %1626 = vmatprep.subr.mxu0 0.0
        %1627 = vmatpush1.msra.mxu0 0.0
        %1628 = vmatprep.subr.mxu0 0.0
        %1629 = vmatpush1.msra.mxu0 0.0
        %1630 = vmatprep.subr.mxu0 0.0
        %1631 = vmatpush1.msra.mxu0 0.0
        %1632 = vmatprep.subr.mxu0 0.0
        %1633 = vmatpush1.msra.mxu0 0.0
        %1634 = vmatprep.subr.mxu0 0.0
        %1635 = vmatpush1.msra.mxu0 0.0
        %1636 = vmatprep.subr.mxu0 0.0
        %1637 = vmatpush1.msra.mxu0 0.0
        %1638 = vmatprep.subr.mxu0 0.0
        %1639 = vmatpush1.msra.mxu0 0.0
        %1640 = vmatprep.subr.mxu0 0.0
        %1641 = vmatpush1.msra.mxu0 0.0
        %1642 = vmatprep.subr.mxu0 0.0
        %1643 = vmatpush1.msra.mxu0 %v1529
        %1644 = vmatprep.subr.mxu0 0.0
        %1645 = vmatpush1.msra.mxu0 %v1528
        %1646 = vmatprep.subr.mxu0 0.0
        %1647 = vmatpush1.msra.mxu0 %v1527
        %1648 = vmatprep.subr.mxu0 0.0
        %1649 = vmatpush1.msra.mxu0 %v1526
        %1650 = vmatprep.subr.mxu0 0.0
        %1651 = vmatpush1.msra.mxu0 %v1525
        %1652 = vmatprep.subr.mxu0 0.0
        %1653 = vmatpush1.msra.mxu0 %v1524
        %1654 = vmatprep.subr.mxu0 0.0
        %1655 = vmatpush1.msra.mxu0 %v1523
        %1656 = vmatprep.subr.mxu0 0.0
        %1657 = vmatpush1.msra.mxu0 %v1522
        %1658 = vmatprep.subr.mxu0 0.0
        %1659 = vmatpush2.msra.mxu0 0.0
        %1660 = vmatprep.subr.mxu0 0.0
        %1661 = vmatpush2.msra.mxu0 0.0
        %1662 = vmatprep.subr.mxu0 0.0
        %1663 = vmatpush2.msra.mxu0 0.0
        %1664 = vmatprep.subr.mxu0 0.0
        %1665 = vmatpush2.msra.mxu0 0.0
        %1666 = vmatprep.subr.mxu0 0.0
        %1667 = vmatpush2.msra.mxu0 0.0
        %1668 = vmatprep.subr.mxu0 0.0
        %1669 = vmatpush2.msra.mxu0 0.0
        %1670 = vmatprep.subr.mxu0 0.0
        %1671 = vmatpush2.msra.mxu0 0.0
        %1672 = vmatprep.subr.mxu0 0.0
        %1673 = vmatpush2.msra.mxu0 0.0
        %1674 = vmatprep.subr.mxu0 0.0
        %1675 = vmatpush2.msra.mxu0 0.0
        %1676 = vmatprep.subr.mxu0 0.0
        %1677 = vmatpush2.msra.mxu0 0.0
        %1678 = vmatprep.subr.mxu0 0.0
        %1679 = vmatpush2.msra.mxu0 0.0
        %1680 = vmatprep.subr.mxu0 0.0
        %1681 = vmatpush2.msra.mxu0 0.0
        %1682 = vmatprep.subr.mxu0 0.0
        %1683 = vmatpush2.msra.mxu0 0.0
        %1684 = vmatprep.subr.mxu0 0.0
        %1685 = vmatpush2.msra.mxu0 0.0
        %1686 = vmatprep.subr.mxu0 0.0
        %1687 = vmatpush2.msra.mxu0 0.0
        %1688 = vmatprep.subr.mxu0 0.0
        %1689 = vmatpush2.msra.mxu0 0.0
        %1690 = vmatprep.mubr.f32.mxu0 0.0
        %1691 = vmatmul.mubr.f32.gmra.mxu0 %v1531
        %v1692 = vpop.f32.mrf.mxu0
        %v1693 = vadd.f32 0.0, %v1692
        %v1694 = vpop.f32.mrf.mxu0
        %1695 = vmatprep.mubr.f32.mxu0 0.0
        %1696 = vmatmul.mubr.f32.gmra.mxu0 %v1534
        %v1697 = vpop.f32.mrf.mxu0
        %v1698 = vadd.f32 0.0, %v1697
        %v1699 = vpop.f32.mrf.mxu0
        %1700 = vmatprep.mubr.f32.mxu0 0.0
        %1701 = vmatmul.mubr.f32.gmra.mxu0 %v1537
        %v1702 = vpop.f32.mrf.mxu0
        %v1703 = vadd.f32 0.0, %v1702
        %v1704 = vpop.f32.mrf.mxu0
        %1705 = vmatprep.mubr.f32.mxu0 0.0
        %1706 = vmatmul.mubr.f32.gmra.mxu0 %v1540
        %v1707 = vpop.f32.mrf.mxu0
        %v1708 = vadd.f32 0.0, %v1707
        %v1709 = vpop.f32.mrf.mxu0
        %1710 = vmatprep.mubr.f32.mxu0 0.0
        %1711 = vmatmul.mubr.f32.gmra.mxu0 %v1543
        %v1712 = vpop.f32.mrf.mxu0
        %v1713 = vadd.f32 0.0, %v1712
        %v1714 = vpop.f32.mrf.mxu0
        %1715 = vmatprep.mubr.f32.mxu0 0.0
        %1716 = vmatmul.mubr.f32.gmra.mxu0 %v1546
        %v1717 = vpop.f32.mrf.mxu0
        %v1718 = vadd.f32 0.0, %v1717
        %v1719 = vpop.f32.mrf.mxu0
        %1720 = vmatprep.mubr.f32.mxu0 0.0
        %1721 = vmatmul.mubr.f32.gmra.mxu0 %v1549
        %v1722 = vpop.f32.mrf.mxu0
        %v1723 = vadd.f32 0.0, %v1722
        %v1724 = vpop.f32.mrf.mxu0
        %1725 = vmatprep.mubr.f32.mxu0 0.0
        %1726 = vmatmul.mubr.f32.gmra.mxu0 %v1552
        %v1727 = vpop.f32.mrf.mxu0
        %v1728 = vadd.f32 0.0, %v1727
        %v1729 = vpop.f32.mrf.mxu0
        %1730 = vmatprep.mubr.f32.mxu0 0.0
        %1731 = vmatmul.mubr.f32.gmra.mxu0 %v1555
        %v1732 = vpop.f32.mrf.mxu0
        %v1733 = vadd.f32 0.0, %v1732
        %v1734 = vpop.f32.mrf.mxu0
        %1735 = vmatprep.mubr.f32.mxu0 0.0
        %1736 = vmatmul.mubr.f32.gmra.mxu0 %v1558
        %v1737 = vpop.f32.mrf.mxu0
        %v1738 = vadd.f32 0.0, %v1737
        %v1739 = vpop.f32.mrf.mxu0
        %1740 = vmatprep.mubr.f32.mxu0 0.0
        %1741 = vmatmul.mubr.f32.gmra.mxu0 %v1561
        %v1742 = vpop.f32.mrf.mxu0
        %v1743 = vadd.f32 0.0, %v1742
        %v1744 = vpop.f32.mrf.mxu0
        %1745 = vmatprep.mubr.f32.mxu0 0.0
        %1746 = vmatmul.mubr.f32.gmra.mxu0 %v1564
        %v1747 = vpop.f32.mrf.mxu0
        %v1748 = vadd.f32 0.0, %v1747
        %v1749 = vpop.f32.mrf.mxu0
        %1750 = vmatprep.mubr.f32.mxu0 0.0
        %1751 = vmatmul.mubr.f32.gmra.mxu0 %v1567
        %v1752 = vpop.f32.mrf.mxu0
        %v1753 = vadd.f32 0.0, %v1752
        %v1754 = vpop.f32.mrf.mxu0
        %1755 = vmatprep.mubr.f32.mxu0 0.0
        %1756 = vmatmul.mubr.f32.gmra.mxu0 %v1570
        %v1757 = vpop.f32.mrf.mxu0
        %v1758 = vadd.f32 0.0, %v1757
        %v1759 = vpop.f32.mrf.mxu0
        %1760 = vmatprep.mubr.f32.mxu0 0.0
        %1761 = vmatmul.mubr.f32.gmra.mxu0 %v1573
        %v1762 = vpop.f32.mrf.mxu0
        %v1763 = vadd.f32 0.0, %v1762
        %v1764 = vpop.f32.mrf.mxu0
        %1765 = vmatprep.mubr.f32.mxu0 0.0
        %1766 = vmatmul.mubr.f32.gmra.mxu0 %v1576
        %v1767 = vpop.f32.mrf.mxu0
        %v1768 = vadd.f32 0.0, %v1767
        %v1769 = vpop.f32.mrf.mxu0
        %1770 = vmatprep.mubr.f32.mxu0 0.0
        %1771 = vmatmul.mubr.f32.gmra.mxu0 %v1579
        %v1772 = vpop.f32.mrf.mxu0
        %v1773 = vadd.f32 0.0, %v1772
        %v1774 = vpop.f32.mrf.mxu0
        %1775 = vmatprep.mubr.f32.mxu0 0.0
        %1776 = vmatmul.mubr.f32.gmra.mxu0 %v1582
        %v1777 = vpop.f32.mrf.mxu0
        %v1778 = vadd.f32 0.0, %v1777
        %v1779 = vpop.f32.mrf.mxu0
        %1780 = vmatprep.mubr.f32.mxu0 0.0
        %1781 = vmatmul.mubr.f32.gmra.mxu0 %v1585
        %v1782 = vpop.f32.mrf.mxu0
        %v1783 = vadd.f32 0.0, %v1782
        %v1784 = vpop.f32.mrf.mxu0
        %1785 = vmatprep.mubr.f32.mxu0 0.0
        %1786 = vmatmul.mubr.f32.gmra.mxu0 %v1588
        %v1787 = vpop.f32.mrf.mxu0
        %v1788 = vadd.f32 0.0, %v1787
        %v1789 = vpop.f32.mrf.mxu0
        %1790 = vmatprep.mubr.f32.mxu0 0.0
        %1791 = vmatmul.mubr.f32.gmra.mxu0 %v1591
        %v1792 = vpop.f32.mrf.mxu0
        %v1793 = vadd.f32 0.0, %v1792
        %v1794 = vpop.f32.mrf.mxu0
        %1795 = vmatprep.mubr.f32.mxu0 0.0
        %1796 = vmatmul.mubr.f32.gmra.mxu0 %v1594
        %v1797 = vpop.f32.mrf.mxu0
        %v1798 = vadd.f32 0.0, %v1797
        %v1799 = vpop.f32.mrf.mxu0
        %1800 = vmatprep.mubr.f32.mxu0 0.0
        %1801 = vmatmul.mubr.f32.gmra.mxu0 %v1597
        %v1802 = vpop.f32.mrf.mxu0
        %v1803 = vadd.f32 0.0, %v1802
        %v1804 = vpop.f32.mrf.mxu0
        %1805 = vmatprep.mubr.f32.mxu0 0.0
        %1806 = vmatmul.mubr.f32.gmra.mxu0 %v1600
        %v1807 = vpop.f32.mrf.mxu0
        %v1808 = vadd.f32 0.0, %v1807
        %v1809 = vpop.f32.mrf.mxu0
        %1810 = vmatprep.mubr.f32.mxu0 0.0
        %1811 = vmatmul.mubr.f32.gmra.mxu0 %v1603
        %v1812 = vpop.f32.mrf.mxu0
        %v1813 = vadd.f32 0.0, %v1812
        %v1814 = vpop.f32.mrf.mxu0
        %1815 = vmatprep.mubr.f32.mxu0 0.0
        %1816 = vmatmul.mubr.f32.gmra.mxu0 %v1606
        %v1817 = vpop.f32.mrf.mxu0
        %v1818 = vadd.f32 0.0, %v1817
        %v1819 = vpop.f32.mrf.mxu0
        %1820 = vmatprep.mubr.f32.mxu0 0.0
        %1821 = vmatmul.mubr.f32.gmra.mxu0 %v1609
        %v1822 = vpop.f32.mrf.mxu0
        %v1823 = vadd.f32 0.0, %v1822
        %v1824 = vpop.f32.mrf.mxu0
        %1825 = vmatprep.mubr.f32.mxu0 0.0
        %1826 = vmatmul.mubr.f32.gmra.mxu0 %v1612
        %v1827 = vpop.f32.mrf.mxu0
        %v1828 = vadd.f32 0.0, %v1827
        %v1829 = vpop.f32.mrf.mxu0
        %1830 = vmatprep.mubr.f32.mxu0 0.0
        %1831 = vmatmul.mubr.f32.gmra.mxu0 %v1615
        %v1832 = vpop.f32.mrf.mxu0
        %v1833 = vadd.f32 0.0, %v1832
        %v1834 = vpop.f32.mrf.mxu0
        %1835 = vmatprep.mubr.f32.mxu0 0.0
        %1836 = vmatmul.mubr.f32.gmra.mxu0 %v1618
        %v1837 = vpop.f32.mrf.mxu0
        %v1838 = vadd.f32 0.0, %v1837
        %v1839 = vpop.f32.mrf.mxu0
        %1840 = vmatprep.mubr.f32.mxu0 0.0
        %1841 = vmatmul.mubr.f32.gmra.mxu0 %v1621
        %v1842 = vpop.f32.mrf.mxu0
        %v1843 = vadd.f32 0.0, %v1842
        %v1844 = vpop.f32.mrf.mxu0
        %1845 = vmatprep.mubr.f32.mxu0 0.0
        %1846 = vmatmul.mubr.f32.gmra.mxu0 %v1624
        %v1847 = vpop.f32.mrf.mxu0
        %v1848 = vadd.f32 0.0, %v1847
        %v1849 = vpop.f32.mrf.mxu0
        %1850 = vdwg.mxu0
        %v1851 = vadd.f32 %v1331, %v1693
        %v1852 = vadd.f32 %v1336, %v1698
        %v1853 = vadd.f32 %v1341, %v1703
        %v1854 = vadd.f32 %v1346, %v1708
        %v1855 = vadd.f32 %v1351, %v1713
        %v1856 = vadd.f32 %v1356, %v1718
        %v1857 = vadd.f32 %v1361, %v1723
        %v1858 = vadd.f32 %v1366, %v1728
        %v1859 = vadd.f32 %v1371, %v1733
        %v1860 = vadd.f32 %v1376, %v1738
        %v1861 = vadd.f32 %v1381, %v1743
        %v1862 = vadd.f32 %v1386, %v1748
        %v1863 = vadd.f32 %v1391, %v1753
        %v1864 = vadd.f32 %v1396, %v1758
        %v1865 = vadd.f32 %v1401, %v1763
        %v1866 = vadd.f32 %v1406, %v1768
        %v1867 = vadd.f32 %v1411, %v1773
        %v1868 = vadd.f32 %v1416, %v1778
        %v1869 = vadd.f32 %v1421, %v1783
        %v1870 = vadd.f32 %v1426, %v1788
        %v1871 = vadd.f32 %v1431, %v1793
        %v1872 = vadd.f32 %v1436, %v1798
        %v1873 = vadd.f32 %v1441, %v1803
        %v1874 = vadd.f32 %v1446, %v1808
        %v1875 = vadd.f32 %v1451, %v1813
        %v1876 = vadd.f32 %v1456, %v1818
        %v1877 = vadd.f32 %v1461, %v1823
        %v1878 = vadd.f32 %v1466, %v1828
        %v1879 = vadd.f32 %v1471, %v1833
        %v1880 = vadd.f32 %v1476, %v1838
        %v1881 = vadd.f32 %v1481, %v1843
        %v1882 = vadd.f32 %v1486, %v1848
        %v1883 = vld [vmem:[%s733] sm:$0xff]
        %v1884 = vld [vmem:[%s733 + $0x8] sm:$0xff]
        %v1885 = vld [vmem:[%s733 + $0x18] sm:$0xff]
        %v1886 = vld [vmem:[%s733 + $0x20] sm:$0xff]
        %v1887 = vld [vmem:[%s733 + $0x30] sm:$0xff]
        %v1888 = vld [vmem:[%s733 + $0x38] sm:$0xff]
        %v1889 = vld [vmem:[%s733 + $0x48] sm:$0xff]
        %v1890 = vld [vmem:[%s733 + $0x50] sm:$0xff]
        %v1891 = vld [vmem:[%s733 + $0x60] sm:$0xff]
        %v1892 = vld [vmem:[%s733 + $0x68] sm:$0xff]
        %v1893 = vld [vmem:[%s733 + $0x78] sm:$0xff]
        %v1894 = vld [vmem:[%s733 + $0x80] sm:$0xff]
        %v1895 = vld [vmem:[%s733 + $0x90] sm:$0xff]
        %v1896 = vld [vmem:[%s733 + $0x98] sm:$0xff]
        %v1897 = vld [vmem:[%s733 + $0xa8] sm:$0xff]
        %v1898 = vld [vmem:[%s733 + $0xb0] sm:$0xff]
        %v1899 = vld [vmem:[%s733 + $0xc0] sm:$0xff]
        %v1900 = vld [vmem:[%s733 + $0xc8] sm:$0xff]
        %v1901 = vld [vmem:[%s733 + $0xd8] sm:$0xff]
        %v1902 = vld [vmem:[%s733 + $0xe0] sm:$0xff]
        %v1903 = vld [vmem:[%s733 + $0xf0] sm:$0xff]
        %v1904 = vld [vmem:[%s733 + $0xf8] sm:$0xff]
        %v1905 = vld [vmem:[%s733 + $0x108] sm:$0xff]
        %v1906 = vld [vmem:[%s733 + $0x110] sm:$0xff]
        %v1907 = vld [vmem:[%s733 + $0x120] sm:$0xff]
        %v1908 = vld [vmem:[%s733 + $0x128] sm:$0xff]
        %v1909 = vld [vmem:[%s733 + $0x138] sm:$0xff]
        %v1910 = vld [vmem:[%s733 + $0x140] sm:$0xff]
        %v1911 = vld [vmem:[%s733 + $0x150] sm:$0xff]
        %v1912 = vld [vmem:[%s733 + $0x158] sm:$0xff]
        %v1913 = vld [vmem:[%s733 + $0x168] sm:$0xff]
        %v1914 = vld [vmem:[%s733 + $0x170] sm:$0xff]
        %s1915 = scalar_lea.vmem %s3, 192
        %v1916 = vld [vmem:[%s1915] sm:$0xff]
        %v1917 = vld [vmem:[%s1915 + $0x8] sm:$0xff]
        %v1918 = vld [vmem:[%s1915 + $0x10] sm:$0xff]
        %v1919 = vld [vmem:[%s1915 + $0x18] sm:$0xff]
        %v1920 = vld [vmem:[%s1915 + $0x20] sm:$0xff]
        %v1921 = vld [vmem:[%s1915 + $0x28] sm:$0xff]
        %v1922 = vld [vmem:[%s1915 + $0x30] sm:$0xff]
        %v1923 = vld [vmem:[%s1915 + $0x38] sm:$0xff]
        %v1925 = vsel %vm687, %v1883, 0
        %v1928 = vsel %vm687, %v1884, 0
        %v1931 = vsel %vm687, %v1885, 0
        %v1934 = vsel %vm687, %v1886, 0
        %v1937 = vsel %vm687, %v1887, 0
        %v1940 = vsel %vm687, %v1888, 0
        %v1943 = vsel %vm687, %v1889, 0
        %v1946 = vsel %vm687, %v1890, 0
        %v1949 = vsel %vm687, %v1891, 0
        %v1952 = vsel %vm687, %v1892, 0
        %v1955 = vsel %vm687, %v1893, 0
        %v1958 = vsel %vm687, %v1894, 0
        %v1961 = vsel %vm687, %v1895, 0
        %v1964 = vsel %vm687, %v1896, 0
        %v1967 = vsel %vm687, %v1897, 0
        %v1970 = vsel %vm687, %v1898, 0
        %v1973 = vsel %vm687, %v1899, 0
        %v1976 = vsel %vm687, %v1900, 0
        %v1979 = vsel %vm687, %v1901, 0
        %v1982 = vsel %vm687, %v1902, 0
        %v1985 = vsel %vm687, %v1903, 0
        %v1988 = vsel %vm687, %v1904, 0
        %v1991 = vsel %vm687, %v1905, 0
        %v1994 = vsel %vm687, %v1906, 0
        %v1997 = vsel %vm687, %v1907, 0
        %v2000 = vsel %vm687, %v1908, 0
        %v2003 = vsel %vm687, %v1909, 0
        %v2006 = vsel %vm687, %v1910, 0
        %v2009 = vsel %vm687, %v1911, 0
        %v2012 = vsel %vm687, %v1912, 0
        %v2015 = vsel %vm687, %v1913, 0
        %v2018 = vsel %vm687, %v1914, 0
        %2020 = vmatprep.subr.mxu0 0.0
        %2021 = vmatpush1.msra.mxu0 0.0
        %2022 = vmatprep.subr.mxu0 0.0
        %2023 = vmatpush1.msra.mxu0 0.0
        %2024 = vmatprep.subr.mxu0 0.0
        %2025 = vmatpush1.msra.mxu0 0.0
        %2026 = vmatprep.subr.mxu0 0.0
        %2027 = vmatpush1.msra.mxu0 0.0
        %2028 = vmatprep.subr.mxu0 0.0
        %2029 = vmatpush1.msra.mxu0 0.0
        %2030 = vmatprep.subr.mxu0 0.0
        %2031 = vmatpush1.msra.mxu0 0.0
        %2032 = vmatprep.subr.mxu0 0.0
        %2033 = vmatpush1.msra.mxu0 0.0
        %2034 = vmatprep.subr.mxu0 0.0
        %2035 = vmatpush1.msra.mxu0 0.0
        %2036 = vmatprep.subr.mxu0 0.0
        %2037 = vmatpush1.msra.mxu0 %v1923
        %2038 = vmatprep.subr.mxu0 0.0
        %2039 = vmatpush1.msra.mxu0 %v1922
        %2040 = vmatprep.subr.mxu0 0.0
        %2041 = vmatpush1.msra.mxu0 %v1921
        %2042 = vmatprep.subr.mxu0 0.0
        %2043 = vmatpush1.msra.mxu0 %v1920
        %2044 = vmatprep.subr.mxu0 0.0
        %2045 = vmatpush1.msra.mxu0 %v1919
        %2046 = vmatprep.subr.mxu0 0.0
        %2047 = vmatpush1.msra.mxu0 %v1918
        %2048 = vmatprep.subr.mxu0 0.0
        %2049 = vmatpush1.msra.mxu0 %v1917
        %2050 = vmatprep.subr.mxu0 0.0
        %2051 = vmatpush1.msra.mxu0 %v1916
        %2052 = vmatprep.subr.mxu0 0.0
        %2053 = vmatpush2.msra.mxu0 0.0
        %2054 = vmatprep.subr.mxu0 0.0
        %2055 = vmatpush2.msra.mxu0 0.0
        %2056 = vmatprep.subr.mxu0 0.0
        %2057 = vmatpush2.msra.mxu0 0.0
        %2058 = vmatprep.subr.mxu0 0.0
        %2059 = vmatpush2.msra.mxu0 0.0
        %2060 = vmatprep.subr.mxu0 0.0
        %2061 = vmatpush2.msra.mxu0 0.0
        %2062 = vmatprep.subr.mxu0 0.0
        %2063 = vmatpush2.msra.mxu0 0.0
        %2064 = vmatprep.subr.mxu0 0.0
        %2065 = vmatpush2.msra.mxu0 0.0
        %2066 = vmatprep.subr.mxu0 0.0
        %2067 = vmatpush2.msra.mxu0 0.0
        %2068 = vmatprep.subr.mxu0 0.0
        %2069 = vmatpush2.msra.mxu0 0.0
        %2070 = vmatprep.subr.mxu0 0.0
        %2071 = vmatpush2.msra.mxu0 0.0
        %2072 = vmatprep.subr.mxu0 0.0
        %2073 = vmatpush2.msra.mxu0 0.0
        %2074 = vmatprep.subr.mxu0 0.0
        %2075 = vmatpush2.msra.mxu0 0.0
        %2076 = vmatprep.subr.mxu0 0.0
        %2077 = vmatpush2.msra.mxu0 0.0
        %2078 = vmatprep.subr.mxu0 0.0
        %2079 = vmatpush2.msra.mxu0 0.0
        %2080 = vmatprep.subr.mxu0 0.0
        %2081 = vmatpush2.msra.mxu0 0.0
        %2082 = vmatprep.subr.mxu0 0.0
        %2083 = vmatpush2.msra.mxu0 0.0
        %2084 = vmatprep.mubr.f32.mxu0 0.0
        %2085 = vmatmul.mubr.f32.gmra.mxu0 %v1925
        %v2086 = vpop.f32.mrf.mxu0
        %v2087 = vadd.f32 0.0, %v2086
        %v2088 = vpop.f32.mrf.mxu0
        %2089 = vmatprep.mubr.f32.mxu0 0.0
        %2090 = vmatmul.mubr.f32.gmra.mxu0 %v1928
        %v2091 = vpop.f32.mrf.mxu0
        %v2092 = vadd.f32 0.0, %v2091
        %v2093 = vpop.f32.mrf.mxu0
        %2094 = vmatprep.mubr.f32.mxu0 0.0
        %2095 = vmatmul.mubr.f32.gmra.mxu0 %v1931
        %v2096 = vpop.f32.mrf.mxu0
        %v2097 = vadd.f32 0.0, %v2096
        %v2098 = vpop.f32.mrf.mxu0
        %2099 = vmatprep.mubr.f32.mxu0 0.0
        %2100 = vmatmul.mubr.f32.gmra.mxu0 %v1934
        %v2101 = vpop.f32.mrf.mxu0
        %v2102 = vadd.f32 0.0, %v2101
        %v2103 = vpop.f32.mrf.mxu0
        %2104 = vmatprep.mubr.f32.mxu0 0.0
        %2105 = vmatmul.mubr.f32.gmra.mxu0 %v1937
        %v2106 = vpop.f32.mrf.mxu0
        %v2107 = vadd.f32 0.0, %v2106
        %v2108 = vpop.f32.mrf.mxu0
        %2109 = vmatprep.mubr.f32.mxu0 0.0
        %2110 = vmatmul.mubr.f32.gmra.mxu0 %v1940
        %v2111 = vpop.f32.mrf.mxu0
        %v2112 = vadd.f32 0.0, %v2111
        %v2113 = vpop.f32.mrf.mxu0
        %2114 = vmatprep.mubr.f32.mxu0 0.0
        %2115 = vmatmul.mubr.f32.gmra.mxu0 %v1943
        %v2116 = vpop.f32.mrf.mxu0
        %v2117 = vadd.f32 0.0, %v2116
        %v2118 = vpop.f32.mrf.mxu0
        %2119 = vmatprep.mubr.f32.mxu0 0.0
        %2120 = vmatmul.mubr.f32.gmra.mxu0 %v1946
        %v2121 = vpop.f32.mrf.mxu0
        %v2122 = vadd.f32 0.0, %v2121
        %v2123 = vpop.f32.mrf.mxu0
        %2124 = vmatprep.mubr.f32.mxu0 0.0
        %2125 = vmatmul.mubr.f32.gmra.mxu0 %v1949
        %v2126 = vpop.f32.mrf.mxu0
        %v2127 = vadd.f32 0.0, %v2126
        %v2128 = vpop.f32.mrf.mxu0
        %2129 = vmatprep.mubr.f32.mxu0 0.0
        %2130 = vmatmul.mubr.f32.gmra.mxu0 %v1952
        %v2131 = vpop.f32.mrf.mxu0
        %v2132 = vadd.f32 0.0, %v2131
        %v2133 = vpop.f32.mrf.mxu0
        %2134 = vmatprep.mubr.f32.mxu0 0.0
        %2135 = vmatmul.mubr.f32.gmra.mxu0 %v1955
        %v2136 = vpop.f32.mrf.mxu0
        %v2137 = vadd.f32 0.0, %v2136
        %v2138 = vpop.f32.mrf.mxu0
        %2139 = vmatprep.mubr.f32.mxu0 0.0
        %2140 = vmatmul.mubr.f32.gmra.mxu0 %v1958
        %v2141 = vpop.f32.mrf.mxu0
        %v2142 = vadd.f32 0.0, %v2141
        %v2143 = vpop.f32.mrf.mxu0
        %2144 = vmatprep.mubr.f32.mxu0 0.0
        %2145 = vmatmul.mubr.f32.gmra.mxu0 %v1961
        %v2146 = vpop.f32.mrf.mxu0
        %v2147 = vadd.f32 0.0, %v2146
        %v2148 = vpop.f32.mrf.mxu0
        %2149 = vmatprep.mubr.f32.mxu0 0.0
        %2150 = vmatmul.mubr.f32.gmra.mxu0 %v1964
        %v2151 = vpop.f32.mrf.mxu0
        %v2152 = vadd.f32 0.0, %v2151
        %v2153 = vpop.f32.mrf.mxu0
        %2154 = vmatprep.mubr.f32.mxu0 0.0
        %2155 = vmatmul.mubr.f32.gmra.mxu0 %v1967
        %v2156 = vpop.f32.mrf.mxu0
        %v2157 = vadd.f32 0.0, %v2156
        %v2158 = vpop.f32.mrf.mxu0
        %2159 = vmatprep.mubr.f32.mxu0 0.0
        %2160 = vmatmul.mubr.f32.gmra.mxu0 %v1970
        %v2161 = vpop.f32.mrf.mxu0
        %v2162 = vadd.f32 0.0, %v2161
        %v2163 = vpop.f32.mrf.mxu0
        %2164 = vmatprep.mubr.f32.mxu0 0.0
        %2165 = vmatmul.mubr.f32.gmra.mxu0 %v1973
        %v2166 = vpop.f32.mrf.mxu0
        %v2167 = vadd.f32 0.0, %v2166
        %v2168 = vpop.f32.mrf.mxu0
        %2169 = vmatprep.mubr.f32.mxu0 0.0
        %2170 = vmatmul.mubr.f32.gmra.mxu0 %v1976
        %v2171 = vpop.f32.mrf.mxu0
        %v2172 = vadd.f32 0.0, %v2171
        %v2173 = vpop.f32.mrf.mxu0
        %2174 = vmatprep.mubr.f32.mxu0 0.0
        %2175 = vmatmul.mubr.f32.gmra.mxu0 %v1979
        %v2176 = vpop.f32.mrf.mxu0
        %v2177 = vadd.f32 0.0, %v2176
        %v2178 = vpop.f32.mrf.mxu0
        %2179 = vmatprep.mubr.f32.mxu0 0.0
        %2180 = vmatmul.mubr.f32.gmra.mxu0 %v1982
        %v2181 = vpop.f32.mrf.mxu0
        %v2182 = vadd.f32 0.0, %v2181
        %v2183 = vpop.f32.mrf.mxu0
        %2184 = vmatprep.mubr.f32.mxu0 0.0
        %2185 = vmatmul.mubr.f32.gmra.mxu0 %v1985
        %v2186 = vpop.f32.mrf.mxu0
        %v2187 = vadd.f32 0.0, %v2186
        %v2188 = vpop.f32.mrf.mxu0
        %2189 = vmatprep.mubr.f32.mxu0 0.0
        %2190 = vmatmul.mubr.f32.gmra.mxu0 %v1988
        %v2191 = vpop.f32.mrf.mxu0
        %v2192 = vadd.f32 0.0, %v2191
        %v2193 = vpop.f32.mrf.mxu0
        %2194 = vmatprep.mubr.f32.mxu0 0.0
        %2195 = vmatmul.mubr.f32.gmra.mxu0 %v1991
        %v2196 = vpop.f32.mrf.mxu0
        %v2197 = vadd.f32 0.0, %v2196
        %v2198 = vpop.f32.mrf.mxu0
        %2199 = vmatprep.mubr.f32.mxu0 0.0
        %2200 = vmatmul.mubr.f32.gmra.mxu0 %v1994
        %v2201 = vpop.f32.mrf.mxu0
        %v2202 = vadd.f32 0.0, %v2201
        %v2203 = vpop.f32.mrf.mxu0
        %2204 = vmatprep.mubr.f32.mxu0 0.0
        %2205 = vmatmul.mubr.f32.gmra.mxu0 %v1997
        %v2206 = vpop.f32.mrf.mxu0
        %v2207 = vadd.f32 0.0, %v2206
        %v2208 = vpop.f32.mrf.mxu0
        %2209 = vmatprep.mubr.f32.mxu0 0.0
        %2210 = vmatmul.mubr.f32.gmra.mxu0 %v2000
        %v2211 = vpop.f32.mrf.mxu0
        %v2212 = vadd.f32 0.0, %v2211
        %v2213 = vpop.f32.mrf.mxu0
        %2214 = vmatprep.mubr.f32.mxu0 0.0
        %2215 = vmatmul.mubr.f32.gmra.mxu0 %v2003
        %v2216 = vpop.f32.mrf.mxu0
        %v2217 = vadd.f32 0.0, %v2216
        %v2218 = vpop.f32.mrf.mxu0
        %2219 = vmatprep.mubr.f32.mxu0 0.0
        %2220 = vmatmul.mubr.f32.gmra.mxu0 %v2006
        %v2221 = vpop.f32.mrf.mxu0
        %v2222 = vadd.f32 0.0, %v2221
        %v2223 = vpop.f32.mrf.mxu0
        %2224 = vmatprep.mubr.f32.mxu0 0.0
        %2225 = vmatmul.mubr.f32.gmra.mxu0 %v2009
        %v2226 = vpop.f32.mrf.mxu0
        %v2227 = vadd.f32 0.0, %v2226
        %v2228 = vpop.f32.mrf.mxu0
        %2229 = vmatprep.mubr.f32.mxu0 0.0
        %2230 = vmatmul.mubr.f32.gmra.mxu0 %v2012
        %v2231 = vpop.f32.mrf.mxu0
        %v2232 = vadd.f32 0.0, %v2231
        %v2233 = vpop.f32.mrf.mxu0
        %2234 = vmatprep.mubr.f32.mxu0 0.0
        %2235 = vmatmul.mubr.f32.gmra.mxu0 %v2015
        %v2236 = vpop.f32.mrf.mxu0
        %v2237 = vadd.f32 0.0, %v2236
        %v2238 = vpop.f32.mrf.mxu0
        %2239 = vmatprep.mubr.f32.mxu0 0.0
        %2240 = vmatmul.mubr.f32.gmra.mxu0 %v2018
        %v2241 = vpop.f32.mrf.mxu0
        %v2242 = vadd.f32 0.0, %v2241
        %v2243 = vpop.f32.mrf.mxu0
        %2244 = vdwg.mxu0
        %v2245 = vadd.f32 %v1851, %v2087
        %v2246 = vadd.f32 %v1852, %v2092
        %v2247 = vadd.f32 %v1853, %v2097
        %v2248 = vadd.f32 %v1854, %v2102
        %v2249 = vadd.f32 %v1855, %v2107
        %v2250 = vadd.f32 %v1856, %v2112
        %v2251 = vadd.f32 %v1857, %v2117
        %v2252 = vadd.f32 %v1858, %v2122
        %v2253 = vadd.f32 %v1859, %v2127
        %v2254 = vadd.f32 %v1860, %v2132
        %v2255 = vadd.f32 %v1861, %v2137
        %v2256 = vadd.f32 %v1862, %v2142
        %v2257 = vadd.f32 %v1863, %v2147
        %v2258 = vadd.f32 %v1864, %v2152
        %v2259 = vadd.f32 %v1865, %v2157
        %v2260 = vadd.f32 %v1866, %v2162
        %v2261 = vadd.f32 %v1867, %v2167
        %v2262 = vadd.f32 %v1868, %v2172
        %v2263 = vadd.f32 %v1869, %v2177
        %v2264 = vadd.f32 %v1870, %v2182
        %v2265 = vadd.f32 %v1871, %v2187
        %v2266 = vadd.f32 %v1872, %v2192
        %v2267 = vadd.f32 %v1873, %v2197
        %v2268 = vadd.f32 %v1874, %v2202
        %v2269 = vadd.f32 %v1875, %v2207
        %v2270 = vadd.f32 %v1876, %v2212
        %v2271 = vadd.f32 %v1877, %v2217
        %v2272 = vadd.f32 %v1878, %v2222
        %v2273 = vadd.f32 %v1879, %v2227
        %v2274 = vadd.f32 %v1880, %v2232
        %v2275 = vadd.f32 %v1881, %v2237
        %v2276 = vadd.f32 %v1882, %v2242
        %v2277 = vld [vmem:[%s733 + $0x1] sm:$0xff]
        %v2278 = vld [vmem:[%s733 + $0x9] sm:$0xff]
        %v2279 = vld [vmem:[%s733 + $0x19] sm:$0xff]
        %v2280 = vld [vmem:[%s733 + $0x21] sm:$0xff]
        %v2281 = vld [vmem:[%s733 + $0x31] sm:$0xff]
        %v2282 = vld [vmem:[%s733 + $0x39] sm:$0xff]
        %v2283 = vld [vmem:[%s733 + $0x49] sm:$0xff]
        %v2284 = vld [vmem:[%s733 + $0x51] sm:$0xff]
        %v2285 = vld [vmem:[%s733 + $0x61] sm:$0xff]
        %v2286 = vld [vmem:[%s733 + $0x69] sm:$0xff]
        %v2287 = vld [vmem:[%s733 + $0x79] sm:$0xff]
        %v2288 = vld [vmem:[%s733 + $0x81] sm:$0xff]
        %v2289 = vld [vmem:[%s733 + $0x91] sm:$0xff]
        %v2290 = vld [vmem:[%s733 + $0x99] sm:$0xff]
        %v2291 = vld [vmem:[%s733 + $0xa9] sm:$0xff]
        %v2292 = vld [vmem:[%s733 + $0xb1] sm:$0xff]
        %v2293 = vld [vmem:[%s733 + $0xc1] sm:$0xff]
        %v2294 = vld [vmem:[%s733 + $0xc9] sm:$0xff]
        %v2295 = vld [vmem:[%s733 + $0xd9] sm:$0xff]
        %v2296 = vld [vmem:[%s733 + $0xe1] sm:$0xff]
        %v2297 = vld [vmem:[%s733 + $0xf1] sm:$0xff]
        %v2298 = vld [vmem:[%s733 + $0xf9] sm:$0xff]
        %v2299 = vld [vmem:[%s733 + $0x109] sm:$0xff]
        %v2300 = vld [vmem:[%s733 + $0x111] sm:$0xff]
        %v2301 = vld [vmem:[%s733 + $0x121] sm:$0xff]
        %v2302 = vld [vmem:[%s733 + $0x129] sm:$0xff]
        %v2303 = vld [vmem:[%s733 + $0x139] sm:$0xff]
        %v2304 = vld [vmem:[%s733 + $0x141] sm:$0xff]
        %v2305 = vld [vmem:[%s733 + $0x151] sm:$0xff]
        %v2306 = vld [vmem:[%s733 + $0x159] sm:$0xff]
        %v2307 = vld [vmem:[%s733 + $0x169] sm:$0xff]
        %v2308 = vld [vmem:[%s733 + $0x171] sm:$0xff]
        %s2309 = scalar_lea.vmem %s3, 256
        %v2310 = vld [vmem:[%s2309] sm:$0xff]
        %v2311 = vld [vmem:[%s2309 + $0x8] sm:$0xff]
        %v2312 = vld [vmem:[%s2309 + $0x10] sm:$0xff]
        %v2313 = vld [vmem:[%s2309 + $0x18] sm:$0xff]
        %v2314 = vld [vmem:[%s2309 + $0x20] sm:$0xff]
        %v2315 = vld [vmem:[%s2309 + $0x28] sm:$0xff]
        %v2316 = vld [vmem:[%s2309 + $0x30] sm:$0xff]
        %v2317 = vld [vmem:[%s2309 + $0x38] sm:$0xff]
        %v2319 = vsel %vm687, %v2277, 0
        %v2322 = vsel %vm687, %v2278, 0
        %v2325 = vsel %vm687, %v2279, 0
        %v2328 = vsel %vm687, %v2280, 0
        %v2331 = vsel %vm687, %v2281, 0
        %v2334 = vsel %vm687, %v2282, 0
        %v2337 = vsel %vm687, %v2283, 0
        %v2340 = vsel %vm687, %v2284, 0
        %v2343 = vsel %vm687, %v2285, 0
        %v2346 = vsel %vm687, %v2286, 0
        %v2349 = vsel %vm687, %v2287, 0
        %v2352 = vsel %vm687, %v2288, 0
        %v2355 = vsel %vm687, %v2289, 0
        %v2358 = vsel %vm687, %v2290, 0
        %v2361 = vsel %vm687, %v2291, 0
        %v2364 = vsel %vm687, %v2292, 0
        %v2367 = vsel %vm687, %v2293, 0
        %v2370 = vsel %vm687, %v2294, 0
        %v2373 = vsel %vm687, %v2295, 0
        %v2376 = vsel %vm687, %v2296, 0
        %v2379 = vsel %vm687, %v2297, 0
        %v2382 = vsel %vm687, %v2298, 0
        %v2385 = vsel %vm687, %v2299, 0
        %v2388 = vsel %vm687, %v2300, 0
        %v2391 = vsel %vm687, %v2301, 0
        %v2394 = vsel %vm687, %v2302, 0
        %v2397 = vsel %vm687, %v2303, 0
        %v2400 = vsel %vm687, %v2304, 0
        %v2403 = vsel %vm687, %v2305, 0
        %v2406 = vsel %vm687, %v2306, 0
        %v2409 = vsel %vm687, %v2307, 0
        %v2412 = vsel %vm687, %v2308, 0
        %2414 = vmatprep.subr.mxu0 0.0
        %2415 = vmatpush1.msra.mxu0 0.0
        %2416 = vmatprep.subr.mxu0 0.0
        %2417 = vmatpush1.msra.mxu0 0.0
        %2418 = vmatprep.subr.mxu0 0.0
        %2419 = vmatpush1.msra.mxu0 0.0
        %2420 = vmatprep.subr.mxu0 0.0
        %2421 = vmatpush1.msra.mxu0 0.0
        %2422 = vmatprep.subr.mxu0 0.0
        %2423 = vmatpush1.msra.mxu0 0.0
        %2424 = vmatprep.subr.mxu0 0.0
        %2425 = vmatpush1.msra.mxu0 0.0
        %2426 = vmatprep.subr.mxu0 0.0
        %2427 = vmatpush1.msra.mxu0 0.0
        %2428 = vmatprep.subr.mxu0 0.0
        %2429 = vmatpush1.msra.mxu0 0.0
        %2430 = vmatprep.subr.mxu0 0.0
        %2431 = vmatpush1.msra.mxu0 %v2317
        %2432 = vmatprep.subr.mxu0 0.0
        %2433 = vmatpush1.msra.mxu0 %v2316
        %2434 = vmatprep.subr.mxu0 0.0
        %2435 = vmatpush1.msra.mxu0 %v2315
        %2436 = vmatprep.subr.mxu0 0.0
        %2437 = vmatpush1.msra.mxu0 %v2314
        %2438 = vmatprep.subr.mxu0 0.0
        %2439 = vmatpush1.msra.mxu0 %v2313
        %2440 = vmatprep.subr.mxu0 0.0
        %2441 = vmatpush1.msra.mxu0 %v2312
        %2442 = vmatprep.subr.mxu0 0.0
        %2443 = vmatpush1.msra.mxu0 %v2311
        %2444 = vmatprep.subr.mxu0 0.0
        %2445 = vmatpush1.msra.mxu0 %v2310
        %2446 = vmatprep.subr.mxu0 0.0
        %2447 = vmatpush2.msra.mxu0 0.0
        %2448 = vmatprep.subr.mxu0 0.0
        %2449 = vmatpush2.msra.mxu0 0.0
        %2450 = vmatprep.subr.mxu0 0.0
        %2451 = vmatpush2.msra.mxu0 0.0
        %2452 = vmatprep.subr.mxu0 0.0
        %2453 = vmatpush2.msra.mxu0 0.0
        %2454 = vmatprep.subr.mxu0 0.0
        %2455 = vmatpush2.msra.mxu0 0.0
        %2456 = vmatprep.subr.mxu0 0.0
        %2457 = vmatpush2.msra.mxu0 0.0
        %2458 = vmatprep.subr.mxu0 0.0
        %2459 = vmatpush2.msra.mxu0 0.0
        %2460 = vmatprep.subr.mxu0 0.0
        %2461 = vmatpush2.msra.mxu0 0.0
        %2462 = vmatprep.subr.mxu0 0.0
        %2463 = vmatpush2.msra.mxu0 0.0
        %2464 = vmatprep.subr.mxu0 0.0
        %2465 = vmatpush2.msra.mxu0 0.0
        %2466 = vmatprep.subr.mxu0 0.0
        %2467 = vmatpush2.msra.mxu0 0.0
        %2468 = vmatprep.subr.mxu0 0.0
        %2469 = vmatpush2.msra.mxu0 0.0
        %2470 = vmatprep.subr.mxu0 0.0
        %2471 = vmatpush2.msra.mxu0 0.0
        %2472 = vmatprep.subr.mxu0 0.0
        %2473 = vmatpush2.msra.mxu0 0.0
        %2474 = vmatprep.subr.mxu0 0.0
        %2475 = vmatpush2.msra.mxu0 0.0
        %2476 = vmatprep.subr.mxu0 0.0
        %2477 = vmatpush2.msra.mxu0 0.0
        %2478 = vmatprep.mubr.f32.mxu0 0.0
        %2479 = vmatmul.mubr.f32.gmra.mxu0 %v2319
        %v2480 = vpop.f32.mrf.mxu0
        %v2481 = vadd.f32 0.0, %v2480
        %v2482 = vpop.f32.mrf.mxu0
        %2483 = vmatprep.mubr.f32.mxu0 0.0
        %2484 = vmatmul.mubr.f32.gmra.mxu0 %v2322
        %v2485 = vpop.f32.mrf.mxu0
        %v2486 = vadd.f32 0.0, %v2485
        %v2487 = vpop.f32.mrf.mxu0
        %2488 = vmatprep.mubr.f32.mxu0 0.0
        %2489 = vmatmul.mubr.f32.gmra.mxu0 %v2325
        %v2490 = vpop.f32.mrf.mxu0
        %v2491 = vadd.f32 0.0, %v2490
        %v2492 = vpop.f32.mrf.mxu0
        %2493 = vmatprep.mubr.f32.mxu0 0.0
        %2494 = vmatmul.mubr.f32.gmra.mxu0 %v2328
        %v2495 = vpop.f32.mrf.mxu0
        %v2496 = vadd.f32 0.0, %v2495
        %v2497 = vpop.f32.mrf.mxu0
        %2498 = vmatprep.mubr.f32.mxu0 0.0
        %2499 = vmatmul.mubr.f32.gmra.mxu0 %v2331
        %v2500 = vpop.f32.mrf.mxu0
        %v2501 = vadd.f32 0.0, %v2500
        %v2502 = vpop.f32.mrf.mxu0
        %2503 = vmatprep.mubr.f32.mxu0 0.0
        %2504 = vmatmul.mubr.f32.gmra.mxu0 %v2334
        %v2505 = vpop.f32.mrf.mxu0
        %v2506 = vadd.f32 0.0, %v2505
        %v2507 = vpop.f32.mrf.mxu0
        %2508 = vmatprep.mubr.f32.mxu0 0.0
        %2509 = vmatmul.mubr.f32.gmra.mxu0 %v2337
        %v2510 = vpop.f32.mrf.mxu0
        %v2511 = vadd.f32 0.0, %v2510
        %v2512 = vpop.f32.mrf.mxu0
        %2513 = vmatprep.mubr.f32.mxu0 0.0
        %2514 = vmatmul.mubr.f32.gmra.mxu0 %v2340
        %v2515 = vpop.f32.mrf.mxu0
        %v2516 = vadd.f32 0.0, %v2515
        %v2517 = vpop.f32.mrf.mxu0
        %2518 = vmatprep.mubr.f32.mxu0 0.0
        %2519 = vmatmul.mubr.f32.gmra.mxu0 %v2343
        %v2520 = vpop.f32.mrf.mxu0
        %v2521 = vadd.f32 0.0, %v2520
        %v2522 = vpop.f32.mrf.mxu0
        %2523 = vmatprep.mubr.f32.mxu0 0.0
        %2524 = vmatmul.mubr.f32.gmra.mxu0 %v2346
        %v2525 = vpop.f32.mrf.mxu0
        %v2526 = vadd.f32 0.0, %v2525
        %v2527 = vpop.f32.mrf.mxu0
        %2528 = vmatprep.mubr.f32.mxu0 0.0
        %2529 = vmatmul.mubr.f32.gmra.mxu0 %v2349
        %v2530 = vpop.f32.mrf.mxu0
        %v2531 = vadd.f32 0.0, %v2530
        %v2532 = vpop.f32.mrf.mxu0
        %2533 = vmatprep.mubr.f32.mxu0 0.0
        %2534 = vmatmul.mubr.f32.gmra.mxu0 %v2352
        %v2535 = vpop.f32.mrf.mxu0
        %v2536 = vadd.f32 0.0, %v2535
        %v2537 = vpop.f32.mrf.mxu0
        %2538 = vmatprep.mubr.f32.mxu0 0.0
        %2539 = vmatmul.mubr.f32.gmra.mxu0 %v2355
        %v2540 = vpop.f32.mrf.mxu0
        %v2541 = vadd.f32 0.0, %v2540
        %v2542 = vpop.f32.mrf.mxu0
        %2543 = vmatprep.mubr.f32.mxu0 0.0
        %2544 = vmatmul.mubr.f32.gmra.mxu0 %v2358
        %v2545 = vpop.f32.mrf.mxu0
        %v2546 = vadd.f32 0.0, %v2545
        %v2547 = vpop.f32.mrf.mxu0
        %2548 = vmatprep.mubr.f32.mxu0 0.0
        %2549 = vmatmul.mubr.f32.gmra.mxu0 %v2361
        %v2550 = vpop.f32.mrf.mxu0
        %v2551 = vadd.f32 0.0, %v2550
        %v2552 = vpop.f32.mrf.mxu0
        %2553 = vmatprep.mubr.f32.mxu0 0.0
        %2554 = vmatmul.mubr.f32.gmra.mxu0 %v2364
        %v2555 = vpop.f32.mrf.mxu0
        %v2556 = vadd.f32 0.0, %v2555
        %v2557 = vpop.f32.mrf.mxu0
        %2558 = vmatprep.mubr.f32.mxu0 0.0
        %2559 = vmatmul.mubr.f32.gmra.mxu0 %v2367
        %v2560 = vpop.f32.mrf.mxu0
        %v2561 = vadd.f32 0.0, %v2560
        %v2562 = vpop.f32.mrf.mxu0
        %2563 = vmatprep.mubr.f32.mxu0 0.0
        %2564 = vmatmul.mubr.f32.gmra.mxu0 %v2370
        %v2565 = vpop.f32.mrf.mxu0
        %v2566 = vadd.f32 0.0, %v2565
        %v2567 = vpop.f32.mrf.mxu0
        %2568 = vmatprep.mubr.f32.mxu0 0.0
        %2569 = vmatmul.mubr.f32.gmra.mxu0 %v2373
        %v2570 = vpop.f32.mrf.mxu0
        %v2571 = vadd.f32 0.0, %v2570
        %v2572 = vpop.f32.mrf.mxu0
        %2573 = vmatprep.mubr.f32.mxu0 0.0
        %2574 = vmatmul.mubr.f32.gmra.mxu0 %v2376
        %v2575 = vpop.f32.mrf.mxu0
        %v2576 = vadd.f32 0.0, %v2575
        %v2577 = vpop.f32.mrf.mxu0
        %2578 = vmatprep.mubr.f32.mxu0 0.0
        %2579 = vmatmul.mubr.f32.gmra.mxu0 %v2379
        %v2580 = vpop.f32.mrf.mxu0
        %v2581 = vadd.f32 0.0, %v2580
        %v2582 = vpop.f32.mrf.mxu0
        %2583 = vmatprep.mubr.f32.mxu0 0.0
        %2584 = vmatmul.mubr.f32.gmra.mxu0 %v2382
        %v2585 = vpop.f32.mrf.mxu0
        %v2586 = vadd.f32 0.0, %v2585
        %v2587 = vpop.f32.mrf.mxu0
        %2588 = vmatprep.mubr.f32.mxu0 0.0
        %2589 = vmatmul.mubr.f32.gmra.mxu0 %v2385
        %v2590 = vpop.f32.mrf.mxu0
        %v2591 = vadd.f32 0.0, %v2590
        %v2592 = vpop.f32.mrf.mxu0
        %2593 = vmatprep.mubr.f32.mxu0 0.0
        %2594 = vmatmul.mubr.f32.gmra.mxu0 %v2388
        %v2595 = vpop.f32.mrf.mxu0
        %v2596 = vadd.f32 0.0, %v2595
        %v2597 = vpop.f32.mrf.mxu0
        %2598 = vmatprep.mubr.f32.mxu0 0.0
        %2599 = vmatmul.mubr.f32.gmra.mxu0 %v2391
        %v2600 = vpop.f32.mrf.mxu0
        %v2601 = vadd.f32 0.0, %v2600
        %v2602 = vpop.f32.mrf.mxu0
        %2603 = vmatprep.mubr.f32.mxu0 0.0
        %2604 = vmatmul.mubr.f32.gmra.mxu0 %v2394
        %v2605 = vpop.f32.mrf.mxu0
        %v2606 = vadd.f32 0.0, %v2605
        %v2607 = vpop.f32.mrf.mxu0
        %2608 = vmatprep.mubr.f32.mxu0 0.0
        %2609 = vmatmul.mubr.f32.gmra.mxu0 %v2397
        %v2610 = vpop.f32.mrf.mxu0
        %v2611 = vadd.f32 0.0, %v2610
        %v2612 = vpop.f32.mrf.mxu0
        %2613 = vmatprep.mubr.f32.mxu0 0.0
        %2614 = vmatmul.mubr.f32.gmra.mxu0 %v2400
        %v2615 = vpop.f32.mrf.mxu0
        %v2616 = vadd.f32 0.0, %v2615
        %v2617 = vpop.f32.mrf.mxu0
        %2618 = vmatprep.mubr.f32.mxu0 0.0
        %2619 = vmatmul.mubr.f32.gmra.mxu0 %v2403
        %v2620 = vpop.f32.mrf.mxu0
        %v2621 = vadd.f32 0.0, %v2620
        %v2622 = vpop.f32.mrf.mxu0
        %2623 = vmatprep.mubr.f32.mxu0 0.0
        %2624 = vmatmul.mubr.f32.gmra.mxu0 %v2406
        %v2625 = vpop.f32.mrf.mxu0
        %v2626 = vadd.f32 0.0, %v2625
        %v2627 = vpop.f32.mrf.mxu0
        %2628 = vmatprep.mubr.f32.mxu0 0.0
        %2629 = vmatmul.mubr.f32.gmra.mxu0 %v2409
        %v2630 = vpop.f32.mrf.mxu0
        %v2631 = vadd.f32 0.0, %v2630
        %v2632 = vpop.f32.mrf.mxu0
        %2633 = vmatprep.mubr.f32.mxu0 0.0
        %2634 = vmatmul.mubr.f32.gmra.mxu0 %v2412
        %v2635 = vpop.f32.mrf.mxu0
        %v2636 = vadd.f32 0.0, %v2635
        %v2637 = vpop.f32.mrf.mxu0
        %2638 = vdwg.mxu0
        %v2639 = vadd.f32 %v2245, %v2481
        %v2640 = vadd.f32 %v2246, %v2486
        %v2641 = vadd.f32 %v2247, %v2491
        %v2642 = vadd.f32 %v2248, %v2496
        %v2643 = vadd.f32 %v2249, %v2501
        %v2644 = vadd.f32 %v2250, %v2506
        %v2645 = vadd.f32 %v2251, %v2511
        %v2646 = vadd.f32 %v2252, %v2516
        %v2647 = vadd.f32 %v2253, %v2521
        %v2648 = vadd.f32 %v2254, %v2526
        %v2649 = vadd.f32 %v2255, %v2531
        %v2650 = vadd.f32 %v2256, %v2536
        %v2651 = vadd.f32 %v2257, %v2541
        %v2652 = vadd.f32 %v2258, %v2546
        %v2653 = vadd.f32 %v2259, %v2551
        %v2654 = vadd.f32 %v2260, %v2556
        %v2655 = vadd.f32 %v2261, %v2561
        %v2656 = vadd.f32 %v2262, %v2566
        %v2657 = vadd.f32 %v2263, %v2571
        %v2658 = vadd.f32 %v2264, %v2576
        %v2659 = vadd.f32 %v2265, %v2581
        %v2660 = vadd.f32 %v2266, %v2586
        %v2661 = vadd.f32 %v2267, %v2591
        %v2662 = vadd.f32 %v2268, %v2596
        %v2663 = vadd.f32 %v2269, %v2601
        %v2664 = vadd.f32 %v2270, %v2606
        %v2665 = vadd.f32 %v2271, %v2611
        %v2666 = vadd.f32 %v2272, %v2616
        %v2667 = vadd.f32 %v2273, %v2621
        %v2668 = vadd.f32 %v2274, %v2626
        %v2669 = vadd.f32 %v2275, %v2631
        %v2670 = vadd.f32 %v2276, %v2636
        %v2671 = vld [vmem:[%s733 + $0x2] sm:$0xff]
        %v2672 = vld [vmem:[%s733 + $0xa] sm:$0xff]
        %v2673 = vld [vmem:[%s733 + $0x1a] sm:$0xff]
        %v2674 = vld [vmem:[%s733 + $0x22] sm:$0xff]
        %v2675 = vld [vmem:[%s733 + $0x32] sm:$0xff]
        %v2676 = vld [vmem:[%s733 + $0x3a] sm:$0xff]
        %v2677 = vld [vmem:[%s733 + $0x4a] sm:$0xff]
        %v2678 = vld [vmem:[%s733 + $0x52] sm:$0xff]
        %v2679 = vld [vmem:[%s733 + $0x62] sm:$0xff]
        %v2680 = vld [vmem:[%s733 + $0x6a] sm:$0xff]
        %v2681 = vld [vmem:[%s733 + $0x7a] sm:$0xff]
        %v2682 = vld [vmem:[%s733 + $0x82] sm:$0xff]
        %v2683 = vld [vmem:[%s733 + $0x92] sm:$0xff]
        %v2684 = vld [vmem:[%s733 + $0x9a] sm:$0xff]
        %v2685 = vld [vmem:[%s733 + $0xaa] sm:$0xff]
        %v2686 = vld [vmem:[%s733 + $0xb2] sm:$0xff]
        %v2687 = vld [vmem:[%s733 + $0xc2] sm:$0xff]
        %v2688 = vld [vmem:[%s733 + $0xca] sm:$0xff]
        %v2689 = vld [vmem:[%s733 + $0xda] sm:$0xff]
        %v2690 = vld [vmem:[%s733 + $0xe2] sm:$0xff]
        %v2691 = vld [vmem:[%s733 + $0xf2] sm:$0xff]
        %v2692 = vld [vmem:[%s733 + $0xfa] sm:$0xff]
        %v2693 = vld [vmem:[%s733 + $0x10a] sm:$0xff]
        %v2694 = vld [vmem:[%s733 + $0x112] sm:$0xff]
        %v2695 = vld [vmem:[%s733 + $0x122] sm:$0xff]
        %v2696 = vld [vmem:[%s733 + $0x12a] sm:$0xff]
        %v2697 = vld [vmem:[%s733 + $0x13a] sm:$0xff]
        %v2698 = vld [vmem:[%s733 + $0x142] sm:$0xff]
        %v2699 = vld [vmem:[%s733 + $0x152] sm:$0xff]
        %v2700 = vld [vmem:[%s733 + $0x15a] sm:$0xff]
        %v2701 = vld [vmem:[%s733 + $0x16a] sm:$0xff]
        %v2702 = vld [vmem:[%s733 + $0x172] sm:$0xff]
        %s2703 = scalar_lea.vmem %s3, 320
        %v2704 = vld [vmem:[%s2703] sm:$0xff]
        %v2705 = vld [vmem:[%s2703 + $0x8] sm:$0xff]
        %v2706 = vld [vmem:[%s2703 + $0x10] sm:$0xff]
        %v2707 = vld [vmem:[%s2703 + $0x18] sm:$0xff]
        %v2708 = vld [vmem:[%s2703 + $0x20] sm:$0xff]
        %v2709 = vld [vmem:[%s2703 + $0x28] sm:$0xff]
        %v2710 = vld [vmem:[%s2703 + $0x30] sm:$0xff]
        %v2711 = vld [vmem:[%s2703 + $0x38] sm:$0xff]
        %v2713 = vsel %vm687, %v2671, 0
        %v2716 = vsel %vm687, %v2672, 0
        %v2719 = vsel %vm687, %v2673, 0
        %v2722 = vsel %vm687, %v2674, 0
        %v2725 = vsel %vm687, %v2675, 0
        %v2728 = vsel %vm687, %v2676, 0
        %v2731 = vsel %vm687, %v2677, 0
        %v2734 = vsel %vm687, %v2678, 0
        %v2737 = vsel %vm687, %v2679, 0
        %v2740 = vsel %vm687, %v2680, 0
        %v2743 = vsel %vm687, %v2681, 0
        %v2746 = vsel %vm687, %v2682, 0
        %v2749 = vsel %vm687, %v2683, 0
        %v2752 = vsel %vm687, %v2684, 0
        %v2755 = vsel %vm687, %v2685, 0
        %v2758 = vsel %vm687, %v2686, 0
        %v2761 = vsel %vm687, %v2687, 0
        %v2764 = vsel %vm687, %v2688, 0
        %v2767 = vsel %vm687, %v2689, 0
        %v2770 = vsel %vm687, %v2690, 0
        %v2773 = vsel %vm687, %v2691, 0
        %v2776 = vsel %vm687, %v2692, 0
        %v2779 = vsel %vm687, %v2693, 0
        %v2782 = vsel %vm687, %v2694, 0
        %v2785 = vsel %vm687, %v2695, 0
        %v2788 = vsel %vm687, %v2696, 0
        %v2791 = vsel %vm687, %v2697, 0
        %v2794 = vsel %vm687, %v2698, 0
        %v2797 = vsel %vm687, %v2699, 0
        %v2800 = vsel %vm687, %v2700, 0
        %v2803 = vsel %vm687, %v2701, 0
        %v2806 = vsel %vm687, %v2702, 0
        %2808 = vmatprep.subr.mxu0 0.0
        %2809 = vmatpush1.msra.mxu0 0.0
        %2810 = vmatprep.subr.mxu0 0.0
        %2811 = vmatpush1.msra.mxu0 0.0
        %2812 = vmatprep.subr.mxu0 0.0
        %2813 = vmatpush1.msra.mxu0 0.0
        %2814 = vmatprep.subr.mxu0 0.0
        %2815 = vmatpush1.msra.mxu0 0.0
        %2816 = vmatprep.subr.mxu0 0.0
        %2817 = vmatpush1.msra.mxu0 0.0
        %2818 = vmatprep.subr.mxu0 0.0
        %2819 = vmatpush1.msra.mxu0 0.0
        %2820 = vmatprep.subr.mxu0 0.0
        %2821 = vmatpush1.msra.mxu0 0.0
        %2822 = vmatprep.subr.mxu0 0.0
        %2823 = vmatpush1.msra.mxu0 0.0
        %2824 = vmatprep.subr.mxu0 0.0
        %2825 = vmatpush1.msra.mxu0 %v2711
        %2826 = vmatprep.subr.mxu0 0.0
        %2827 = vmatpush1.msra.mxu0 %v2710
        %2828 = vmatprep.subr.mxu0 0.0
        %2829 = vmatpush1.msra.mxu0 %v2709
        %2830 = vmatprep.subr.mxu0 0.0
        %2831 = vmatpush1.msra.mxu0 %v2708
        %2832 = vmatprep.subr.mxu0 0.0
        %2833 = vmatpush1.msra.mxu0 %v2707
        %2834 = vmatprep.subr.mxu0 0.0
        %2835 = vmatpush1.msra.mxu0 %v2706
        %2836 = vmatprep.subr.mxu0 0.0
        %2837 = vmatpush1.msra.mxu0 %v2705
        %2838 = vmatprep.subr.mxu0 0.0
        %2839 = vmatpush1.msra.mxu0 %v2704
        %2840 = vmatprep.subr.mxu0 0.0
        %2841 = vmatpush2.msra.mxu0 0.0
        %2842 = vmatprep.subr.mxu0 0.0
        %2843 = vmatpush2.msra.mxu0 0.0
        %2844 = vmatprep.subr.mxu0 0.0
        %2845 = vmatpush2.msra.mxu0 0.0
        %2846 = vmatprep.subr.mxu0 0.0
        %2847 = vmatpush2.msra.mxu0 0.0
        %2848 = vmatprep.subr.mxu0 0.0
        %2849 = vmatpush2.msra.mxu0 0.0
        %2850 = vmatprep.subr.mxu0 0.0
        %2851 = vmatpush2.msra.mxu0 0.0
        %2852 = vmatprep.subr.mxu0 0.0
        %2853 = vmatpush2.msra.mxu0 0.0
        %2854 = vmatprep.subr.mxu0 0.0
        %2855 = vmatpush2.msra.mxu0 0.0
        %2856 = vmatprep.subr.mxu0 0.0
        %2857 = vmatpush2.msra.mxu0 0.0
        %2858 = vmatprep.subr.mxu0 0.0
        %2859 = vmatpush2.msra.mxu0 0.0
        %2860 = vmatprep.subr.mxu0 0.0
        %2861 = vmatpush2.msra.mxu0 0.0
        %2862 = vmatprep.subr.mxu0 0.0
        %2863 = vmatpush2.msra.mxu0 0.0
        %2864 = vmatprep.subr.mxu0 0.0
        %2865 = vmatpush2.msra.mxu0 0.0
        %2866 = vmatprep.subr.mxu0 0.0
        %2867 = vmatpush2.msra.mxu0 0.0
        %2868 = vmatprep.subr.mxu0 0.0
        %2869 = vmatpush2.msra.mxu0 0.0
        %2870 = vmatprep.subr.mxu0 0.0
        %2871 = vmatpush2.msra.mxu0 0.0
        %2872 = vmatprep.mubr.f32.mxu0 0.0
        %2873 = vmatmul.mubr.f32.gmra.mxu0 %v2713
        %v2874 = vpop.f32.mrf.mxu0
        %v2875 = vadd.f32 0.0, %v2874
        %v2876 = vpop.f32.mrf.mxu0
        %2877 = vmatprep.mubr.f32.mxu0 0.0
        %2878 = vmatmul.mubr.f32.gmra.mxu0 %v2716
        %v2879 = vpop.f32.mrf.mxu0
        %v2880 = vadd.f32 0.0, %v2879
        %v2881 = vpop.f32.mrf.mxu0
        %2882 = vmatprep.mubr.f32.mxu0 0.0
        %2883 = vmatmul.mubr.f32.gmra.mxu0 %v2719
        %v2884 = vpop.f32.mrf.mxu0
        %v2885 = vadd.f32 0.0, %v2884
        %v2886 = vpop.f32.mrf.mxu0
        %2887 = vmatprep.mubr.f32.mxu0 0.0
        %2888 = vmatmul.mubr.f32.gmra.mxu0 %v2722
        %v2889 = vpop.f32.mrf.mxu0
        %v2890 = vadd.f32 0.0, %v2889
        %v2891 = vpop.f32.mrf.mxu0
        %2892 = vmatprep.mubr.f32.mxu0 0.0
        %2893 = vmatmul.mubr.f32.gmra.mxu0 %v2725
        %v2894 = vpop.f32.mrf.mxu0
        %v2895 = vadd.f32 0.0, %v2894
        %v2896 = vpop.f32.mrf.mxu0
        %2897 = vmatprep.mubr.f32.mxu0 0.0
        %2898 = vmatmul.mubr.f32.gmra.mxu0 %v2728
        %v2899 = vpop.f32.mrf.mxu0
        %v2900 = vadd.f32 0.0, %v2899
        %v2901 = vpop.f32.mrf.mxu0
        %2902 = vmatprep.mubr.f32.mxu0 0.0
        %2903 = vmatmul.mubr.f32.gmra.mxu0 %v2731
        %v2904 = vpop.f32.mrf.mxu0
        %v2905 = vadd.f32 0.0, %v2904
        %v2906 = vpop.f32.mrf.mxu0
        %2907 = vmatprep.mubr.f32.mxu0 0.0
        %2908 = vmatmul.mubr.f32.gmra.mxu0 %v2734
        %v2909 = vpop.f32.mrf.mxu0
        %v2910 = vadd.f32 0.0, %v2909
        %v2911 = vpop.f32.mrf.mxu0
        %2912 = vmatprep.mubr.f32.mxu0 0.0
        %2913 = vmatmul.mubr.f32.gmra.mxu0 %v2737
        %v2914 = vpop.f32.mrf.mxu0
        %v2915 = vadd.f32 0.0, %v2914
        %v2916 = vpop.f32.mrf.mxu0
        %2917 = vmatprep.mubr.f32.mxu0 0.0
        %2918 = vmatmul.mubr.f32.gmra.mxu0 %v2740
        %v2919 = vpop.f32.mrf.mxu0
        %v2920 = vadd.f32 0.0, %v2919
        %v2921 = vpop.f32.mrf.mxu0
        %2922 = vmatprep.mubr.f32.mxu0 0.0
        %2923 = vmatmul.mubr.f32.gmra.mxu0 %v2743
        %v2924 = vpop.f32.mrf.mxu0
        %v2925 = vadd.f32 0.0, %v2924
        %v2926 = vpop.f32.mrf.mxu0
        %2927 = vmatprep.mubr.f32.mxu0 0.0
        %2928 = vmatmul.mubr.f32.gmra.mxu0 %v2746
        %v2929 = vpop.f32.mrf.mxu0
        %v2930 = vadd.f32 0.0, %v2929
        %v2931 = vpop.f32.mrf.mxu0
        %2932 = vmatprep.mubr.f32.mxu0 0.0
        %2933 = vmatmul.mubr.f32.gmra.mxu0 %v2749
        %v2934 = vpop.f32.mrf.mxu0
        %v2935 = vadd.f32 0.0, %v2934
        %v2936 = vpop.f32.mrf.mxu0
        %2937 = vmatprep.mubr.f32.mxu0 0.0
        %2938 = vmatmul.mubr.f32.gmra.mxu0 %v2752
        %v2939 = vpop.f32.mrf.mxu0
        %v2940 = vadd.f32 0.0, %v2939
        %v2941 = vpop.f32.mrf.mxu0
        %2942 = vmatprep.mubr.f32.mxu0 0.0
        %2943 = vmatmul.mubr.f32.gmra.mxu0 %v2755
        %v2944 = vpop.f32.mrf.mxu0
        %v2945 = vadd.f32 0.0, %v2944
        %v2946 = vpop.f32.mrf.mxu0
        %2947 = vmatprep.mubr.f32.mxu0 0.0
        %2948 = vmatmul.mubr.f32.gmra.mxu0 %v2758
        %v2949 = vpop.f32.mrf.mxu0
        %v2950 = vadd.f32 0.0, %v2949
        %v2951 = vpop.f32.mrf.mxu0
        %2952 = vmatprep.mubr.f32.mxu0 0.0
        %2953 = vmatmul.mubr.f32.gmra.mxu0 %v2761
        %v2954 = vpop.f32.mrf.mxu0
        %v2955 = vadd.f32 0.0, %v2954
        %v2956 = vpop.f32.mrf.mxu0
        %2957 = vmatprep.mubr.f32.mxu0 0.0
        %2958 = vmatmul.mubr.f32.gmra.mxu0 %v2764
        %v2959 = vpop.f32.mrf.mxu0
        %v2960 = vadd.f32 0.0, %v2959
        %v2961 = vpop.f32.mrf.mxu0
        %2962 = vmatprep.mubr.f32.mxu0 0.0
        %2963 = vmatmul.mubr.f32.gmra.mxu0 %v2767
        %v2964 = vpop.f32.mrf.mxu0
        %v2965 = vadd.f32 0.0, %v2964
        %v2966 = vpop.f32.mrf.mxu0
        %2967 = vmatprep.mubr.f32.mxu0 0.0
        %2968 = vmatmul.mubr.f32.gmra.mxu0 %v2770
        %v2969 = vpop.f32.mrf.mxu0
        %v2970 = vadd.f32 0.0, %v2969
        %v2971 = vpop.f32.mrf.mxu0
        %2972 = vmatprep.mubr.f32.mxu0 0.0
        %2973 = vmatmul.mubr.f32.gmra.mxu0 %v2773
        %v2974 = vpop.f32.mrf.mxu0
        %v2975 = vadd.f32 0.0, %v2974
        %v2976 = vpop.f32.mrf.mxu0
        %2977 = vmatprep.mubr.f32.mxu0 0.0
        %2978 = vmatmul.mubr.f32.gmra.mxu0 %v2776
        %v2979 = vpop.f32.mrf.mxu0
        %v2980 = vadd.f32 0.0, %v2979
        %v2981 = vpop.f32.mrf.mxu0
        %2982 = vmatprep.mubr.f32.mxu0 0.0
        %2983 = vmatmul.mubr.f32.gmra.mxu0 %v2779
        %v2984 = vpop.f32.mrf.mxu0
        %v2985 = vadd.f32 0.0, %v2984
        %v2986 = vpop.f32.mrf.mxu0
        %2987 = vmatprep.mubr.f32.mxu0 0.0
        %2988 = vmatmul.mubr.f32.gmra.mxu0 %v2782
        %v2989 = vpop.f32.mrf.mxu0
        %v2990 = vadd.f32 0.0, %v2989
        %v2991 = vpop.f32.mrf.mxu0
        %2992 = vmatprep.mubr.f32.mxu0 0.0
        %2993 = vmatmul.mubr.f32.gmra.mxu0 %v2785
        %v2994 = vpop.f32.mrf.mxu0
        %v2995 = vadd.f32 0.0, %v2994
        %v2996 = vpop.f32.mrf.mxu0
        %2997 = vmatprep.mubr.f32.mxu0 0.0
        %2998 = vmatmul.mubr.f32.gmra.mxu0 %v2788
        %v2999 = vpop.f32.mrf.mxu0
        %v3000 = vadd.f32 0.0, %v2999
        %v3001 = vpop.f32.mrf.mxu0
        %3002 = vmatprep.mubr.f32.mxu0 0.0
        %3003 = vmatmul.mubr.f32.gmra.mxu0 %v2791
        %v3004 = vpop.f32.mrf.mxu0
        %v3005 = vadd.f32 0.0, %v3004
        %v3006 = vpop.f32.mrf.mxu0
        %3007 = vmatprep.mubr.f32.mxu0 0.0
        %3008 = vmatmul.mubr.f32.gmra.mxu0 %v2794
        %v3009 = vpop.f32.mrf.mxu0
        %v3010 = vadd.f32 0.0, %v3009
        %v3011 = vpop.f32.mrf.mxu0
        %3012 = vmatprep.mubr.f32.mxu0 0.0
        %3013 = vmatmul.mubr.f32.gmra.mxu0 %v2797
        %v3014 = vpop.f32.mrf.mxu0
        %v3015 = vadd.f32 0.0, %v3014
        %v3016 = vpop.f32.mrf.mxu0
        %3017 = vmatprep.mubr.f32.mxu0 0.0
        %3018 = vmatmul.mubr.f32.gmra.mxu0 %v2800
        %v3019 = vpop.f32.mrf.mxu0
        %v3020 = vadd.f32 0.0, %v3019
        %v3021 = vpop.f32.mrf.mxu0
        %3022 = vmatprep.mubr.f32.mxu0 0.0
        %3023 = vmatmul.mubr.f32.gmra.mxu0 %v2803
        %v3024 = vpop.f32.mrf.mxu0
        %v3025 = vadd.f32 0.0, %v3024
        %v3026 = vpop.f32.mrf.mxu0
        %3027 = vmatprep.mubr.f32.mxu0 0.0
        %3028 = vmatmul.mubr.f32.gmra.mxu0 %v2806
        %v3029 = vpop.f32.mrf.mxu0
        %v3030 = vadd.f32 0.0, %v3029
        %v3031 = vpop.f32.mrf.mxu0
        %3032 = vdwg.mxu0
        %v3033 = vadd.f32 %v2639, %v2875
        %v3034 = vadd.f32 %v2640, %v2880
        %v3035 = vadd.f32 %v2641, %v2885
        %v3036 = vadd.f32 %v2642, %v2890
        %v3037 = vadd.f32 %v2643, %v2895
        %v3038 = vadd.f32 %v2644, %v2900
        %v3039 = vadd.f32 %v2645, %v2905
        %v3040 = vadd.f32 %v2646, %v2910
        %v3041 = vadd.f32 %v2647, %v2915
        %v3042 = vadd.f32 %v2648, %v2920
        %v3043 = vadd.f32 %v2649, %v2925
        %v3044 = vadd.f32 %v2650, %v2930
        %v3045 = vadd.f32 %v2651, %v2935
        %v3046 = vadd.f32 %v2652, %v2940
        %v3047 = vadd.f32 %v2653, %v2945
        %v3048 = vadd.f32 %v2654, %v2950
        %v3049 = vadd.f32 %v2655, %v2955
        %v3050 = vadd.f32 %v2656, %v2960
        %v3051 = vadd.f32 %v2657, %v2965
        %v3052 = vadd.f32 %v2658, %v2970
        %v3053 = vadd.f32 %v2659, %v2975
        %v3054 = vadd.f32 %v2660, %v2980
        %v3055 = vadd.f32 %v2661, %v2985
        %v3056 = vadd.f32 %v2662, %v2990
        %v3057 = vadd.f32 %v2663, %v2995
        %v3058 = vadd.f32 %v2664, %v3000
        %v3059 = vadd.f32 %v2665, %v3005
        %v3060 = vadd.f32 %v2666, %v3010
        %v3061 = vadd.f32 %v2667, %v3015
        %v3062 = vadd.f32 %v2668, %v3020
        %v3063 = vadd.f32 %v2669, %v3025
        %v3064 = vadd.f32 %v2670, %v3030
        %s3065 = scalar_lea.vmem [#allocation2], 48
        %v3066 = vld [vmem:[%s3065] sm:$0xff]
        %v3067 = vld [vmem:[%s3065 + $0x8] sm:$0xff]
        %v3068 = vld [vmem:[%s3065 + $0x18] sm:$0xff]
        %v3069 = vld [vmem:[%s3065 + $0x20] sm:$0xff]
        %v3070 = vld [vmem:[%s3065 + $0x30] sm:$0xff]
        %v3071 = vld [vmem:[%s3065 + $0x38] sm:$0xff]
        %v3072 = vld [vmem:[%s3065 + $0x48] sm:$0xff]
        %v3073 = vld [vmem:[%s3065 + $0x50] sm:$0xff]
        %v3074 = vld [vmem:[%s3065 + $0x60] sm:$0xff]
        %v3075 = vld [vmem:[%s3065 + $0x68] sm:$0xff]
        %v3076 = vld [vmem:[%s3065 + $0x78] sm:$0xff]
        %v3077 = vld [vmem:[%s3065 + $0x80] sm:$0xff]
        %v3078 = vld [vmem:[%s3065 + $0x90] sm:$0xff]
        %v3079 = vld [vmem:[%s3065 + $0x98] sm:$0xff]
        %v3080 = vld [vmem:[%s3065 + $0xa8] sm:$0xff]
        %v3081 = vld [vmem:[%s3065 + $0xb0] sm:$0xff]
        %v3082 = vld [vmem:[%s3065 + $0xc0] sm:$0xff]
        %v3083 = vld [vmem:[%s3065 + $0xc8] sm:$0xff]
        %v3084 = vld [vmem:[%s3065 + $0xd8] sm:$0xff]
        %v3085 = vld [vmem:[%s3065 + $0xe0] sm:$0xff]
        %v3086 = vld [vmem:[%s3065 + $0xf0] sm:$0xff]
        %v3087 = vld [vmem:[%s3065 + $0xf8] sm:$0xff]
        %v3088 = vld [vmem:[%s3065 + $0x108] sm:$0xff]
        %v3089 = vld [vmem:[%s3065 + $0x110] sm:$0xff]
        %v3090 = vld [vmem:[%s3065 + $0x120] sm:$0xff]
        %v3091 = vld [vmem:[%s3065 + $0x128] sm:$0xff]
        %v3092 = vld [vmem:[%s3065 + $0x138] sm:$0xff]
        %v3093 = vld [vmem:[%s3065 + $0x140] sm:$0xff]
        %v3094 = vld [vmem:[%s3065 + $0x150] sm:$0xff]
        %v3095 = vld [vmem:[%s3065 + $0x158] sm:$0xff]
        %v3096 = vld [vmem:[%s3065 + $0x168] sm:$0xff]
        %v3097 = vld [vmem:[%s3065 + $0x170] sm:$0xff]
        %s3098 = scalar_lea.vmem %s3, 384
        %v3099 = vld [vmem:[%s3098] sm:$0xff]
        %v3100 = vld [vmem:[%s3098 + $0x8] sm:$0xff]
        %v3101 = vld [vmem:[%s3098 + $0x10] sm:$0xff]
        %v3102 = vld [vmem:[%s3098 + $0x18] sm:$0xff]
        %v3103 = vld [vmem:[%s3098 + $0x20] sm:$0xff]
        %v3104 = vld [vmem:[%s3098 + $0x28] sm:$0xff]
        %v3105 = vld [vmem:[%s3098 + $0x30] sm:$0xff]
        %v3106 = vld [vmem:[%s3098 + $0x38] sm:$0xff]
        %v3108 = vsel %vm687, %v3066, 0
        %v3111 = vsel %vm687, %v3067, 0
        %v3114 = vsel %vm687, %v3068, 0
        %v3117 = vsel %vm687, %v3069, 0
        %v3120 = vsel %vm687, %v3070, 0
        %v3123 = vsel %vm687, %v3071, 0
        %v3126 = vsel %vm687, %v3072, 0
        %v3129 = vsel %vm687, %v3073, 0
        %v3132 = vsel %vm687, %v3074, 0
        %v3135 = vsel %vm687, %v3075, 0
        %v3138 = vsel %vm687, %v3076, 0
        %v3141 = vsel %vm687, %v3077, 0
        %v3144 = vsel %vm687, %v3078, 0
        %v3147 = vsel %vm687, %v3079, 0
        %v3150 = vsel %vm687, %v3080, 0
        %v3153 = vsel %vm687, %v3081, 0
        %v3156 = vsel %vm687, %v3082, 0
        %v3159 = vsel %vm687, %v3083, 0
        %v3162 = vsel %vm687, %v3084, 0
        %v3165 = vsel %vm687, %v3085, 0
        %v3168 = vsel %vm687, %v3086, 0
        %v3171 = vsel %vm687, %v3087, 0
        %v3174 = vsel %vm687, %v3088, 0
        %v3177 = vsel %vm687, %v3089, 0
        %v3180 = vsel %vm687, %v3090, 0
        %v3183 = vsel %vm687, %v3091, 0
        %v3186 = vsel %vm687, %v3092, 0
        %v3189 = vsel %vm687, %v3093, 0
        %v3192 = vsel %vm687, %v3094, 0
        %v3195 = vsel %vm687, %v3095, 0
        %v3198 = vsel %vm687, %v3096, 0
        %v3201 = vsel %vm687, %v3097, 0
        %3203 = vmatprep.subr.mxu0 0.0
        %3204 = vmatpush1.msra.mxu0 0.0
        %3205 = vmatprep.subr.mxu0 0.0
        %3206 = vmatpush1.msra.mxu0 0.0
        %3207 = vmatprep.subr.mxu0 0.0
        %3208 = vmatpush1.msra.mxu0 0.0
        %3209 = vmatprep.subr.mxu0 0.0
        %3210 = vmatpush1.msra.mxu0 0.0
        %3211 = vmatprep.subr.mxu0 0.0
        %3212 = vmatpush1.msra.mxu0 0.0
        %3213 = vmatprep.subr.mxu0 0.0
        %3214 = vmatpush1.msra.mxu0 0.0
        %3215 = vmatprep.subr.mxu0 0.0
        %3216 = vmatpush1.msra.mxu0 0.0
        %3217 = vmatprep.subr.mxu0 0.0
        %3218 = vmatpush1.msra.mxu0 0.0
        %3219 = vmatprep.subr.mxu0 0.0
        %3220 = vmatpush1.msra.mxu0 %v3106
        %3221 = vmatprep.subr.mxu0 0.0
        %3222 = vmatpush1.msra.mxu0 %v3105
        %3223 = vmatprep.subr.mxu0 0.0
        %3224 = vmatpush1.msra.mxu0 %v3104
        %3225 = vmatprep.subr.mxu0 0.0
        %3226 = vmatpush1.msra.mxu0 %v3103
        %3227 = vmatprep.subr.mxu0 0.0
        %3228 = vmatpush1.msra.mxu0 %v3102
        %3229 = vmatprep.subr.mxu0 0.0
        %3230 = vmatpush1.msra.mxu0 %v3101
        %3231 = vmatprep.subr.mxu0 0.0
        %3232 = vmatpush1.msra.mxu0 %v3100
        %3233 = vmatprep.subr.mxu0 0.0
        %3234 = vmatpush1.msra.mxu0 %v3099
        %3235 = vmatprep.subr.mxu0 0.0
        %3236 = vmatpush2.msra.mxu0 0.0
        %3237 = vmatprep.subr.mxu0 0.0
        %3238 = vmatpush2.msra.mxu0 0.0
        %3239 = vmatprep.subr.mxu0 0.0
        %3240 = vmatpush2.msra.mxu0 0.0
        %3241 = vmatprep.subr.mxu0 0.0
        %3242 = vmatpush2.msra.mxu0 0.0
        %3243 = vmatprep.subr.mxu0 0.0
        %3244 = vmatpush2.msra.mxu0 0.0
        %3245 = vmatprep.subr.mxu0 0.0
        %3246 = vmatpush2.msra.mxu0 0.0
        %3247 = vmatprep.subr.mxu0 0.0
        %3248 = vmatpush2.msra.mxu0 0.0
        %3249 = vmatprep.subr.mxu0 0.0
        %3250 = vmatpush2.msra.mxu0 0.0
        %3251 = vmatprep.subr.mxu0 0.0
        %3252 = vmatpush2.msra.mxu0 0.0
        %3253 = vmatprep.subr.mxu0 0.0
        %3254 = vmatpush2.msra.mxu0 0.0
        %3255 = vmatprep.subr.mxu0 0.0
        %3256 = vmatpush2.msra.mxu0 0.0
        %3257 = vmatprep.subr.mxu0 0.0
        %3258 = vmatpush2.msra.mxu0 0.0
        %3259 = vmatprep.subr.mxu0 0.0
        %3260 = vmatpush2.msra.mxu0 0.0
        %3261 = vmatprep.subr.mxu0 0.0
        %3262 = vmatpush2.msra.mxu0 0.0
        %3263 = vmatprep.subr.mxu0 0.0
        %3264 = vmatpush2.msra.mxu0 0.0
        %3265 = vmatprep.subr.mxu0 0.0
        %3266 = vmatpush2.msra.mxu0 0.0
        %3267 = vmatprep.mubr.f32.mxu0 0.0
        %3268 = vmatmul.mubr.f32.gmra.mxu0 %v3108
        %v3269 = vpop.f32.mrf.mxu0
        %v3270 = vadd.f32 0.0, %v3269
        %v3271 = vpop.f32.mrf.mxu0
        %3272 = vmatprep.mubr.f32.mxu0 0.0
        %3273 = vmatmul.mubr.f32.gmra.mxu0 %v3111
        %v3274 = vpop.f32.mrf.mxu0
        %v3275 = vadd.f32 0.0, %v3274
        %v3276 = vpop.f32.mrf.mxu0
        %3277 = vmatprep.mubr.f32.mxu0 0.0
        %3278 = vmatmul.mubr.f32.gmra.mxu0 %v3114
        %v3279 = vpop.f32.mrf.mxu0
        %v3280 = vadd.f32 0.0, %v3279
        %v3281 = vpop.f32.mrf.mxu0
        %3282 = vmatprep.mubr.f32.mxu0 0.0
        %3283 = vmatmul.mubr.f32.gmra.mxu0 %v3117
        %v3284 = vpop.f32.mrf.mxu0
        %v3285 = vadd.f32 0.0, %v3284
        %v3286 = vpop.f32.mrf.mxu0
        %3287 = vmatprep.mubr.f32.mxu0 0.0
        %3288 = vmatmul.mubr.f32.gmra.mxu0 %v3120
        %v3289 = vpop.f32.mrf.mxu0
        %v3290 = vadd.f32 0.0, %v3289
        %v3291 = vpop.f32.mrf.mxu0
        %3292 = vmatprep.mubr.f32.mxu0 0.0
        %3293 = vmatmul.mubr.f32.gmra.mxu0 %v3123
        %v3294 = vpop.f32.mrf.mxu0
        %v3295 = vadd.f32 0.0, %v3294
        %v3296 = vpop.f32.mrf.mxu0
        %3297 = vmatprep.mubr.f32.mxu0 0.0
        %3298 = vmatmul.mubr.f32.gmra.mxu0 %v3126
        %v3299 = vpop.f32.mrf.mxu0
        %v3300 = vadd.f32 0.0, %v3299
        %v3301 = vpop.f32.mrf.mxu0
        %3302 = vmatprep.mubr.f32.mxu0 0.0
        %3303 = vmatmul.mubr.f32.gmra.mxu0 %v3129
        %v3304 = vpop.f32.mrf.mxu0
        %v3305 = vadd.f32 0.0, %v3304
        %v3306 = vpop.f32.mrf.mxu0
        %3307 = vmatprep.mubr.f32.mxu0 0.0
        %3308 = vmatmul.mubr.f32.gmra.mxu0 %v3132
        %v3309 = vpop.f32.mrf.mxu0
        %v3310 = vadd.f32 0.0, %v3309
        %v3311 = vpop.f32.mrf.mxu0
        %3312 = vmatprep.mubr.f32.mxu0 0.0
        %3313 = vmatmul.mubr.f32.gmra.mxu0 %v3135
        %v3314 = vpop.f32.mrf.mxu0
        %v3315 = vadd.f32 0.0, %v3314
        %v3316 = vpop.f32.mrf.mxu0
        %3317 = vmatprep.mubr.f32.mxu0 0.0
        %3318 = vmatmul.mubr.f32.gmra.mxu0 %v3138
        %v3319 = vpop.f32.mrf.mxu0
        %v3320 = vadd.f32 0.0, %v3319
        %v3321 = vpop.f32.mrf.mxu0
        %3322 = vmatprep.mubr.f32.mxu0 0.0
        %3323 = vmatmul.mubr.f32.gmra.mxu0 %v3141
        %v3324 = vpop.f32.mrf.mxu0
        %v3325 = vadd.f32 0.0, %v3324
        %v3326 = vpop.f32.mrf.mxu0
        %3327 = vmatprep.mubr.f32.mxu0 0.0
        %3328 = vmatmul.mubr.f32.gmra.mxu0 %v3144
        %v3329 = vpop.f32.mrf.mxu0
        %v3330 = vadd.f32 0.0, %v3329
        %v3331 = vpop.f32.mrf.mxu0
        %3332 = vmatprep.mubr.f32.mxu0 0.0
        %3333 = vmatmul.mubr.f32.gmra.mxu0 %v3147
        %v3334 = vpop.f32.mrf.mxu0
        %v3335 = vadd.f32 0.0, %v3334
        %v3336 = vpop.f32.mrf.mxu0
        %3337 = vmatprep.mubr.f32.mxu0 0.0
        %3338 = vmatmul.mubr.f32.gmra.mxu0 %v3150
        %v3339 = vpop.f32.mrf.mxu0
        %v3340 = vadd.f32 0.0, %v3339
        %v3341 = vpop.f32.mrf.mxu0
        %3342 = vmatprep.mubr.f32.mxu0 0.0
        %3343 = vmatmul.mubr.f32.gmra.mxu0 %v3153
        %v3344 = vpop.f32.mrf.mxu0
        %v3345 = vadd.f32 0.0, %v3344
        %v3346 = vpop.f32.mrf.mxu0
        %3347 = vmatprep.mubr.f32.mxu0 0.0
        %3348 = vmatmul.mubr.f32.gmra.mxu0 %v3156
        %v3349 = vpop.f32.mrf.mxu0
        %v3350 = vadd.f32 0.0, %v3349
        %v3351 = vpop.f32.mrf.mxu0
        %3352 = vmatprep.mubr.f32.mxu0 0.0
        %3353 = vmatmul.mubr.f32.gmra.mxu0 %v3159
        %v3354 = vpop.f32.mrf.mxu0
        %v3355 = vadd.f32 0.0, %v3354
        %v3356 = vpop.f32.mrf.mxu0
        %3357 = vmatprep.mubr.f32.mxu0 0.0
        %3358 = vmatmul.mubr.f32.gmra.mxu0 %v3162
        %v3359 = vpop.f32.mrf.mxu0
        %v3360 = vadd.f32 0.0, %v3359
        %v3361 = vpop.f32.mrf.mxu0
        %3362 = vmatprep.mubr.f32.mxu0 0.0
        %3363 = vmatmul.mubr.f32.gmra.mxu0 %v3165
        %v3364 = vpop.f32.mrf.mxu0
        %v3365 = vadd.f32 0.0, %v3364
        %v3366 = vpop.f32.mrf.mxu0
        %3367 = vmatprep.mubr.f32.mxu0 0.0
        %3368 = vmatmul.mubr.f32.gmra.mxu0 %v3168
        %v3369 = vpop.f32.mrf.mxu0
        %v3370 = vadd.f32 0.0, %v3369
        %v3371 = vpop.f32.mrf.mxu0
        %3372 = vmatprep.mubr.f32.mxu0 0.0
        %3373 = vmatmul.mubr.f32.gmra.mxu0 %v3171
        %v3374 = vpop.f32.mrf.mxu0
        %v3375 = vadd.f32 0.0, %v3374
        %v3376 = vpop.f32.mrf.mxu0
        %3377 = vmatprep.mubr.f32.mxu0 0.0
        %3378 = vmatmul.mubr.f32.gmra.mxu0 %v3174
        %v3379 = vpop.f32.mrf.mxu0
        %v3380 = vadd.f32 0.0, %v3379
        %v3381 = vpop.f32.mrf.mxu0
        %3382 = vmatprep.mubr.f32.mxu0 0.0
        %3383 = vmatmul.mubr.f32.gmra.mxu0 %v3177
        %v3384 = vpop.f32.mrf.mxu0
        %v3385 = vadd.f32 0.0, %v3384
        %v3386 = vpop.f32.mrf.mxu0
        %3387 = vmatprep.mubr.f32.mxu0 0.0
        %3388 = vmatmul.mubr.f32.gmra.mxu0 %v3180
        %v3389 = vpop.f32.mrf.mxu0
        %v3390 = vadd.f32 0.0, %v3389
        %v3391 = vpop.f32.mrf.mxu0
        %3392 = vmatprep.mubr.f32.mxu0 0.0
        %3393 = vmatmul.mubr.f32.gmra.mxu0 %v3183
        %v3394 = vpop.f32.mrf.mxu0
        %v3395 = vadd.f32 0.0, %v3394
        %v3396 = vpop.f32.mrf.mxu0
        %3397 = vmatprep.mubr.f32.mxu0 0.0
        %3398 = vmatmul.mubr.f32.gmra.mxu0 %v3186
        %v3399 = vpop.f32.mrf.mxu0
        %v3400 = vadd.f32 0.0, %v3399
        %v3401 = vpop.f32.mrf.mxu0
        %3402 = vmatprep.mubr.f32.mxu0 0.0
        %3403 = vmatmul.mubr.f32.gmra.mxu0 %v3189
        %v3404 = vpop.f32.mrf.mxu0
        %v3405 = vadd.f32 0.0, %v3404
        %v3406 = vpop.f32.mrf.mxu0
        %3407 = vmatprep.mubr.f32.mxu0 0.0
        %3408 = vmatmul.mubr.f32.gmra.mxu0 %v3192
        %v3409 = vpop.f32.mrf.mxu0
        %v3410 = vadd.f32 0.0, %v3409
        %v3411 = vpop.f32.mrf.mxu0
        %3412 = vmatprep.mubr.f32.mxu0 0.0
        %3413 = vmatmul.mubr.f32.gmra.mxu0 %v3195
        %v3414 = vpop.f32.mrf.mxu0
        %v3415 = vadd.f32 0.0, %v3414
        %v3416 = vpop.f32.mrf.mxu0
        %3417 = vmatprep.mubr.f32.mxu0 0.0
        %3418 = vmatmul.mubr.f32.gmra.mxu0 %v3198
        %v3419 = vpop.f32.mrf.mxu0
        %v3420 = vadd.f32 0.0, %v3419
        %v3421 = vpop.f32.mrf.mxu0
        %3422 = vmatprep.mubr.f32.mxu0 0.0
        %3423 = vmatmul.mubr.f32.gmra.mxu0 %v3201
        %v3424 = vpop.f32.mrf.mxu0
        %v3425 = vadd.f32 0.0, %v3424
        %v3426 = vpop.f32.mrf.mxu0
        %3427 = vdwg.mxu0
        %v3428 = vadd.f32 %v3033, %v3270
        %v3429 = vadd.f32 %v3034, %v3275
        %v3430 = vadd.f32 %v3035, %v3280
        %v3431 = vadd.f32 %v3036, %v3285
        %v3432 = vadd.f32 %v3037, %v3290
        %v3433 = vadd.f32 %v3038, %v3295
        %v3434 = vadd.f32 %v3039, %v3300
        %v3435 = vadd.f32 %v3040, %v3305
        %v3436 = vadd.f32 %v3041, %v3310
        %v3437 = vadd.f32 %v3042, %v3315
        %v3438 = vadd.f32 %v3043, %v3320
        %v3439 = vadd.f32 %v3044, %v3325
        %v3440 = vadd.f32 %v3045, %v3330
        %v3441 = vadd.f32 %v3046, %v3335
        %v3442 = vadd.f32 %v3047, %v3340
        %v3443 = vadd.f32 %v3048, %v3345
        %v3444 = vadd.f32 %v3049, %v3350
        %v3445 = vadd.f32 %v3050, %v3355
        %v3446 = vadd.f32 %v3051, %v3360
        %v3447 = vadd.f32 %v3052, %v3365
        %v3448 = vadd.f32 %v3053, %v3370
        %v3449 = vadd.f32 %v3054, %v3375
        %v3450 = vadd.f32 %v3055, %v3380
        %v3451 = vadd.f32 %v3056, %v3385
        %v3452 = vadd.f32 %v3057, %v3390
        %v3453 = vadd.f32 %v3058, %v3395
        %v3454 = vadd.f32 %v3059, %v3400
        %v3455 = vadd.f32 %v3060, %v3405
        %v3456 = vadd.f32 %v3061, %v3410
        %v3457 = vadd.f32 %v3062, %v3415
        %v3458 = vadd.f32 %v3063, %v3420
        %v3459 = vadd.f32 %v3064, %v3425
        %v3460 = vld [vmem:[%s3065 + $0x1] sm:$0xff]
        %v3461 = vld [vmem:[%s3065 + $0x9] sm:$0xff]
        %v3462 = vld [vmem:[%s3065 + $0x19] sm:$0xff]
        %v3463 = vld [vmem:[%s3065 + $0x21] sm:$0xff]
        %v3464 = vld [vmem:[%s3065 + $0x31] sm:$0xff]
        %v3465 = vld [vmem:[%s3065 + $0x39] sm:$0xff]
        %v3466 = vld [vmem:[%s3065 + $0x49] sm:$0xff]
        %v3467 = vld [vmem:[%s3065 + $0x51] sm:$0xff]
        %v3468 = vld [vmem:[%s3065 + $0x61] sm:$0xff]
        %v3469 = vld [vmem:[%s3065 + $0x69] sm:$0xff]
        %v3470 = vld [vmem:[%s3065 + $0x79] sm:$0xff]
        %v3471 = vld [vmem:[%s3065 + $0x81] sm:$0xff]
        %v3472 = vld [vmem:[%s3065 + $0x91] sm:$0xff]
        %v3473 = vld [vmem:[%s3065 + $0x99] sm:$0xff]
        %v3474 = vld [vmem:[%s3065 + $0xa9] sm:$0xff]
        %v3475 = vld [vmem:[%s3065 + $0xb1] sm:$0xff]
        %v3476 = vld [vmem:[%s3065 + $0xc1] sm:$0xff]
        %v3477 = vld [vmem:[%s3065 + $0xc9] sm:$0xff]
        %v3478 = vld [vmem:[%s3065 + $0xd9] sm:$0xff]
        %v3479 = vld [vmem:[%s3065 + $0xe1] sm:$0xff]
        %v3480 = vld [vmem:[%s3065 + $0xf1] sm:$0xff]
        %v3481 = vld [vmem:[%s3065 + $0xf9] sm:$0xff]
        %v3482 = vld [vmem:[%s3065 + $0x109] sm:$0xff]
        %v3483 = vld [vmem:[%s3065 + $0x111] sm:$0xff]
        %v3484 = vld [vmem:[%s3065 + $0x121] sm:$0xff]
        %v3485 = vld [vmem:[%s3065 + $0x129] sm:$0xff]
        %v3486 = vld [vmem:[%s3065 + $0x139] sm:$0xff]
        %v3487 = vld [vmem:[%s3065 + $0x141] sm:$0xff]
        %v3488 = vld [vmem:[%s3065 + $0x151] sm:$0xff]
        %v3489 = vld [vmem:[%s3065 + $0x159] sm:$0xff]
        %v3490 = vld [vmem:[%s3065 + $0x169] sm:$0xff]
        %v3491 = vld [vmem:[%s3065 + $0x171] sm:$0xff]
        %s3492 = scalar_lea.vmem %s3, 448
        %v3493 = vld [vmem:[%s3492] sm:$0xff]
        %v3494 = vld [vmem:[%s3492 + $0x8] sm:$0xff]
        %v3495 = vld [vmem:[%s3492 + $0x10] sm:$0xff]
        %v3496 = vld [vmem:[%s3492 + $0x18] sm:$0xff]
        %v3497 = vld [vmem:[%s3492 + $0x20] sm:$0xff]
        %v3498 = vld [vmem:[%s3492 + $0x28] sm:$0xff]
        %v3499 = vld [vmem:[%s3492 + $0x30] sm:$0xff]
        %v3500 = vld [vmem:[%s3492 + $0x38] sm:$0xff]
        %v3502 = vsel %vm687, %v3460, 0
        %v3505 = vsel %vm687, %v3461, 0
        %v3508 = vsel %vm687, %v3462, 0
        %v3511 = vsel %vm687, %v3463, 0
        %v3514 = vsel %vm687, %v3464, 0
        %v3517 = vsel %vm687, %v3465, 0
        %v3520 = vsel %vm687, %v3466, 0
        %v3523 = vsel %vm687, %v3467, 0
        %v3526 = vsel %vm687, %v3468, 0
        %v3529 = vsel %vm687, %v3469, 0
        %v3532 = vsel %vm687, %v3470, 0
        %v3535 = vsel %vm687, %v3471, 0
        %v3538 = vsel %vm687, %v3472, 0
        %v3541 = vsel %vm687, %v3473, 0
        %v3544 = vsel %vm687, %v3474, 0
        %v3547 = vsel %vm687, %v3475, 0
        %v3550 = vsel %vm687, %v3476, 0
        %v3553 = vsel %vm687, %v3477, 0
        %v3556 = vsel %vm687, %v3478, 0
        %v3559 = vsel %vm687, %v3479, 0
        %v3562 = vsel %vm687, %v3480, 0
        %v3565 = vsel %vm687, %v3481, 0
        %v3568 = vsel %vm687, %v3482, 0
        %v3571 = vsel %vm687, %v3483, 0
        %v3574 = vsel %vm687, %v3484, 0
        %v3577 = vsel %vm687, %v3485, 0
        %v3580 = vsel %vm687, %v3486, 0
        %v3583 = vsel %vm687, %v3487, 0
        %v3586 = vsel %vm687, %v3488, 0
        %v3589 = vsel %vm687, %v3489, 0
        %v3592 = vsel %vm687, %v3490, 0
        %v3595 = vsel %vm687, %v3491, 0
        %3597 = vmatprep.subr.mxu0 0.0
        %3598 = vmatpush1.msra.mxu0 0.0
        %3599 = vmatprep.subr.mxu0 0.0
        %3600 = vmatpush1.msra.mxu0 0.0
        %3601 = vmatprep.subr.mxu0 0.0
        %3602 = vmatpush1.msra.mxu0 0.0
        %3603 = vmatprep.subr.mxu0 0.0
        %3604 = vmatpush1.msra.mxu0 0.0
        %3605 = vmatprep.subr.mxu0 0.0
        %3606 = vmatpush1.msra.mxu0 0.0
        %3607 = vmatprep.subr.mxu0 0.0
        %3608 = vmatpush1.msra.mxu0 0.0
        %3609 = vmatprep.subr.mxu0 0.0
        %3610 = vmatpush1.msra.mxu0 0.0
        %3611 = vmatprep.subr.mxu0 0.0
        %3612 = vmatpush1.msra.mxu0 0.0
        %3613 = vmatprep.subr.mxu0 0.0
        %3614 = vmatpush1.msra.mxu0 %v3500
        %3615 = vmatprep.subr.mxu0 0.0
        %3616 = vmatpush1.msra.mxu0 %v3499
        %3617 = vmatprep.subr.mxu0 0.0
        %3618 = vmatpush1.msra.mxu0 %v3498
        %3619 = vmatprep.subr.mxu0 0.0
        %3620 = vmatpush1.msra.mxu0 %v3497
        %3621 = vmatprep.subr.mxu0 0.0
        %3622 = vmatpush1.msra.mxu0 %v3496
        %3623 = vmatprep.subr.mxu0 0.0
        %3624 = vmatpush1.msra.mxu0 %v3495
        %3625 = vmatprep.subr.mxu0 0.0
        %3626 = vmatpush1.msra.mxu0 %v3494
        %3627 = vmatprep.subr.mxu0 0.0
        %3628 = vmatpush1.msra.mxu0 %v3493
        %3629 = vmatprep.subr.mxu0 0.0
        %3630 = vmatpush2.msra.mxu0 0.0
        %3631 = vmatprep.subr.mxu0 0.0
        %3632 = vmatpush2.msra.mxu0 0.0
        %3633 = vmatprep.subr.mxu0 0.0
        %3634 = vmatpush2.msra.mxu0 0.0
        %3635 = vmatprep.subr.mxu0 0.0
        %3636 = vmatpush2.msra.mxu0 0.0
        %3637 = vmatprep.subr.mxu0 0.0
        %3638 = vmatpush2.msra.mxu0 0.0
        %3639 = vmatprep.subr.mxu0 0.0
        %3640 = vmatpush2.msra.mxu0 0.0
        %3641 = vmatprep.subr.mxu0 0.0
        %3642 = vmatpush2.msra.mxu0 0.0
        %3643 = vmatprep.subr.mxu0 0.0
        %3644 = vmatpush2.msra.mxu0 0.0
        %3645 = vmatprep.subr.mxu0 0.0
        %3646 = vmatpush2.msra.mxu0 0.0
        %3647 = vmatprep.subr.mxu0 0.0
        %3648 = vmatpush2.msra.mxu0 0.0
        %3649 = vmatprep.subr.mxu0 0.0
        %3650 = vmatpush2.msra.mxu0 0.0
        %3651 = vmatprep.subr.mxu0 0.0
        %3652 = vmatpush2.msra.mxu0 0.0
        %3653 = vmatprep.subr.mxu0 0.0
        %3654 = vmatpush2.msra.mxu0 0.0
        %3655 = vmatprep.subr.mxu0 0.0
        %3656 = vmatpush2.msra.mxu0 0.0
        %3657 = vmatprep.subr.mxu0 0.0
        %3658 = vmatpush2.msra.mxu0 0.0
        %3659 = vmatprep.subr.mxu0 0.0
        %3660 = vmatpush2.msra.mxu0 0.0
        %3661 = vmatprep.mubr.f32.mxu0 0.0
        %3662 = vmatmul.mubr.f32.gmra.mxu0 %v3502
        %v3663 = vpop.f32.mrf.mxu0
        %v3664 = vadd.f32 0.0, %v3663
        %v3665 = vpop.f32.mrf.mxu0
        %3666 = vmatprep.mubr.f32.mxu0 0.0
        %3667 = vmatmul.mubr.f32.gmra.mxu0 %v3505
        %v3668 = vpop.f32.mrf.mxu0
        %v3669 = vadd.f32 0.0, %v3668
        %v3670 = vpop.f32.mrf.mxu0
        %3671 = vmatprep.mubr.f32.mxu0 0.0
        %3672 = vmatmul.mubr.f32.gmra.mxu0 %v3508
        %v3673 = vpop.f32.mrf.mxu0
        %v3674 = vadd.f32 0.0, %v3673
        %v3675 = vpop.f32.mrf.mxu0
        %3676 = vmatprep.mubr.f32.mxu0 0.0
        %3677 = vmatmul.mubr.f32.gmra.mxu0 %v3511
        %v3678 = vpop.f32.mrf.mxu0
        %v3679 = vadd.f32 0.0, %v3678
        %v3680 = vpop.f32.mrf.mxu0
        %3681 = vmatprep.mubr.f32.mxu0 0.0
        %3682 = vmatmul.mubr.f32.gmra.mxu0 %v3514
        %v3683 = vpop.f32.mrf.mxu0
        %v3684 = vadd.f32 0.0, %v3683
        %v3685 = vpop.f32.mrf.mxu0
        %3686 = vmatprep.mubr.f32.mxu0 0.0
        %3687 = vmatmul.mubr.f32.gmra.mxu0 %v3517
        %v3688 = vpop.f32.mrf.mxu0
        %v3689 = vadd.f32 0.0, %v3688
        %v3690 = vpop.f32.mrf.mxu0
        %3691 = vmatprep.mubr.f32.mxu0 0.0
        %3692 = vmatmul.mubr.f32.gmra.mxu0 %v3520
        %v3693 = vpop.f32.mrf.mxu0
        %v3694 = vadd.f32 0.0, %v3693
        %v3695 = vpop.f32.mrf.mxu0
        %3696 = vmatprep.mubr.f32.mxu0 0.0
        %3697 = vmatmul.mubr.f32.gmra.mxu0 %v3523
        %v3698 = vpop.f32.mrf.mxu0
        %v3699 = vadd.f32 0.0, %v3698
        %v3700 = vpop.f32.mrf.mxu0
        %3701 = vmatprep.mubr.f32.mxu0 0.0
        %3702 = vmatmul.mubr.f32.gmra.mxu0 %v3526
        %v3703 = vpop.f32.mrf.mxu0
        %v3704 = vadd.f32 0.0, %v3703
        %v3705 = vpop.f32.mrf.mxu0
        %3706 = vmatprep.mubr.f32.mxu0 0.0
        %3707 = vmatmul.mubr.f32.gmra.mxu0 %v3529
        %v3708 = vpop.f32.mrf.mxu0
        %v3709 = vadd.f32 0.0, %v3708
        %v3710 = vpop.f32.mrf.mxu0
        %3711 = vmatprep.mubr.f32.mxu0 0.0
        %3712 = vmatmul.mubr.f32.gmra.mxu0 %v3532
        %v3713 = vpop.f32.mrf.mxu0
        %v3714 = vadd.f32 0.0, %v3713
        %v3715 = vpop.f32.mrf.mxu0
        %3716 = vmatprep.mubr.f32.mxu0 0.0
        %3717 = vmatmul.mubr.f32.gmra.mxu0 %v3535
        %v3718 = vpop.f32.mrf.mxu0
        %v3719 = vadd.f32 0.0, %v3718
        %v3720 = vpop.f32.mrf.mxu0
        %3721 = vmatprep.mubr.f32.mxu0 0.0
        %3722 = vmatmul.mubr.f32.gmra.mxu0 %v3538
        %v3723 = vpop.f32.mrf.mxu0
        %v3724 = vadd.f32 0.0, %v3723
        %v3725 = vpop.f32.mrf.mxu0
        %3726 = vmatprep.mubr.f32.mxu0 0.0
        %3727 = vmatmul.mubr.f32.gmra.mxu0 %v3541
        %v3728 = vpop.f32.mrf.mxu0
        %v3729 = vadd.f32 0.0, %v3728
        %v3730 = vpop.f32.mrf.mxu0
        %3731 = vmatprep.mubr.f32.mxu0 0.0
        %3732 = vmatmul.mubr.f32.gmra.mxu0 %v3544
        %v3733 = vpop.f32.mrf.mxu0
        %v3734 = vadd.f32 0.0, %v3733
        %v3735 = vpop.f32.mrf.mxu0
        %3736 = vmatprep.mubr.f32.mxu0 0.0
        %3737 = vmatmul.mubr.f32.gmra.mxu0 %v3547
        %v3738 = vpop.f32.mrf.mxu0
        %v3739 = vadd.f32 0.0, %v3738
        %v3740 = vpop.f32.mrf.mxu0
        %3741 = vmatprep.mubr.f32.mxu0 0.0
        %3742 = vmatmul.mubr.f32.gmra.mxu0 %v3550
        %v3743 = vpop.f32.mrf.mxu0
        %v3744 = vadd.f32 0.0, %v3743
        %v3745 = vpop.f32.mrf.mxu0
        %3746 = vmatprep.mubr.f32.mxu0 0.0
        %3747 = vmatmul.mubr.f32.gmra.mxu0 %v3553
        %v3748 = vpop.f32.mrf.mxu0
        %v3749 = vadd.f32 0.0, %v3748
        %v3750 = vpop.f32.mrf.mxu0
        %3751 = vmatprep.mubr.f32.mxu0 0.0
        %3752 = vmatmul.mubr.f32.gmra.mxu0 %v3556
        %v3753 = vpop.f32.mrf.mxu0
        %v3754 = vadd.f32 0.0, %v3753
        %v3755 = vpop.f32.mrf.mxu0
        %3756 = vmatprep.mubr.f32.mxu0 0.0
        %3757 = vmatmul.mubr.f32.gmra.mxu0 %v3559
        %v3758 = vpop.f32.mrf.mxu0
        %v3759 = vadd.f32 0.0, %v3758
        %v3760 = vpop.f32.mrf.mxu0
        %3761 = vmatprep.mubr.f32.mxu0 0.0
        %3762 = vmatmul.mubr.f32.gmra.mxu0 %v3562
        %v3763 = vpop.f32.mrf.mxu0
        %v3764 = vadd.f32 0.0, %v3763
        %v3765 = vpop.f32.mrf.mxu0
        %3766 = vmatprep.mubr.f32.mxu0 0.0
        %3767 = vmatmul.mubr.f32.gmra.mxu0 %v3565
        %v3768 = vpop.f32.mrf.mxu0
        %v3769 = vadd.f32 0.0, %v3768
        %v3770 = vpop.f32.mrf.mxu0
        %3771 = vmatprep.mubr.f32.mxu0 0.0
        %3772 = vmatmul.mubr.f32.gmra.mxu0 %v3568
        %v3773 = vpop.f32.mrf.mxu0
        %v3774 = vadd.f32 0.0, %v3773
        %v3775 = vpop.f32.mrf.mxu0
        %3776 = vmatprep.mubr.f32.mxu0 0.0
        %3777 = vmatmul.mubr.f32.gmra.mxu0 %v3571
        %v3778 = vpop.f32.mrf.mxu0
        %v3779 = vadd.f32 0.0, %v3778
        %v3780 = vpop.f32.mrf.mxu0
        %3781 = vmatprep.mubr.f32.mxu0 0.0
        %3782 = vmatmul.mubr.f32.gmra.mxu0 %v3574
        %v3783 = vpop.f32.mrf.mxu0
        %v3784 = vadd.f32 0.0, %v3783
        %v3785 = vpop.f32.mrf.mxu0
        %3786 = vmatprep.mubr.f32.mxu0 0.0
        %3787 = vmatmul.mubr.f32.gmra.mxu0 %v3577
        %v3788 = vpop.f32.mrf.mxu0
        %v3789 = vadd.f32 0.0, %v3788
        %v3790 = vpop.f32.mrf.mxu0
        %3791 = vmatprep.mubr.f32.mxu0 0.0
        %3792 = vmatmul.mubr.f32.gmra.mxu0 %v3580
        %v3793 = vpop.f32.mrf.mxu0
        %v3794 = vadd.f32 0.0, %v3793
        %v3795 = vpop.f32.mrf.mxu0
        %3796 = vmatprep.mubr.f32.mxu0 0.0
        %3797 = vmatmul.mubr.f32.gmra.mxu0 %v3583
        %v3798 = vpop.f32.mrf.mxu0
        %v3799 = vadd.f32 0.0, %v3798
        %v3800 = vpop.f32.mrf.mxu0
        %3801 = vmatprep.mubr.f32.mxu0 0.0
        %3802 = vmatmul.mubr.f32.gmra.mxu0 %v3586
        %v3803 = vpop.f32.mrf.mxu0
        %v3804 = vadd.f32 0.0, %v3803
        %v3805 = vpop.f32.mrf.mxu0
        %3806 = vmatprep.mubr.f32.mxu0 0.0
        %3807 = vmatmul.mubr.f32.gmra.mxu0 %v3589
        %v3808 = vpop.f32.mrf.mxu0
        %v3809 = vadd.f32 0.0, %v3808
        %v3810 = vpop.f32.mrf.mxu0
        %3811 = vmatprep.mubr.f32.mxu0 0.0
        %3812 = vmatmul.mubr.f32.gmra.mxu0 %v3592
        %v3813 = vpop.f32.mrf.mxu0
        %v3814 = vadd.f32 0.0, %v3813
        %v3815 = vpop.f32.mrf.mxu0
        %3816 = vmatprep.mubr.f32.mxu0 0.0
        %3817 = vmatmul.mubr.f32.gmra.mxu0 %v3595
        %v3818 = vpop.f32.mrf.mxu0
        %v3819 = vadd.f32 0.0, %v3818
        %v3820 = vpop.f32.mrf.mxu0
        %3821 = vdwg.mxu0
        %v3822 = vadd.f32 %v3428, %v3664
        %v3823 = vadd.f32 %v3429, %v3669
        %v3824 = vadd.f32 %v3430, %v3674
        %v3825 = vadd.f32 %v3431, %v3679
        %v3826 = vadd.f32 %v3432, %v3684
        %v3827 = vadd.f32 %v3433, %v3689
        %v3828 = vadd.f32 %v3434, %v3694
        %v3829 = vadd.f32 %v3435, %v3699
        %v3830 = vadd.f32 %v3436, %v3704
        %v3831 = vadd.f32 %v3437, %v3709
        %v3832 = vadd.f32 %v3438, %v3714
        %v3833 = vadd.f32 %v3439, %v3719
        %v3834 = vadd.f32 %v3440, %v3724
        %v3835 = vadd.f32 %v3441, %v3729
        %v3836 = vadd.f32 %v3442, %v3734
        %v3837 = vadd.f32 %v3443, %v3739
        %v3838 = vadd.f32 %v3444, %v3744
        %v3839 = vadd.f32 %v3445, %v3749
        %v3840 = vadd.f32 %v3446, %v3754
        %v3841 = vadd.f32 %v3447, %v3759
        %v3842 = vadd.f32 %v3448, %v3764
        %v3843 = vadd.f32 %v3449, %v3769
        %v3844 = vadd.f32 %v3450, %v3774
        %v3845 = vadd.f32 %v3451, %v3779
        %v3846 = vadd.f32 %v3452, %v3784
        %v3847 = vadd.f32 %v3453, %v3789
        %v3848 = vadd.f32 %v3454, %v3794
        %v3849 = vadd.f32 %v3455, %v3799
        %v3850 = vadd.f32 %v3456, %v3804
        %v3851 = vadd.f32 %v3457, %v3809
        %v3852 = vadd.f32 %v3458, %v3814
        %v3853 = vadd.f32 %v3459, %v3819
        %v3854 = vld [vmem:[%s3065 + $0x2] sm:$0xff]
        %v3855 = vld [vmem:[%s3065 + $0xa] sm:$0xff]
        %v3856 = vld [vmem:[%s3065 + $0x1a] sm:$0xff]
        %v3857 = vld [vmem:[%s3065 + $0x22] sm:$0xff]
        %v3858 = vld [vmem:[%s3065 + $0x32] sm:$0xff]
        %v3859 = vld [vmem:[%s3065 + $0x3a] sm:$0xff]
        %v3860 = vld [vmem:[%s3065 + $0x4a] sm:$0xff]
        %v3861 = vld [vmem:[%s3065 + $0x52] sm:$0xff]
        %v3862 = vld [vmem:[%s3065 + $0x62] sm:$0xff]
        %v3863 = vld [vmem:[%s3065 + $0x6a] sm:$0xff]
        %v3864 = vld [vmem:[%s3065 + $0x7a] sm:$0xff]
        %v3865 = vld [vmem:[%s3065 + $0x82] sm:$0xff]
        %v3866 = vld [vmem:[%s3065 + $0x92] sm:$0xff]
        %v3867 = vld [vmem:[%s3065 + $0x9a] sm:$0xff]
        %v3868 = vld [vmem:[%s3065 + $0xaa] sm:$0xff]
        %v3869 = vld [vmem:[%s3065 + $0xb2] sm:$0xff]
        %v3870 = vld [vmem:[%s3065 + $0xc2] sm:$0xff]
        %v3871 = vld [vmem:[%s3065 + $0xca] sm:$0xff]
        %v3872 = vld [vmem:[%s3065 + $0xda] sm:$0xff]
        %v3873 = vld [vmem:[%s3065 + $0xe2] sm:$0xff]
        %v3874 = vld [vmem:[%s3065 + $0xf2] sm:$0xff]
        %v3875 = vld [vmem:[%s3065 + $0xfa] sm:$0xff]
        %v3876 = vld [vmem:[%s3065 + $0x10a] sm:$0xff]
        %v3877 = vld [vmem:[%s3065 + $0x112] sm:$0xff]
        %v3878 = vld [vmem:[%s3065 + $0x122] sm:$0xff]
        %v3879 = vld [vmem:[%s3065 + $0x12a] sm:$0xff]
        %v3880 = vld [vmem:[%s3065 + $0x13a] sm:$0xff]
        %v3881 = vld [vmem:[%s3065 + $0x142] sm:$0xff]
        %v3882 = vld [vmem:[%s3065 + $0x152] sm:$0xff]
        %v3883 = vld [vmem:[%s3065 + $0x15a] sm:$0xff]
        %v3884 = vld [vmem:[%s3065 + $0x16a] sm:$0xff]
        %v3885 = vld [vmem:[%s3065 + $0x172] sm:$0xff]
        %s3886 = scalar_lea.vmem %s3, 512
        %v3887 = vld [vmem:[%s3886] sm:$0xff]
        %v3888 = vld [vmem:[%s3886 + $0x8] sm:$0xff]
        %v3889 = vld [vmem:[%s3886 + $0x10] sm:$0xff]
        %v3890 = vld [vmem:[%s3886 + $0x18] sm:$0xff]
        %v3891 = vld [vmem:[%s3886 + $0x20] sm:$0xff]
        %v3892 = vld [vmem:[%s3886 + $0x28] sm:$0xff]
        %v3893 = vld [vmem:[%s3886 + $0x30] sm:$0xff]
        %v3894 = vld [vmem:[%s3886 + $0x38] sm:$0xff]
        %v3896 = vsel %vm687, %v3854, 0
        %v3899 = vsel %vm687, %v3855, 0
        %v3902 = vsel %vm687, %v3856, 0
        %v3905 = vsel %vm687, %v3857, 0
        %v3908 = vsel %vm687, %v3858, 0
        %v3911 = vsel %vm687, %v3859, 0
        %v3914 = vsel %vm687, %v3860, 0
        %v3917 = vsel %vm687, %v3861, 0
        %v3920 = vsel %vm687, %v3862, 0
        %v3923 = vsel %vm687, %v3863, 0
        %v3926 = vsel %vm687, %v3864, 0
        %v3929 = vsel %vm687, %v3865, 0
        %v3932 = vsel %vm687, %v3866, 0
        %v3935 = vsel %vm687, %v3867, 0
        %v3938 = vsel %vm687, %v3868, 0
        %v3941 = vsel %vm687, %v3869, 0
        %v3944 = vsel %vm687, %v3870, 0
        %v3947 = vsel %vm687, %v3871, 0
        %v3950 = vsel %vm687, %v3872, 0
        %v3953 = vsel %vm687, %v3873, 0
        %v3956 = vsel %vm687, %v3874, 0
        %v3959 = vsel %vm687, %v3875, 0
        %v3962 = vsel %vm687, %v3876, 0
        %v3965 = vsel %vm687, %v3877, 0
        %v3968 = vsel %vm687, %v3878, 0
        %v3971 = vsel %vm687, %v3879, 0
        %v3974 = vsel %vm687, %v3880, 0
        %v3977 = vsel %vm687, %v3881, 0
        %v3980 = vsel %vm687, %v3882, 0
        %v3983 = vsel %vm687, %v3883, 0
        %v3986 = vsel %vm687, %v3884, 0
        %v3989 = vsel %vm687, %v3885, 0
        %3991 = vmatprep.subr.mxu0 0.0
        %3992 = vmatpush1.msra.mxu0 0.0
        %3993 = vmatprep.subr.mxu0 0.0
        %3994 = vmatpush1.msra.mxu0 0.0
        %3995 = vmatprep.subr.mxu0 0.0
        %3996 = vmatpush1.msra.mxu0 0.0
        %3997 = vmatprep.subr.mxu0 0.0
        %3998 = vmatpush1.msra.mxu0 0.0
        %3999 = vmatprep.subr.mxu0 0.0
        %4000 = vmatpush1.msra.mxu0 0.0
        %4001 = vmatprep.subr.mxu0 0.0
        %4002 = vmatpush1.msra.mxu0 0.0
        %4003 = vmatprep.subr.mxu0 0.0
        %4004 = vmatpush1.msra.mxu0 0.0
        %4005 = vmatprep.subr.mxu0 0.0
        %4006 = vmatpush1.msra.mxu0 0.0
        %4007 = vmatprep.subr.mxu0 0.0
        %4008 = vmatpush1.msra.mxu0 %v3894
        %4009 = vmatprep.subr.mxu0 0.0
        %4010 = vmatpush1.msra.mxu0 %v3893
        %4011 = vmatprep.subr.mxu0 0.0
        %4012 = vmatpush1.msra.mxu0 %v3892
        %4013 = vmatprep.subr.mxu0 0.0
        %4014 = vmatpush1.msra.mxu0 %v3891
        %4015 = vmatprep.subr.mxu0 0.0
        %4016 = vmatpush1.msra.mxu0 %v3890
        %4017 = vmatprep.subr.mxu0 0.0
        %4018 = vmatpush1.msra.mxu0 %v3889
        %4019 = vmatprep.subr.mxu0 0.0
        %4020 = vmatpush1.msra.mxu0 %v3888
        %4021 = vmatprep.subr.mxu0 0.0
        %4022 = vmatpush1.msra.mxu0 %v3887
        %4023 = vmatprep.subr.mxu0 0.0
        %4024 = vmatpush2.msra.mxu0 0.0
        %4025 = vmatprep.subr.mxu0 0.0
        %4026 = vmatpush2.msra.mxu0 0.0
        %4027 = vmatprep.subr.mxu0 0.0
        %4028 = vmatpush2.msra.mxu0 0.0
        %4029 = vmatprep.subr.mxu0 0.0
        %4030 = vmatpush2.msra.mxu0 0.0
        %4031 = vmatprep.subr.mxu0 0.0
        %4032 = vmatpush2.msra.mxu0 0.0
        %4033 = vmatprep.subr.mxu0 0.0
        %4034 = vmatpush2.msra.mxu0 0.0
        %4035 = vmatprep.subr.mxu0 0.0
        %4036 = vmatpush2.msra.mxu0 0.0
        %4037 = vmatprep.subr.mxu0 0.0
        %4038 = vmatpush2.msra.mxu0 0.0
        %4039 = vmatprep.subr.mxu0 0.0
        %4040 = vmatpush2.msra.mxu0 0.0
        %4041 = vmatprep.subr.mxu0 0.0
        %4042 = vmatpush2.msra.mxu0 0.0
        %4043 = vmatprep.subr.mxu0 0.0
        %4044 = vmatpush2.msra.mxu0 0.0
        %4045 = vmatprep.subr.mxu0 0.0
        %4046 = vmatpush2.msra.mxu0 0.0
        %4047 = vmatprep.subr.mxu0 0.0
        %4048 = vmatpush2.msra.mxu0 0.0
        %4049 = vmatprep.subr.mxu0 0.0
        %4050 = vmatpush2.msra.mxu0 0.0
        %4051 = vmatprep.subr.mxu0 0.0
        %4052 = vmatpush2.msra.mxu0 0.0
        %4053 = vmatprep.subr.mxu0 0.0
        %4054 = vmatpush2.msra.mxu0 0.0
        %4055 = vmatprep.mubr.f32.mxu0 0.0
        %4056 = vmatmul.mubr.f32.gmra.mxu0 %v3896
        %v4057 = vpop.f32.mrf.mxu0
        %v4058 = vadd.f32 0.0, %v4057
        %v4059 = vpop.f32.mrf.mxu0
        %4060 = vmatprep.mubr.f32.mxu0 0.0
        %4061 = vmatmul.mubr.f32.gmra.mxu0 %v3899
        %v4062 = vpop.f32.mrf.mxu0
        %v4063 = vadd.f32 0.0, %v4062
        %v4064 = vpop.f32.mrf.mxu0
        %4065 = vmatprep.mubr.f32.mxu0 0.0
        %4066 = vmatmul.mubr.f32.gmra.mxu0 %v3902
        %v4067 = vpop.f32.mrf.mxu0
        %v4068 = vadd.f32 0.0, %v4067
        %v4069 = vpop.f32.mrf.mxu0
        %4070 = vmatprep.mubr.f32.mxu0 0.0
        %4071 = vmatmul.mubr.f32.gmra.mxu0 %v3905
        %v4072 = vpop.f32.mrf.mxu0
        %v4073 = vadd.f32 0.0, %v4072
        %v4074 = vpop.f32.mrf.mxu0
        %4075 = vmatprep.mubr.f32.mxu0 0.0
        %4076 = vmatmul.mubr.f32.gmra.mxu0 %v3908
        %v4077 = vpop.f32.mrf.mxu0
        %v4078 = vadd.f32 0.0, %v4077
        %v4079 = vpop.f32.mrf.mxu0
        %4080 = vmatprep.mubr.f32.mxu0 0.0
        %4081 = vmatmul.mubr.f32.gmra.mxu0 %v3911
        %v4082 = vpop.f32.mrf.mxu0
        %v4083 = vadd.f32 0.0, %v4082
        %v4084 = vpop.f32.mrf.mxu0
        %4085 = vmatprep.mubr.f32.mxu0 0.0
        %4086 = vmatmul.mubr.f32.gmra.mxu0 %v3914
        %v4087 = vpop.f32.mrf.mxu0
        %v4088 = vadd.f32 0.0, %v4087
        %v4089 = vpop.f32.mrf.mxu0
        %4090 = vmatprep.mubr.f32.mxu0 0.0
        %4091 = vmatmul.mubr.f32.gmra.mxu0 %v3917
        %v4092 = vpop.f32.mrf.mxu0
        %v4093 = vadd.f32 0.0, %v4092
        %v4094 = vpop.f32.mrf.mxu0
        %4095 = vmatprep.mubr.f32.mxu0 0.0
        %4096 = vmatmul.mubr.f32.gmra.mxu0 %v3920
        %v4097 = vpop.f32.mrf.mxu0
        %v4098 = vadd.f32 0.0, %v4097
        %v4099 = vpop.f32.mrf.mxu0
        %4100 = vmatprep.mubr.f32.mxu0 0.0
        %4101 = vmatmul.mubr.f32.gmra.mxu0 %v3923
        %v4102 = vpop.f32.mrf.mxu0
        %v4103 = vadd.f32 0.0, %v4102
        %v4104 = vpop.f32.mrf.mxu0
        %4105 = vmatprep.mubr.f32.mxu0 0.0
        %4106 = vmatmul.mubr.f32.gmra.mxu0 %v3926
        %v4107 = vpop.f32.mrf.mxu0
        %v4108 = vadd.f32 0.0, %v4107
        %v4109 = vpop.f32.mrf.mxu0
        %4110 = vmatprep.mubr.f32.mxu0 0.0
        %4111 = vmatmul.mubr.f32.gmra.mxu0 %v3929
        %v4112 = vpop.f32.mrf.mxu0
        %v4113 = vadd.f32 0.0, %v4112
        %v4114 = vpop.f32.mrf.mxu0
        %4115 = vmatprep.mubr.f32.mxu0 0.0
        %4116 = vmatmul.mubr.f32.gmra.mxu0 %v3932
        %v4117 = vpop.f32.mrf.mxu0
        %v4118 = vadd.f32 0.0, %v4117
        %v4119 = vpop.f32.mrf.mxu0
        %4120 = vmatprep.mubr.f32.mxu0 0.0
        %4121 = vmatmul.mubr.f32.gmra.mxu0 %v3935
        %v4122 = vpop.f32.mrf.mxu0
        %v4123 = vadd.f32 0.0, %v4122
        %v4124 = vpop.f32.mrf.mxu0
        %4125 = vmatprep.mubr.f32.mxu0 0.0
        %4126 = vmatmul.mubr.f32.gmra.mxu0 %v3938
        %v4127 = vpop.f32.mrf.mxu0
        %v4128 = vadd.f32 0.0, %v4127
        %v4129 = vpop.f32.mrf.mxu0
        %4130 = vmatprep.mubr.f32.mxu0 0.0
        %4131 = vmatmul.mubr.f32.gmra.mxu0 %v3941
        %v4132 = vpop.f32.mrf.mxu0
        %v4133 = vadd.f32 0.0, %v4132
        %v4134 = vpop.f32.mrf.mxu0
        %4135 = vmatprep.mubr.f32.mxu0 0.0
        %4136 = vmatmul.mubr.f32.gmra.mxu0 %v3944
        %v4137 = vpop.f32.mrf.mxu0
        %v4138 = vadd.f32 0.0, %v4137
        %v4139 = vpop.f32.mrf.mxu0
        %4140 = vmatprep.mubr.f32.mxu0 0.0
        %4141 = vmatmul.mubr.f32.gmra.mxu0 %v3947
        %v4142 = vpop.f32.mrf.mxu0
        %v4143 = vadd.f32 0.0, %v4142
        %v4144 = vpop.f32.mrf.mxu0
        %4145 = vmatprep.mubr.f32.mxu0 0.0
        %4146 = vmatmul.mubr.f32.gmra.mxu0 %v3950
        %v4147 = vpop.f32.mrf.mxu0
        %v4148 = vadd.f32 0.0, %v4147
        %v4149 = vpop.f32.mrf.mxu0
        %4150 = vmatprep.mubr.f32.mxu0 0.0
        %4151 = vmatmul.mubr.f32.gmra.mxu0 %v3953
        %v4152 = vpop.f32.mrf.mxu0
        %v4153 = vadd.f32 0.0, %v4152
        %v4154 = vpop.f32.mrf.mxu0
        %4155 = vmatprep.mubr.f32.mxu0 0.0
        %4156 = vmatmul.mubr.f32.gmra.mxu0 %v3956
        %v4157 = vpop.f32.mrf.mxu0
        %v4158 = vadd.f32 0.0, %v4157
        %v4159 = vpop.f32.mrf.mxu0
        %4160 = vmatprep.mubr.f32.mxu0 0.0
        %4161 = vmatmul.mubr.f32.gmra.mxu0 %v3959
        %v4162 = vpop.f32.mrf.mxu0
        %v4163 = vadd.f32 0.0, %v4162
        %v4164 = vpop.f32.mrf.mxu0
        %4165 = vmatprep.mubr.f32.mxu0 0.0
        %4166 = vmatmul.mubr.f32.gmra.mxu0 %v3962
        %v4167 = vpop.f32.mrf.mxu0
        %v4168 = vadd.f32 0.0, %v4167
        %v4169 = vpop.f32.mrf.mxu0
        %4170 = vmatprep.mubr.f32.mxu0 0.0
        %4171 = vmatmul.mubr.f32.gmra.mxu0 %v3965
        %v4172 = vpop.f32.mrf.mxu0
        %v4173 = vadd.f32 0.0, %v4172
        %v4174 = vpop.f32.mrf.mxu0
        %4175 = vmatprep.mubr.f32.mxu0 0.0
        %4176 = vmatmul.mubr.f32.gmra.mxu0 %v3968
        %v4177 = vpop.f32.mrf.mxu0
        %v4178 = vadd.f32 0.0, %v4177
        %v4179 = vpop.f32.mrf.mxu0
        %4180 = vmatprep.mubr.f32.mxu0 0.0
        %4181 = vmatmul.mubr.f32.gmra.mxu0 %v3971
        %v4182 = vpop.f32.mrf.mxu0
        %v4183 = vadd.f32 0.0, %v4182
        %v4184 = vpop.f32.mrf.mxu0
        %4185 = vmatprep.mubr.f32.mxu0 0.0
        %4186 = vmatmul.mubr.f32.gmra.mxu0 %v3974
        %v4187 = vpop.f32.mrf.mxu0
        %v4188 = vadd.f32 0.0, %v4187
        %v4189 = vpop.f32.mrf.mxu0
        %4190 = vmatprep.mubr.f32.mxu0 0.0
        %4191 = vmatmul.mubr.f32.gmra.mxu0 %v3977
        %v4192 = vpop.f32.mrf.mxu0
        %v4193 = vadd.f32 0.0, %v4192
        %v4194 = vpop.f32.mrf.mxu0
        %4195 = vmatprep.mubr.f32.mxu0 0.0
        %4196 = vmatmul.mubr.f32.gmra.mxu0 %v3980
        %v4197 = vpop.f32.mrf.mxu0
        %v4198 = vadd.f32 0.0, %v4197
        %v4199 = vpop.f32.mrf.mxu0
        %4200 = vmatprep.mubr.f32.mxu0 0.0
        %4201 = vmatmul.mubr.f32.gmra.mxu0 %v3983
        %v4202 = vpop.f32.mrf.mxu0
        %v4203 = vadd.f32 0.0, %v4202
        %v4204 = vpop.f32.mrf.mxu0
        %4205 = vmatprep.mubr.f32.mxu0 0.0
        %4206 = vmatmul.mubr.f32.gmra.mxu0 %v3986
        %v4207 = vpop.f32.mrf.mxu0
        %v4208 = vadd.f32 0.0, %v4207
        %v4209 = vpop.f32.mrf.mxu0
        %4210 = vmatprep.mubr.f32.mxu0 0.0
        %4211 = vmatmul.mubr.f32.gmra.mxu0 %v3989
        %v4212 = vpop.f32.mrf.mxu0
        %v4213 = vadd.f32 0.0, %v4212
        %v4214 = vpop.f32.mrf.mxu0
        %4215 = vdwg.mxu0
        %v4216 = vadd.f32 %v3822, %v4058
        %v4217 = vadd.f32 %v3823, %v4063
        %v4218 = vadd.f32 %v3824, %v4068
        %v4219 = vadd.f32 %v3825, %v4073
        %v4220 = vadd.f32 %v3826, %v4078
        %v4221 = vadd.f32 %v3827, %v4083
        %v4222 = vadd.f32 %v3828, %v4088
        %v4223 = vadd.f32 %v3829, %v4093
        %v4224 = vadd.f32 %v3830, %v4098
        %v4225 = vadd.f32 %v3831, %v4103
        %v4226 = vadd.f32 %v3832, %v4108
        %v4227 = vadd.f32 %v3833, %v4113
        %v4228 = vadd.f32 %v3834, %v4118
        %v4229 = vadd.f32 %v3835, %v4123
        %v4230 = vadd.f32 %v3836, %v4128
        %v4231 = vadd.f32 %v3837, %v4133
        %v4232 = vadd.f32 %v3838, %v4138
        %v4233 = vadd.f32 %v3839, %v4143
        %v4234 = vadd.f32 %v3840, %v4148
        %v4235 = vadd.f32 %v3841, %v4153
        %v4236 = vadd.f32 %v3842, %v4158
        %v4237 = vadd.f32 %v3843, %v4163
        %v4238 = vadd.f32 %v3844, %v4168
        %v4239 = vadd.f32 %v3845, %v4173
        %v4240 = vadd.f32 %v3846, %v4178
        %v4241 = vadd.f32 %v3847, %v4183
        %v4242 = vadd.f32 %v3848, %v4188
        %v4243 = vadd.f32 %v3849, %v4193
        %v4244 = vadd.f32 %v3850, %v4198
        %v4245 = vadd.f32 %v3851, %v4203
        %v4246 = vadd.f32 %v3852, %v4208
        %v4247 = vadd.f32 %v3853, %v4213
        %v4248 = vld [vmem:[%s4] sm:$0x1]
        %v4250 = vlaneseq
        %v4251 = vshrl.u32 %v4250, 7
        %v4252 = vsub.s32 0, %v4251
        %v4253 = vrot.slane %v4248, %v4252
        %v4255 = vadd.f32 %v4216, %v4253
        %v4256 = vadd.f32 %v4217, %v4253
        %v4257 = vadd.f32 %v4218, %v4253
        %v4258 = vadd.f32 %v4219, %v4253
        %v4259 = vadd.f32 %v4220, %v4253
        %v4260 = vadd.f32 %v4221, %v4253
        %v4261 = vadd.f32 %v4222, %v4253
        %v4262 = vadd.f32 %v4223, %v4253
        %v4263 = vadd.f32 %v4224, %v4253
        %v4264 = vadd.f32 %v4225, %v4253
        %v4265 = vadd.f32 %v4226, %v4253
        %v4266 = vadd.f32 %v4227, %v4253
        %v4267 = vadd.f32 %v4228, %v4253
        %v4268 = vadd.f32 %v4229, %v4253
        %v4269 = vadd.f32 %v4230, %v4253
        %v4270 = vadd.f32 %v4231, %v4253
        %v4271 = vadd.f32 %v4232, %v4253
        %v4272 = vadd.f32 %v4233, %v4253
        %v4273 = vadd.f32 %v4234, %v4253
        %v4274 = vadd.f32 %v4235, %v4253
        %v4275 = vadd.f32 %v4236, %v4253
        %v4276 = vadd.f32 %v4237, %v4253
        %v4277 = vadd.f32 %v4238, %v4253
        %v4278 = vadd.f32 %v4239, %v4253
        %v4279 = vadd.f32 %v4240, %v4253
        %v4280 = vadd.f32 %v4241, %v4253
        %v4281 = vadd.f32 %v4242, %v4253
        %v4282 = vadd.f32 %v4243, %v4253
        %v4283 = vadd.f32 %v4244, %v4253
        %v4284 = vadd.f32 %v4245, %v4253
        %v4285 = vadd.f32 %v4246, %v4253
        %v4286 = vadd.f32 %v4247, %v4253
        %v4287 = vmax.f32 %v4255, 0.0
        %v4288 = vmax.f32 %v4256, 0.0
        %v4289 = vmax.f32 %v4257, 0.0
        %v4290 = vmax.f32 %v4258, 0.0
        %v4291 = vmax.f32 %v4259, 0.0
        %v4292 = vmax.f32 %v4260, 0.0
        %v4293 = vmax.f32 %v4261, 0.0
        %v4294 = vmax.f32 %v4262, 0.0
        %v4295 = vmax.f32 %v4263, 0.0
        %v4296 = vmax.f32 %v4264, 0.0
        %v4297 = vmax.f32 %v4265, 0.0
        %v4298 = vmax.f32 %v4266, 0.0
        %v4299 = vmax.f32 %v4267, 0.0
        %v4300 = vmax.f32 %v4268, 0.0
        %v4301 = vmax.f32 %v4269, 0.0
        %v4302 = vmax.f32 %v4270, 0.0
        %v4303 = vmax.f32 %v4271, 0.0
        %v4304 = vmax.f32 %v4272, 0.0
        %v4305 = vmax.f32 %v4273, 0.0
        %v4306 = vmax.f32 %v4274, 0.0
        %v4307 = vmax.f32 %v4275, 0.0
        %v4308 = vmax.f32 %v4276, 0.0
        %v4309 = vmax.f32 %v4277, 0.0
        %v4310 = vmax.f32 %v4278, 0.0
        %v4311 = vmax.f32 %v4279, 0.0
        %v4312 = vmax.f32 %v4280, 0.0
        %v4313 = vmax.f32 %v4281, 0.0
        %v4314 = vmax.f32 %v4282, 0.0
        %v4315 = vmax.f32 %v4283, 0.0
        %v4316 = vmax.f32 %v4284, 0.0
        %v4317 = vmax.f32 %v4285, 0.0
        %v4318 = vmax.f32 %v4286, 0.0
        %vm4319 = vcmask 261120
        %4320 = vst.msk [vmem:[#allocation3] sm:$0xff] %vm4319, 0.0
        %4321 = vst.msk [vmem:[#allocation3 + $0x8] sm:$0xff] %vm4319, 0.0
        %vm4322 = vcmask 257024
        %4323 = vst.msk [vmem:[#allocation3 + $0x10] sm:$0xf] %vm4322, 0.0
        %4324 = vst.msk [vmem:[#allocation3 + $0x18] sm:$0xff] %vm4319, 0.0
        %4325 = vst.msk [vmem:[#allocation3 + $0x20] sm:$0xff] %vm4319, 0.0
        %4326 = vst.msk [vmem:[#allocation3 + $0x28] sm:$0xf] %vm4322, 0.0
        %s4327 = scalar_lea.vmem [#allocation3], 432
        %4328 = vst.msk [vmem:[%s4327] sm:$0xff] %vm4319, 0.0
        %4329 = vst.msk [vmem:[%s4327 + $0x8] sm:$0xff] %vm4319, 0.0
        %4330 = vst.msk [vmem:[%s4327 + $0x10] sm:$0xf] %vm4322, 0.0
        %4331 = vst.msk [vmem:[%s4327 + $0x18] sm:$0xff] %vm4319, 0.0
        %4332 = vst.msk [vmem:[%s4327 + $0x20] sm:$0xff] %vm4319, 0.0
        %4333 = vst.msk [vmem:[%s4327 + $0x28] sm:$0xf] %vm4322, 0.0
        %vm4334 = vcmask 254976
        %4335 = vst.msk [vmem:[#allocation3] sm:$0x3] %vm4334, 0.0
        %4336 = vst.msk [vmem:[#allocation3 + $0x18] sm:$0x3] %vm4334, 0.0
        %4337 = vst.msk [vmem:[#allocation3 + $0x30] sm:$0x3] %vm4334, 0.0
        %4338 = vst.msk [vmem:[#allocation3 + $0x48] sm:$0x3] %vm4334, 0.0
        %4339 = vst.msk [vmem:[#allocation3 + $0x60] sm:$0x3] %vm4334, 0.0
        %4340 = vst.msk [vmem:[#allocation3 + $0x78] sm:$0x3] %vm4334, 0.0
        %4341 = vst.msk [vmem:[#allocation3 + $0x90] sm:$0x3] %vm4334, 0.0
        %4342 = vst.msk [vmem:[#allocation3 + $0xa8] sm:$0x3] %vm4334, 0.0
        %4343 = vst.msk [vmem:[#allocation3 + $0xc0] sm:$0x3] %vm4334, 0.0
        %4344 = vst.msk [vmem:[#allocation3 + $0xd8] sm:$0x3] %vm4334, 0.0
        %4345 = vst.msk [vmem:[#allocation3 + $0xf0] sm:$0x3] %vm4334, 0.0
        %4346 = vst.msk [vmem:[#allocation3 + $0x108] sm:$0x3] %vm4334, 0.0
        %4347 = vst.msk [vmem:[#allocation3 + $0x120] sm:$0x3] %vm4334, 0.0
        %4348 = vst.msk [vmem:[#allocation3 + $0x138] sm:$0x3] %vm4334, 0.0
        %4349 = vst.msk [vmem:[#allocation3 + $0x150] sm:$0x3] %vm4334, 0.0
        %4350 = vst.msk [vmem:[#allocation3 + $0x168] sm:$0x3] %vm4334, 0.0
        %4351 = vst.msk [vmem:[#allocation3 + $0x180] sm:$0x3] %vm4334, 0.0
        %4352 = vst.msk [vmem:[#allocation3 + $0x198] sm:$0x3] %vm4334, 0.0
        %4353 = vst.msk [vmem:[#allocation3 + $0x1b0] sm:$0x3] %vm4334, 0.0
        %4354 = vst.msk [vmem:[#allocation3 + $0x1c8] sm:$0x3] %vm4334, 0.0
        %4355 = vst.msk [vmem:[#allocation3 + $0x12] sm:$0x3] %vm4334, 0.0
        %4356 = vst.msk [vmem:[#allocation3 + $0x2a] sm:$0x3] %vm4334, 0.0
        %4357 = vst.msk [vmem:[#allocation3 + $0x42] sm:$0x3] %vm4334, 0.0
        %4358 = vst.msk [vmem:[#allocation3 + $0x5a] sm:$0x3] %vm4334, 0.0
        %4359 = vst.msk [vmem:[#allocation3 + $0x72] sm:$0x3] %vm4334, 0.0
        %4360 = vst.msk [vmem:[#allocation3 + $0x8a] sm:$0x3] %vm4334, 0.0
        %4361 = vst.msk [vmem:[#allocation3 + $0xa2] sm:$0x3] %vm4334, 0.0
        %4362 = vst.msk [vmem:[#allocation3 + $0xba] sm:$0x3] %vm4334, 0.0
        %4363 = vst.msk [vmem:[#allocation3 + $0xd2] sm:$0x3] %vm4334, 0.0
        %4364 = vst.msk [vmem:[#allocation3 + $0xea] sm:$0x3] %vm4334, 0.0
        %4365 = vst.msk [vmem:[#allocation3 + $0x102] sm:$0x3] %vm4334, 0.0
        %4366 = vst.msk [vmem:[#allocation3 + $0x11a] sm:$0x3] %vm4334, 0.0
        %4367 = vst.msk [vmem:[#allocation3 + $0x132] sm:$0x3] %vm4334, 0.0
        %4368 = vst.msk [vmem:[#allocation3 + $0x14a] sm:$0x3] %vm4334, 0.0
        %4369 = vst.msk [vmem:[#allocation3 + $0x162] sm:$0x3] %vm4334, 0.0
        %4370 = vst.msk [vmem:[#allocation3 + $0x17a] sm:$0x3] %vm4334, 0.0
        %4371 = vst.msk [vmem:[#allocation3 + $0x192] sm:$0x3] %vm4334, 0.0
        %4372 = vst.msk [vmem:[#allocation3 + $0x1aa] sm:$0x3] %vm4334, 0.0
        %4373 = vst.msk [vmem:[#allocation3 + $0x1c2] sm:$0x3] %vm4334, 0.0
        %4374 = vst.msk [vmem:[#allocation3 + $0x1da] sm:$0x3] %vm4334, 0.0
        %s4375 = scalar_lea.vmem [#allocation3], 48
        %4376 = vst.msk [vmem:[%s4375 + $0x2] sm:$0xff] %vm4319, %v4287
        %4377 = vst.msk [vmem:[%s4375 + $0xa] sm:$0xff] %vm4319, %v4288
        %4378 = vst.msk [vmem:[%s4375 + $0x1a] sm:$0xff] %vm4319, %v4289
        %4379 = vst.msk [vmem:[%s4375 + $0x22] sm:$0xff] %vm4319, %v4290
        %4380 = vst.msk [vmem:[%s4375 + $0x32] sm:$0xff] %vm4319, %v4291
        %4381 = vst.msk [vmem:[%s4375 + $0x3a] sm:$0xff] %vm4319, %v4292
        %4382 = vst.msk [vmem:[%s4375 + $0x4a] sm:$0xff] %vm4319, %v4293
        %4383 = vst.msk [vmem:[%s4375 + $0x52] sm:$0xff] %vm4319, %v4294
        %4384 = vst.msk [vmem:[%s4375 + $0x62] sm:$0xff] %vm4319, %v4295
        %4385 = vst.msk [vmem:[%s4375 + $0x6a] sm:$0xff] %vm4319, %v4296
        %4386 = vst.msk [vmem:[%s4375 + $0x7a] sm:$0xff] %vm4319, %v4297
        %4387 = vst.msk [vmem:[%s4375 + $0x82] sm:$0xff] %vm4319, %v4298
        %4388 = vst.msk [vmem:[%s4375 + $0x92] sm:$0xff] %vm4319, %v4299
        %4389 = vst.msk [vmem:[%s4375 + $0x9a] sm:$0xff] %vm4319, %v4300
        %4390 = vst.msk [vmem:[%s4375 + $0xaa] sm:$0xff] %vm4319, %v4301
        %4391 = vst.msk [vmem:[%s4375 + $0xb2] sm:$0xff] %vm4319, %v4302
        %4392 = vst.msk [vmem:[%s4375 + $0xc2] sm:$0xff] %vm4319, %v4303
        %4393 = vst.msk [vmem:[%s4375 + $0xca] sm:$0xff] %vm4319, %v4304
        %4394 = vst.msk [vmem:[%s4375 + $0xda] sm:$0xff] %vm4319, %v4305
        %4395 = vst.msk [vmem:[%s4375 + $0xe2] sm:$0xff] %vm4319, %v4306
        %4396 = vst.msk [vmem:[%s4375 + $0xf2] sm:$0xff] %vm4319, %v4307
        %4397 = vst.msk [vmem:[%s4375 + $0xfa] sm:$0xff] %vm4319, %v4308
        %4398 = vst.msk [vmem:[%s4375 + $0x10a] sm:$0xff] %vm4319, %v4309
        %4399 = vst.msk [vmem:[%s4375 + $0x112] sm:$0xff] %vm4319, %v4310
        %4400 = vst.msk [vmem:[%s4375 + $0x122] sm:$0xff] %vm4319, %v4311
        %4401 = vst.msk [vmem:[%s4375 + $0x12a] sm:$0xff] %vm4319, %v4312
        %4402 = vst.msk [vmem:[%s4375 + $0x13a] sm:$0xff] %vm4319, %v4313
        %4403 = vst.msk [vmem:[%s4375 + $0x142] sm:$0xff] %vm4319, %v4314
        %4404 = vst.msk [vmem:[%s4375 + $0x152] sm:$0xff] %vm4319, %v4315
        %4405 = vst.msk [vmem:[%s4375 + $0x15a] sm:$0xff] %vm4319, %v4316
        %4406 = vst.msk [vmem:[%s4375 + $0x16a] sm:$0xff] %vm4319, %v4317
        %4407 = vst.msk [vmem:[%s4375 + $0x172] sm:$0xff] %vm4319, %v4318
        %v4408 = vld [vmem:[#allocation3] sm:$0xff]
        %v4409 = vld [vmem:[#allocation3 + $0x8] sm:$0xff]
        %v4410 = vld [vmem:[#allocation3 + $0x18] sm:$0xff]
        %v4411 = vld [vmem:[#allocation3 + $0x20] sm:$0xff]
        %v4412 = vld [vmem:[#allocation3 + $0x30] sm:$0xff]
        %v4413 = vld [vmem:[#allocation3 + $0x38] sm:$0xff]
        %v4414 = vld [vmem:[#allocation3 + $0x48] sm:$0xff]
        %v4415 = vld [vmem:[#allocation3 + $0x50] sm:$0xff]
        %v4416 = vld [vmem:[#allocation3 + $0x60] sm:$0xff]
        %v4417 = vld [vmem:[#allocation3 + $0x68] sm:$0xff]
        %v4418 = vld [vmem:[#allocation3 + $0x78] sm:$0xff]
        %v4419 = vld [vmem:[#allocation3 + $0x80] sm:$0xff]
        %v4420 = vld [vmem:[#allocation3 + $0x90] sm:$0xff]
        %v4421 = vld [vmem:[#allocation3 + $0x98] sm:$0xff]
        %v4422 = vld [vmem:[#allocation3 + $0xa8] sm:$0xff]
        %v4423 = vld [vmem:[#allocation3 + $0xb0] sm:$0xff]
        %v4424 = vld [vmem:[#allocation3 + $0xc0] sm:$0xff]
        %v4425 = vld [vmem:[#allocation3 + $0xc8] sm:$0xff]
        %v4426 = vld [vmem:[#allocation3 + $0xd8] sm:$0xff]
        %v4427 = vld [vmem:[#allocation3 + $0xe0] sm:$0xff]
        %v4428 = vld [vmem:[#allocation3 + $0xf0] sm:$0xff]
        %v4429 = vld [vmem:[#allocation3 + $0xf8] sm:$0xff]
        %v4430 = vld [vmem:[#allocation3 + $0x108] sm:$0xff]
        %v4431 = vld [vmem:[#allocation3 + $0x110] sm:$0xff]
        %v4432 = vld [vmem:[#allocation3 + $0x120] sm:$0xff]
        %v4433 = vld [vmem:[#allocation3 + $0x128] sm:$0xff]
        %v4434 = vld [vmem:[#allocation3 + $0x138] sm:$0xff]
        %v4435 = vld [vmem:[#allocation3 + $0x140] sm:$0xff]
        %v4436 = vld [vmem:[#allocation3 + $0x150] sm:$0xff]
        %v4437 = vld [vmem:[#allocation3 + $0x158] sm:$0xff]
        %v4438 = vld [vmem:[#allocation3 + $0x168] sm:$0xff]
        %v4439 = vld [vmem:[#allocation3 + $0x170] sm:$0xff]
        %v4440 = vld [vmem:[%s5] sm:$0x1]
        %v4441 = vlaneseq
        %v4442 = vshrl.u32 %v4441, 7
        %v4443 = vsub.s32 0, %v4442
        %v4444 = vrot.slane %v4440, %v4443
        %v4445 = vmul.f32 %v4408, %v4444
        %v4446 = vmul.f32 %v4409, %v4444
        %v4447 = vmul.f32 %v4410, %v4444
        %v4448 = vmul.f32 %v4411, %v4444
        %v4449 = vmul.f32 %v4412, %v4444
        %v4450 = vmul.f32 %v4413, %v4444
        %v4451 = vmul.f32 %v4414, %v4444
        %v4452 = vmul.f32 %v4415, %v4444
        %v4453 = vmul.f32 %v4416, %v4444
        %v4454 = vmul.f32 %v4417, %v4444
        %v4455 = vmul.f32 %v4418, %v4444
        %v4456 = vmul.f32 %v4419, %v4444
        %v4457 = vmul.f32 %v4420, %v4444
        %v4458 = vmul.f32 %v4421, %v4444
        %v4459 = vmul.f32 %v4422, %v4444
        %v4460 = vmul.f32 %v4423, %v4444
        %v4461 = vmul.f32 %v4424, %v4444
        %v4462 = vmul.f32 %v4425, %v4444
        %v4463 = vmul.f32 %v4426, %v4444
        %v4464 = vmul.f32 %v4427, %v4444
        %v4465 = vmul.f32 %v4428, %v4444
        %v4466 = vmul.f32 %v4429, %v4444
        %v4467 = vmul.f32 %v4430, %v4444
        %v4468 = vmul.f32 %v4431, %v4444
        %v4469 = vmul.f32 %v4432, %v4444
        %v4470 = vmul.f32 %v4433, %v4444
        %v4471 = vmul.f32 %v4434, %v4444
        %v4472 = vmul.f32 %v4435, %v4444
        %v4473 = vmul.f32 %v4436, %v4444
        %v4474 = vmul.f32 %v4437, %v4444
        %v4475 = vmul.f32 %v4438, %v4444
        %v4476 = vmul.f32 %v4439, %v4444
        %v4477 = vld [vmem:[#allocation3 + $0x1] sm:$0xff]
        %v4478 = vld [vmem:[#allocation3 + $0x9] sm:$0xff]
        %v4479 = vld [vmem:[#allocation3 + $0x19] sm:$0xff]
        %v4480 = vld [vmem:[#allocation3 + $0x21] sm:$0xff]
        %v4481 = vld [vmem:[#allocation3 + $0x31] sm:$0xff]
        %v4482 = vld [vmem:[#allocation3 + $0x39] sm:$0xff]
        %v4483 = vld [vmem:[#allocation3 + $0x49] sm:$0xff]
        %v4484 = vld [vmem:[#allocation3 + $0x51] sm:$0xff]
        %v4485 = vld [vmem:[#allocation3 + $0x61] sm:$0xff]
        %v4486 = vld [vmem:[#allocation3 + $0x69] sm:$0xff]
        %v4487 = vld [vmem:[#allocation3 + $0x79] sm:$0xff]
        %v4488 = vld [vmem:[#allocation3 + $0x81] sm:$0xff]
        %v4489 = vld [vmem:[#allocation3 + $0x91] sm:$0xff]
        %v4490 = vld [vmem:[#allocation3 + $0x99] sm:$0xff]
        %v4491 = vld [vmem:[#allocation3 + $0xa9] sm:$0xff]
        %v4492 = vld [vmem:[#allocation3 + $0xb1] sm:$0xff]
        %v4493 = vld [vmem:[#allocation3 + $0xc1] sm:$0xff]
        %v4494 = vld [vmem:[#allocation3 + $0xc9] sm:$0xff]
        %v4495 = vld [vmem:[#allocation3 + $0xd9] sm:$0xff]
        %v4496 = vld [vmem:[#allocation3 + $0xe1] sm:$0xff]
        %v4497 = vld [vmem:[#allocation3 + $0xf1] sm:$0xff]
        %v4498 = vld [vmem:[#allocation3 + $0xf9] sm:$0xff]
        %v4499 = vld [vmem:[#allocation3 + $0x109] sm:$0xff]
        %v4500 = vld [vmem:[#allocation3 + $0x111] sm:$0xff]
        %v4501 = vld [vmem:[#allocation3 + $0x121] sm:$0xff]
        %v4502 = vld [vmem:[#allocation3 + $0x129] sm:$0xff]
        %v4503 = vld [vmem:[#allocation3 + $0x139] sm:$0xff]
        %v4504 = vld [vmem:[#allocation3 + $0x141] sm:$0xff]
        %v4505 = vld [vmem:[#allocation3 + $0x151] sm:$0xff]
        %v4506 = vld [vmem:[#allocation3 + $0x159] sm:$0xff]
        %v4507 = vld [vmem:[#allocation3 + $0x169] sm:$0xff]
        %v4508 = vld [vmem:[#allocation3 + $0x171] sm:$0xff]
        %v4509 = vld [vmem:[%s5 + $0x1] sm:$0x1]
        %v4510 = vlaneseq
        %v4511 = vshrl.u32 %v4510, 7
        %v4512 = vsub.s32 0, %v4511
        %v4513 = vrot.slane %v4509, %v4512
        %v4514 = vmul.f32 %v4477, %v4513
        %v4515 = vmul.f32 %v4478, %v4513
        %v4516 = vmul.f32 %v4479, %v4513
        %v4517 = vmul.f32 %v4480, %v4513
        %v4518 = vmul.f32 %v4481, %v4513
        %v4519 = vmul.f32 %v4482, %v4513
        %v4520 = vmul.f32 %v4483, %v4513
        %v4521 = vmul.f32 %v4484, %v4513
        %v4522 = vmul.f32 %v4485, %v4513
        %v4523 = vmul.f32 %v4486, %v4513
        %v4524 = vmul.f32 %v4487, %v4513
        %v4525 = vmul.f32 %v4488, %v4513
        %v4526 = vmul.f32 %v4489, %v4513
        %v4527 = vmul.f32 %v4490, %v4513
        %v4528 = vmul.f32 %v4491, %v4513
        %v4529 = vmul.f32 %v4492, %v4513
        %v4530 = vmul.f32 %v4493, %v4513
        %v4531 = vmul.f32 %v4494, %v4513
        %v4532 = vmul.f32 %v4495, %v4513
        %v4533 = vmul.f32 %v4496, %v4513
        %v4534 = vmul.f32 %v4497, %v4513
        %v4535 = vmul.f32 %v4498, %v4513
        %v4536 = vmul.f32 %v4499, %v4513
        %v4537 = vmul.f32 %v4500, %v4513
        %v4538 = vmul.f32 %v4501, %v4513
        %v4539 = vmul.f32 %v4502, %v4513
        %v4540 = vmul.f32 %v4503, %v4513
        %v4541 = vmul.f32 %v4504, %v4513
        %v4542 = vmul.f32 %v4505, %v4513
        %v4543 = vmul.f32 %v4506, %v4513
        %v4544 = vmul.f32 %v4507, %v4513
        %v4545 = vmul.f32 %v4508, %v4513
        %v4546 = vadd.f32 %v4445, %v4514
        %v4547 = vadd.f32 %v4446, %v4515
        %v4548 = vadd.f32 %v4447, %v4516
        %v4549 = vadd.f32 %v4448, %v4517
        %v4550 = vadd.f32 %v4449, %v4518
        %v4551 = vadd.f32 %v4450, %v4519
        %v4552 = vadd.f32 %v4451, %v4520
        %v4553 = vadd.f32 %v4452, %v4521
        %v4554 = vadd.f32 %v4453, %v4522
        %v4555 = vadd.f32 %v4454, %v4523
        %v4556 = vadd.f32 %v4455, %v4524
        %v4557 = vadd.f32 %v4456, %v4525
        %v4558 = vadd.f32 %v4457, %v4526
        %v4559 = vadd.f32 %v4458, %v4527
        %v4560 = vadd.f32 %v4459, %v4528
        %v4561 = vadd.f32 %v4460, %v4529
        %v4562 = vadd.f32 %v4461, %v4530
        %v4563 = vadd.f32 %v4462, %v4531
        %v4564 = vadd.f32 %v4463, %v4532
        %v4565 = vadd.f32 %v4464, %v4533
        %v4566 = vadd.f32 %v4465, %v4534
        %v4567 = vadd.f32 %v4466, %v4535
        %v4568 = vadd.f32 %v4467, %v4536
        %v4569 = vadd.f32 %v4468, %v4537
        %v4570 = vadd.f32 %v4469, %v4538
        %v4571 = vadd.f32 %v4470, %v4539
        %v4572 = vadd.f32 %v4471, %v4540
        %v4573 = vadd.f32 %v4472, %v4541
        %v4574 = vadd.f32 %v4473, %v4542
        %v4575 = vadd.f32 %v4474, %v4543
        %v4576 = vadd.f32 %v4475, %v4544
        %v4577 = vadd.f32 %v4476, %v4545
        %v4578 = vld [vmem:[#allocation3 + $0x2] sm:$0xff]
        %v4579 = vld [vmem:[#allocation3 + $0xa] sm:$0xff]
        %v4580 = vld [vmem:[#allocation3 + $0x1a] sm:$0xff]
        %v4581 = vld [vmem:[#allocation3 + $0x22] sm:$0xff]
        %v4582 = vld [vmem:[#allocation3 + $0x32] sm:$0xff]
        %v4583 = vld [vmem:[#allocation3 + $0x3a] sm:$0xff]
        %v4584 = vld [vmem:[#allocation3 + $0x4a] sm:$0xff]
        %v4585 = vld [vmem:[#allocation3 + $0x52] sm:$0xff]
        %v4586 = vld [vmem:[#allocation3 + $0x62] sm:$0xff]
        %v4587 = vld [vmem:[#allocation3 + $0x6a] sm:$0xff]
        %v4588 = vld [vmem:[#allocation3 + $0x7a] sm:$0xff]
        %v4589 = vld [vmem:[#allocation3 + $0x82] sm:$0xff]
        %v4590 = vld [vmem:[#allocation3 + $0x92] sm:$0xff]
        %v4591 = vld [vmem:[#allocation3 + $0x9a] sm:$0xff]
        %v4592 = vld [vmem:[#allocation3 + $0xaa] sm:$0xff]
        %v4593 = vld [vmem:[#allocation3 + $0xb2] sm:$0xff]
        %v4594 = vld [vmem:[#allocation3 + $0xc2] sm:$0xff]
        %v4595 = vld [vmem:[#allocation3 + $0xca] sm:$0xff]
        %v4596 = vld [vmem:[#allocation3 + $0xda] sm:$0xff]
        %v4597 = vld [vmem:[#allocation3 + $0xe2] sm:$0xff]
        %v4598 = vld [vmem:[#allocation3 + $0xf2] sm:$0xff]
        %v4599 = vld [vmem:[#allocation3 + $0xfa] sm:$0xff]
        %v4600 = vld [vmem:[#allocation3 + $0x10a] sm:$0xff]
        %v4601 = vld [vmem:[#allocation3 + $0x112] sm:$0xff]
        %v4602 = vld [vmem:[#allocation3 + $0x122] sm:$0xff]
        %v4603 = vld [vmem:[#allocation3 + $0x12a] sm:$0xff]
        %v4604 = vld [vmem:[#allocation3 + $0x13a] sm:$0xff]
        %v4605 = vld [vmem:[#allocation3 + $0x142] sm:$0xff]
        %v4606 = vld [vmem:[#allocation3 + $0x152] sm:$0xff]
        %v4607 = vld [vmem:[#allocation3 + $0x15a] sm:$0xff]
        %v4608 = vld [vmem:[#allocation3 + $0x16a] sm:$0xff]
        %v4609 = vld [vmem:[#allocation3 + $0x172] sm:$0xff]
        %v4610 = vld [vmem:[%s5 + $0x2] sm:$0x1]
        %v4611 = vlaneseq
        %v4612 = vshrl.u32 %v4611, 7
        %v4613 = vsub.s32 0, %v4612
        %v4614 = vrot.slane %v4610, %v4613
        %v4615 = vmul.f32 %v4578, %v4614
        %v4616 = vmul.f32 %v4579, %v4614
        %v4617 = vmul.f32 %v4580, %v4614
        %v4618 = vmul.f32 %v4581, %v4614
        %v4619 = vmul.f32 %v4582, %v4614
        %v4620 = vmul.f32 %v4583, %v4614
        %v4621 = vmul.f32 %v4584, %v4614
        %v4622 = vmul.f32 %v4585, %v4614
        %v4623 = vmul.f32 %v4586, %v4614
        %v4624 = vmul.f32 %v4587, %v4614
        %v4625 = vmul.f32 %v4588, %v4614
        %v4626 = vmul.f32 %v4589, %v4614
        %v4627 = vmul.f32 %v4590, %v4614
        %v4628 = vmul.f32 %v4591, %v4614
        %v4629 = vmul.f32 %v4592, %v4614
        %v4630 = vmul.f32 %v4593, %v4614
        %v4631 = vmul.f32 %v4594, %v4614
        %v4632 = vmul.f32 %v4595, %v4614
        %v4633 = vmul.f32 %v4596, %v4614
        %v4634 = vmul.f32 %v4597, %v4614
        %v4635 = vmul.f32 %v4598, %v4614
        %v4636 = vmul.f32 %v4599, %v4614
        %v4637 = vmul.f32 %v4600, %v4614
        %v4638 = vmul.f32 %v4601, %v4614
        %v4639 = vmul.f32 %v4602, %v4614
        %v4640 = vmul.f32 %v4603, %v4614
        %v4641 = vmul.f32 %v4604, %v4614
        %v4642 = vmul.f32 %v4605, %v4614
        %v4643 = vmul.f32 %v4606, %v4614
        %v4644 = vmul.f32 %v4607, %v4614
        %v4645 = vmul.f32 %v4608, %v4614
        %v4646 = vmul.f32 %v4609, %v4614
        %v4647 = vadd.f32 %v4546, %v4615
        %v4648 = vadd.f32 %v4547, %v4616
        %v4649 = vadd.f32 %v4548, %v4617
        %v4650 = vadd.f32 %v4549, %v4618
        %v4651 = vadd.f32 %v4550, %v4619
        %v4652 = vadd.f32 %v4551, %v4620
        %v4653 = vadd.f32 %v4552, %v4621
        %v4654 = vadd.f32 %v4553, %v4622
        %v4655 = vadd.f32 %v4554, %v4623
        %v4656 = vadd.f32 %v4555, %v4624
        %v4657 = vadd.f32 %v4556, %v4625
        %v4658 = vadd.f32 %v4557, %v4626
        %v4659 = vadd.f32 %v4558, %v4627
        %v4660 = vadd.f32 %v4559, %v4628
        %v4661 = vadd.f32 %v4560, %v4629
        %v4662 = vadd.f32 %v4561, %v4630
        %v4663 = vadd.f32 %v4562, %v4631
        %v4664 = vadd.f32 %v4563, %v4632
        %v4665 = vadd.f32 %v4564, %v4633
        %v4666 = vadd.f32 %v4565, %v4634
        %v4667 = vadd.f32 %v4566, %v4635
        %v4668 = vadd.f32 %v4567, %v4636
        %v4669 = vadd.f32 %v4568, %v4637
        %v4670 = vadd.f32 %v4569, %v4638
        %v4671 = vadd.f32 %v4570, %v4639
        %v4672 = vadd.f32 %v4571, %v4640
        %v4673 = vadd.f32 %v4572, %v4641
        %v4674 = vadd.f32 %v4573, %v4642
        %v4675 = vadd.f32 %v4574, %v4643
        %v4676 = vadd.f32 %v4575, %v4644
        %v4677 = vadd.f32 %v4576, %v4645
        %v4678 = vadd.f32 %v4577, %v4646
        %v4679 = vld [vmem:[#allocation3 + $0x3] sm:$0xff]
        %v4680 = vld [vmem:[#allocation3 + $0xb] sm:$0xff]
        %v4681 = vld [vmem:[#allocation3 + $0x1b] sm:$0xff]
        %v4682 = vld [vmem:[#allocation3 + $0x23] sm:$0xff]
        %v4683 = vld [vmem:[#allocation3 + $0x33] sm:$0xff]
        %v4684 = vld [vmem:[#allocation3 + $0x3b] sm:$0xff]
        %v4685 = vld [vmem:[#allocation3 + $0x4b] sm:$0xff]
        %v4686 = vld [vmem:[#allocation3 + $0x53] sm:$0xff]
        %v4687 = vld [vmem:[#allocation3 + $0x63] sm:$0xff]
        %v4688 = vld [vmem:[#allocation3 + $0x6b] sm:$0xff]
        %v4689 = vld [vmem:[#allocation3 + $0x7b] sm:$0xff]
        %v4690 = vld [vmem:[#allocation3 + $0x83] sm:$0xff]
        %v4691 = vld [vmem:[#allocation3 + $0x93] sm:$0xff]
        %v4692 = vld [vmem:[#allocation3 + $0x9b] sm:$0xff]
        %v4693 = vld [vmem:[#allocation3 + $0xab] sm:$0xff]
        %v4694 = vld [vmem:[#allocation3 + $0xb3] sm:$0xff]
        %v4695 = vld [vmem:[#allocation3 + $0xc3] sm:$0xff]
        %v4696 = vld [vmem:[#allocation3 + $0xcb] sm:$0xff]
        %v4697 = vld [vmem:[#allocation3 + $0xdb] sm:$0xff]
        %v4698 = vld [vmem:[#allocation3 + $0xe3] sm:$0xff]
        %v4699 = vld [vmem:[#allocation3 + $0xf3] sm:$0xff]
        %v4700 = vld [vmem:[#allocation3 + $0xfb] sm:$0xff]
        %v4701 = vld [vmem:[#allocation3 + $0x10b] sm:$0xff]
        %v4702 = vld [vmem:[#allocation3 + $0x113] sm:$0xff]
        %v4703 = vld [vmem:[#allocation3 + $0x123] sm:$0xff]
        %v4704 = vld [vmem:[#allocation3 + $0x12b] sm:$0xff]
        %v4705 = vld [vmem:[#allocation3 + $0x13b] sm:$0xff]
        %v4706 = vld [vmem:[#allocation3 + $0x143] sm:$0xff]
        %v4707 = vld [vmem:[#allocation3 + $0x153] sm:$0xff]
        %v4708 = vld [vmem:[#allocation3 + $0x15b] sm:$0xff]
        %v4709 = vld [vmem:[#allocation3 + $0x16b] sm:$0xff]
        %v4710 = vld [vmem:[#allocation3 + $0x173] sm:$0xff]
        %v4711 = vld [vmem:[%s5 + $0x3] sm:$0x1]
        %v4712 = vlaneseq
        %v4713 = vshrl.u32 %v4712, 7
        %v4714 = vsub.s32 0, %v4713
        %v4715 = vrot.slane %v4711, %v4714
        %v4716 = vmul.f32 %v4679, %v4715
        %v4717 = vmul.f32 %v4680, %v4715
        %v4718 = vmul.f32 %v4681, %v4715
        %v4719 = vmul.f32 %v4682, %v4715
        %v4720 = vmul.f32 %v4683, %v4715
        %v4721 = vmul.f32 %v4684, %v4715
        %v4722 = vmul.f32 %v4685, %v4715
        %v4723 = vmul.f32 %v4686, %v4715
        %v4724 = vmul.f32 %v4687, %v4715
        %v4725 = vmul.f32 %v4688, %v4715
        %v4726 = vmul.f32 %v4689, %v4715
        %v4727 = vmul.f32 %v4690, %v4715
        %v4728 = vmul.f32 %v4691, %v4715
        %v4729 = vmul.f32 %v4692, %v4715
        %v4730 = vmul.f32 %v4693, %v4715
        %v4731 = vmul.f32 %v4694, %v4715
        %v4732 = vmul.f32 %v4695, %v4715
        %v4733 = vmul.f32 %v4696, %v4715
        %v4734 = vmul.f32 %v4697, %v4715
        %v4735 = vmul.f32 %v4698, %v4715
        %v4736 = vmul.f32 %v4699, %v4715
        %v4737 = vmul.f32 %v4700, %v4715
        %v4738 = vmul.f32 %v4701, %v4715
        %v4739 = vmul.f32 %v4702, %v4715
        %v4740 = vmul.f32 %v4703, %v4715
        %v4741 = vmul.f32 %v4704, %v4715
        %v4742 = vmul.f32 %v4705, %v4715
        %v4743 = vmul.f32 %v4706, %v4715
        %v4744 = vmul.f32 %v4707, %v4715
        %v4745 = vmul.f32 %v4708, %v4715
        %v4746 = vmul.f32 %v4709, %v4715
        %v4747 = vmul.f32 %v4710, %v4715
        %v4748 = vadd.f32 %v4647, %v4716
        %v4749 = vadd.f32 %v4648, %v4717
        %v4750 = vadd.f32 %v4649, %v4718
        %v4751 = vadd.f32 %v4650, %v4719
        %v4752 = vadd.f32 %v4651, %v4720
        %v4753 = vadd.f32 %v4652, %v4721
        %v4754 = vadd.f32 %v4653, %v4722
        %v4755 = vadd.f32 %v4654, %v4723
        %v4756 = vadd.f32 %v4655, %v4724
        %v4757 = vadd.f32 %v4656, %v4725
        %v4758 = vadd.f32 %v4657, %v4726
        %v4759 = vadd.f32 %v4658, %v4727
        %v4760 = vadd.f32 %v4659, %v4728
        %v4761 = vadd.f32 %v4660, %v4729
        %v4762 = vadd.f32 %v4661, %v4730
        %v4763 = vadd.f32 %v4662, %v4731
        %v4764 = vadd.f32 %v4663, %v4732
        %v4765 = vadd.f32 %v4664, %v4733
        %v4766 = vadd.f32 %v4665, %v4734
        %v4767 = vadd.f32 %v4666, %v4735
        %v4768 = vadd.f32 %v4667, %v4736
        %v4769 = vadd.f32 %v4668, %v4737
        %v4770 = vadd.f32 %v4669, %v4738
        %v4771 = vadd.f32 %v4670, %v4739
        %v4772 = vadd.f32 %v4671, %v4740
        %v4773 = vadd.f32 %v4672, %v4741
        %v4774 = vadd.f32 %v4673, %v4742
        %v4775 = vadd.f32 %v4674, %v4743
        %v4776 = vadd.f32 %v4675, %v4744
        %v4777 = vadd.f32 %v4676, %v4745
        %v4778 = vadd.f32 %v4677, %v4746
        %v4779 = vadd.f32 %v4678, %v4747
        %v4780 = vld [vmem:[#allocation3 + $0x4] sm:$0xff]
        %v4781 = vld [vmem:[#allocation3 + $0xc] sm:$0xff]
        %v4782 = vld [vmem:[#allocation3 + $0x1c] sm:$0xff]
        %v4783 = vld [vmem:[#allocation3 + $0x24] sm:$0xff]
        %v4784 = vld [vmem:[#allocation3 + $0x34] sm:$0xff]
        %v4785 = vld [vmem:[#allocation3 + $0x3c] sm:$0xff]
        %v4786 = vld [vmem:[#allocation3 + $0x4c] sm:$0xff]
        %v4787 = vld [vmem:[#allocation3 + $0x54] sm:$0xff]
        %v4788 = vld [vmem:[#allocation3 + $0x64] sm:$0xff]
        %v4789 = vld [vmem:[#allocation3 + $0x6c] sm:$0xff]
        %v4790 = vld [vmem:[#allocation3 + $0x7c] sm:$0xff]
        %v4791 = vld [vmem:[#allocation3 + $0x84] sm:$0xff]
        %v4792 = vld [vmem:[#allocation3 + $0x94] sm:$0xff]
        %v4793 = vld [vmem:[#allocation3 + $0x9c] sm:$0xff]
        %v4794 = vld [vmem:[#allocation3 + $0xac] sm:$0xff]
        %v4795 = vld [vmem:[#allocation3 + $0xb4] sm:$0xff]
        %v4796 = vld [vmem:[#allocation3 + $0xc4] sm:$0xff]
        %v4797 = vld [vmem:[#allocation3 + $0xcc] sm:$0xff]
        %v4798 = vld [vmem:[#allocation3 + $0xdc] sm:$0xff]
        %v4799 = vld [vmem:[#allocation3 + $0xe4] sm:$0xff]
        %v4800 = vld [vmem:[#allocation3 + $0xf4] sm:$0xff]
        %v4801 = vld [vmem:[#allocation3 + $0xfc] sm:$0xff]
        %v4802 = vld [vmem:[#allocation3 + $0x10c] sm:$0xff]
        %v4803 = vld [vmem:[#allocation3 + $0x114] sm:$0xff]
        %v4804 = vld [vmem:[#allocation3 + $0x124] sm:$0xff]
        %v4805 = vld [vmem:[#allocation3 + $0x12c] sm:$0xff]
        %v4806 = vld [vmem:[#allocation3 + $0x13c] sm:$0xff]
        %v4807 = vld [vmem:[#allocation3 + $0x144] sm:$0xff]
        %v4808 = vld [vmem:[#allocation3 + $0x154] sm:$0xff]
        %v4809 = vld [vmem:[#allocation3 + $0x15c] sm:$0xff]
        %v4810 = vld [vmem:[#allocation3 + $0x16c] sm:$0xff]
        %v4811 = vld [vmem:[#allocation3 + $0x174] sm:$0xff]
        %v4812 = vld [vmem:[%s5 + $0x4] sm:$0x1]
        %v4813 = vlaneseq
        %v4814 = vshrl.u32 %v4813, 7
        %v4815 = vsub.s32 0, %v4814
        %v4816 = vrot.slane %v4812, %v4815
        %v4817 = vmul.f32 %v4780, %v4816
        %v4818 = vmul.f32 %v4781, %v4816
        %v4819 = vmul.f32 %v4782, %v4816
        %v4820 = vmul.f32 %v4783, %v4816
        %v4821 = vmul.f32 %v4784, %v4816
        %v4822 = vmul.f32 %v4785, %v4816
        %v4823 = vmul.f32 %v4786, %v4816
        %v4824 = vmul.f32 %v4787, %v4816
        %v4825 = vmul.f32 %v4788, %v4816
        %v4826 = vmul.f32 %v4789, %v4816
        %v4827 = vmul.f32 %v4790, %v4816
        %v4828 = vmul.f32 %v4791, %v4816
        %v4829 = vmul.f32 %v4792, %v4816
        %v4830 = vmul.f32 %v4793, %v4816
        %v4831 = vmul.f32 %v4794, %v4816
        %v4832 = vmul.f32 %v4795, %v4816
        %v4833 = vmul.f32 %v4796, %v4816
        %v4834 = vmul.f32 %v4797, %v4816
        %v4835 = vmul.f32 %v4798, %v4816
        %v4836 = vmul.f32 %v4799, %v4816
        %v4837 = vmul.f32 %v4800, %v4816
        %v4838 = vmul.f32 %v4801, %v4816
        %v4839 = vmul.f32 %v4802, %v4816
        %v4840 = vmul.f32 %v4803, %v4816
        %v4841 = vmul.f32 %v4804, %v4816
        %v4842 = vmul.f32 %v4805, %v4816
        %v4843 = vmul.f32 %v4806, %v4816
        %v4844 = vmul.f32 %v4807, %v4816
        %v4845 = vmul.f32 %v4808, %v4816
        %v4846 = vmul.f32 %v4809, %v4816
        %v4847 = vmul.f32 %v4810, %v4816
        %v4848 = vmul.f32 %v4811, %v4816
        %v4849 = vadd.f32 %v4748, %v4817
        %v4850 = vadd.f32 %v4749, %v4818
        %v4851 = vadd.f32 %v4750, %v4819
        %v4852 = vadd.f32 %v4751, %v4820
        %v4853 = vadd.f32 %v4752, %v4821
        %v4854 = vadd.f32 %v4753, %v4822
        %v4855 = vadd.f32 %v4754, %v4823
        %v4856 = vadd.f32 %v4755, %v4824
        %v4857 = vadd.f32 %v4756, %v4825
        %v4858 = vadd.f32 %v4757, %v4826
        %v4859 = vadd.f32 %v4758, %v4827
        %v4860 = vadd.f32 %v4759, %v4828
        %v4861 = vadd.f32 %v4760, %v4829
        %v4862 = vadd.f32 %v4761, %v4830
        %v4863 = vadd.f32 %v4762, %v4831
        %v4864 = vadd.f32 %v4763, %v4832
        %v4865 = vadd.f32 %v4764, %v4833
        %v4866 = vadd.f32 %v4765, %v4834
        %v4867 = vadd.f32 %v4766, %v4835
        %v4868 = vadd.f32 %v4767, %v4836
        %v4869 = vadd.f32 %v4768, %v4837
        %v4870 = vadd.f32 %v4769, %v4838
        %v4871 = vadd.f32 %v4770, %v4839
        %v4872 = vadd.f32 %v4771, %v4840
        %v4873 = vadd.f32 %v4772, %v4841
        %v4874 = vadd.f32 %v4773, %v4842
        %v4875 = vadd.f32 %v4774, %v4843
        %v4876 = vadd.f32 %v4775, %v4844
        %v4877 = vadd.f32 %v4776, %v4845
        %v4878 = vadd.f32 %v4777, %v4846
        %v4879 = vadd.f32 %v4778, %v4847
        %v4880 = vadd.f32 %v4779, %v4848
        %s4881 = scalar_lea.vmem [#allocation3], 24
        %v4882 = vld [vmem:[%s4881] sm:$0xff]
        %v4883 = vld [vmem:[%s4881 + $0x8] sm:$0xff]
        %v4884 = vld [vmem:[%s4881 + $0x18] sm:$0xff]
        %v4885 = vld [vmem:[%s4881 + $0x20] sm:$0xff]
        %v4886 = vld [vmem:[%s4881 + $0x30] sm:$0xff]
        %v4887 = vld [vmem:[%s4881 + $0x38] sm:$0xff]
        %v4888 = vld [vmem:[%s4881 + $0x48] sm:$0xff]
        %v4889 = vld [vmem:[%s4881 + $0x50] sm:$0xff]
        %v4890 = vld [vmem:[%s4881 + $0x60] sm:$0xff]
        %v4891 = vld [vmem:[%s4881 + $0x68] sm:$0xff]
        %v4892 = vld [vmem:[%s4881 + $0x78] sm:$0xff]
        %v4893 = vld [vmem:[%s4881 + $0x80] sm:$0xff]
        %v4894 = vld [vmem:[%s4881 + $0x90] sm:$0xff]
        %v4895 = vld [vmem:[%s4881 + $0x98] sm:$0xff]
        %v4896 = vld [vmem:[%s4881 + $0xa8] sm:$0xff]
        %v4897 = vld [vmem:[%s4881 + $0xb0] sm:$0xff]
        %v4898 = vld [vmem:[%s4881 + $0xc0] sm:$0xff]
        %v4899 = vld [vmem:[%s4881 + $0xc8] sm:$0xff]
        %v4900 = vld [vmem:[%s4881 + $0xd8] sm:$0xff]
        %v4901 = vld [vmem:[%s4881 + $0xe0] sm:$0xff]
        %v4902 = vld [vmem:[%s4881 + $0xf0] sm:$0xff]
        %v4903 = vld [vmem:[%s4881 + $0xf8] sm:$0xff]
        %v4904 = vld [vmem:[%s4881 + $0x108] sm:$0xff]
        %v4905 = vld [vmem:[%s4881 + $0x110] sm:$0xff]
        %v4906 = vld [vmem:[%s4881 + $0x120] sm:$0xff]
        %v4907 = vld [vmem:[%s4881 + $0x128] sm:$0xff]
        %v4908 = vld [vmem:[%s4881 + $0x138] sm:$0xff]
        %v4909 = vld [vmem:[%s4881 + $0x140] sm:$0xff]
        %v4910 = vld [vmem:[%s4881 + $0x150] sm:$0xff]
        %v4911 = vld [vmem:[%s4881 + $0x158] sm:$0xff]
        %v4912 = vld [vmem:[%s4881 + $0x168] sm:$0xff]
        %v4913 = vld [vmem:[%s4881 + $0x170] sm:$0xff]
        %v4914 = vld [vmem:[%s5 + $0x5] sm:$0x1]
        %v4915 = vlaneseq
        %v4916 = vshrl.u32 %v4915, 7
        %v4917 = vsub.s32 0, %v4916
        %v4918 = vrot.slane %v4914, %v4917
        %v4919 = vmul.f32 %v4882, %v4918
        %v4920 = vmul.f32 %v4883, %v4918
        %v4921 = vmul.f32 %v4884, %v4918
        %v4922 = vmul.f32 %v4885, %v4918
        %v4923 = vmul.f32 %v4886, %v4918
        %v4924 = vmul.f32 %v4887, %v4918
        %v4925 = vmul.f32 %v4888, %v4918
        %v4926 = vmul.f32 %v4889, %v4918
        %v4927 = vmul.f32 %v4890, %v4918
        %v4928 = vmul.f32 %v4891, %v4918
        %v4929 = vmul.f32 %v4892, %v4918
        %v4930 = vmul.f32 %v4893, %v4918
        %v4931 = vmul.f32 %v4894, %v4918
        %v4932 = vmul.f32 %v4895, %v4918
        %v4933 = vmul.f32 %v4896, %v4918
        %v4934 = vmul.f32 %v4897, %v4918
        %v4935 = vmul.f32 %v4898, %v4918
        %v4936 = vmul.f32 %v4899, %v4918
        %v4937 = vmul.f32 %v4900, %v4918
        %v4938 = vmul.f32 %v4901, %v4918
        %v4939 = vmul.f32 %v4902, %v4918
        %v4940 = vmul.f32 %v4903, %v4918
        %v4941 = vmul.f32 %v4904, %v4918
        %v4942 = vmul.f32 %v4905, %v4918
        %v4943 = vmul.f32 %v4906, %v4918
        %v4944 = vmul.f32 %v4907, %v4918
        %v4945 = vmul.f32 %v4908, %v4918
        %v4946 = vmul.f32 %v4909, %v4918
        %v4947 = vmul.f32 %v4910, %v4918
        %v4948 = vmul.f32 %v4911, %v4918
        %v4949 = vmul.f32 %v4912, %v4918
        %v4950 = vmul.f32 %v4913, %v4918
        %v4951 = vadd.f32 %v4849, %v4919
        %v4952 = vadd.f32 %v4850, %v4920
        %v4953 = vadd.f32 %v4851, %v4921
        %v4954 = vadd.f32 %v4852, %v4922
        %v4955 = vadd.f32 %v4853, %v4923
        %v4956 = vadd.f32 %v4854, %v4924
        %v4957 = vadd.f32 %v4855, %v4925
        %v4958 = vadd.f32 %v4856, %v4926
        %v4959 = vadd.f32 %v4857, %v4927
        %v4960 = vadd.f32 %v4858, %v4928
        %v4961 = vadd.f32 %v4859, %v4929
        %v4962 = vadd.f32 %v4860, %v4930
        %v4963 = vadd.f32 %v4861, %v4931
        %v4964 = vadd.f32 %v4862, %v4932
        %v4965 = vadd.f32 %v4863, %v4933
        %v4966 = vadd.f32 %v4864, %v4934
        %v4967 = vadd.f32 %v4865, %v4935
        %v4968 = vadd.f32 %v4866, %v4936
        %v4969 = vadd.f32 %v4867, %v4937
        %v4970 = vadd.f32 %v4868, %v4938
        %v4971 = vadd.f32 %v4869, %v4939
        %v4972 = vadd.f32 %v4870, %v4940
        %v4973 = vadd.f32 %v4871, %v4941
        %v4974 = vadd.f32 %v4872, %v4942
        %v4975 = vadd.f32 %v4873, %v4943
        %v4976 = vadd.f32 %v4874, %v4944
        %v4977 = vadd.f32 %v4875, %v4945
        %v4978 = vadd.f32 %v4876, %v4946
        %v4979 = vadd.f32 %v4877, %v4947
        %v4980 = vadd.f32 %v4878, %v4948
        %v4981 = vadd.f32 %v4879, %v4949
        %v4982 = vadd.f32 %v4880, %v4950
        %v4983 = vld [vmem:[%s4881 + $0x1] sm:$0xff]
        %v4984 = vld [vmem:[%s4881 + $0x9] sm:$0xff]
        %v4985 = vld [vmem:[%s4881 + $0x19] sm:$0xff]
        %v4986 = vld [vmem:[%s4881 + $0x21] sm:$0xff]
        %v4987 = vld [vmem:[%s4881 + $0x31] sm:$0xff]
        %v4988 = vld [vmem:[%s4881 + $0x39] sm:$0xff]
        %v4989 = vld [vmem:[%s4881 + $0x49] sm:$0xff]
        %v4990 = vld [vmem:[%s4881 + $0x51] sm:$0xff]
        %v4991 = vld [vmem:[%s4881 + $0x61] sm:$0xff]
        %v4992 = vld [vmem:[%s4881 + $0x69] sm:$0xff]
        %v4993 = vld [vmem:[%s4881 + $0x79] sm:$0xff]
        %v4994 = vld [vmem:[%s4881 + $0x81] sm:$0xff]
        %v4995 = vld [vmem:[%s4881 + $0x91] sm:$0xff]
        %v4996 = vld [vmem:[%s4881 + $0x99] sm:$0xff]
        %v4997 = vld [vmem:[%s4881 + $0xa9] sm:$0xff]
        %v4998 = vld [vmem:[%s4881 + $0xb1] sm:$0xff]
        %v4999 = vld [vmem:[%s4881 + $0xc1] sm:$0xff]
        %v5000 = vld [vmem:[%s4881 + $0xc9] sm:$0xff]
        %v5001 = vld [vmem:[%s4881 + $0xd9] sm:$0xff]
        %v5002 = vld [vmem:[%s4881 + $0xe1] sm:$0xff]
        %v5003 = vld [vmem:[%s4881 + $0xf1] sm:$0xff]
        %v5004 = vld [vmem:[%s4881 + $0xf9] sm:$0xff]
        %v5005 = vld [vmem:[%s4881 + $0x109] sm:$0xff]
        %v5006 = vld [vmem:[%s4881 + $0x111] sm:$0xff]
        %v5007 = vld [vmem:[%s4881 + $0x121] sm:$0xff]
        %v5008 = vld [vmem:[%s4881 + $0x129] sm:$0xff]
        %v5009 = vld [vmem:[%s4881 + $0x139] sm:$0xff]
        %v5010 = vld [vmem:[%s4881 + $0x141] sm:$0xff]
        %v5011 = vld [vmem:[%s4881 + $0x151] sm:$0xff]
        %v5012 = vld [vmem:[%s4881 + $0x159] sm:$0xff]
        %v5013 = vld [vmem:[%s4881 + $0x169] sm:$0xff]
        %v5014 = vld [vmem:[%s4881 + $0x171] sm:$0xff]
        %v5015 = vld [vmem:[%s5 + $0x6] sm:$0x1]
        %v5016 = vlaneseq
        %v5017 = vshrl.u32 %v5016, 7
        %v5018 = vsub.s32 0, %v5017
        %v5019 = vrot.slane %v5015, %v5018
        %v5020 = vmul.f32 %v4983, %v5019
        %v5021 = vmul.f32 %v4984, %v5019
        %v5022 = vmul.f32 %v4985, %v5019
        %v5023 = vmul.f32 %v4986, %v5019
        %v5024 = vmul.f32 %v4987, %v5019
        %v5025 = vmul.f32 %v4988, %v5019
        %v5026 = vmul.f32 %v4989, %v5019
        %v5027 = vmul.f32 %v4990, %v5019
        %v5028 = vmul.f32 %v4991, %v5019
        %v5029 = vmul.f32 %v4992, %v5019
        %v5030 = vmul.f32 %v4993, %v5019
        %v5031 = vmul.f32 %v4994, %v5019
        %v5032 = vmul.f32 %v4995, %v5019
        %v5033 = vmul.f32 %v4996, %v5019
        %v5034 = vmul.f32 %v4997, %v5019
        %v5035 = vmul.f32 %v4998, %v5019
        %v5036 = vmul.f32 %v4999, %v5019
        %v5037 = vmul.f32 %v5000, %v5019
        %v5038 = vmul.f32 %v5001, %v5019
        %v5039 = vmul.f32 %v5002, %v5019
        %v5040 = vmul.f32 %v5003, %v5019
        %v5041 = vmul.f32 %v5004, %v5019
        %v5042 = vmul.f32 %v5005, %v5019
        %v5043 = vmul.f32 %v5006, %v5019
        %v5044 = vmul.f32 %v5007, %v5019
        %v5045 = vmul.f32 %v5008, %v5019
        %v5046 = vmul.f32 %v5009, %v5019
        %v5047 = vmul.f32 %v5010, %v5019
        %v5048 = vmul.f32 %v5011, %v5019
        %v5049 = vmul.f32 %v5012, %v5019
        %v5050 = vmul.f32 %v5013, %v5019
        %v5051 = vmul.f32 %v5014, %v5019
        %v5052 = vadd.f32 %v4951, %v5020
        %v5053 = vadd.f32 %v4952, %v5021
        %v5054 = vadd.f32 %v4953, %v5022
        %v5055 = vadd.f32 %v4954, %v5023
        %v5056 = vadd.f32 %v4955, %v5024
        %v5057 = vadd.f32 %v4956, %v5025
        %v5058 = vadd.f32 %v4957, %v5026
        %v5059 = vadd.f32 %v4958, %v5027
        %v5060 = vadd.f32 %v4959, %v5028
        %v5061 = vadd.f32 %v4960, %v5029
        %v5062 = vadd.f32 %v4961, %v5030
        %v5063 = vadd.f32 %v4962, %v5031
        %v5064 = vadd.f32 %v4963, %v5032
        %v5065 = vadd.f32 %v4964, %v5033
        %v5066 = vadd.f32 %v4965, %v5034
        %v5067 = vadd.f32 %v4966, %v5035
        %v5068 = vadd.f32 %v4967, %v5036
        %v5069 = vadd.f32 %v4968, %v5037
        %v5070 = vadd.f32 %v4969, %v5038
        %v5071 = vadd.f32 %v4970, %v5039
        %v5072 = vadd.f32 %v4971, %v5040
        %v5073 = vadd.f32 %v4972, %v5041
        %v5074 = vadd.f32 %v4973, %v5042
        %v5075 = vadd.f32 %v4974, %v5043
        %v5076 = vadd.f32 %v4975, %v5044
        %v5077 = vadd.f32 %v4976, %v5045
        %v5078 = vadd.f32 %v4977, %v5046
        %v5079 = vadd.f32 %v4978, %v5047
        %v5080 = vadd.f32 %v4979, %v5048
        %v5081 = vadd.f32 %v4980, %v5049
        %v5082 = vadd.f32 %v4981, %v5050
        %v5083 = vadd.f32 %v4982, %v5051
        %v5084 = vld [vmem:[%s4881 + $0x2] sm:$0xff]
        %v5085 = vld [vmem:[%s4881 + $0xa] sm:$0xff]
        %v5086 = vld [vmem:[%s4881 + $0x1a] sm:$0xff]
        %v5087 = vld [vmem:[%s4881 + $0x22] sm:$0xff]
        %v5088 = vld [vmem:[%s4881 + $0x32] sm:$0xff]
        %v5089 = vld [vmem:[%s4881 + $0x3a] sm:$0xff]
        %v5090 = vld [vmem:[%s4881 + $0x4a] sm:$0xff]
        %v5091 = vld [vmem:[%s4881 + $0x52] sm:$0xff]
        %v5092 = vld [vmem:[%s4881 + $0x62] sm:$0xff]
        %v5093 = vld [vmem:[%s4881 + $0x6a] sm:$0xff]
        %v5094 = vld [vmem:[%s4881 + $0x7a] sm:$0xff]
        %v5095 = vld [vmem:[%s4881 + $0x82] sm:$0xff]
        %v5096 = vld [vmem:[%s4881 + $0x92] sm:$0xff]
        %v5097 = vld [vmem:[%s4881 + $0x9a] sm:$0xff]
        %v5098 = vld [vmem:[%s4881 + $0xaa] sm:$0xff]
        %v5099 = vld [vmem:[%s4881 + $0xb2] sm:$0xff]
        %v5100 = vld [vmem:[%s4881 + $0xc2] sm:$0xff]
        %v5101 = vld [vmem:[%s4881 + $0xca] sm:$0xff]
        %v5102 = vld [vmem:[%s4881 + $0xda] sm:$0xff]
        %v5103 = vld [vmem:[%s4881 + $0xe2] sm:$0xff]
        %v5104 = vld [vmem:[%s4881 + $0xf2] sm:$0xff]
        %v5105 = vld [vmem:[%s4881 + $0xfa] sm:$0xff]
        %v5106 = vld [vmem:[%s4881 + $0x10a] sm:$0xff]
        %v5107 = vld [vmem:[%s4881 + $0x112] sm:$0xff]
        %v5108 = vld [vmem:[%s4881 + $0x122] sm:$0xff]
        %v5109 = vld [vmem:[%s4881 + $0x12a] sm:$0xff]
        %v5110 = vld [vmem:[%s4881 + $0x13a] sm:$0xff]
        %v5111 = vld [vmem:[%s4881 + $0x142] sm:$0xff]
        %v5112 = vld [vmem:[%s4881 + $0x152] sm:$0xff]
        %v5113 = vld [vmem:[%s4881 + $0x15a] sm:$0xff]
        %v5114 = vld [vmem:[%s4881 + $0x16a] sm:$0xff]
        %v5115 = vld [vmem:[%s4881 + $0x172] sm:$0xff]
        %v5116 = vld [vmem:[%s5 + $0x7] sm:$0x1]
        %v5117 = vlaneseq
        %v5118 = vshrl.u32 %v5117, 7
        %v5119 = vsub.s32 0, %v5118
        %v5120 = vrot.slane %v5116, %v5119
        %v5121 = vmul.f32 %v5084, %v5120
        %v5122 = vmul.f32 %v5085, %v5120
        %v5123 = vmul.f32 %v5086, %v5120
        %v5124 = vmul.f32 %v5087, %v5120
        %v5125 = vmul.f32 %v5088, %v5120
        %v5126 = vmul.f32 %v5089, %v5120
        %v5127 = vmul.f32 %v5090, %v5120
        %v5128 = vmul.f32 %v5091, %v5120
        %v5129 = vmul.f32 %v5092, %v5120
        %v5130 = vmul.f32 %v5093, %v5120
        %v5131 = vmul.f32 %v5094, %v5120
        %v5132 = vmul.f32 %v5095, %v5120
        %v5133 = vmul.f32 %v5096, %v5120
        %v5134 = vmul.f32 %v5097, %v5120
        %v5135 = vmul.f32 %v5098, %v5120
        %v5136 = vmul.f32 %v5099, %v5120
        %v5137 = vmul.f32 %v5100, %v5120
        %v5138 = vmul.f32 %v5101, %v5120
        %v5139 = vmul.f32 %v5102, %v5120
        %v5140 = vmul.f32 %v5103, %v5120
        %v5141 = vmul.f32 %v5104, %v5120
        %v5142 = vmul.f32 %v5105, %v5120
        %v5143 = vmul.f32 %v5106, %v5120
        %v5144 = vmul.f32 %v5107, %v5120
        %v5145 = vmul.f32 %v5108, %v5120
        %v5146 = vmul.f32 %v5109, %v5120
        %v5147 = vmul.f32 %v5110, %v5120
        %v5148 = vmul.f32 %v5111, %v5120
        %v5149 = vmul.f32 %v5112, %v5120
        %v5150 = vmul.f32 %v5113, %v5120
        %v5151 = vmul.f32 %v5114, %v5120
        %v5152 = vmul.f32 %v5115, %v5120
        %v5153 = vadd.f32 %v5052, %v5121
        %v5154 = vadd.f32 %v5053, %v5122
        %v5155 = vadd.f32 %v5054, %v5123
        %v5156 = vadd.f32 %v5055, %v5124
        %v5157 = vadd.f32 %v5056, %v5125
        %v5158 = vadd.f32 %v5057, %v5126
        %v5159 = vadd.f32 %v5058, %v5127
        %v5160 = vadd.f32 %v5059, %v5128
        %v5161 = vadd.f32 %v5060, %v5129
        %v5162 = vadd.f32 %v5061, %v5130
        %v5163 = vadd.f32 %v5062, %v5131
        %v5164 = vadd.f32 %v5063, %v5132
        %v5165 = vadd.f32 %v5064, %v5133
        %v5166 = vadd.f32 %v5065, %v5134
        %v5167 = vadd.f32 %v5066, %v5135
        %v5168 = vadd.f32 %v5067, %v5136
        %v5169 = vadd.f32 %v5068, %v5137
        %v5170 = vadd.f32 %v5069, %v5138
        %v5171 = vadd.f32 %v5070, %v5139
        %v5172 = vadd.f32 %v5071, %v5140
        %v5173 = vadd.f32 %v5072, %v5141
        %v5174 = vadd.f32 %v5073, %v5142
        %v5175 = vadd.f32 %v5074, %v5143
        %v5176 = vadd.f32 %v5075, %v5144
        %v5177 = vadd.f32 %v5076, %v5145
        %v5178 = vadd.f32 %v5077, %v5146
        %v5179 = vadd.f32 %v5078, %v5147
        %v5180 = vadd.f32 %v5079, %v5148
        %v5181 = vadd.f32 %v5080, %v5149
        %v5182 = vadd.f32 %v5081, %v5150
        %v5183 = vadd.f32 %v5082, %v5151
        %v5184 = vadd.f32 %v5083, %v5152
        %v5185 = vld [vmem:[%s4881 + $0x3] sm:$0xff]
        %v5186 = vld [vmem:[%s4881 + $0xb] sm:$0xff]
        %v5187 = vld [vmem:[%s4881 + $0x1b] sm:$0xff]
        %v5188 = vld [vmem:[%s4881 + $0x23] sm:$0xff]
        %v5189 = vld [vmem:[%s4881 + $0x33] sm:$0xff]
        %v5190 = vld [vmem:[%s4881 + $0x3b] sm:$0xff]
        %v5191 = vld [vmem:[%s4881 + $0x4b] sm:$0xff]
        %v5192 = vld [vmem:[%s4881 + $0x53] sm:$0xff]
        %v5193 = vld [vmem:[%s4881 + $0x63] sm:$0xff]
        %v5194 = vld [vmem:[%s4881 + $0x6b] sm:$0xff]
        %v5195 = vld [vmem:[%s4881 + $0x7b] sm:$0xff]
        %v5196 = vld [vmem:[%s4881 + $0x83] sm:$0xff]
        %v5197 = vld [vmem:[%s4881 + $0x93] sm:$0xff]
        %v5198 = vld [vmem:[%s4881 + $0x9b] sm:$0xff]
        %v5199 = vld [vmem:[%s4881 + $0xab] sm:$0xff]
        %v5200 = vld [vmem:[%s4881 + $0xb3] sm:$0xff]
        %v5201 = vld [vmem:[%s4881 + $0xc3] sm:$0xff]
        %v5202 = vld [vmem:[%s4881 + $0xcb] sm:$0xff]
        %v5203 = vld [vmem:[%s4881 + $0xdb] sm:$0xff]
        %v5204 = vld [vmem:[%s4881 + $0xe3] sm:$0xff]
        %v5205 = vld [vmem:[%s4881 + $0xf3] sm:$0xff]
        %v5206 = vld [vmem:[%s4881 + $0xfb] sm:$0xff]
        %v5207 = vld [vmem:[%s4881 + $0x10b] sm:$0xff]
        %v5208 = vld [vmem:[%s4881 + $0x113] sm:$0xff]
        %v5209 = vld [vmem:[%s4881 + $0x123] sm:$0xff]
        %v5210 = vld [vmem:[%s4881 + $0x12b] sm:$0xff]
        %v5211 = vld [vmem:[%s4881 + $0x13b] sm:$0xff]
        %v5212 = vld [vmem:[%s4881 + $0x143] sm:$0xff]
        %v5213 = vld [vmem:[%s4881 + $0x153] sm:$0xff]
        %v5214 = vld [vmem:[%s4881 + $0x15b] sm:$0xff]
        %v5215 = vld [vmem:[%s4881 + $0x16b] sm:$0xff]
        %v5216 = vld [vmem:[%s4881 + $0x173] sm:$0xff]
        %v5217 = vld [vmem:[%s5 + $0x8] sm:$0x1]
        %v5218 = vlaneseq
        %v5219 = vshrl.u32 %v5218, 7
        %v5220 = vsub.s32 0, %v5219
        %v5221 = vrot.slane %v5217, %v5220
        %v5222 = vmul.f32 %v5185, %v5221
        %v5223 = vmul.f32 %v5186, %v5221
        %v5224 = vmul.f32 %v5187, %v5221
        %v5225 = vmul.f32 %v5188, %v5221
        %v5226 = vmul.f32 %v5189, %v5221
        %v5227 = vmul.f32 %v5190, %v5221
        %v5228 = vmul.f32 %v5191, %v5221
        %v5229 = vmul.f32 %v5192, %v5221
        %v5230 = vmul.f32 %v5193, %v5221
        %v5231 = vmul.f32 %v5194, %v5221
        %v5232 = vmul.f32 %v5195, %v5221
        %v5233 = vmul.f32 %v5196, %v5221
        %v5234 = vmul.f32 %v5197, %v5221
        %v5235 = vmul.f32 %v5198, %v5221
        %v5236 = vmul.f32 %v5199, %v5221
        %v5237 = vmul.f32 %v5200, %v5221
        %v5238 = vmul.f32 %v5201, %v5221
        %v5239 = vmul.f32 %v5202, %v5221
        %v5240 = vmul.f32 %v5203, %v5221
        %v5241 = vmul.f32 %v5204, %v5221
        %v5242 = vmul.f32 %v5205, %v5221
        %v5243 = vmul.f32 %v5206, %v5221
        %v5244 = vmul.f32 %v5207, %v5221
        %v5245 = vmul.f32 %v5208, %v5221
        %v5246 = vmul.f32 %v5209, %v5221
        %v5247 = vmul.f32 %v5210, %v5221
        %v5248 = vmul.f32 %v5211, %v5221
        %v5249 = vmul.f32 %v5212, %v5221
        %v5250 = vmul.f32 %v5213, %v5221
        %v5251 = vmul.f32 %v5214, %v5221
        %v5252 = vmul.f32 %v5215, %v5221
        %v5253 = vmul.f32 %v5216, %v5221
        %v5254 = vadd.f32 %v5153, %v5222
        %v5255 = vadd.f32 %v5154, %v5223
        %v5256 = vadd.f32 %v5155, %v5224
        %v5257 = vadd.f32 %v5156, %v5225
        %v5258 = vadd.f32 %v5157, %v5226
        %v5259 = vadd.f32 %v5158, %v5227
        %v5260 = vadd.f32 %v5159, %v5228
        %v5261 = vadd.f32 %v5160, %v5229
        %v5262 = vadd.f32 %v5161, %v5230
        %v5263 = vadd.f32 %v5162, %v5231
        %v5264 = vadd.f32 %v5163, %v5232
        %v5265 = vadd.f32 %v5164, %v5233
        %v5266 = vadd.f32 %v5165, %v5234
        %v5267 = vadd.f32 %v5166, %v5235
        %v5268 = vadd.f32 %v5167, %v5236
        %v5269 = vadd.f32 %v5168, %v5237
        %v5270 = vadd.f32 %v5169, %v5238
        %v5271 = vadd.f32 %v5170, %v5239
        %v5272 = vadd.f32 %v5171, %v5240
        %v5273 = vadd.f32 %v5172, %v5241
        %v5274 = vadd.f32 %v5173, %v5242
        %v5275 = vadd.f32 %v5174, %v5243
        %v5276 = vadd.f32 %v5175, %v5244
        %v5277 = vadd.f32 %v5176, %v5245
        %v5278 = vadd.f32 %v5177, %v5246
        %v5279 = vadd.f32 %v5178, %v5247
        %v5280 = vadd.f32 %v5179, %v5248
        %v5281 = vadd.f32 %v5180, %v5249
        %v5282 = vadd.f32 %v5181, %v5250
        %v5283 = vadd.f32 %v5182, %v5251
        %v5284 = vadd.f32 %v5183, %v5252
        %v5285 = vadd.f32 %v5184, %v5253
        %v5286 = vld [vmem:[%s4881 + $0x4] sm:$0xff]
        %v5287 = vld [vmem:[%s4881 + $0xc] sm:$0xff]
        %v5288 = vld [vmem:[%s4881 + $0x1c] sm:$0xff]
        %v5289 = vld [vmem:[%s4881 + $0x24] sm:$0xff]
        %v5290 = vld [vmem:[%s4881 + $0x34] sm:$0xff]
        %v5291 = vld [vmem:[%s4881 + $0x3c] sm:$0xff]
        %v5292 = vld [vmem:[%s4881 + $0x4c] sm:$0xff]
        %v5293 = vld [vmem:[%s4881 + $0x54] sm:$0xff]
        %v5294 = vld [vmem:[%s4881 + $0x64] sm:$0xff]
        %v5295 = vld [vmem:[%s4881 + $0x6c] sm:$0xff]
        %v5296 = vld [vmem:[%s4881 + $0x7c] sm:$0xff]
        %v5297 = vld [vmem:[%s4881 + $0x84] sm:$0xff]
        %v5298 = vld [vmem:[%s4881 + $0x94] sm:$0xff]
        %v5299 = vld [vmem:[%s4881 + $0x9c] sm:$0xff]
        %v5300 = vld [vmem:[%s4881 + $0xac] sm:$0xff]
        %v5301 = vld [vmem:[%s4881 + $0xb4] sm:$0xff]
        %v5302 = vld [vmem:[%s4881 + $0xc4] sm:$0xff]
        %v5303 = vld [vmem:[%s4881 + $0xcc] sm:$0xff]
        %v5304 = vld [vmem:[%s4881 + $0xdc] sm:$0xff]
        %v5305 = vld [vmem:[%s4881 + $0xe4] sm:$0xff]
        %v5306 = vld [vmem:[%s4881 + $0xf4] sm:$0xff]
        %v5307 = vld [vmem:[%s4881 + $0xfc] sm:$0xff]
        %v5308 = vld [vmem:[%s4881 + $0x10c] sm:$0xff]
        %v5309 = vld [vmem:[%s4881 + $0x114] sm:$0xff]
        %v5310 = vld [vmem:[%s4881 + $0x124] sm:$0xff]
        %v5311 = vld [vmem:[%s4881 + $0x12c] sm:$0xff]
        %v5312 = vld [vmem:[%s4881 + $0x13c] sm:$0xff]
        %v5313 = vld [vmem:[%s4881 + $0x144] sm:$0xff]
        %v5314 = vld [vmem:[%s4881 + $0x154] sm:$0xff]
        %v5315 = vld [vmem:[%s4881 + $0x15c] sm:$0xff]
        %v5316 = vld [vmem:[%s4881 + $0x16c] sm:$0xff]
        %v5317 = vld [vmem:[%s4881 + $0x174] sm:$0xff]
        %v5318 = vld [vmem:[%s5 + $0x9] sm:$0x1]
        %v5319 = vlaneseq
        %v5320 = vshrl.u32 %v5319, 7
        %v5321 = vsub.s32 0, %v5320
        %v5322 = vrot.slane %v5318, %v5321
        %v5323 = vmul.f32 %v5286, %v5322
        %v5324 = vmul.f32 %v5287, %v5322
        %v5325 = vmul.f32 %v5288, %v5322
        %v5326 = vmul.f32 %v5289, %v5322
        %v5327 = vmul.f32 %v5290, %v5322
        %v5328 = vmul.f32 %v5291, %v5322
        %v5329 = vmul.f32 %v5292, %v5322
        %v5330 = vmul.f32 %v5293, %v5322
        %v5331 = vmul.f32 %v5294, %v5322
        %v5332 = vmul.f32 %v5295, %v5322
        %v5333 = vmul.f32 %v5296, %v5322
        %v5334 = vmul.f32 %v5297, %v5322
        %v5335 = vmul.f32 %v5298, %v5322
        %v5336 = vmul.f32 %v5299, %v5322
        %v5337 = vmul.f32 %v5300, %v5322
        %v5338 = vmul.f32 %v5301, %v5322
        %v5339 = vmul.f32 %v5302, %v5322
        %v5340 = vmul.f32 %v5303, %v5322
        %v5341 = vmul.f32 %v5304, %v5322
        %v5342 = vmul.f32 %v5305, %v5322
        %v5343 = vmul.f32 %v5306, %v5322
        %v5344 = vmul.f32 %v5307, %v5322
        %v5345 = vmul.f32 %v5308, %v5322
        %v5346 = vmul.f32 %v5309, %v5322
        %v5347 = vmul.f32 %v5310, %v5322
        %v5348 = vmul.f32 %v5311, %v5322
        %v5349 = vmul.f32 %v5312, %v5322
        %v5350 = vmul.f32 %v5313, %v5322
        %v5351 = vmul.f32 %v5314, %v5322
        %v5352 = vmul.f32 %v5315, %v5322
        %v5353 = vmul.f32 %v5316, %v5322
        %v5354 = vmul.f32 %v5317, %v5322
        %v5355 = vadd.f32 %v5254, %v5323
        %v5356 = vadd.f32 %v5255, %v5324
        %v5357 = vadd.f32 %v5256, %v5325
        %v5358 = vadd.f32 %v5257, %v5326
        %v5359 = vadd.f32 %v5258, %v5327
        %v5360 = vadd.f32 %v5259, %v5328
        %v5361 = vadd.f32 %v5260, %v5329
        %v5362 = vadd.f32 %v5261, %v5330
        %v5363 = vadd.f32 %v5262, %v5331
        %v5364 = vadd.f32 %v5263, %v5332
        %v5365 = vadd.f32 %v5264, %v5333
        %v5366 = vadd.f32 %v5265, %v5334
        %v5367 = vadd.f32 %v5266, %v5335
        %v5368 = vadd.f32 %v5267, %v5336
        %v5369 = vadd.f32 %v5268, %v5337
        %v5370 = vadd.f32 %v5269, %v5338
        %v5371 = vadd.f32 %v5270, %v5339
        %v5372 = vadd.f32 %v5271, %v5340
        %v5373 = vadd.f32 %v5272, %v5341
        %v5374 = vadd.f32 %v5273, %v5342
        %v5375 = vadd.f32 %v5274, %v5343
        %v5376 = vadd.f32 %v5275, %v5344
        %v5377 = vadd.f32 %v5276, %v5345
        %v5378 = vadd.f32 %v5277, %v5346
        %v5379 = vadd.f32 %v5278, %v5347
        %v5380 = vadd.f32 %v5279, %v5348
        %v5381 = vadd.f32 %v5280, %v5349
        %v5382 = vadd.f32 %v5281, %v5350
        %v5383 = vadd.f32 %v5282, %v5351
        %v5384 = vadd.f32 %v5283, %v5352
        %v5385 = vadd.f32 %v5284, %v5353
        %v5386 = vadd.f32 %v5285, %v5354
        %v5387 = vld [vmem:[%s4375] sm:$0xff]
        %v5388 = vld [vmem:[%s4375 + $0x8] sm:$0xff]
        %v5389 = vld [vmem:[%s4375 + $0x18] sm:$0xff]
        %v5390 = vld [vmem:[%s4375 + $0x20] sm:$0xff]
        %v5391 = vld [vmem:[%s4375 + $0x30] sm:$0xff]
        %v5392 = vld [vmem:[%s4375 + $0x38] sm:$0xff]
        %v5393 = vld [vmem:[%s4375 + $0x48] sm:$0xff]
        %v5394 = vld [vmem:[%s4375 + $0x50] sm:$0xff]
        %v5395 = vld [vmem:[%s4375 + $0x60] sm:$0xff]
        %v5396 = vld [vmem:[%s4375 + $0x68] sm:$0xff]
        %v5397 = vld [vmem:[%s4375 + $0x78] sm:$0xff]
        %v5398 = vld [vmem:[%s4375 + $0x80] sm:$0xff]
        %v5399 = vld [vmem:[%s4375 + $0x90] sm:$0xff]
        %v5400 = vld [vmem:[%s4375 + $0x98] sm:$0xff]
        %v5401 = vld [vmem:[%s4375 + $0xa8] sm:$0xff]
        %v5402 = vld [vmem:[%s4375 + $0xb0] sm:$0xff]
        %v5403 = vld [vmem:[%s4375 + $0xc0] sm:$0xff]
        %v5404 = vld [vmem:[%s4375 + $0xc8] sm:$0xff]
        %v5405 = vld [vmem:[%s4375 + $0xd8] sm:$0xff]
        %v5406 = vld [vmem:[%s4375 + $0xe0] sm:$0xff]
        %v5407 = vld [vmem:[%s4375 + $0xf0] sm:$0xff]
        %v5408 = vld [vmem:[%s4375 + $0xf8] sm:$0xff]
        %v5409 = vld [vmem:[%s4375 + $0x108] sm:$0xff]
        %v5410 = vld [vmem:[%s4375 + $0x110] sm:$0xff]
        %v5411 = vld [vmem:[%s4375 + $0x120] sm:$0xff]
        %v5412 = vld [vmem:[%s4375 + $0x128] sm:$0xff]
        %v5413 = vld [vmem:[%s4375 + $0x138] sm:$0xff]
        %v5414 = vld [vmem:[%s4375 + $0x140] sm:$0xff]
        %v5415 = vld [vmem:[%s4375 + $0x150] sm:$0xff]
        %v5416 = vld [vmem:[%s4375 + $0x158] sm:$0xff]
        %v5417 = vld [vmem:[%s4375 + $0x168] sm:$0xff]
        %v5418 = vld [vmem:[%s4375 + $0x170] sm:$0xff]
        %v5419 = vld [vmem:[%s5 + $0xa] sm:$0x1]
        %v5420 = vlaneseq
        %v5421 = vshrl.u32 %v5420, 7
        %v5422 = vsub.s32 0, %v5421
        %v5423 = vrot.slane %v5419, %v5422
        %v5424 = vmul.f32 %v5387, %v5423
        %v5425 = vmul.f32 %v5388, %v5423
        %v5426 = vmul.f32 %v5389, %v5423
        %v5427 = vmul.f32 %v5390, %v5423
        %v5428 = vmul.f32 %v5391, %v5423
        %v5429 = vmul.f32 %v5392, %v5423
        %v5430 = vmul.f32 %v5393, %v5423
        %v5431 = vmul.f32 %v5394, %v5423
        %v5432 = vmul.f32 %v5395, %v5423
        %v5433 = vmul.f32 %v5396, %v5423
        %v5434 = vmul.f32 %v5397, %v5423
        %v5435 = vmul.f32 %v5398, %v5423
        %v5436 = vmul.f32 %v5399, %v5423
        %v5437 = vmul.f32 %v5400, %v5423
        %v5438 = vmul.f32 %v5401, %v5423
        %v5439 = vmul.f32 %v5402, %v5423
        %v5440 = vmul.f32 %v5403, %v5423
        %v5441 = vmul.f32 %v5404, %v5423
        %v5442 = vmul.f32 %v5405, %v5423
        %v5443 = vmul.f32 %v5406, %v5423
        %v5444 = vmul.f32 %v5407, %v5423
        %v5445 = vmul.f32 %v5408, %v5423
        %v5446 = vmul.f32 %v5409, %v5423
        %v5447 = vmul.f32 %v5410, %v5423
        %v5448 = vmul.f32 %v5411, %v5423
        %v5449 = vmul.f32 %v5412, %v5423
        %v5450 = vmul.f32 %v5413, %v5423
        %v5451 = vmul.f32 %v5414, %v5423
        %v5452 = vmul.f32 %v5415, %v5423
        %v5453 = vmul.f32 %v5416, %v5423
        %v5454 = vmul.f32 %v5417, %v5423
        %v5455 = vmul.f32 %v5418, %v5423
        %v5456 = vadd.f32 %v5355, %v5424
        %v5457 = vadd.f32 %v5356, %v5425
        %v5458 = vadd.f32 %v5357, %v5426
        %v5459 = vadd.f32 %v5358, %v5427
        %v5460 = vadd.f32 %v5359, %v5428
        %v5461 = vadd.f32 %v5360, %v5429
        %v5462 = vadd.f32 %v5361, %v5430
        %v5463 = vadd.f32 %v5362, %v5431
        %v5464 = vadd.f32 %v5363, %v5432
        %v5465 = vadd.f32 %v5364, %v5433
        %v5466 = vadd.f32 %v5365, %v5434
        %v5467 = vadd.f32 %v5366, %v5435
        %v5468 = vadd.f32 %v5367, %v5436
        %v5469 = vadd.f32 %v5368, %v5437
        %v5470 = vadd.f32 %v5369, %v5438
        %v5471 = vadd.f32 %v5370, %v5439
        %v5472 = vadd.f32 %v5371, %v5440
        %v5473 = vadd.f32 %v5372, %v5441
        %v5474 = vadd.f32 %v5373, %v5442
        %v5475 = vadd.f32 %v5374, %v5443
        %v5476 = vadd.f32 %v5375, %v5444
        %v5477 = vadd.f32 %v5376, %v5445
        %v5478 = vadd.f32 %v5377, %v5446
        %v5479 = vadd.f32 %v5378, %v5447
        %v5480 = vadd.f32 %v5379, %v5448
        %v5481 = vadd.f32 %v5380, %v5449
        %v5482 = vadd.f32 %v5381, %v5450
        %v5483 = vadd.f32 %v5382, %v5451
        %v5484 = vadd.f32 %v5383, %v5452
        %v5485 = vadd.f32 %v5384, %v5453
        %v5486 = vadd.f32 %v5385, %v5454
        %v5487 = vadd.f32 %v5386, %v5455
        %v5488 = vld [vmem:[%s4375 + $0x1] sm:$0xff]
        %v5489 = vld [vmem:[%s4375 + $0x9] sm:$0xff]
        %v5490 = vld [vmem:[%s4375 + $0x19] sm:$0xff]
        %v5491 = vld [vmem:[%s4375 + $0x21] sm:$0xff]
        %v5492 = vld [vmem:[%s4375 + $0x31] sm:$0xff]
        %v5493 = vld [vmem:[%s4375 + $0x39] sm:$0xff]
        %v5494 = vld [vmem:[%s4375 + $0x49] sm:$0xff]
        %v5495 = vld [vmem:[%s4375 + $0x51] sm:$0xff]
        %v5496 = vld [vmem:[%s4375 + $0x61] sm:$0xff]
        %v5497 = vld [vmem:[%s4375 + $0x69] sm:$0xff]
        %v5498 = vld [vmem:[%s4375 + $0x79] sm:$0xff]
        %v5499 = vld [vmem:[%s4375 + $0x81] sm:$0xff]
        %v5500 = vld [vmem:[%s4375 + $0x91] sm:$0xff]
        %v5501 = vld [vmem:[%s4375 + $0x99] sm:$0xff]
        %v5502 = vld [vmem:[%s4375 + $0xa9] sm:$0xff]
        %v5503 = vld [vmem:[%s4375 + $0xb1] sm:$0xff]
        %v5504 = vld [vmem:[%s4375 + $0xc1] sm:$0xff]
        %v5505 = vld [vmem:[%s4375 + $0xc9] sm:$0xff]
        %v5506 = vld [vmem:[%s4375 + $0xd9] sm:$0xff]
        %v5507 = vld [vmem:[%s4375 + $0xe1] sm:$0xff]
        %v5508 = vld [vmem:[%s4375 + $0xf1] sm:$0xff]
        %v5509 = vld [vmem:[%s4375 + $0xf9] sm:$0xff]
        %v5510 = vld [vmem:[%s4375 + $0x109] sm:$0xff]
        %v5511 = vld [vmem:[%s4375 + $0x111] sm:$0xff]
        %v5512 = vld [vmem:[%s4375 + $0x121] sm:$0xff]
        %v5513 = vld [vmem:[%s4375 + $0x129] sm:$0xff]
        %v5514 = vld [vmem:[%s4375 + $0x139] sm:$0xff]
        %v5515 = vld [vmem:[%s4375 + $0x141] sm:$0xff]
        %v5516 = vld [vmem:[%s4375 + $0x151] sm:$0xff]
        %v5517 = vld [vmem:[%s4375 + $0x159] sm:$0xff]
        %v5518 = vld [vmem:[%s4375 + $0x169] sm:$0xff]
        %v5519 = vld [vmem:[%s4375 + $0x171] sm:$0xff]
        %v5520 = vld [vmem:[%s5 + $0xb] sm:$0x1]
        %v5521 = vlaneseq
        %v5522 = vshrl.u32 %v5521, 7
        %v5523 = vsub.s32 0, %v5522
        %v5524 = vrot.slane %v5520, %v5523
        %v5525 = vmul.f32 %v5488, %v5524
        %v5526 = vmul.f32 %v5489, %v5524
        %v5527 = vmul.f32 %v5490, %v5524
        %v5528 = vmul.f32 %v5491, %v5524
        %v5529 = vmul.f32 %v5492, %v5524
        %v5530 = vmul.f32 %v5493, %v5524
        %v5531 = vmul.f32 %v5494, %v5524
        %v5532 = vmul.f32 %v5495, %v5524
        %v5533 = vmul.f32 %v5496, %v5524
        %v5534 = vmul.f32 %v5497, %v5524
        %v5535 = vmul.f32 %v5498, %v5524
        %v5536 = vmul.f32 %v5499, %v5524
        %v5537 = vmul.f32 %v5500, %v5524
        %v5538 = vmul.f32 %v5501, %v5524
        %v5539 = vmul.f32 %v5502, %v5524
        %v5540 = vmul.f32 %v5503, %v5524
        %v5541 = vmul.f32 %v5504, %v5524
        %v5542 = vmul.f32 %v5505, %v5524
        %v5543 = vmul.f32 %v5506, %v5524
        %v5544 = vmul.f32 %v5507, %v5524
        %v5545 = vmul.f32 %v5508, %v5524
        %v5546 = vmul.f32 %v5509, %v5524
        %v5547 = vmul.f32 %v5510, %v5524
        %v5548 = vmul.f32 %v5511, %v5524
        %v5549 = vmul.f32 %v5512, %v5524
        %v5550 = vmul.f32 %v5513, %v5524
        %v5551 = vmul.f32 %v5514, %v5524
        %v5552 = vmul.f32 %v5515, %v5524
        %v5553 = vmul.f32 %v5516, %v5524
        %v5554 = vmul.f32 %v5517, %v5524
        %v5555 = vmul.f32 %v5518, %v5524
        %v5556 = vmul.f32 %v5519, %v5524
        %v5557 = vadd.f32 %v5456, %v5525
        %v5558 = vadd.f32 %v5457, %v5526
        %v5559 = vadd.f32 %v5458, %v5527
        %v5560 = vadd.f32 %v5459, %v5528
        %v5561 = vadd.f32 %v5460, %v5529
        %v5562 = vadd.f32 %v5461, %v5530
        %v5563 = vadd.f32 %v5462, %v5531
        %v5564 = vadd.f32 %v5463, %v5532
        %v5565 = vadd.f32 %v5464, %v5533
        %v5566 = vadd.f32 %v5465, %v5534
        %v5567 = vadd.f32 %v5466, %v5535
        %v5568 = vadd.f32 %v5467, %v5536
        %v5569 = vadd.f32 %v5468, %v5537
        %v5570 = vadd.f32 %v5469, %v5538
        %v5571 = vadd.f32 %v5470, %v5539
        %v5572 = vadd.f32 %v5471, %v5540
        %v5573 = vadd.f32 %v5472, %v5541
        %v5574 = vadd.f32 %v5473, %v5542
        %v5575 = vadd.f32 %v5474, %v5543
        %v5576 = vadd.f32 %v5475, %v5544
        %v5577 = vadd.f32 %v5476, %v5545
        %v5578 = vadd.f32 %v5477, %v5546
        %v5579 = vadd.f32 %v5478, %v5547
        %v5580 = vadd.f32 %v5479, %v5548
        %v5581 = vadd.f32 %v5480, %v5549
        %v5582 = vadd.f32 %v5481, %v5550
        %v5583 = vadd.f32 %v5482, %v5551
        %v5584 = vadd.f32 %v5483, %v5552
        %v5585 = vadd.f32 %v5484, %v5553
        %v5586 = vadd.f32 %v5485, %v5554
        %v5587 = vadd.f32 %v5486, %v5555
        %v5588 = vadd.f32 %v5487, %v5556
        %v5589 = vld [vmem:[%s4375 + $0x2] sm:$0xff]
        %v5590 = vld [vmem:[%s4375 + $0xa] sm:$0xff]
        %v5591 = vld [vmem:[%s4375 + $0x1a] sm:$0xff]
        %v5592 = vld [vmem:[%s4375 + $0x22] sm:$0xff]
        %v5593 = vld [vmem:[%s4375 + $0x32] sm:$0xff]
        %v5594 = vld [vmem:[%s4375 + $0x3a] sm:$0xff]
        %v5595 = vld [vmem:[%s4375 + $0x4a] sm:$0xff]
        %v5596 = vld [vmem:[%s4375 + $0x52] sm:$0xff]
        %v5597 = vld [vmem:[%s4375 + $0x62] sm:$0xff]
        %v5598 = vld [vmem:[%s4375 + $0x6a] sm:$0xff]
        %v5599 = vld [vmem:[%s4375 + $0x7a] sm:$0xff]
        %v5600 = vld [vmem:[%s4375 + $0x82] sm:$0xff]
        %v5601 = vld [vmem:[%s4375 + $0x92] sm:$0xff]
        %v5602 = vld [vmem:[%s4375 + $0x9a] sm:$0xff]
        %v5603 = vld [vmem:[%s4375 + $0xaa] sm:$0xff]
        %v5604 = vld [vmem:[%s4375 + $0xb2] sm:$0xff]
        %v5605 = vld [vmem:[%s4375 + $0xc2] sm:$0xff]
        %v5606 = vld [vmem:[%s4375 + $0xca] sm:$0xff]
        %v5607 = vld [vmem:[%s4375 + $0xda] sm:$0xff]
        %v5608 = vld [vmem:[%s4375 + $0xe2] sm:$0xff]
        %v5609 = vld [vmem:[%s4375 + $0xf2] sm:$0xff]
        %v5610 = vld [vmem:[%s4375 + $0xfa] sm:$0xff]
        %v5611 = vld [vmem:[%s4375 + $0x10a] sm:$0xff]
        %v5612 = vld [vmem:[%s4375 + $0x112] sm:$0xff]
        %v5613 = vld [vmem:[%s4375 + $0x122] sm:$0xff]
        %v5614 = vld [vmem:[%s4375 + $0x12a] sm:$0xff]
        %v5615 = vld [vmem:[%s4375 + $0x13a] sm:$0xff]
        %v5616 = vld [vmem:[%s4375 + $0x142] sm:$0xff]
        %v5617 = vld [vmem:[%s4375 + $0x152] sm:$0xff]
        %v5618 = vld [vmem:[%s4375 + $0x15a] sm:$0xff]
        %v5619 = vld [vmem:[%s4375 + $0x16a] sm:$0xff]
        %v5620 = vld [vmem:[%s4375 + $0x172] sm:$0xff]
        %v5621 = vld [vmem:[%s5 + $0xc] sm:$0x1]
        %v5622 = vlaneseq
        %v5623 = vshrl.u32 %v5622, 7
        %v5624 = vsub.s32 0, %v5623
        %v5625 = vrot.slane %v5621, %v5624
        %v5626 = vmul.f32 %v5589, %v5625
        %v5627 = vmul.f32 %v5590, %v5625
        %v5628 = vmul.f32 %v5591, %v5625
        %v5629 = vmul.f32 %v5592, %v5625
        %v5630 = vmul.f32 %v5593, %v5625
        %v5631 = vmul.f32 %v5594, %v5625
        %v5632 = vmul.f32 %v5595, %v5625
        %v5633 = vmul.f32 %v5596, %v5625
        %v5634 = vmul.f32 %v5597, %v5625
        %v5635 = vmul.f32 %v5598, %v5625
        %v5636 = vmul.f32 %v5599, %v5625
        %v5637 = vmul.f32 %v5600, %v5625
        %v5638 = vmul.f32 %v5601, %v5625
        %v5639 = vmul.f32 %v5602, %v5625
        %v5640 = vmul.f32 %v5603, %v5625
        %v5641 = vmul.f32 %v5604, %v5625
        %v5642 = vmul.f32 %v5605, %v5625
        %v5643 = vmul.f32 %v5606, %v5625
        %v5644 = vmul.f32 %v5607, %v5625
        %v5645 = vmul.f32 %v5608, %v5625
        %v5646 = vmul.f32 %v5609, %v5625
        %v5647 = vmul.f32 %v5610, %v5625
        %v5648 = vmul.f32 %v5611, %v5625
        %v5649 = vmul.f32 %v5612, %v5625
        %v5650 = vmul.f32 %v5613, %v5625
        %v5651 = vmul.f32 %v5614, %v5625
        %v5652 = vmul.f32 %v5615, %v5625
        %v5653 = vmul.f32 %v5616, %v5625
        %v5654 = vmul.f32 %v5617, %v5625
        %v5655 = vmul.f32 %v5618, %v5625
        %v5656 = vmul.f32 %v5619, %v5625
        %v5657 = vmul.f32 %v5620, %v5625
        %v5658 = vadd.f32 %v5557, %v5626
        %v5659 = vadd.f32 %v5558, %v5627
        %v5660 = vadd.f32 %v5559, %v5628
        %v5661 = vadd.f32 %v5560, %v5629
        %v5662 = vadd.f32 %v5561, %v5630
        %v5663 = vadd.f32 %v5562, %v5631
        %v5664 = vadd.f32 %v5563, %v5632
        %v5665 = vadd.f32 %v5564, %v5633
        %v5666 = vadd.f32 %v5565, %v5634
        %v5667 = vadd.f32 %v5566, %v5635
        %v5668 = vadd.f32 %v5567, %v5636
        %v5669 = vadd.f32 %v5568, %v5637
        %v5670 = vadd.f32 %v5569, %v5638
        %v5671 = vadd.f32 %v5570, %v5639
        %v5672 = vadd.f32 %v5571, %v5640
        %v5673 = vadd.f32 %v5572, %v5641
        %v5674 = vadd.f32 %v5573, %v5642
        %v5675 = vadd.f32 %v5574, %v5643
        %v5676 = vadd.f32 %v5575, %v5644
        %v5677 = vadd.f32 %v5576, %v5645
        %v5678 = vadd.f32 %v5577, %v5646
        %v5679 = vadd.f32 %v5578, %v5647
        %v5680 = vadd.f32 %v5579, %v5648
        %v5681 = vadd.f32 %v5580, %v5649
        %v5682 = vadd.f32 %v5581, %v5650
        %v5683 = vadd.f32 %v5582, %v5651
        %v5684 = vadd.f32 %v5583, %v5652
        %v5685 = vadd.f32 %v5584, %v5653
        %v5686 = vadd.f32 %v5585, %v5654
        %v5687 = vadd.f32 %v5586, %v5655
        %v5688 = vadd.f32 %v5587, %v5656
        %v5689 = vadd.f32 %v5588, %v5657
        %v5690 = vld [vmem:[%s4375 + $0x3] sm:$0xff]
        %v5691 = vld [vmem:[%s4375 + $0xb] sm:$0xff]
        %v5692 = vld [vmem:[%s4375 + $0x1b] sm:$0xff]
        %v5693 = vld [vmem:[%s4375 + $0x23] sm:$0xff]
        %v5694 = vld [vmem:[%s4375 + $0x33] sm:$0xff]
        %v5695 = vld [vmem:[%s4375 + $0x3b] sm:$0xff]
        %v5696 = vld [vmem:[%s4375 + $0x4b] sm:$0xff]
        %v5697 = vld [vmem:[%s4375 + $0x53] sm:$0xff]
        %v5698 = vld [vmem:[%s4375 + $0x63] sm:$0xff]
        %v5699 = vld [vmem:[%s4375 + $0x6b] sm:$0xff]
        %v5700 = vld [vmem:[%s4375 + $0x7b] sm:$0xff]
        %v5701 = vld [vmem:[%s4375 + $0x83] sm:$0xff]
        %v5702 = vld [vmem:[%s4375 + $0x93] sm:$0xff]
        %v5703 = vld [vmem:[%s4375 + $0x9b] sm:$0xff]
        %v5704 = vld [vmem:[%s4375 + $0xab] sm:$0xff]
        %v5705 = vld [vmem:[%s4375 + $0xb3] sm:$0xff]
        %v5706 = vld [vmem:[%s4375 + $0xc3] sm:$0xff]
        %v5707 = vld [vmem:[%s4375 + $0xcb] sm:$0xff]
        %v5708 = vld [vmem:[%s4375 + $0xdb] sm:$0xff]
        %v5709 = vld [vmem:[%s4375 + $0xe3] sm:$0xff]
        %v5710 = vld [vmem:[%s4375 + $0xf3] sm:$0xff]
        %v5711 = vld [vmem:[%s4375 + $0xfb] sm:$0xff]
        %v5712 = vld [vmem:[%s4375 + $0x10b] sm:$0xff]
        %v5713 = vld [vmem:[%s4375 + $0x113] sm:$0xff]
        %v5714 = vld [vmem:[%s4375 + $0x123] sm:$0xff]
        %v5715 = vld [vmem:[%s4375 + $0x12b] sm:$0xff]
        %v5716 = vld [vmem:[%s4375 + $0x13b] sm:$0xff]
        %v5717 = vld [vmem:[%s4375 + $0x143] sm:$0xff]
        %v5718 = vld [vmem:[%s4375 + $0x153] sm:$0xff]
        %v5719 = vld [vmem:[%s4375 + $0x15b] sm:$0xff]
        %v5720 = vld [vmem:[%s4375 + $0x16b] sm:$0xff]
        %v5721 = vld [vmem:[%s4375 + $0x173] sm:$0xff]
        %v5722 = vld [vmem:[%s5 + $0xd] sm:$0x1]
        %v5723 = vlaneseq
        %v5724 = vshrl.u32 %v5723, 7
        %v5725 = vsub.s32 0, %v5724
        %v5726 = vrot.slane %v5722, %v5725
        %v5727 = vmul.f32 %v5690, %v5726
        %v5728 = vmul.f32 %v5691, %v5726
        %v5729 = vmul.f32 %v5692, %v5726
        %v5730 = vmul.f32 %v5693, %v5726
        %v5731 = vmul.f32 %v5694, %v5726
        %v5732 = vmul.f32 %v5695, %v5726
        %v5733 = vmul.f32 %v5696, %v5726
        %v5734 = vmul.f32 %v5697, %v5726
        %v5735 = vmul.f32 %v5698, %v5726
        %v5736 = vmul.f32 %v5699, %v5726
        %v5737 = vmul.f32 %v5700, %v5726
        %v5738 = vmul.f32 %v5701, %v5726
        %v5739 = vmul.f32 %v5702, %v5726
        %v5740 = vmul.f32 %v5703, %v5726
        %v5741 = vmul.f32 %v5704, %v5726
        %v5742 = vmul.f32 %v5705, %v5726
        %v5743 = vmul.f32 %v5706, %v5726
        %v5744 = vmul.f32 %v5707, %v5726
        %v5745 = vmul.f32 %v5708, %v5726
        %v5746 = vmul.f32 %v5709, %v5726
        %v5747 = vmul.f32 %v5710, %v5726
        %v5748 = vmul.f32 %v5711, %v5726
        %v5749 = vmul.f32 %v5712, %v5726
        %v5750 = vmul.f32 %v5713, %v5726
        %v5751 = vmul.f32 %v5714, %v5726
        %v5752 = vmul.f32 %v5715, %v5726
        %v5753 = vmul.f32 %v5716, %v5726
        %v5754 = vmul.f32 %v5717, %v5726
        %v5755 = vmul.f32 %v5718, %v5726
        %v5756 = vmul.f32 %v5719, %v5726
        %v5757 = vmul.f32 %v5720, %v5726
        %v5758 = vmul.f32 %v5721, %v5726
        %v5759 = vadd.f32 %v5658, %v5727
        %v5760 = vadd.f32 %v5659, %v5728
        %v5761 = vadd.f32 %v5660, %v5729
        %v5762 = vadd.f32 %v5661, %v5730
        %v5763 = vadd.f32 %v5662, %v5731
        %v5764 = vadd.f32 %v5663, %v5732
        %v5765 = vadd.f32 %v5664, %v5733
        %v5766 = vadd.f32 %v5665, %v5734
        %v5767 = vadd.f32 %v5666, %v5735
        %v5768 = vadd.f32 %v5667, %v5736
        %v5769 = vadd.f32 %v5668, %v5737
        %v5770 = vadd.f32 %v5669, %v5738
        %v5771 = vadd.f32 %v5670, %v5739
        %v5772 = vadd.f32 %v5671, %v5740
        %v5773 = vadd.f32 %v5672, %v5741
        %v5774 = vadd.f32 %v5673, %v5742
        %v5775 = vadd.f32 %v5674, %v5743
        %v5776 = vadd.f32 %v5675, %v5744
        %v5777 = vadd.f32 %v5676, %v5745
        %v5778 = vadd.f32 %v5677, %v5746
        %v5779 = vadd.f32 %v5678, %v5747
        %v5780 = vadd.f32 %v5679, %v5748
        %v5781 = vadd.f32 %v5680, %v5749
        %v5782 = vadd.f32 %v5681, %v5750
        %v5783 = vadd.f32 %v5682, %v5751
        %v5784 = vadd.f32 %v5683, %v5752
        %v5785 = vadd.f32 %v5684, %v5753
        %v5786 = vadd.f32 %v5685, %v5754
        %v5787 = vadd.f32 %v5686, %v5755
        %v5788 = vadd.f32 %v5687, %v5756
        %v5789 = vadd.f32 %v5688, %v5757
        %v5790 = vadd.f32 %v5689, %v5758
        %v5791 = vld [vmem:[%s4375 + $0x4] sm:$0xff]
        %v5792 = vld [vmem:[%s4375 + $0xc] sm:$0xff]
        %v5793 = vld [vmem:[%s4375 + $0x1c] sm:$0xff]
        %v5794 = vld [vmem:[%s4375 + $0x24] sm:$0xff]
        %v5795 = vld [vmem:[%s4375 + $0x34] sm:$0xff]
        %v5796 = vld [vmem:[%s4375 + $0x3c] sm:$0xff]
        %v5797 = vld [vmem:[%s4375 + $0x4c] sm:$0xff]
        %v5798 = vld [vmem:[%s4375 + $0x54] sm:$0xff]
        %v5799 = vld [vmem:[%s4375 + $0x64] sm:$0xff]
        %v5800 = vld [vmem:[%s4375 + $0x6c] sm:$0xff]
        %v5801 = vld [vmem:[%s4375 + $0x7c] sm:$0xff]
        %v5802 = vld [vmem:[%s4375 + $0x84] sm:$0xff]
        %v5803 = vld [vmem:[%s4375 + $0x94] sm:$0xff]
        %v5804 = vld [vmem:[%s4375 + $0x9c] sm:$0xff]
        %v5805 = vld [vmem:[%s4375 + $0xac] sm:$0xff]
        %v5806 = vld [vmem:[%s4375 + $0xb4] sm:$0xff]
        %v5807 = vld [vmem:[%s4375 + $0xc4] sm:$0xff]
        %v5808 = vld [vmem:[%s4375 + $0xcc] sm:$0xff]
        %v5809 = vld [vmem:[%s4375 + $0xdc] sm:$0xff]
        %v5810 = vld [vmem:[%s4375 + $0xe4] sm:$0xff]
        %v5811 = vld [vmem:[%s4375 + $0xf4] sm:$0xff]
        %v5812 = vld [vmem:[%s4375 + $0xfc] sm:$0xff]
        %v5813 = vld [vmem:[%s4375 + $0x10c] sm:$0xff]
        %v5814 = vld [vmem:[%s4375 + $0x114] sm:$0xff]
        %v5815 = vld [vmem:[%s4375 + $0x124] sm:$0xff]
        %v5816 = vld [vmem:[%s4375 + $0x12c] sm:$0xff]
        %v5817 = vld [vmem:[%s4375 + $0x13c] sm:$0xff]
        %v5818 = vld [vmem:[%s4375 + $0x144] sm:$0xff]
        %v5819 = vld [vmem:[%s4375 + $0x154] sm:$0xff]
        %v5820 = vld [vmem:[%s4375 + $0x15c] sm:$0xff]
        %v5821 = vld [vmem:[%s4375 + $0x16c] sm:$0xff]
        %v5822 = vld [vmem:[%s4375 + $0x174] sm:$0xff]
        %v5823 = vld [vmem:[%s5 + $0xe] sm:$0x1]
        %v5824 = vlaneseq
        %v5825 = vshrl.u32 %v5824, 7
        %v5826 = vsub.s32 0, %v5825
        %v5827 = vrot.slane %v5823, %v5826
        %v5828 = vmul.f32 %v5791, %v5827
        %v5829 = vmul.f32 %v5792, %v5827
        %v5830 = vmul.f32 %v5793, %v5827
        %v5831 = vmul.f32 %v5794, %v5827
        %v5832 = vmul.f32 %v5795, %v5827
        %v5833 = vmul.f32 %v5796, %v5827
        %v5834 = vmul.f32 %v5797, %v5827
        %v5835 = vmul.f32 %v5798, %v5827
        %v5836 = vmul.f32 %v5799, %v5827
        %v5837 = vmul.f32 %v5800, %v5827
        %v5838 = vmul.f32 %v5801, %v5827
        %v5839 = vmul.f32 %v5802, %v5827
        %v5840 = vmul.f32 %v5803, %v5827
        %v5841 = vmul.f32 %v5804, %v5827
        %v5842 = vmul.f32 %v5805, %v5827
        %v5843 = vmul.f32 %v5806, %v5827
        %v5844 = vmul.f32 %v5807, %v5827
        %v5845 = vmul.f32 %v5808, %v5827
        %v5846 = vmul.f32 %v5809, %v5827
        %v5847 = vmul.f32 %v5810, %v5827
        %v5848 = vmul.f32 %v5811, %v5827
        %v5849 = vmul.f32 %v5812, %v5827
        %v5850 = vmul.f32 %v5813, %v5827
        %v5851 = vmul.f32 %v5814, %v5827
        %v5852 = vmul.f32 %v5815, %v5827
        %v5853 = vmul.f32 %v5816, %v5827
        %v5854 = vmul.f32 %v5817, %v5827
        %v5855 = vmul.f32 %v5818, %v5827
        %v5856 = vmul.f32 %v5819, %v5827
        %v5857 = vmul.f32 %v5820, %v5827
        %v5858 = vmul.f32 %v5821, %v5827
        %v5859 = vmul.f32 %v5822, %v5827
        %v5860 = vadd.f32 %v5759, %v5828
        %v5861 = vadd.f32 %v5760, %v5829
        %v5862 = vadd.f32 %v5761, %v5830
        %v5863 = vadd.f32 %v5762, %v5831
        %v5864 = vadd.f32 %v5763, %v5832
        %v5865 = vadd.f32 %v5764, %v5833
        %v5866 = vadd.f32 %v5765, %v5834
        %v5867 = vadd.f32 %v5766, %v5835
        %v5868 = vadd.f32 %v5767, %v5836
        %v5869 = vadd.f32 %v5768, %v5837
        %v5870 = vadd.f32 %v5769, %v5838
        %v5871 = vadd.f32 %v5770, %v5839
        %v5872 = vadd.f32 %v5771, %v5840
        %v5873 = vadd.f32 %v5772, %v5841
        %v5874 = vadd.f32 %v5773, %v5842
        %v5875 = vadd.f32 %v5774, %v5843
        %v5876 = vadd.f32 %v5775, %v5844
        %v5877 = vadd.f32 %v5776, %v5845
        %v5878 = vadd.f32 %v5777, %v5846
        %v5879 = vadd.f32 %v5778, %v5847
        %v5880 = vadd.f32 %v5779, %v5848
        %v5881 = vadd.f32 %v5780, %v5849
        %v5882 = vadd.f32 %v5781, %v5850
        %v5883 = vadd.f32 %v5782, %v5851
        %v5884 = vadd.f32 %v5783, %v5852
        %v5885 = vadd.f32 %v5784, %v5853
        %v5886 = vadd.f32 %v5785, %v5854
        %v5887 = vadd.f32 %v5786, %v5855
        %v5888 = vadd.f32 %v5787, %v5856
        %v5889 = vadd.f32 %v5788, %v5857
        %v5890 = vadd.f32 %v5789, %v5858
        %v5891 = vadd.f32 %v5790, %v5859
        %s5892 = scalar_lea.vmem [#allocation3], 72
        %v5893 = vld [vmem:[%s5892] sm:$0xff]
        %v5894 = vld [vmem:[%s5892 + $0x8] sm:$0xff]
        %v5895 = vld [vmem:[%s5892 + $0x18] sm:$0xff]
        %v5896 = vld [vmem:[%s5892 + $0x20] sm:$0xff]
        %v5897 = vld [vmem:[%s5892 + $0x30] sm:$0xff]
        %v5898 = vld [vmem:[%s5892 + $0x38] sm:$0xff]
        %v5899 = vld [vmem:[%s5892 + $0x48] sm:$0xff]
        %v5900 = vld [vmem:[%s5892 + $0x50] sm:$0xff]
        %v5901 = vld [vmem:[%s5892 + $0x60] sm:$0xff]
        %v5902 = vld [vmem:[%s5892 + $0x68] sm:$0xff]
        %v5903 = vld [vmem:[%s5892 + $0x78] sm:$0xff]
        %v5904 = vld [vmem:[%s5892 + $0x80] sm:$0xff]
        %v5905 = vld [vmem:[%s5892 + $0x90] sm:$0xff]
        %v5906 = vld [vmem:[%s5892 + $0x98] sm:$0xff]
        %v5907 = vld [vmem:[%s5892 + $0xa8] sm:$0xff]
        %v5908 = vld [vmem:[%s5892 + $0xb0] sm:$0xff]
        %v5909 = vld [vmem:[%s5892 + $0xc0] sm:$0xff]
        %v5910 = vld [vmem:[%s5892 + $0xc8] sm:$0xff]
        %v5911 = vld [vmem:[%s5892 + $0xd8] sm:$0xff]
        %v5912 = vld [vmem:[%s5892 + $0xe0] sm:$0xff]
        %v5913 = vld [vmem:[%s5892 + $0xf0] sm:$0xff]
        %v5914 = vld [vmem:[%s5892 + $0xf8] sm:$0xff]
        %v5915 = vld [vmem:[%s5892 + $0x108] sm:$0xff]
        %v5916 = vld [vmem:[%s5892 + $0x110] sm:$0xff]
        %v5917 = vld [vmem:[%s5892 + $0x120] sm:$0xff]
        %v5918 = vld [vmem:[%s5892 + $0x128] sm:$0xff]
        %v5919 = vld [vmem:[%s5892 + $0x138] sm:$0xff]
        %v5920 = vld [vmem:[%s5892 + $0x140] sm:$0xff]
        %v5921 = vld [vmem:[%s5892 + $0x150] sm:$0xff]
        %v5922 = vld [vmem:[%s5892 + $0x158] sm:$0xff]
        %v5923 = vld [vmem:[%s5892 + $0x168] sm:$0xff]
        %v5924 = vld [vmem:[%s5892 + $0x170] sm:$0xff]
        %v5925 = vld [vmem:[%s5 + $0xf] sm:$0x1]
        %v5926 = vlaneseq
        %v5927 = vshrl.u32 %v5926, 7
        %v5928 = vsub.s32 0, %v5927
        %v5929 = vrot.slane %v5925, %v5928
        %v5930 = vmul.f32 %v5893, %v5929
        %v5931 = vmul.f32 %v5894, %v5929
        %v5932 = vmul.f32 %v5895, %v5929
        %v5933 = vmul.f32 %v5896, %v5929
        %v5934 = vmul.f32 %v5897, %v5929
        %v5935 = vmul.f32 %v5898, %v5929
        %v5936 = vmul.f32 %v5899, %v5929
        %v5937 = vmul.f32 %v5900, %v5929
        %v5938 = vmul.f32 %v5901, %v5929
        %v5939 = vmul.f32 %v5902, %v5929
        %v5940 = vmul.f32 %v5903, %v5929
        %v5941 = vmul.f32 %v5904, %v5929
        %v5942 = vmul.f32 %v5905, %v5929
        %v5943 = vmul.f32 %v5906, %v5929
        %v5944 = vmul.f32 %v5907, %v5929
        %v5945 = vmul.f32 %v5908, %v5929
        %v5946 = vmul.f32 %v5909, %v5929
        %v5947 = vmul.f32 %v5910, %v5929
        %v5948 = vmul.f32 %v5911, %v5929
        %v5949 = vmul.f32 %v5912, %v5929
        %v5950 = vmul.f32 %v5913, %v5929
        %v5951 = vmul.f32 %v5914, %v5929
        %v5952 = vmul.f32 %v5915, %v5929
        %v5953 = vmul.f32 %v5916, %v5929
        %v5954 = vmul.f32 %v5917, %v5929
        %v5955 = vmul.f32 %v5918, %v5929
        %v5956 = vmul.f32 %v5919, %v5929
        %v5957 = vmul.f32 %v5920, %v5929
        %v5958 = vmul.f32 %v5921, %v5929
        %v5959 = vmul.f32 %v5922, %v5929
        %v5960 = vmul.f32 %v5923, %v5929
        %v5961 = vmul.f32 %v5924, %v5929
        %v5962 = vadd.f32 %v5860, %v5930
        %v5963 = vadd.f32 %v5861, %v5931
        %v5964 = vadd.f32 %v5862, %v5932
        %v5965 = vadd.f32 %v5863, %v5933
        %v5966 = vadd.f32 %v5864, %v5934
        %v5967 = vadd.f32 %v5865, %v5935
        %v5968 = vadd.f32 %v5866, %v5936
        %v5969 = vadd.f32 %v5867, %v5937
        %v5970 = vadd.f32 %v5868, %v5938
        %v5971 = vadd.f32 %v5869, %v5939
        %v5972 = vadd.f32 %v5870, %v5940
        %v5973 = vadd.f32 %v5871, %v5941
        %v5974 = vadd.f32 %v5872, %v5942
        %v5975 = vadd.f32 %v5873, %v5943
        %v5976 = vadd.f32 %v5874, %v5944
        %v5977 = vadd.f32 %v5875, %v5945
        %v5978 = vadd.f32 %v5876, %v5946
        %v5979 = vadd.f32 %v5877, %v5947
        %v5980 = vadd.f32 %v5878, %v5948
        %v5981 = vadd.f32 %v5879, %v5949
        %v5982 = vadd.f32 %v5880, %v5950
        %v5983 = vadd.f32 %v5881, %v5951
        %v5984 = vadd.f32 %v5882, %v5952
        %v5985 = vadd.f32 %v5883, %v5953
        %v5986 = vadd.f32 %v5884, %v5954
        %v5987 = vadd.f32 %v5885, %v5955
        %v5988 = vadd.f32 %v5886, %v5956
        %v5989 = vadd.f32 %v5887, %v5957
        %v5990 = vadd.f32 %v5888, %v5958
        %v5991 = vadd.f32 %v5889, %v5959
        %v5992 = vadd.f32 %v5890, %v5960
        %v5993 = vadd.f32 %v5891, %v5961
        %v5994 = vld [vmem:[%s5892 + $0x1] sm:$0xff]
        %v5995 = vld [vmem:[%s5892 + $0x9] sm:$0xff]
        %v5996 = vld [vmem:[%s5892 + $0x19] sm:$0xff]
        %v5997 = vld [vmem:[%s5892 + $0x21] sm:$0xff]
        %v5998 = vld [vmem:[%s5892 + $0x31] sm:$0xff]
        %v5999 = vld [vmem:[%s5892 + $0x39] sm:$0xff]
        %v6000 = vld [vmem:[%s5892 + $0x49] sm:$0xff]
        %v6001 = vld [vmem:[%s5892 + $0x51] sm:$0xff]
        %v6002 = vld [vmem:[%s5892 + $0x61] sm:$0xff]
        %v6003 = vld [vmem:[%s5892 + $0x69] sm:$0xff]
        %v6004 = vld [vmem:[%s5892 + $0x79] sm:$0xff]
        %v6005 = vld [vmem:[%s5892 + $0x81] sm:$0xff]
        %v6006 = vld [vmem:[%s5892 + $0x91] sm:$0xff]
        %v6007 = vld [vmem:[%s5892 + $0x99] sm:$0xff]
        %v6008 = vld [vmem:[%s5892 + $0xa9] sm:$0xff]
        %v6009 = vld [vmem:[%s5892 + $0xb1] sm:$0xff]
        %v6010 = vld [vmem:[%s5892 + $0xc1] sm:$0xff]
        %v6011 = vld [vmem:[%s5892 + $0xc9] sm:$0xff]
        %v6012 = vld [vmem:[%s5892 + $0xd9] sm:$0xff]
        %v6013 = vld [vmem:[%s5892 + $0xe1] sm:$0xff]
        %v6014 = vld [vmem:[%s5892 + $0xf1] sm:$0xff]
        %v6015 = vld [vmem:[%s5892 + $0xf9] sm:$0xff]
        %v6016 = vld [vmem:[%s5892 + $0x109] sm:$0xff]
        %v6017 = vld [vmem:[%s5892 + $0x111] sm:$0xff]
        %v6018 = vld [vmem:[%s5892 + $0x121] sm:$0xff]
        %v6019 = vld [vmem:[%s5892 + $0x129] sm:$0xff]
        %v6020 = vld [vmem:[%s5892 + $0x139] sm:$0xff]
        %v6021 = vld [vmem:[%s5892 + $0x141] sm:$0xff]
        %v6022 = vld [vmem:[%s5892 + $0x151] sm:$0xff]
        %v6023 = vld [vmem:[%s5892 + $0x159] sm:$0xff]
        %v6024 = vld [vmem:[%s5892 + $0x169] sm:$0xff]
        %v6025 = vld [vmem:[%s5892 + $0x171] sm:$0xff]
        %v6026 = vld [vmem:[%s5 + $0x10] sm:$0x1]
        %v6027 = vlaneseq
        %v6028 = vshrl.u32 %v6027, 7
        %v6029 = vsub.s32 0, %v6028
        %v6030 = vrot.slane %v6026, %v6029
        %v6031 = vmul.f32 %v5994, %v6030
        %v6032 = vmul.f32 %v5995, %v6030
        %v6033 = vmul.f32 %v5996, %v6030
        %v6034 = vmul.f32 %v5997, %v6030
        %v6035 = vmul.f32 %v5998, %v6030
        %v6036 = vmul.f32 %v5999, %v6030
        %v6037 = vmul.f32 %v6000, %v6030
        %v6038 = vmul.f32 %v6001, %v6030
        %v6039 = vmul.f32 %v6002, %v6030
        %v6040 = vmul.f32 %v6003, %v6030
        %v6041 = vmul.f32 %v6004, %v6030
        %v6042 = vmul.f32 %v6005, %v6030
        %v6043 = vmul.f32 %v6006, %v6030
        %v6044 = vmul.f32 %v6007, %v6030
        %v6045 = vmul.f32 %v6008, %v6030
        %v6046 = vmul.f32 %v6009, %v6030
        %v6047 = vmul.f32 %v6010, %v6030
        %v6048 = vmul.f32 %v6011, %v6030
        %v6049 = vmul.f32 %v6012, %v6030
        %v6050 = vmul.f32 %v6013, %v6030
        %v6051 = vmul.f32 %v6014, %v6030
        %v6052 = vmul.f32 %v6015, %v6030
        %v6053 = vmul.f32 %v6016, %v6030
        %v6054 = vmul.f32 %v6017, %v6030
        %v6055 = vmul.f32 %v6018, %v6030
        %v6056 = vmul.f32 %v6019, %v6030
        %v6057 = vmul.f32 %v6020, %v6030
        %v6058 = vmul.f32 %v6021, %v6030
        %v6059 = vmul.f32 %v6022, %v6030
        %v6060 = vmul.f32 %v6023, %v6030
        %v6061 = vmul.f32 %v6024, %v6030
        %v6062 = vmul.f32 %v6025, %v6030
        %v6063 = vadd.f32 %v5962, %v6031
        %v6064 = vadd.f32 %v5963, %v6032
        %v6065 = vadd.f32 %v5964, %v6033
        %v6066 = vadd.f32 %v5965, %v6034
        %v6067 = vadd.f32 %v5966, %v6035
        %v6068 = vadd.f32 %v5967, %v6036
        %v6069 = vadd.f32 %v5968, %v6037
        %v6070 = vadd.f32 %v5969, %v6038
        %v6071 = vadd.f32 %v5970, %v6039
        %v6072 = vadd.f32 %v5971, %v6040
        %v6073 = vadd.f32 %v5972, %v6041
        %v6074 = vadd.f32 %v5973, %v6042
        %v6075 = vadd.f32 %v5974, %v6043
        %v6076 = vadd.f32 %v5975, %v6044
        %v6077 = vadd.f32 %v5976, %v6045
        %v6078 = vadd.f32 %v5977, %v6046
        %v6079 = vadd.f32 %v5978, %v6047
        %v6080 = vadd.f32 %v5979, %v6048
        %v6081 = vadd.f32 %v5980, %v6049
        %v6082 = vadd.f32 %v5981, %v6050
        %v6083 = vadd.f32 %v5982, %v6051
        %v6084 = vadd.f32 %v5983, %v6052
        %v6085 = vadd.f32 %v5984, %v6053
        %v6086 = vadd.f32 %v5985, %v6054
        %v6087 = vadd.f32 %v5986, %v6055
        %v6088 = vadd.f32 %v5987, %v6056
        %v6089 = vadd.f32 %v5988, %v6057
        %v6090 = vadd.f32 %v5989, %v6058
        %v6091 = vadd.f32 %v5990, %v6059
        %v6092 = vadd.f32 %v5991, %v6060
        %v6093 = vadd.f32 %v5992, %v6061
        %v6094 = vadd.f32 %v5993, %v6062
        %v6095 = vld [vmem:[%s5892 + $0x2] sm:$0xff]
        %v6096 = vld [vmem:[%s5892 + $0xa] sm:$0xff]
        %v6097 = vld [vmem:[%s5892 + $0x1a] sm:$0xff]
        %v6098 = vld [vmem:[%s5892 + $0x22] sm:$0xff]
        %v6099 = vld [vmem:[%s5892 + $0x32] sm:$0xff]
        %v6100 = vld [vmem:[%s5892 + $0x3a] sm:$0xff]
        %v6101 = vld [vmem:[%s5892 + $0x4a] sm:$0xff]
        %v6102 = vld [vmem:[%s5892 + $0x52] sm:$0xff]
        %v6103 = vld [vmem:[%s5892 + $0x62] sm:$0xff]
        %v6104 = vld [vmem:[%s5892 + $0x6a] sm:$0xff]
        %v6105 = vld [vmem:[%s5892 + $0x7a] sm:$0xff]
        %v6106 = vld [vmem:[%s5892 + $0x82] sm:$0xff]
        %v6107 = vld [vmem:[%s5892 + $0x92] sm:$0xff]
        %v6108 = vld [vmem:[%s5892 + $0x9a] sm:$0xff]
        %v6109 = vld [vmem:[%s5892 + $0xaa] sm:$0xff]
        %v6110 = vld [vmem:[%s5892 + $0xb2] sm:$0xff]
        %v6111 = vld [vmem:[%s5892 + $0xc2] sm:$0xff]
        %v6112 = vld [vmem:[%s5892 + $0xca] sm:$0xff]
        %v6113 = vld [vmem:[%s5892 + $0xda] sm:$0xff]
        %v6114 = vld [vmem:[%s5892 + $0xe2] sm:$0xff]
        %v6115 = vld [vmem:[%s5892 + $0xf2] sm:$0xff]
        %v6116 = vld [vmem:[%s5892 + $0xfa] sm:$0xff]
        %v6117 = vld [vmem:[%s5892 + $0x10a] sm:$0xff]
        %v6118 = vld [vmem:[%s5892 + $0x112] sm:$0xff]
        %v6119 = vld [vmem:[%s5892 + $0x122] sm:$0xff]
        %v6120 = vld [vmem:[%s5892 + $0x12a] sm:$0xff]
        %v6121 = vld [vmem:[%s5892 + $0x13a] sm:$0xff]
        %v6122 = vld [vmem:[%s5892 + $0x142] sm:$0xff]
        %v6123 = vld [vmem:[%s5892 + $0x152] sm:$0xff]
        %v6124 = vld [vmem:[%s5892 + $0x15a] sm:$0xff]
        %v6125 = vld [vmem:[%s5892 + $0x16a] sm:$0xff]
        %v6126 = vld [vmem:[%s5892 + $0x172] sm:$0xff]
        %v6127 = vld [vmem:[%s5 + $0x11] sm:$0x1]
        %v6128 = vlaneseq
        %v6129 = vshrl.u32 %v6128, 7
        %v6130 = vsub.s32 0, %v6129
        %v6131 = vrot.slane %v6127, %v6130
        %v6132 = vmul.f32 %v6095, %v6131
        %v6133 = vmul.f32 %v6096, %v6131
        %v6134 = vmul.f32 %v6097, %v6131
        %v6135 = vmul.f32 %v6098, %v6131
        %v6136 = vmul.f32 %v6099, %v6131
        %v6137 = vmul.f32 %v6100, %v6131
        %v6138 = vmul.f32 %v6101, %v6131
        %v6139 = vmul.f32 %v6102, %v6131
        %v6140 = vmul.f32 %v6103, %v6131
        %v6141 = vmul.f32 %v6104, %v6131
        %v6142 = vmul.f32 %v6105, %v6131
        %v6143 = vmul.f32 %v6106, %v6131
        %v6144 = vmul.f32 %v6107, %v6131
        %v6145 = vmul.f32 %v6108, %v6131
        %v6146 = vmul.f32 %v6109, %v6131
        %v6147 = vmul.f32 %v6110, %v6131
        %v6148 = vmul.f32 %v6111, %v6131
        %v6149 = vmul.f32 %v6112, %v6131
        %v6150 = vmul.f32 %v6113, %v6131
        %v6151 = vmul.f32 %v6114, %v6131
        %v6152 = vmul.f32 %v6115, %v6131
        %v6153 = vmul.f32 %v6116, %v6131
        %v6154 = vmul.f32 %v6117, %v6131
        %v6155 = vmul.f32 %v6118, %v6131
        %v6156 = vmul.f32 %v6119, %v6131
        %v6157 = vmul.f32 %v6120, %v6131
        %v6158 = vmul.f32 %v6121, %v6131
        %v6159 = vmul.f32 %v6122, %v6131
        %v6160 = vmul.f32 %v6123, %v6131
        %v6161 = vmul.f32 %v6124, %v6131
        %v6162 = vmul.f32 %v6125, %v6131
        %v6163 = vmul.f32 %v6126, %v6131
        %v6164 = vadd.f32 %v6063, %v6132
        %v6165 = vadd.f32 %v6064, %v6133
        %v6166 = vadd.f32 %v6065, %v6134
        %v6167 = vadd.f32 %v6066, %v6135
        %v6168 = vadd.f32 %v6067, %v6136
        %v6169 = vadd.f32 %v6068, %v6137
        %v6170 = vadd.f32 %v6069, %v6138
        %v6171 = vadd.f32 %v6070, %v6139
        %v6172 = vadd.f32 %v6071, %v6140
        %v6173 = vadd.f32 %v6072, %v6141
        %v6174 = vadd.f32 %v6073, %v6142
        %v6175 = vadd.f32 %v6074, %v6143
        %v6176 = vadd.f32 %v6075, %v6144
        %v6177 = vadd.f32 %v6076, %v6145
        %v6178 = vadd.f32 %v6077, %v6146
        %v6179 = vadd.f32 %v6078, %v6147
        %v6180 = vadd.f32 %v6079, %v6148
        %v6181 = vadd.f32 %v6080, %v6149
        %v6182 = vadd.f32 %v6081, %v6150
        %v6183 = vadd.f32 %v6082, %v6151
        %v6184 = vadd.f32 %v6083, %v6152
        %v6185 = vadd.f32 %v6084, %v6153
        %v6186 = vadd.f32 %v6085, %v6154
        %v6187 = vadd.f32 %v6086, %v6155
        %v6188 = vadd.f32 %v6087, %v6156
        %v6189 = vadd.f32 %v6088, %v6157
        %v6190 = vadd.f32 %v6089, %v6158
        %v6191 = vadd.f32 %v6090, %v6159
        %v6192 = vadd.f32 %v6091, %v6160
        %v6193 = vadd.f32 %v6092, %v6161
        %v6194 = vadd.f32 %v6093, %v6162
        %v6195 = vadd.f32 %v6094, %v6163
        %v6196 = vld [vmem:[%s5892 + $0x3] sm:$0xff]
        %v6197 = vld [vmem:[%s5892 + $0xb] sm:$0xff]
        %v6198 = vld [vmem:[%s5892 + $0x1b] sm:$0xff]
        %v6199 = vld [vmem:[%s5892 + $0x23] sm:$0xff]
        %v6200 = vld [vmem:[%s5892 + $0x33] sm:$0xff]
        %v6201 = vld [vmem:[%s5892 + $0x3b] sm:$0xff]
        %v6202 = vld [vmem:[%s5892 + $0x4b] sm:$0xff]
        %v6203 = vld [vmem:[%s5892 + $0x53] sm:$0xff]
        %v6204 = vld [vmem:[%s5892 + $0x63] sm:$0xff]
        %v6205 = vld [vmem:[%s5892 + $0x6b] sm:$0xff]
        %v6206 = vld [vmem:[%s5892 + $0x7b] sm:$0xff]
        %v6207 = vld [vmem:[%s5892 + $0x83] sm:$0xff]
        %v6208 = vld [vmem:[%s5892 + $0x93] sm:$0xff]
        %v6209 = vld [vmem:[%s5892 + $0x9b] sm:$0xff]
        %v6210 = vld [vmem:[%s5892 + $0xab] sm:$0xff]
        %v6211 = vld [vmem:[%s5892 + $0xb3] sm:$0xff]
        %v6212 = vld [vmem:[%s5892 + $0xc3] sm:$0xff]
        %v6213 = vld [vmem:[%s5892 + $0xcb] sm:$0xff]
        %v6214 = vld [vmem:[%s5892 + $0xdb] sm:$0xff]
        %v6215 = vld [vmem:[%s5892 + $0xe3] sm:$0xff]
        %v6216 = vld [vmem:[%s5892 + $0xf3] sm:$0xff]
        %v6217 = vld [vmem:[%s5892 + $0xfb] sm:$0xff]
        %v6218 = vld [vmem:[%s5892 + $0x10b] sm:$0xff]
        %v6219 = vld [vmem:[%s5892 + $0x113] sm:$0xff]
        %v6220 = vld [vmem:[%s5892 + $0x123] sm:$0xff]
        %v6221 = vld [vmem:[%s5892 + $0x12b] sm:$0xff]
        %v6222 = vld [vmem:[%s5892 + $0x13b] sm:$0xff]
        %v6223 = vld [vmem:[%s5892 + $0x143] sm:$0xff]
        %v6224 = vld [vmem:[%s5892 + $0x153] sm:$0xff]
        %v6225 = vld [vmem:[%s5892 + $0x15b] sm:$0xff]
        %v6226 = vld [vmem:[%s5892 + $0x16b] sm:$0xff]
        %v6227 = vld [vmem:[%s5892 + $0x173] sm:$0xff]
        %v6228 = vld [vmem:[%s5 + $0x12] sm:$0x1]
        %v6229 = vlaneseq
        %v6230 = vshrl.u32 %v6229, 7
        %v6231 = vsub.s32 0, %v6230
        %v6232 = vrot.slane %v6228, %v6231
        %v6233 = vmul.f32 %v6196, %v6232
        %v6234 = vmul.f32 %v6197, %v6232
        %v6235 = vmul.f32 %v6198, %v6232
        %v6236 = vmul.f32 %v6199, %v6232
        %v6237 = vmul.f32 %v6200, %v6232
        %v6238 = vmul.f32 %v6201, %v6232
        %v6239 = vmul.f32 %v6202, %v6232
        %v6240 = vmul.f32 %v6203, %v6232
        %v6241 = vmul.f32 %v6204, %v6232
        %v6242 = vmul.f32 %v6205, %v6232
        %v6243 = vmul.f32 %v6206, %v6232
        %v6244 = vmul.f32 %v6207, %v6232
        %v6245 = vmul.f32 %v6208, %v6232
        %v6246 = vmul.f32 %v6209, %v6232
        %v6247 = vmul.f32 %v6210, %v6232
        %v6248 = vmul.f32 %v6211, %v6232
        %v6249 = vmul.f32 %v6212, %v6232
        %v6250 = vmul.f32 %v6213, %v6232
        %v6251 = vmul.f32 %v6214, %v6232
        %v6252 = vmul.f32 %v6215, %v6232
        %v6253 = vmul.f32 %v6216, %v6232
        %v6254 = vmul.f32 %v6217, %v6232
        %v6255 = vmul.f32 %v6218, %v6232
        %v6256 = vmul.f32 %v6219, %v6232
        %v6257 = vmul.f32 %v6220, %v6232
        %v6258 = vmul.f32 %v6221, %v6232
        %v6259 = vmul.f32 %v6222, %v6232
        %v6260 = vmul.f32 %v6223, %v6232
        %v6261 = vmul.f32 %v6224, %v6232
        %v6262 = vmul.f32 %v6225, %v6232
        %v6263 = vmul.f32 %v6226, %v6232
        %v6264 = vmul.f32 %v6227, %v6232
        %v6265 = vadd.f32 %v6164, %v6233
        %v6266 = vadd.f32 %v6165, %v6234
        %v6267 = vadd.f32 %v6166, %v6235
        %v6268 = vadd.f32 %v6167, %v6236
        %v6269 = vadd.f32 %v6168, %v6237
        %v6270 = vadd.f32 %v6169, %v6238
        %v6271 = vadd.f32 %v6170, %v6239
        %v6272 = vadd.f32 %v6171, %v6240
        %v6273 = vadd.f32 %v6172, %v6241
        %v6274 = vadd.f32 %v6173, %v6242
        %v6275 = vadd.f32 %v6174, %v6243
        %v6276 = vadd.f32 %v6175, %v6244
        %v6277 = vadd.f32 %v6176, %v6245
        %v6278 = vadd.f32 %v6177, %v6246
        %v6279 = vadd.f32 %v6178, %v6247
        %v6280 = vadd.f32 %v6179, %v6248
        %v6281 = vadd.f32 %v6180, %v6249
        %v6282 = vadd.f32 %v6181, %v6250
        %v6283 = vadd.f32 %v6182, %v6251
        %v6284 = vadd.f32 %v6183, %v6252
        %v6285 = vadd.f32 %v6184, %v6253
        %v6286 = vadd.f32 %v6185, %v6254
        %v6287 = vadd.f32 %v6186, %v6255
        %v6288 = vadd.f32 %v6187, %v6256
        %v6289 = vadd.f32 %v6188, %v6257
        %v6290 = vadd.f32 %v6189, %v6258
        %v6291 = vadd.f32 %v6190, %v6259
        %v6292 = vadd.f32 %v6191, %v6260
        %v6293 = vadd.f32 %v6192, %v6261
        %v6294 = vadd.f32 %v6193, %v6262
        %v6295 = vadd.f32 %v6194, %v6263
        %v6296 = vadd.f32 %v6195, %v6264
        %v6297 = vld [vmem:[%s5892 + $0x4] sm:$0xff]
        %v6298 = vld [vmem:[%s5892 + $0xc] sm:$0xff]
        %v6299 = vld [vmem:[%s5892 + $0x1c] sm:$0xff]
        %v6300 = vld [vmem:[%s5892 + $0x24] sm:$0xff]
        %v6301 = vld [vmem:[%s5892 + $0x34] sm:$0xff]
        %v6302 = vld [vmem:[%s5892 + $0x3c] sm:$0xff]
        %v6303 = vld [vmem:[%s5892 + $0x4c] sm:$0xff]
        %v6304 = vld [vmem:[%s5892 + $0x54] sm:$0xff]
        %v6305 = vld [vmem:[%s5892 + $0x64] sm:$0xff]
        %v6306 = vld [vmem:[%s5892 + $0x6c] sm:$0xff]
        %v6307 = vld [vmem:[%s5892 + $0x7c] sm:$0xff]
        %v6308 = vld [vmem:[%s5892 + $0x84] sm:$0xff]
        %v6309 = vld [vmem:[%s5892 + $0x94] sm:$0xff]
        %v6310 = vld [vmem:[%s5892 + $0x9c] sm:$0xff]
        %v6311 = vld [vmem:[%s5892 + $0xac] sm:$0xff]
        %v6312 = vld [vmem:[%s5892 + $0xb4] sm:$0xff]
        %v6313 = vld [vmem:[%s5892 + $0xc4] sm:$0xff]
        %v6314 = vld [vmem:[%s5892 + $0xcc] sm:$0xff]
        %v6315 = vld [vmem:[%s5892 + $0xdc] sm:$0xff]
        %v6316 = vld [vmem:[%s5892 + $0xe4] sm:$0xff]
        %v6317 = vld [vmem:[%s5892 + $0xf4] sm:$0xff]
        %v6318 = vld [vmem:[%s5892 + $0xfc] sm:$0xff]
        %v6319 = vld [vmem:[%s5892 + $0x10c] sm:$0xff]
        %v6320 = vld [vmem:[%s5892 + $0x114] sm:$0xff]
        %v6321 = vld [vmem:[%s5892 + $0x124] sm:$0xff]
        %v6322 = vld [vmem:[%s5892 + $0x12c] sm:$0xff]
        %v6323 = vld [vmem:[%s5892 + $0x13c] sm:$0xff]
        %v6324 = vld [vmem:[%s5892 + $0x144] sm:$0xff]
        %v6325 = vld [vmem:[%s5892 + $0x154] sm:$0xff]
        %v6326 = vld [vmem:[%s5892 + $0x15c] sm:$0xff]
        %v6327 = vld [vmem:[%s5892 + $0x16c] sm:$0xff]
        %v6328 = vld [vmem:[%s5892 + $0x174] sm:$0xff]
        %v6329 = vld [vmem:[%s5 + $0x13] sm:$0x1]
        %v6330 = vlaneseq
        %v6331 = vshrl.u32 %v6330, 7
        %v6332 = vsub.s32 0, %v6331
        %v6333 = vrot.slane %v6329, %v6332
        %v6334 = vmul.f32 %v6297, %v6333
        %v6335 = vmul.f32 %v6298, %v6333
        %v6336 = vmul.f32 %v6299, %v6333
        %v6337 = vmul.f32 %v6300, %v6333
        %v6338 = vmul.f32 %v6301, %v6333
        %v6339 = vmul.f32 %v6302, %v6333
        %v6340 = vmul.f32 %v6303, %v6333
        %v6341 = vmul.f32 %v6304, %v6333
        %v6342 = vmul.f32 %v6305, %v6333
        %v6343 = vmul.f32 %v6306, %v6333
        %v6344 = vmul.f32 %v6307, %v6333
        %v6345 = vmul.f32 %v6308, %v6333
        %v6346 = vmul.f32 %v6309, %v6333
        %v6347 = vmul.f32 %v6310, %v6333
        %v6348 = vmul.f32 %v6311, %v6333
        %v6349 = vmul.f32 %v6312, %v6333
        %v6350 = vmul.f32 %v6313, %v6333
        %v6351 = vmul.f32 %v6314, %v6333
        %v6352 = vmul.f32 %v6315, %v6333
        %v6353 = vmul.f32 %v6316, %v6333
        %v6354 = vmul.f32 %v6317, %v6333
        %v6355 = vmul.f32 %v6318, %v6333
        %v6356 = vmul.f32 %v6319, %v6333
        %v6357 = vmul.f32 %v6320, %v6333
        %v6358 = vmul.f32 %v6321, %v6333
        %v6359 = vmul.f32 %v6322, %v6333
        %v6360 = vmul.f32 %v6323, %v6333
        %v6361 = vmul.f32 %v6324, %v6333
        %v6362 = vmul.f32 %v6325, %v6333
        %v6363 = vmul.f32 %v6326, %v6333
        %v6364 = vmul.f32 %v6327, %v6333
        %v6365 = vmul.f32 %v6328, %v6333
        %v6366 = vadd.f32 %v6265, %v6334
        %v6367 = vadd.f32 %v6266, %v6335
        %v6368 = vadd.f32 %v6267, %v6336
        %v6369 = vadd.f32 %v6268, %v6337
        %v6370 = vadd.f32 %v6269, %v6338
        %v6371 = vadd.f32 %v6270, %v6339
        %v6372 = vadd.f32 %v6271, %v6340
        %v6373 = vadd.f32 %v6272, %v6341
        %v6374 = vadd.f32 %v6273, %v6342
        %v6375 = vadd.f32 %v6274, %v6343
        %v6376 = vadd.f32 %v6275, %v6344
        %v6377 = vadd.f32 %v6276, %v6345
        %v6378 = vadd.f32 %v6277, %v6346
        %v6379 = vadd.f32 %v6278, %v6347
        %v6380 = vadd.f32 %v6279, %v6348
        %v6381 = vadd.f32 %v6280, %v6349
        %v6382 = vadd.f32 %v6281, %v6350
        %v6383 = vadd.f32 %v6282, %v6351
        %v6384 = vadd.f32 %v6283, %v6352
        %v6385 = vadd.f32 %v6284, %v6353
        %v6386 = vadd.f32 %v6285, %v6354
        %v6387 = vadd.f32 %v6286, %v6355
        %v6388 = vadd.f32 %v6287, %v6356
        %v6389 = vadd.f32 %v6288, %v6357
        %v6390 = vadd.f32 %v6289, %v6358
        %v6391 = vadd.f32 %v6290, %v6359
        %v6392 = vadd.f32 %v6291, %v6360
        %v6393 = vadd.f32 %v6292, %v6361
        %v6394 = vadd.f32 %v6293, %v6362
        %v6395 = vadd.f32 %v6294, %v6363
        %v6396 = vadd.f32 %v6295, %v6364
        %v6397 = vadd.f32 %v6296, %v6365
        %s6398 = scalar_lea.vmem [#allocation3], 96
        %v6399 = vld [vmem:[%s6398] sm:$0xff]
        %v6400 = vld [vmem:[%s6398 + $0x8] sm:$0xff]
        %v6401 = vld [vmem:[%s6398 + $0x18] sm:$0xff]
        %v6402 = vld [vmem:[%s6398 + $0x20] sm:$0xff]
        %v6403 = vld [vmem:[%s6398 + $0x30] sm:$0xff]
        %v6404 = vld [vmem:[%s6398 + $0x38] sm:$0xff]
        %v6405 = vld [vmem:[%s6398 + $0x48] sm:$0xff]
        %v6406 = vld [vmem:[%s6398 + $0x50] sm:$0xff]
        %v6407 = vld [vmem:[%s6398 + $0x60] sm:$0xff]
        %v6408 = vld [vmem:[%s6398 + $0x68] sm:$0xff]
        %v6409 = vld [vmem:[%s6398 + $0x78] sm:$0xff]
        %v6410 = vld [vmem:[%s6398 + $0x80] sm:$0xff]
        %v6411 = vld [vmem:[%s6398 + $0x90] sm:$0xff]
        %v6412 = vld [vmem:[%s6398 + $0x98] sm:$0xff]
        %v6413 = vld [vmem:[%s6398 + $0xa8] sm:$0xff]
        %v6414 = vld [vmem:[%s6398 + $0xb0] sm:$0xff]
        %v6415 = vld [vmem:[%s6398 + $0xc0] sm:$0xff]
        %v6416 = vld [vmem:[%s6398 + $0xc8] sm:$0xff]
        %v6417 = vld [vmem:[%s6398 + $0xd8] sm:$0xff]
        %v6418 = vld [vmem:[%s6398 + $0xe0] sm:$0xff]
        %v6419 = vld [vmem:[%s6398 + $0xf0] sm:$0xff]
        %v6420 = vld [vmem:[%s6398 + $0xf8] sm:$0xff]
        %v6421 = vld [vmem:[%s6398 + $0x108] sm:$0xff]
        %v6422 = vld [vmem:[%s6398 + $0x110] sm:$0xff]
        %v6423 = vld [vmem:[%s6398 + $0x120] sm:$0xff]
        %v6424 = vld [vmem:[%s6398 + $0x128] sm:$0xff]
        %v6425 = vld [vmem:[%s6398 + $0x138] sm:$0xff]
        %v6426 = vld [vmem:[%s6398 + $0x140] sm:$0xff]
        %v6427 = vld [vmem:[%s6398 + $0x150] sm:$0xff]
        %v6428 = vld [vmem:[%s6398 + $0x158] sm:$0xff]
        %v6429 = vld [vmem:[%s6398 + $0x168] sm:$0xff]
        %v6430 = vld [vmem:[%s6398 + $0x170] sm:$0xff]
        %v6431 = vld [vmem:[%s5 + $0x14] sm:$0x1]
        %v6432 = vlaneseq
        %v6433 = vshrl.u32 %v6432, 7
        %v6434 = vsub.s32 0, %v6433
        %v6435 = vrot.slane %v6431, %v6434
        %v6436 = vmul.f32 %v6399, %v6435
        %v6437 = vmul.f32 %v6400, %v6435
        %v6438 = vmul.f32 %v6401, %v6435
        %v6439 = vmul.f32 %v6402, %v6435
        %v6440 = vmul.f32 %v6403, %v6435
        %v6441 = vmul.f32 %v6404, %v6435
        %v6442 = vmul.f32 %v6405, %v6435
        %v6443 = vmul.f32 %v6406, %v6435
        %v6444 = vmul.f32 %v6407, %v6435
        %v6445 = vmul.f32 %v6408, %v6435
        %v6446 = vmul.f32 %v6409, %v6435
        %v6447 = vmul.f32 %v6410, %v6435
        %v6448 = vmul.f32 %v6411, %v6435
        %v6449 = vmul.f32 %v6412, %v6435
        %v6450 = vmul.f32 %v6413, %v6435
        %v6451 = vmul.f32 %v6414, %v6435
        %v6452 = vmul.f32 %v6415, %v6435
        %v6453 = vmul.f32 %v6416, %v6435
        %v6454 = vmul.f32 %v6417, %v6435
        %v6455 = vmul.f32 %v6418, %v6435
        %v6456 = vmul.f32 %v6419, %v6435
        %v6457 = vmul.f32 %v6420, %v6435
        %v6458 = vmul.f32 %v6421, %v6435
        %v6459 = vmul.f32 %v6422, %v6435
        %v6460 = vmul.f32 %v6423, %v6435
        %v6461 = vmul.f32 %v6424, %v6435
        %v6462 = vmul.f32 %v6425, %v6435
        %v6463 = vmul.f32 %v6426, %v6435
        %v6464 = vmul.f32 %v6427, %v6435
        %v6465 = vmul.f32 %v6428, %v6435
        %v6466 = vmul.f32 %v6429, %v6435
        %v6467 = vmul.f32 %v6430, %v6435
        %v6468 = vadd.f32 %v6366, %v6436
        %v6469 = vadd.f32 %v6367, %v6437
        %v6470 = vadd.f32 %v6368, %v6438
        %v6471 = vadd.f32 %v6369, %v6439
        %v6472 = vadd.f32 %v6370, %v6440
        %v6473 = vadd.f32 %v6371, %v6441
        %v6474 = vadd.f32 %v6372, %v6442
        %v6475 = vadd.f32 %v6373, %v6443
        %v6476 = vadd.f32 %v6374, %v6444
        %v6477 = vadd.f32 %v6375, %v6445
        %v6478 = vadd.f32 %v6376, %v6446
        %v6479 = vadd.f32 %v6377, %v6447
        %v6480 = vadd.f32 %v6378, %v6448
        %v6481 = vadd.f32 %v6379, %v6449
        %v6482 = vadd.f32 %v6380, %v6450
        %v6483 = vadd.f32 %v6381, %v6451
        %v6484 = vadd.f32 %v6382, %v6452
        %v6485 = vadd.f32 %v6383, %v6453
        %v6486 = vadd.f32 %v6384, %v6454
        %v6487 = vadd.f32 %v6385, %v6455
        %v6488 = vadd.f32 %v6386, %v6456
        %v6489 = vadd.f32 %v6387, %v6457
        %v6490 = vadd.f32 %v6388, %v6458
        %v6491 = vadd.f32 %v6389, %v6459
        %v6492 = vadd.f32 %v6390, %v6460
        %v6493 = vadd.f32 %v6391, %v6461
        %v6494 = vadd.f32 %v6392, %v6462
        %v6495 = vadd.f32 %v6393, %v6463
        %v6496 = vadd.f32 %v6394, %v6464
        %v6497 = vadd.f32 %v6395, %v6465
        %v6498 = vadd.f32 %v6396, %v6466
        %v6499 = vadd.f32 %v6397, %v6467
        %v6500 = vld [vmem:[%s6398 + $0x1] sm:$0xff]
        %v6501 = vld [vmem:[%s6398 + $0x9] sm:$0xff]
        %v6502 = vld [vmem:[%s6398 + $0x19] sm:$0xff]
        %v6503 = vld [vmem:[%s6398 + $0x21] sm:$0xff]
        %v6504 = vld [vmem:[%s6398 + $0x31] sm:$0xff]
        %v6505 = vld [vmem:[%s6398 + $0x39] sm:$0xff]
        %v6506 = vld [vmem:[%s6398 + $0x49] sm:$0xff]
        %v6507 = vld [vmem:[%s6398 + $0x51] sm:$0xff]
        %v6508 = vld [vmem:[%s6398 + $0x61] sm:$0xff]
        %v6509 = vld [vmem:[%s6398 + $0x69] sm:$0xff]
        %v6510 = vld [vmem:[%s6398 + $0x79] sm:$0xff]
        %v6511 = vld [vmem:[%s6398 + $0x81] sm:$0xff]
        %v6512 = vld [vmem:[%s6398 + $0x91] sm:$0xff]
        %v6513 = vld [vmem:[%s6398 + $0x99] sm:$0xff]
        %v6514 = vld [vmem:[%s6398 + $0xa9] sm:$0xff]
        %v6515 = vld [vmem:[%s6398 + $0xb1] sm:$0xff]
        %v6516 = vld [vmem:[%s6398 + $0xc1] sm:$0xff]
        %v6517 = vld [vmem:[%s6398 + $0xc9] sm:$0xff]
        %v6518 = vld [vmem:[%s6398 + $0xd9] sm:$0xff]
        %v6519 = vld [vmem:[%s6398 + $0xe1] sm:$0xff]
        %v6520 = vld [vmem:[%s6398 + $0xf1] sm:$0xff]
        %v6521 = vld [vmem:[%s6398 + $0xf9] sm:$0xff]
        %v6522 = vld [vmem:[%s6398 + $0x109] sm:$0xff]
        %v6523 = vld [vmem:[%s6398 + $0x111] sm:$0xff]
        %v6524 = vld [vmem:[%s6398 + $0x121] sm:$0xff]
        %v6525 = vld [vmem:[%s6398 + $0x129] sm:$0xff]
        %v6526 = vld [vmem:[%s6398 + $0x139] sm:$0xff]
        %v6527 = vld [vmem:[%s6398 + $0x141] sm:$0xff]
        %v6528 = vld [vmem:[%s6398 + $0x151] sm:$0xff]
        %v6529 = vld [vmem:[%s6398 + $0x159] sm:$0xff]
        %v6530 = vld [vmem:[%s6398 + $0x169] sm:$0xff]
        %v6531 = vld [vmem:[%s6398 + $0x171] sm:$0xff]
        %v6532 = vld [vmem:[%s5 + $0x15] sm:$0x1]
        %v6533 = vlaneseq
        %v6534 = vshrl.u32 %v6533, 7
        %v6535 = vsub.s32 0, %v6534
        %v6536 = vrot.slane %v6532, %v6535
        %v6537 = vmul.f32 %v6500, %v6536
        %v6538 = vmul.f32 %v6501, %v6536
        %v6539 = vmul.f32 %v6502, %v6536
        %v6540 = vmul.f32 %v6503, %v6536
        %v6541 = vmul.f32 %v6504, %v6536
        %v6542 = vmul.f32 %v6505, %v6536
        %v6543 = vmul.f32 %v6506, %v6536
        %v6544 = vmul.f32 %v6507, %v6536
        %v6545 = vmul.f32 %v6508, %v6536
        %v6546 = vmul.f32 %v6509, %v6536
        %v6547 = vmul.f32 %v6510, %v6536
        %v6548 = vmul.f32 %v6511, %v6536
        %v6549 = vmul.f32 %v6512, %v6536
        %v6550 = vmul.f32 %v6513, %v6536
        %v6551 = vmul.f32 %v6514, %v6536
        %v6552 = vmul.f32 %v6515, %v6536
        %v6553 = vmul.f32 %v6516, %v6536
        %v6554 = vmul.f32 %v6517, %v6536
        %v6555 = vmul.f32 %v6518, %v6536
        %v6556 = vmul.f32 %v6519, %v6536
        %v6557 = vmul.f32 %v6520, %v6536
        %v6558 = vmul.f32 %v6521, %v6536
        %v6559 = vmul.f32 %v6522, %v6536
        %v6560 = vmul.f32 %v6523, %v6536
        %v6561 = vmul.f32 %v6524, %v6536
        %v6562 = vmul.f32 %v6525, %v6536
        %v6563 = vmul.f32 %v6526, %v6536
        %v6564 = vmul.f32 %v6527, %v6536
        %v6565 = vmul.f32 %v6528, %v6536
        %v6566 = vmul.f32 %v6529, %v6536
        %v6567 = vmul.f32 %v6530, %v6536
        %v6568 = vmul.f32 %v6531, %v6536
        %v6569 = vadd.f32 %v6468, %v6537
        %v6570 = vadd.f32 %v6469, %v6538
        %v6571 = vadd.f32 %v6470, %v6539
        %v6572 = vadd.f32 %v6471, %v6540
        %v6573 = vadd.f32 %v6472, %v6541
        %v6574 = vadd.f32 %v6473, %v6542
        %v6575 = vadd.f32 %v6474, %v6543
        %v6576 = vadd.f32 %v6475, %v6544
        %v6577 = vadd.f32 %v6476, %v6545
        %v6578 = vadd.f32 %v6477, %v6546
        %v6579 = vadd.f32 %v6478, %v6547
        %v6580 = vadd.f32 %v6479, %v6548
        %v6581 = vadd.f32 %v6480, %v6549
        %v6582 = vadd.f32 %v6481, %v6550
        %v6583 = vadd.f32 %v6482, %v6551
        %v6584 = vadd.f32 %v6483, %v6552
        %v6585 = vadd.f32 %v6484, %v6553
        %v6586 = vadd.f32 %v6485, %v6554
        %v6587 = vadd.f32 %v6486, %v6555
        %v6588 = vadd.f32 %v6487, %v6556
        %v6589 = vadd.f32 %v6488, %v6557
        %v6590 = vadd.f32 %v6489, %v6558
        %v6591 = vadd.f32 %v6490, %v6559
        %v6592 = vadd.f32 %v6491, %v6560
        %v6593 = vadd.f32 %v6492, %v6561
        %v6594 = vadd.f32 %v6493, %v6562
        %v6595 = vadd.f32 %v6494, %v6563
        %v6596 = vadd.f32 %v6495, %v6564
        %v6597 = vadd.f32 %v6496, %v6565
        %v6598 = vadd.f32 %v6497, %v6566
        %v6599 = vadd.f32 %v6498, %v6567
        %v6600 = vadd.f32 %v6499, %v6568
        %v6601 = vld [vmem:[%s6398 + $0x2] sm:$0xff]
        %v6602 = vld [vmem:[%s6398 + $0xa] sm:$0xff]
        %v6603 = vld [vmem:[%s6398 + $0x1a] sm:$0xff]
        %v6604 = vld [vmem:[%s6398 + $0x22] sm:$0xff]
        %v6605 = vld [vmem:[%s6398 + $0x32] sm:$0xff]
        %v6606 = vld [vmem:[%s6398 + $0x3a] sm:$0xff]
        %v6607 = vld [vmem:[%s6398 + $0x4a] sm:$0xff]
        %v6608 = vld [vmem:[%s6398 + $0x52] sm:$0xff]
        %v6609 = vld [vmem:[%s6398 + $0x62] sm:$0xff]
        %v6610 = vld [vmem:[%s6398 + $0x6a] sm:$0xff]
        %v6611 = vld [vmem:[%s6398 + $0x7a] sm:$0xff]
        %v6612 = vld [vmem:[%s6398 + $0x82] sm:$0xff]
        %v6613 = vld [vmem:[%s6398 + $0x92] sm:$0xff]
        %v6614 = vld [vmem:[%s6398 + $0x9a] sm:$0xff]
        %v6615 = vld [vmem:[%s6398 + $0xaa] sm:$0xff]
        %v6616 = vld [vmem:[%s6398 + $0xb2] sm:$0xff]
        %v6617 = vld [vmem:[%s6398 + $0xc2] sm:$0xff]
        %v6618 = vld [vmem:[%s6398 + $0xca] sm:$0xff]
        %v6619 = vld [vmem:[%s6398 + $0xda] sm:$0xff]
        %v6620 = vld [vmem:[%s6398 + $0xe2] sm:$0xff]
        %v6621 = vld [vmem:[%s6398 + $0xf2] sm:$0xff]
        %v6622 = vld [vmem:[%s6398 + $0xfa] sm:$0xff]
        %v6623 = vld [vmem:[%s6398 + $0x10a] sm:$0xff]
        %v6624 = vld [vmem:[%s6398 + $0x112] sm:$0xff]
        %v6625 = vld [vmem:[%s6398 + $0x122] sm:$0xff]
        %v6626 = vld [vmem:[%s6398 + $0x12a] sm:$0xff]
        %v6627 = vld [vmem:[%s6398 + $0x13a] sm:$0xff]
        %v6628 = vld [vmem:[%s6398 + $0x142] sm:$0xff]
        %v6629 = vld [vmem:[%s6398 + $0x152] sm:$0xff]
        %v6630 = vld [vmem:[%s6398 + $0x15a] sm:$0xff]
        %v6631 = vld [vmem:[%s6398 + $0x16a] sm:$0xff]
        %v6632 = vld [vmem:[%s6398 + $0x172] sm:$0xff]
        %v6633 = vld [vmem:[%s5 + $0x16] sm:$0x1]
        %v6634 = vlaneseq
        %v6635 = vshrl.u32 %v6634, 7
        %v6636 = vsub.s32 0, %v6635
        %v6637 = vrot.slane %v6633, %v6636
        %v6638 = vmul.f32 %v6601, %v6637
        %v6639 = vmul.f32 %v6602, %v6637
        %v6640 = vmul.f32 %v6603, %v6637
        %v6641 = vmul.f32 %v6604, %v6637
        %v6642 = vmul.f32 %v6605, %v6637
        %v6643 = vmul.f32 %v6606, %v6637
        %v6644 = vmul.f32 %v6607, %v6637
        %v6645 = vmul.f32 %v6608, %v6637
        %v6646 = vmul.f32 %v6609, %v6637
        %v6647 = vmul.f32 %v6610, %v6637
        %v6648 = vmul.f32 %v6611, %v6637
        %v6649 = vmul.f32 %v6612, %v6637
        %v6650 = vmul.f32 %v6613, %v6637
        %v6651 = vmul.f32 %v6614, %v6637
        %v6652 = vmul.f32 %v6615, %v6637
        %v6653 = vmul.f32 %v6616, %v6637
        %v6654 = vmul.f32 %v6617, %v6637
        %v6655 = vmul.f32 %v6618, %v6637
        %v6656 = vmul.f32 %v6619, %v6637
        %v6657 = vmul.f32 %v6620, %v6637
        %v6658 = vmul.f32 %v6621, %v6637
        %v6659 = vmul.f32 %v6622, %v6637
        %v6660 = vmul.f32 %v6623, %v6637
        %v6661 = vmul.f32 %v6624, %v6637
        %v6662 = vmul.f32 %v6625, %v6637
        %v6663 = vmul.f32 %v6626, %v6637
        %v6664 = vmul.f32 %v6627, %v6637
        %v6665 = vmul.f32 %v6628, %v6637
        %v6666 = vmul.f32 %v6629, %v6637
        %v6667 = vmul.f32 %v6630, %v6637
        %v6668 = vmul.f32 %v6631, %v6637
        %v6669 = vmul.f32 %v6632, %v6637
        %v6670 = vadd.f32 %v6569, %v6638
        %v6671 = vadd.f32 %v6570, %v6639
        %v6672 = vadd.f32 %v6571, %v6640
        %v6673 = vadd.f32 %v6572, %v6641
        %v6674 = vadd.f32 %v6573, %v6642
        %v6675 = vadd.f32 %v6574, %v6643
        %v6676 = vadd.f32 %v6575, %v6644
        %v6677 = vadd.f32 %v6576, %v6645
        %v6678 = vadd.f32 %v6577, %v6646
        %v6679 = vadd.f32 %v6578, %v6647
        %v6680 = vadd.f32 %v6579, %v6648
        %v6681 = vadd.f32 %v6580, %v6649
        %v6682 = vadd.f32 %v6581, %v6650
        %v6683 = vadd.f32 %v6582, %v6651
        %v6684 = vadd.f32 %v6583, %v6652
        %v6685 = vadd.f32 %v6584, %v6653
        %v6686 = vadd.f32 %v6585, %v6654
        %v6687 = vadd.f32 %v6586, %v6655
        %v6688 = vadd.f32 %v6587, %v6656
        %v6689 = vadd.f32 %v6588, %v6657
        %v6690 = vadd.f32 %v6589, %v6658
        %v6691 = vadd.f32 %v6590, %v6659
        %v6692 = vadd.f32 %v6591, %v6660
        %v6693 = vadd.f32 %v6592, %v6661
        %v6694 = vadd.f32 %v6593, %v6662
        %v6695 = vadd.f32 %v6594, %v6663
        %v6696 = vadd.f32 %v6595, %v6664
        %v6697 = vadd.f32 %v6596, %v6665
        %v6698 = vadd.f32 %v6597, %v6666
        %v6699 = vadd.f32 %v6598, %v6667
        %v6700 = vadd.f32 %v6599, %v6668
        %v6701 = vadd.f32 %v6600, %v6669
        %v6702 = vld [vmem:[%s6398 + $0x3] sm:$0xff]
        %v6703 = vld [vmem:[%s6398 + $0xb] sm:$0xff]
        %v6704 = vld [vmem:[%s6398 + $0x1b] sm:$0xff]
        %v6705 = vld [vmem:[%s6398 + $0x23] sm:$0xff]
        %v6706 = vld [vmem:[%s6398 + $0x33] sm:$0xff]
        %v6707 = vld [vmem:[%s6398 + $0x3b] sm:$0xff]
        %v6708 = vld [vmem:[%s6398 + $0x4b] sm:$0xff]
        %v6709 = vld [vmem:[%s6398 + $0x53] sm:$0xff]
        %v6710 = vld [vmem:[%s6398 + $0x63] sm:$0xff]
        %v6711 = vld [vmem:[%s6398 + $0x6b] sm:$0xff]
        %v6712 = vld [vmem:[%s6398 + $0x7b] sm:$0xff]
        %v6713 = vld [vmem:[%s6398 + $0x83] sm:$0xff]
        %v6714 = vld [vmem:[%s6398 + $0x93] sm:$0xff]
        %v6715 = vld [vmem:[%s6398 + $0x9b] sm:$0xff]
        %v6716 = vld [vmem:[%s6398 + $0xab] sm:$0xff]
        %v6717 = vld [vmem:[%s6398 + $0xb3] sm:$0xff]
        %v6718 = vld [vmem:[%s6398 + $0xc3] sm:$0xff]
        %v6719 = vld [vmem:[%s6398 + $0xcb] sm:$0xff]
        %v6720 = vld [vmem:[%s6398 + $0xdb] sm:$0xff]
        %v6721 = vld [vmem:[%s6398 + $0xe3] sm:$0xff]
        %v6722 = vld [vmem:[%s6398 + $0xf3] sm:$0xff]
        %v6723 = vld [vmem:[%s6398 + $0xfb] sm:$0xff]
        %v6724 = vld [vmem:[%s6398 + $0x10b] sm:$0xff]
        %v6725 = vld [vmem:[%s6398 + $0x113] sm:$0xff]
        %v6726 = vld [vmem:[%s6398 + $0x123] sm:$0xff]
        %v6727 = vld [vmem:[%s6398 + $0x12b] sm:$0xff]
        %v6728 = vld [vmem:[%s6398 + $0x13b] sm:$0xff]
        %v6729 = vld [vmem:[%s6398 + $0x143] sm:$0xff]
        %v6730 = vld [vmem:[%s6398 + $0x153] sm:$0xff]
        %v6731 = vld [vmem:[%s6398 + $0x15b] sm:$0xff]
        %v6732 = vld [vmem:[%s6398 + $0x16b] sm:$0xff]
        %v6733 = vld [vmem:[%s6398 + $0x173] sm:$0xff]
        %v6734 = vld [vmem:[%s5 + $0x17] sm:$0x1]
        %v6735 = vlaneseq
        %v6736 = vshrl.u32 %v6735, 7
        %v6737 = vsub.s32 0, %v6736
        %v6738 = vrot.slane %v6734, %v6737
        %v6739 = vmul.f32 %v6702, %v6738
        %v6740 = vmul.f32 %v6703, %v6738
        %v6741 = vmul.f32 %v6704, %v6738
        %v6742 = vmul.f32 %v6705, %v6738
        %v6743 = vmul.f32 %v6706, %v6738
        %v6744 = vmul.f32 %v6707, %v6738
        %v6745 = vmul.f32 %v6708, %v6738
        %v6746 = vmul.f32 %v6709, %v6738
        %v6747 = vmul.f32 %v6710, %v6738
        %v6748 = vmul.f32 %v6711, %v6738
        %v6749 = vmul.f32 %v6712, %v6738
        %v6750 = vmul.f32 %v6713, %v6738
        %v6751 = vmul.f32 %v6714, %v6738
        %v6752 = vmul.f32 %v6715, %v6738
        %v6753 = vmul.f32 %v6716, %v6738
        %v6754 = vmul.f32 %v6717, %v6738
        %v6755 = vmul.f32 %v6718, %v6738
        %v6756 = vmul.f32 %v6719, %v6738
        %v6757 = vmul.f32 %v6720, %v6738
        %v6758 = vmul.f32 %v6721, %v6738
        %v6759 = vmul.f32 %v6722, %v6738
        %v6760 = vmul.f32 %v6723, %v6738
        %v6761 = vmul.f32 %v6724, %v6738
        %v6762 = vmul.f32 %v6725, %v6738
        %v6763 = vmul.f32 %v6726, %v6738
        %v6764 = vmul.f32 %v6727, %v6738
        %v6765 = vmul.f32 %v6728, %v6738
        %v6766 = vmul.f32 %v6729, %v6738
        %v6767 = vmul.f32 %v6730, %v6738
        %v6768 = vmul.f32 %v6731, %v6738
        %v6769 = vmul.f32 %v6732, %v6738
        %v6770 = vmul.f32 %v6733, %v6738
        %v6771 = vadd.f32 %v6670, %v6739
        %v6772 = vadd.f32 %v6671, %v6740
        %v6773 = vadd.f32 %v6672, %v6741
        %v6774 = vadd.f32 %v6673, %v6742
        %v6775 = vadd.f32 %v6674, %v6743
        %v6776 = vadd.f32 %v6675, %v6744
        %v6777 = vadd.f32 %v6676, %v6745
        %v6778 = vadd.f32 %v6677, %v6746
        %v6779 = vadd.f32 %v6678, %v6747
        %v6780 = vadd.f32 %v6679, %v6748
        %v6781 = vadd.f32 %v6680, %v6749
        %v6782 = vadd.f32 %v6681, %v6750
        %v6783 = vadd.f32 %v6682, %v6751
        %v6784 = vadd.f32 %v6683, %v6752
        %v6785 = vadd.f32 %v6684, %v6753
        %v6786 = vadd.f32 %v6685, %v6754
        %v6787 = vadd.f32 %v6686, %v6755
        %v6788 = vadd.f32 %v6687, %v6756
        %v6789 = vadd.f32 %v6688, %v6757
        %v6790 = vadd.f32 %v6689, %v6758
        %v6791 = vadd.f32 %v6690, %v6759
        %v6792 = vadd.f32 %v6691, %v6760
        %v6793 = vadd.f32 %v6692, %v6761
        %v6794 = vadd.f32 %v6693, %v6762
        %v6795 = vadd.f32 %v6694, %v6763
        %v6796 = vadd.f32 %v6695, %v6764
        %v6797 = vadd.f32 %v6696, %v6765
        %v6798 = vadd.f32 %v6697, %v6766
        %v6799 = vadd.f32 %v6698, %v6767
        %v6800 = vadd.f32 %v6699, %v6768
        %v6801 = vadd.f32 %v6700, %v6769
        %v6802 = vadd.f32 %v6701, %v6770
        %v6803 = vld [vmem:[%s6398 + $0x4] sm:$0xff]
        %v6804 = vld [vmem:[%s6398 + $0xc] sm:$0xff]
        %v6805 = vld [vmem:[%s6398 + $0x1c] sm:$0xff]
        %v6806 = vld [vmem:[%s6398 + $0x24] sm:$0xff]
        %v6807 = vld [vmem:[%s6398 + $0x34] sm:$0xff]
        %v6808 = vld [vmem:[%s6398 + $0x3c] sm:$0xff]
        %v6809 = vld [vmem:[%s6398 + $0x4c] sm:$0xff]
        %v6810 = vld [vmem:[%s6398 + $0x54] sm:$0xff]
        %v6811 = vld [vmem:[%s6398 + $0x64] sm:$0xff]
        %v6812 = vld [vmem:[%s6398 + $0x6c] sm:$0xff]
        %v6813 = vld [vmem:[%s6398 + $0x7c] sm:$0xff]
        %v6814 = vld [vmem:[%s6398 + $0x84] sm:$0xff]
        %v6815 = vld [vmem:[%s6398 + $0x94] sm:$0xff]
        %v6816 = vld [vmem:[%s6398 + $0x9c] sm:$0xff]
        %v6817 = vld [vmem:[%s6398 + $0xac] sm:$0xff]
        %v6818 = vld [vmem:[%s6398 + $0xb4] sm:$0xff]
        %v6819 = vld [vmem:[%s6398 + $0xc4] sm:$0xff]
        %v6820 = vld [vmem:[%s6398 + $0xcc] sm:$0xff]
        %v6821 = vld [vmem:[%s6398 + $0xdc] sm:$0xff]
        %v6822 = vld [vmem:[%s6398 + $0xe4] sm:$0xff]
        %v6823 = vld [vmem:[%s6398 + $0xf4] sm:$0xff]
        %v6824 = vld [vmem:[%s6398 + $0xfc] sm:$0xff]
        %v6825 = vld [vmem:[%s6398 + $0x10c] sm:$0xff]
        %v6826 = vld [vmem:[%s6398 + $0x114] sm:$0xff]
        %v6827 = vld [vmem:[%s6398 + $0x124] sm:$0xff]
        %v6828 = vld [vmem:[%s6398 + $0x12c] sm:$0xff]
        %v6829 = vld [vmem:[%s6398 + $0x13c] sm:$0xff]
        %v6830 = vld [vmem:[%s6398 + $0x144] sm:$0xff]
        %v6831 = vld [vmem:[%s6398 + $0x154] sm:$0xff]
        %v6832 = vld [vmem:[%s6398 + $0x15c] sm:$0xff]
        %v6833 = vld [vmem:[%s6398 + $0x16c] sm:$0xff]
        %v6834 = vld [vmem:[%s6398 + $0x174] sm:$0xff]
        %v6835 = vld [vmem:[%s5 + $0x18] sm:$0x1]
        %v6836 = vlaneseq
        %v6837 = vshrl.u32 %v6836, 7
        %v6838 = vsub.s32 0, %v6837
        %v6839 = vrot.slane %v6835, %v6838
        %v6840 = vmul.f32 %v6803, %v6839
        %v6841 = vmul.f32 %v6804, %v6839
        %v6842 = vmul.f32 %v6805, %v6839
        %v6843 = vmul.f32 %v6806, %v6839
        %v6844 = vmul.f32 %v6807, %v6839
        %v6845 = vmul.f32 %v6808, %v6839
        %v6846 = vmul.f32 %v6809, %v6839
        %v6847 = vmul.f32 %v6810, %v6839
        %v6848 = vmul.f32 %v6811, %v6839
        %v6849 = vmul.f32 %v6812, %v6839
        %v6850 = vmul.f32 %v6813, %v6839
        %v6851 = vmul.f32 %v6814, %v6839
        %v6852 = vmul.f32 %v6815, %v6839
        %v6853 = vmul.f32 %v6816, %v6839
        %v6854 = vmul.f32 %v6817, %v6839
        %v6855 = vmul.f32 %v6818, %v6839
        %v6856 = vmul.f32 %v6819, %v6839
        %v6857 = vmul.f32 %v6820, %v6839
        %v6858 = vmul.f32 %v6821, %v6839
        %v6859 = vmul.f32 %v6822, %v6839
        %v6860 = vmul.f32 %v6823, %v6839
        %v6861 = vmul.f32 %v6824, %v6839
        %v6862 = vmul.f32 %v6825, %v6839
        %v6863 = vmul.f32 %v6826, %v6839
        %v6864 = vmul.f32 %v6827, %v6839
        %v6865 = vmul.f32 %v6828, %v6839
        %v6866 = vmul.f32 %v6829, %v6839
        %v6867 = vmul.f32 %v6830, %v6839
        %v6868 = vmul.f32 %v6831, %v6839
        %v6869 = vmul.f32 %v6832, %v6839
        %v6870 = vmul.f32 %v6833, %v6839
        %v6871 = vmul.f32 %v6834, %v6839
        %v6872 = vadd.f32 %v6771, %v6840
        %v6873 = vadd.f32 %v6772, %v6841
        %v6874 = vadd.f32 %v6773, %v6842
        %v6875 = vadd.f32 %v6774, %v6843
        %v6876 = vadd.f32 %v6775, %v6844
        %v6877 = vadd.f32 %v6776, %v6845
        %v6878 = vadd.f32 %v6777, %v6846
        %v6879 = vadd.f32 %v6778, %v6847
        %v6880 = vadd.f32 %v6779, %v6848
        %v6881 = vadd.f32 %v6780, %v6849
        %v6882 = vadd.f32 %v6781, %v6850
        %v6883 = vadd.f32 %v6782, %v6851
        %v6884 = vadd.f32 %v6783, %v6852
        %v6885 = vadd.f32 %v6784, %v6853
        %v6886 = vadd.f32 %v6785, %v6854
        %v6887 = vadd.f32 %v6786, %v6855
        %v6888 = vadd.f32 %v6787, %v6856
        %v6889 = vadd.f32 %v6788, %v6857
        %v6890 = vadd.f32 %v6789, %v6858
        %v6891 = vadd.f32 %v6790, %v6859
        %v6892 = vadd.f32 %v6791, %v6860
        %v6893 = vadd.f32 %v6792, %v6861
        %v6894 = vadd.f32 %v6793, %v6862
        %v6895 = vadd.f32 %v6794, %v6863
        %v6896 = vadd.f32 %v6795, %v6864
        %v6897 = vadd.f32 %v6796, %v6865
        %v6898 = vadd.f32 %v6797, %v6866
        %v6899 = vadd.f32 %v6798, %v6867
        %v6900 = vadd.f32 %v6799, %v6868
        %v6901 = vadd.f32 %v6800, %v6869
        %v6902 = vadd.f32 %v6801, %v6870
        %v6903 = vadd.f32 %v6802, %v6871
        %v6904 = vsel %vm4319, %v6872, 0.0
        %6905 = vadd.xlane.f32.xlu0 %v6904
        %v6906 = vpop.xlane.xlu0 %6905
        %v6907 = vsel %vm4319, %v6873, 0.0
        %6908 = vadd.xlane.f32.xlu0 %v6907
        %v6909 = vpop.xlane.xlu0 %6908
        %v6910 = vsel %vm4319, %v6874, 0.0
        %6911 = vadd.xlane.f32.xlu0 %v6910
        %v6912 = vpop.xlane.xlu0 %6911
        %v6913 = vsel %vm4319, %v6875, 0.0
        %6914 = vadd.xlane.f32.xlu0 %v6913
        %v6915 = vpop.xlane.xlu0 %6914
        %v6916 = vsel %vm4319, %v6876, 0.0
        %6917 = vadd.xlane.f32.xlu0 %v6916
        %v6918 = vpop.xlane.xlu0 %6917
        %v6919 = vsel %vm4319, %v6877, 0.0
        %6920 = vadd.xlane.f32.xlu0 %v6919
        %v6921 = vpop.xlane.xlu0 %6920
        %v6922 = vsel %vm4319, %v6878, 0.0
        %6923 = vadd.xlane.f32.xlu0 %v6922
        %v6924 = vpop.xlane.xlu0 %6923
        %v6925 = vsel %vm4319, %v6879, 0.0
        %6926 = vadd.xlane.f32.xlu0 %v6925
        %v6927 = vpop.xlane.xlu0 %6926
        %v6928 = vsel %vm4319, %v6880, 0.0
        %6929 = vadd.xlane.f32.xlu0 %v6928
        %v6930 = vpop.xlane.xlu0 %6929
        %v6931 = vsel %vm4319, %v6881, 0.0
        %6932 = vadd.xlane.f32.xlu0 %v6931
        %v6933 = vpop.xlane.xlu0 %6932
        %v6934 = vsel %vm4319, %v6882, 0.0
        %6935 = vadd.xlane.f32.xlu0 %v6934
        %v6936 = vpop.xlane.xlu0 %6935
        %v6937 = vsel %vm4319, %v6883, 0.0
        %6938 = vadd.xlane.f32.xlu0 %v6937
        %v6939 = vpop.xlane.xlu0 %6938
        %v6940 = vsel %vm4319, %v6884, 0.0
        %6941 = vadd.xlane.f32.xlu0 %v6940
        %v6942 = vpop.xlane.xlu0 %6941
        %v6943 = vsel %vm4319, %v6885, 0.0
        %6944 = vadd.xlane.f32.xlu0 %v6943
        %v6945 = vpop.xlane.xlu0 %6944
        %v6946 = vsel %vm4319, %v6886, 0.0
        %6947 = vadd.xlane.f32.xlu0 %v6946
        %v6948 = vpop.xlane.xlu0 %6947
        %v6949 = vsel %vm4319, %v6887, 0.0
        %6950 = vadd.xlane.f32.xlu0 %v6949
        %v6951 = vpop.xlane.xlu0 %6950
        %v6952 = vsel %vm4319, %v6888, 0.0
        %6953 = vadd.xlane.f32.xlu0 %v6952
        %v6954 = vpop.xlane.xlu0 %6953
        %v6955 = vsel %vm4319, %v6889, 0.0
        %6956 = vadd.xlane.f32.xlu0 %v6955
        %v6957 = vpop.xlane.xlu0 %6956
        %v6958 = vsel %vm4319, %v6890, 0.0
        %6959 = vadd.xlane.f32.xlu0 %v6958
        %v6960 = vpop.xlane.xlu0 %6959
        %v6961 = vsel %vm4319, %v6891, 0.0
        %6962 = vadd.xlane.f32.xlu0 %v6961
        %v6963 = vpop.xlane.xlu0 %6962
        %v6964 = vsel %vm4319, %v6892, 0.0
        %6965 = vadd.xlane.f32.xlu0 %v6964
        %v6966 = vpop.xlane.xlu0 %6965
        %v6967 = vsel %vm4319, %v6893, 0.0
        %6968 = vadd.xlane.f32.xlu0 %v6967
        %v6969 = vpop.xlane.xlu0 %6968
        %v6970 = vsel %vm4319, %v6894, 0.0
        %6971 = vadd.xlane.f32.xlu0 %v6970
        %v6972 = vpop.xlane.xlu0 %6971
        %v6973 = vsel %vm4319, %v6895, 0.0
        %6974 = vadd.xlane.f32.xlu0 %v6973
        %v6975 = vpop.xlane.xlu0 %6974
        %v6976 = vsel %vm4319, %v6896, 0.0
        %6977 = vadd.xlane.f32.xlu0 %v6976
        %v6978 = vpop.xlane.xlu0 %6977
        %v6979 = vsel %vm4319, %v6897, 0.0
        %6980 = vadd.xlane.f32.xlu0 %v6979
        %v6981 = vpop.xlane.xlu0 %6980
        %v6982 = vsel %vm4319, %v6898, 0.0
        %6983 = vadd.xlane.f32.xlu0 %v6982
        %v6984 = vpop.xlane.xlu0 %6983
        %v6985 = vsel %vm4319, %v6899, 0.0
        %6986 = vadd.xlane.f32.xlu0 %v6985
        %v6987 = vpop.xlane.xlu0 %6986
        %v6988 = vsel %vm4319, %v6900, 0.0
        %6989 = vadd.xlane.f32.xlu0 %v6988
        %v6990 = vpop.xlane.xlu0 %6989
        %v6991 = vsel %vm4319, %v6901, 0.0
        %6992 = vadd.xlane.f32.xlu0 %v6991
        %v6993 = vpop.xlane.xlu0 %6992
        %v6994 = vsel %vm4319, %v6902, 0.0
        %6995 = vadd.xlane.f32.xlu0 %v6994
        %v6996 = vpop.xlane.xlu0 %6995
        %v6997 = vsel %vm4319, %v6903, 0.0
        %6998 = vadd.xlane.f32.xlu0 %v6997
        %v6999 = vpop.xlane.xlu0 %6998
        %v7000 = vld [vmem:[#allocation4] sm:$0x1]
        %v7002 = vlaneseq
        %v7003 = vshrl.u32 %v7002, 7
        %v7004 = vsub.s32 0, %v7003
        %v7005 = vrot.slane %v7000, %v7004
        %7006 = vset.pattern.permute.xlu0 0
        %7007 = vperm.xlu0 %7006, %v7005
        %v7008 = vpop.permute.xlu0 %7007
        %v7010 = vadd.f32 %v6906, %v7008
        %v7011 = vadd.f32 %v6909, %v7008
        %v7012 = vadd.f32 %v6912, %v7008
        %v7013 = vadd.f32 %v6915, %v7008
        %v7014 = vadd.f32 %v6918, %v7008
        %v7015 = vadd.f32 %v6921, %v7008
        %v7016 = vadd.f32 %v6924, %v7008
        %v7017 = vadd.f32 %v6927, %v7008
        %v7018 = vadd.f32 %v6930, %v7008
        %v7019 = vadd.f32 %v6933, %v7008
        %v7020 = vadd.f32 %v6936, %v7008
        %v7021 = vadd.f32 %v6939, %v7008
        %v7022 = vadd.f32 %v6942, %v7008
        %v7023 = vadd.f32 %v6945, %v7008
        %v7024 = vadd.f32 %v6948, %v7008
        %v7025 = vadd.f32 %v6951, %v7008
        %v7026 = vadd.f32 %v6954, %v7008
        %v7027 = vadd.f32 %v6957, %v7008
        %v7028 = vadd.f32 %v6960, %v7008
        %v7029 = vadd.f32 %v6963, %v7008
        %v7030 = vadd.f32 %v6966, %v7008
        %v7031 = vadd.f32 %v6969, %v7008
        %v7032 = vadd.f32 %v6972, %v7008
        %v7033 = vadd.f32 %v6975, %v7008
        %v7034 = vadd.f32 %v6978, %v7008
        %v7035 = vadd.f32 %v6981, %v7008
        %v7036 = vadd.f32 %v6984, %v7008
        %v7037 = vadd.f32 %v6987, %v7008
        %v7038 = vadd.f32 %v6990, %v7008
        %v7039 = vadd.f32 %v6993, %v7008
        %v7040 = vadd.f32 %v6996, %v7008
        %v7041 = vadd.f32 %v6999, %v7008
        %v7074 = vlaneseq
        %v7075 = vand.u32 %v7074, 127
        %v7076 = vlaneseq
        %v7077 = vshrl.u32 %v7076, 7
        %v7078 = vsub.s32 %v7075, %v7077
        %v7079 = vrot.slane %v7010, %v7078
        %v7080 = vadd.s32 %v7075, 4294967288
        %v7081 = vlaneseq
        %v7082 = vshrl.u32 %v7081, 7
        %v7083 = vsub.s32 %v7080, %v7082
        %v7084 = vrot.slane %v7011, %v7083
        %vm7085 = vcmask 130112
        %v7086 = vsel %vm7085, %v7084, %v7079
        %v7087 = vlaneseq
        %v7088 = vshrl.u32 %v7087, 7
        %v7089 = vsub.s32 %v7075, %v7088
        %v7090 = vrot.slane %v7012, %v7089
        %v7091 = vlaneseq
        %v7092 = vshrl.u32 %v7091, 7
        %v7093 = vsub.s32 %v7080, %v7092
        %v7094 = vrot.slane %v7013, %v7093
        %v7095 = vsel %vm7085, %v7094, %v7090
        %v7096 = vlaneseq
        %v7097 = vshrl.u32 %v7096, 7
        %v7098 = vsub.s32 %v7075, %v7097
        %v7099 = vrot.slane %v7014, %v7098
        %v7100 = vlaneseq
        %v7101 = vshrl.u32 %v7100, 7
        %v7102 = vsub.s32 %v7080, %v7101
        %v7103 = vrot.slane %v7015, %v7102
        %v7104 = vsel %vm7085, %v7103, %v7099
        %v7105 = vlaneseq
        %v7106 = vshrl.u32 %v7105, 7
        %v7107 = vsub.s32 %v7075, %v7106
        %v7108 = vrot.slane %v7016, %v7107
        %v7109 = vlaneseq
        %v7110 = vshrl.u32 %v7109, 7
        %v7111 = vsub.s32 %v7080, %v7110
        %v7112 = vrot.slane %v7017, %v7111
        %v7113 = vsel %vm7085, %v7112, %v7108
        %v7114 = vlaneseq
        %v7115 = vshrl.u32 %v7114, 7
        %v7116 = vsub.s32 %v7075, %v7115
        %v7117 = vrot.slane %v7018, %v7116
        %v7118 = vlaneseq
        %v7119 = vshrl.u32 %v7118, 7
        %v7120 = vsub.s32 %v7080, %v7119
        %v7121 = vrot.slane %v7019, %v7120
        %v7122 = vsel %vm7085, %v7121, %v7117
        %v7123 = vlaneseq
        %v7124 = vshrl.u32 %v7123, 7
        %v7125 = vsub.s32 %v7075, %v7124
        %v7126 = vrot.slane %v7020, %v7125
        %v7127 = vlaneseq
        %v7128 = vshrl.u32 %v7127, 7
        %v7129 = vsub.s32 %v7080, %v7128
        %v7130 = vrot.slane %v7021, %v7129
        %v7131 = vsel %vm7085, %v7130, %v7126
        %v7132 = vlaneseq
        %v7133 = vshrl.u32 %v7132, 7
        %v7134 = vsub.s32 %v7075, %v7133
        %v7135 = vrot.slane %v7022, %v7134
        %v7136 = vlaneseq
        %v7137 = vshrl.u32 %v7136, 7
        %v7138 = vsub.s32 %v7080, %v7137
        %v7139 = vrot.slane %v7023, %v7138
        %v7140 = vsel %vm7085, %v7139, %v7135
        %v7141 = vlaneseq
        %v7142 = vshrl.u32 %v7141, 7
        %v7143 = vsub.s32 %v7075, %v7142
        %v7144 = vrot.slane %v7024, %v7143
        %v7145 = vlaneseq
        %v7146 = vshrl.u32 %v7145, 7
        %v7147 = vsub.s32 %v7080, %v7146
        %v7148 = vrot.slane %v7025, %v7147
        %v7149 = vsel %vm7085, %v7148, %v7144
        %v7150 = vlaneseq
        %v7151 = vshrl.u32 %v7150, 7
        %v7152 = vsub.s32 %v7075, %v7151
        %v7153 = vrot.slane %v7026, %v7152
        %v7154 = vlaneseq
        %v7155 = vshrl.u32 %v7154, 7
        %v7156 = vsub.s32 %v7080, %v7155
        %v7157 = vrot.slane %v7027, %v7156
        %v7158 = vsel %vm7085, %v7157, %v7153
        %v7159 = vlaneseq
        %v7160 = vshrl.u32 %v7159, 7
        %v7161 = vsub.s32 %v7075, %v7160
        %v7162 = vrot.slane %v7028, %v7161
        %v7163 = vlaneseq
        %v7164 = vshrl.u32 %v7163, 7
        %v7165 = vsub.s32 %v7080, %v7164
        %v7166 = vrot.slane %v7029, %v7165
        %v7167 = vsel %vm7085, %v7166, %v7162
        %v7168 = vlaneseq
        %v7169 = vshrl.u32 %v7168, 7
        %v7170 = vsub.s32 %v7075, %v7169
        %v7171 = vrot.slane %v7030, %v7170
        %v7172 = vlaneseq
        %v7173 = vshrl.u32 %v7172, 7
        %v7174 = vsub.s32 %v7080, %v7173
        %v7175 = vrot.slane %v7031, %v7174
        %v7176 = vsel %vm7085, %v7175, %v7171
        %v7177 = vlaneseq
        %v7178 = vshrl.u32 %v7177, 7
        %v7179 = vsub.s32 %v7075, %v7178
        %v7180 = vrot.slane %v7032, %v7179
        %v7181 = vlaneseq
        %v7182 = vshrl.u32 %v7181, 7
        %v7183 = vsub.s32 %v7080, %v7182
        %v7184 = vrot.slane %v7033, %v7183
        %v7185 = vsel %vm7085, %v7184, %v7180
        %v7186 = vlaneseq
        %v7187 = vshrl.u32 %v7186, 7
        %v7188 = vsub.s32 %v7075, %v7187
        %v7189 = vrot.slane %v7034, %v7188
        %v7190 = vlaneseq
        %v7191 = vshrl.u32 %v7190, 7
        %v7192 = vsub.s32 %v7080, %v7191
        %v7193 = vrot.slane %v7035, %v7192
        %v7194 = vsel %vm7085, %v7193, %v7189
        %v7195 = vlaneseq
        %v7196 = vshrl.u32 %v7195, 7
        %v7197 = vsub.s32 %v7075, %v7196
        %v7198 = vrot.slane %v7036, %v7197
        %v7199 = vlaneseq
        %v7200 = vshrl.u32 %v7199, 7
        %v7201 = vsub.s32 %v7080, %v7200
        %v7202 = vrot.slane %v7037, %v7201
        %v7203 = vsel %vm7085, %v7202, %v7198
        %v7204 = vlaneseq
        %v7205 = vshrl.u32 %v7204, 7
        %v7206 = vsub.s32 %v7075, %v7205
        %v7207 = vrot.slane %v7038, %v7206
        %v7208 = vlaneseq
        %v7209 = vshrl.u32 %v7208, 7
        %v7210 = vsub.s32 %v7080, %v7209
        %v7211 = vrot.slane %v7039, %v7210
        %v7212 = vsel %vm7085, %v7211, %v7207
        %v7213 = vlaneseq
        %v7214 = vshrl.u32 %v7213, 7
        %v7215 = vsub.s32 %v7075, %v7214
        %v7216 = vrot.slane %v7040, %v7215
        %v7217 = vlaneseq
        %v7218 = vshrl.u32 %v7217, 7
        %v7219 = vsub.s32 %v7080, %v7218
        %v7220 = vrot.slane %v7041, %v7219
        %v7221 = vsel %vm7085, %v7220, %v7216
        %vm7222 = vcmask 1041409
        %v7223 = vsel %vm7222, %v7095, %v7086
        %vm7224 = vcmask 1042434
        %v7225 = vsel %vm7224, %v7104, %v7223
        %vm7226 = vcmask 1043459
        %v7227 = vsel %vm7226, %v7113, %v7225
        %vm7228 = vcmask 1044484
        %v7229 = vsel %vm7228, %v7122, %v7227
        %vm7230 = vcmask 1045509
        %v7231 = vsel %vm7230, %v7131, %v7229
        %vm7232 = vcmask 1046534
        %v7233 = vsel %vm7232, %v7140, %v7231
        %vm7234 = vcmask 1047559
        %v7235 = vsel %vm7234, %v7149, %v7233
        %v7236 = vsel %vm7222, %v7167, %v7158
        %v7237 = vsel %vm7224, %v7176, %v7236
        %v7238 = vsel %vm7226, %v7185, %v7237
        %v7239 = vsel %vm7228, %v7194, %v7238
        %v7240 = vsel %vm7230, %v7203, %v7239
        %v7241 = vsel %vm7232, %v7212, %v7240
        %v7242 = vsel %vm7234, %v7221, %v7241
        %vm7245 = vcmask 130048
        %7246 = vst.msk [vmem:[%s273] sm:$0xff] %vm7245, %v7235
        %7247 = vst.msk [vmem:[%s273 + $0x8] sm:$0xff] %vm7245, %v7242
        %s7248 = sand.u32 %s183, 1
        %s7249 = scalar_lea.sflag [#allocation6], %s7248
        %s7250 = sand.u32 %s183, 1
        %s7251 = smul.addr %s7250, 16
        %s7252 = scalar_lea.vmem [#allocation5], %s7251
        // Predicated region
        $region49: #{tpu_custom_call.1} parent=47 // pred_check
          %p7253 = pneg %p193
        $region50: #{tpu_custom_call.1} parent=47 // pred_check_branch
          %7255 = sbr.rel (%p7253) target = $region52
        $region51: #{tpu_custom_call.1} parent=47 // pred_region
          %s7257 = ssub.s32 256, 256
          %7258 = vsyncadd %s7249, %s7257
          %s7259 = smul.addr %s23, 2
          %s7260 = smul.addr %s7259, 128
          %s7261 = scalar_lea.hbm %s7, %s7260
          %s7262 = sshll.u32 %s7252, 4
          %s7263 = int_to_ptr.vmem [resolvable:$true] %s7262
          %7268 = dma.vmem_to_hbm [thread:$0]  %s7263, 256, %s7261, %s7249, 128, 128, 8
        $region52: #{tpu_custom_call.1} parent=47 // pred_fallthru
          _
      $region48: #{tpu_custom_call.1} parent=5 // pred_fallthru
        _
      %p7269 = scmp.le.s32.totalorder 2, %s18
      // Predicated region
      $region53: #{tpu_custom_call.1} parent=5 // pred_check
        %p7270 = pneg %p7269
      $region54: #{tpu_custom_call.1} parent=5 // pred_check_branch
        %7272 = sbr.rel (%p7270) target = $region56
      $region55: #{tpu_custom_call.1} parent=5 // pred_region
        %s7273 = ssub.s32 %s18, 2
        // Predicated region
        $region57: #{tpu_custom_call.1} parent=55 // pred_check
          %p7274 = pneg %p199
        $region58: #{tpu_custom_call.1} parent=55 // pred_check_branch
          %7276 = sbr.rel (%p7274) target = $region60
        $region59: #{tpu_custom_call.1} parent=55 // pred_region
          %s7277 = sand.u32 %s184, 1
          %s7278 = scalar_lea.sflag [#allocation6], %s7277
          %s7279 = sand.u32 %s184, 1
          %s7280 = smul.addr %s7279, 16
          %s7281 = scalar_lea.vmem [#allocation5], %s7280
          %7282 = dma.done %s7278, 256
        $region60: #{tpu_custom_call.1} parent=55 // pred_fallthru
          _
      $region56: #{tpu_custom_call.1} parent=5 // pred_fallthru
        _
    $region6: #{tpu_custom_call.1} parent=1 // loop_footer
      %s22 = sadd.s32 1, %s18
    $region7: #{tpu_custom_call.1} parent=1 // loop_footer_branch
      %17 = sbr.rel target = $region3
    $region8: #{tpu_custom_call.1} parent=1 // loop_exit
      _
    %7283 = vsyncpa [#allocation6], 1
    %s7284 = scalar_lea.sflag [#allocation6], 1
    %7285 = vsyncpa %s7284, 1

</llo_original>
